<compile_context>
chip_gen: v7x
topology: tpu7x:2x2x1
jax: 0.10.0
libtpu: 0.0.40
codegen_flags: <defaults>
</compile_context>

<pallas_src>
import jax
import jax.numpy as jnp
from jax import lax
from jax.experimental import pallas as pl
from jax.experimental.pallas import tpu as pltpu


# ------------------------------ planning -----------------------------------

def _round_up(v, m):
    return ((v + m - 1) // m) * m


def _make_plan(H, W):
    """Row extents for the compact flat layout of every stage.

    Each activation is stored dense with flat index p = h * Wg + w on its own
    stage grid (Wg = that stage's grid width).  Conv outputs include a few
    "garbage" rows (positions with w >= valid width, plus alignment padding)
    so every layer is a plain dense matmul over contiguous rows; garbage rows
    are never read by anything that feeds the output.
    """
    h0, w0 = H - 2, W - 2              # conv0 output grid
    assert h0 >= 2 and w0 >= 2, "input too small"
    h0p, w0p = h0 // 2, w0 // 2        # pool0 grid
    h1, w1 = h0p - 2, w0p - 2          # conv1 output grid
    assert h1 >= 2 and w1 >= 2, "input too small"
    h1p, w1p = h1 // 2, w1 // 2        # pool1 grid
    h2, w2 = h1p - 2, w1p - 2          # conv2 output grid
    assert h2 >= 2 and w2 >= 2, "input too small"
    h2p, w2p = h2 // 2, w2 // 2        # pool2 grid (head)

    m0 = _round_up(h0 * w0, 8)                               # conv0 rows (dense, no garbage cols)
    m1 = _round_up((h1 - 1) * w0p + (w1 - 1) + 1, 8)         # conv1 dense rows on the 15-wide grid
    m2 = _round_up((h2 - 1) * w1p + (w2 - 1) + 1, 8)         # conv2 dense rows on the 6-wide grid

    p0_valid = h0p * w0p
    p0_rows = _round_up(m1 - 1 + 2 * w0p + 2 + 1, 8)         # conv1 taps over-read this far
    p1_valid = h1p * w1p
    p1_rows = _round_up(m2 - 1 + 2 * w1p + 2 + 1, 8)         # conv2 taps over-read this far
    assert p0_rows >= p0_valid and p1_rows >= p1_valid
    assert m0 >= m1                                           # conv1 output reuses conv0's scratch

    return dict(conv0=(h0, w0), pool0=(h0p, w0p), conv1=(h1, w1),
                pool1=(h1p, w1p), conv2=(h2, w2), pool2=(h2p, w2p),
                m0=m0, m1=m1, m2=m2,
                p0_valid=p0_valid, p0_rows=p0_rows,
                p1_valid=p1_valid, p1_rows=p1_rows)


# ------------------------------ the kernel ----------------------------------

def _build_kernel(plan, chunk0=256, chunk_tap=128):
    h0, w0g = plan["conv0"]
    h0p, w0p = plan["pool0"]
    h1p, w1p = plan["pool1"]
    h2p, w2p = plan["pool2"]
    m0, m1, m2 = plan["m0"], plan["m1"], plan["m2"]
    p0_valid, p0_rows = plan["p0_valid"], plan["p0_rows"]
    p1_valid, p1_rows = plan["p1_valid"], plan["p1_rows"]

    def kernel(x_ref, w0_ref, b0_ref, w1_ref, b1_ref, w2_ref, b2_ref,
               wl_ref, bl_ref, out_ref, scr_a, scr_b, scr_c):
        f32 = jnp.float32

        # ---- conv0: one (m, 9*Cin) @ (9*Cin, C0) matmul, M-tiled so the
        #      accumulator / result tile stays register resident.
        for off in range(0, m0, chunk0):
            c = min(chunk0, m0 - off)
            acc = jnp.dot(x_ref[pl.ds(off, c), :], w0_ref[...],
                          preferred_element_type=f32)
            scr_a[pl.ds(off, c), :] = jnp.maximum(acc + b0_ref[...], 0.0)

        def pool2x2_compact(src, dst, w_in, h_out, w_out):
            # 2x2 stride-2 max-pool; src dense on a w_in-wide grid, dst dense
            # on a w_out-wide grid.  One group of strided row loads per pooled
            # row (compaction = review's biggest algorithmic win).
            for i in range(h_out):
                base = 2 * i * w_in
                tl = src[pl.ds(base, w_out, stride=2), :]
                tr = src[pl.ds(base + 1, w_out, stride=2), :]
                bl = src[pl.ds(base + w_in, w_out, stride=2), :]
                br = src[pl.ds(base + w_in + 1, w_out, stride=2), :]
                dst[pl.ds(i * w_out, w_out), :] = jnp.maximum(
                    jnp.maximum(tl, tr), jnp.maximum(bl, br))

        def conv3x3_relu(src, w9, b, m, w_in, dst):
            # 3x3 valid conv as 9 shifted-row matmuls over a dense compact
            # grid; accumulator tiled over M so it never spills.
            co = w9.shape[2]
            for off in range(0, m, chunk_tap):
                c = min(chunk_tap, m - off)
                acc = jnp.zeros((c, co), f32)
                for t in range(9):
                    dh, dw = divmod(t, 3)
                    acc = acc + jnp.dot(
                        src[pl.ds(off + dh * w_in + dw, c), :], w9[t],
                        preferred_element_type=f32)
                dst[pl.ds(off, c), :] = jnp.maximum(acc + b[...], 0.0)

        # ---- pool0: 30x30 -> compact 15x15 --------------------------------
        pool2x2_compact(scr_a, scr_b, w0g, h0p, w0p)
        if p0_rows > p0_valid:   # keep the (never-used) over-read tail finite
            scr_b[pl.ds(p0_valid, p0_rows - p0_valid), :] = jnp.zeros(
                (p0_rows - p0_valid, scr_b.shape[1]), f32)

        # ---- conv1 -> pool1 (13x13 -> compact 6x6) -------------------------
        conv3x3_relu(scr_b, w1_ref, b1_ref, m1, w0p, scr_a)
        pool2x2_compact(scr_a, scr_b, w0p, h1p, w1p)
        if p1_rows > p1_valid:
            scr_b[pl.ds(p1_valid, p1_rows - p1_valid), :] = jnp.zeros(
                (p1_rows - p1_valid, scr_b.shape[1]), f32)

        # ---- conv2 ----------------------------------------------------------
        conv3x3_relu(scr_b, w2_ref, b2_ref, m2, w1p, scr_c)

        # ---- head: 2x2 max-pool over the 4x4 map, global mean, Linear, Tanh.
        co2 = scr_c.shape[1]
        total = jnp.zeros((1, co2), f32)
        for i in range(h2p):
            base = 2 * i * w1p
            tl = scr_c[pl.ds(base, w2p, stride=2), :]
            tr = scr_c[pl.ds(base + 1, w2p, stride=2), :]
            bl = scr_c[pl.ds(base + w1p, w2p, stride=2), :]
            br = scr_c[pl.ds(base + w1p + 1, w2p, stride=2), :]
            row_max = jnp.maximum(jnp.maximum(tl, tr), jnp.maximum(bl, br))
            total = total + jnp.sum(row_max, axis=0, keepdims=True)
        avg = total * (1.0 / float(h2p * w2p))
        out_ref[...] = jnp.tanh(
            jnp.dot(avg, wl_ref[...], preferred_element_type=f32)
            + bl_ref[...])[None]

    return kernel


# ------------------------------ wrapper --------------------------------------

def encoder_forward(x_nchw, params):
    # x_nchw: (N, Cin, H, W) -- PyTorch layout in; compact flat NHWC inside.
    N, Cin, H, W = x_nchw.shape
    (w0, b0), (w1, b1), (w2, b2) = params["convs"]
    assert w0.shape[:3] == (3, 3, Cin)
    c0, c1, c2 = w0.shape[3], w1.shape[3], w2.shape[3]
    assert w1.shape[2] == c0 and w2.shape[2] == c1 and c1 == c0
    wl, bl = params["wl"], params["bl"]
    assert wl.shape[0] == c2
    D = wl.shape[1]

    plan = _make_plan(H, W)
    m0 = plan["m0"]
    h0, w0g = plan["conv0"]

    # conv0 im2col in plain JAX (tiny: ~100 KB/sample of extra HBM traffic).
    x_nhwc = jnp.transpose(x_nchw, (0, 2, 3, 1))
    taps = []
    for dh in range(3):
        for dw in range(3):
            taps.append(x_nhwc[:, dh:dh + h0, dw:dw + w0g, :])
    xcol = jnp.concatenate(taps, axis=-1).reshape(N, h0 * w0g, 9 * Cin)
    if m0 > h0 * w0g:
        xcol = jnp.pad(xcol, ((0, 0), (0, m0 - h0 * w0g), (0, 0)))

    args = [xcol,
            w0.reshape(9 * Cin, c0), b0.reshape(1, c0),
            w1.reshape(9, c0, c1), b1.reshape(1, c1),
            w2.reshape(9, c1, c2), b2.reshape(1, c2),
            wl, bl.reshape(1, D)]

    in_specs = [pl.BlockSpec((None, m0, 9 * Cin), lambda n: (n, 0, 0))]
    for a in args[1:]:
        nd = len(a.shape)
        in_specs.append(pl.BlockSpec(a.shape, lambda n, _nd=nd: (0,) * _nd))

    scratch = [
        pltpu.VMEM((m0, c0), jnp.float32),               # conv0 / conv1 output
        pltpu.VMEM((plan["p0_rows"], c0), jnp.float32),  # pool0 / pool1 (compact)
        pltpu.VMEM((plan["m2"], c2), jnp.float32),       # conv2 output
    ]

    kernel = _build_kernel(plan)

    flops = 2 * N * (m0 * 9 * Cin * c0
                     + plan["m1"] * 9 * c0 * c1
                     + plan["m2"] * 9 * c1 * c2
                     + c2 * D)
    bytes_accessed = sum(int(a.size) * 4 for a in args) + N * D * 4

    out = pl.pallas_call(
        kernel,
        out_shape=jax.ShapeDtypeStruct((N, 1, D), jnp.float32),
        grid=(N,),
        in_specs=in_specs,
        out_specs=pl.BlockSpec((1, 1, D), lambda n: (n, 0, 0)),
        scratch_shapes=scratch,
        compiler_params=pltpu.CompilerParams(
            dimension_semantics=("parallel",)),
        cost_estimate=pl.CostEstimate(
            flops=flops, transcendentals=N * D,
            bytes_accessed=bytes_accessed),
    )(*args)
    return out.reshape(N, D)


# ------------------------------ JAX reference --------------------------------

def encoder_reference(x_nchw, params):
    x = jnp.transpose(x_nchw, (0, 2, 3, 1))
    for w, b in params["convs"]:
        x = lax.conv_general_dilated(
            x, w, window_strides=(1, 1), padding="VALID",
            dimension_numbers=("NHWC", "HWIO", "NHWC"),
            precision=lax.Precision.HIGHEST)
        x = jnp.maximum(x + b, 0.0)
        x = lax.reduce_window(x, -jnp.inf, lax.max,
                              (1, 2, 2, 1), (1, 2, 2, 1), "VALID")
    x = jnp.mean(x, axis=(1, 2))
    return jnp.tanh(jnp.dot(x, params["wl"],
                            precision=lax.Precision.HIGHEST) + params["bl"])


# ------------------------------ params / main --------------------------------

def make_params(key, in_channels, out_dim):
    # Deterministic synthetic init.  Conv weights are HWIO; the Linear weight
    # (PyTorch stores (out_dim, 32)) is generated directly as (32, out_dim).
    ks = jax.random.split(key, 8)
    chans = [(in_channels, 64), (64, 64), (64, 32)]
    convs = []
    for i, (ci, co) in enumerate(chans):
        w = 0.1 * jax.random.normal(ks[2 * i], (3, 3, ci, co), jnp.float32)
        b = 0.05 * jax.random.normal(ks[2 * i + 1], (co,), jnp.float32)
        convs.append((w, b))
    wl = 0.2 * jax.random.normal(ks[6], (32, out_dim), jnp.float32)
    bl = 0.05 * jax.random.normal(ks[7], (out_dim,), jnp.float32)
    return {"convs": convs, "wl": wl, "bl": bl}


if __name__ == "__main__":
    N, Cin, H, W = 2, 3, 32, 32   # 32 -> 30 -> 15 -> 13 -> 6 -> 4 -> 2 -> 1
    out_dim = 8

    key = jax.random.PRNGKey(0)
    kx, kp = jax.random.split(key)
    x = jax.random.normal(kx, (N, Cin, H, W), jnp.float32)
    params = make_params(kp, Cin, out_dim)

    fwd = jax.jit(encoder_forward)
    out = jax.block_until_ready(fwd(x, params))
    assert out.shape == (N, out_dim), out.shape

    ref = encoder_reference(x, params)
    assert jnp.all(jnp.isfinite(out))
    assert jnp.allclose(out, ref, rtol=3e-2, atol=3e-2), (
        float(jnp.max(jnp.abs(out - ref))))

    print("KERNEL_OK")
</pallas_src>

<mosaic_0001>
module attributes {stable_mosaic.version = 11 : i64} {
  func.func @kernel(%arg0: i32, %arg1: memref<1x904x27xf32, #tpu.memory_space<vmem>>, %arg2: memref<27x64xf32, #tpu.memory_space<vmem>>, %arg3: memref<1x64xf32, #tpu.memory_space<vmem>>, %arg4: memref<9x64x64xf32, #tpu.memory_space<vmem>>, %arg5: memref<1x64xf32, #tpu.memory_space<vmem>>, %arg6: memref<9x64x32xf32, #tpu.memory_space<vmem>>, %arg7: memref<1x32xf32, #tpu.memory_space<vmem>>, %arg8: memref<32x8xf32, #tpu.memory_space<vmem>>, %arg9: memref<1x8xf32, #tpu.memory_space<vmem>>, %arg10: memref<1x1x8xf32, #tpu.memory_space<vmem>>, %arg11: memref<904x64xf32, #tpu.memory_space<vmem>>, %arg12: memref<232x64xf32, #tpu.memory_space<vmem>>, %arg13: memref<24x32xf32, #tpu.memory_space<vmem>>) attributes {dimension_semantics = [#tpu.dimension_semantics<parallel>], iteration_bounds = array<i64: 2>, scalar_prefetch = 0 : i64, scratch_operands = 3 : i64, tpu.core_type = #tpu.core_type<tc>, window_params = [{transform_indices = @transform_0, window_bounds = array<i64: 1, 904, 27>}, {pipeline_mode = #tpu.pipeline_mode<synchronous>, transform_indices = @transform_1, window_bounds = array<i64: 27, 64>}, {pipeline_mode = #tpu.pipeline_mode<synchronous>, transform_indices = @transform_2, window_bounds = array<i64: 1, 64>}, {pipeline_mode = #tpu.pipeline_mode<synchronous>, transform_indices = @transform_3, window_bounds = array<i64: 9, 64, 64>}, {pipeline_mode = #tpu.pipeline_mode<synchronous>, transform_indices = @transform_4, window_bounds = array<i64: 1, 64>}, {pipeline_mode = #tpu.pipeline_mode<synchronous>, transform_indices = @transform_5, window_bounds = array<i64: 9, 64, 32>}, {pipeline_mode = #tpu.pipeline_mode<synchronous>, transform_indices = @transform_6, window_bounds = array<i64: 1, 32>}, {pipeline_mode = #tpu.pipeline_mode<synchronous>, transform_indices = @transform_7, window_bounds = array<i64: 32, 8>}, {pipeline_mode = #tpu.pipeline_mode<synchronous>, transform_indices = @transform_8, window_bounds = array<i64: 1, 8>}, {transform_indices = @transform_9, window_bounds = array<i64: 1, 1, 8>}]} {
    %c0 = arith.constant 0 : index
    %c0_0 = arith.constant 0 : index
    %c0_1 = arith.constant 0 : index
    %0 = vector.load %arg1[%c0, %c0_0, %c0_1] : memref<1x904x27xf32, #tpu.memory_space<vmem>>, vector<1x256x27xf32>
    %1 = vector.shape_cast %0 : vector<1x256x27xf32> to vector<256x27xf32>
    %c0_2 = arith.constant 0 : index
    %c0_3 = arith.constant 0 : index
    %2 = vector.load %arg2[%c0_2, %c0_3] : memref<27x64xf32, #tpu.memory_space<vmem>>, vector<27x64xf32>
    %cst = arith.constant dense<0.000000e+00> : vector<256x64xf32>
    %3 = tpu.matmul %1, %2, %cst {dimension_numbers = #tpu.dot_dimension_numbers<[1], [0], [0], [1], [0, 0, 1, 1], [], []>} : vector<256x27xf32>, vector<27x64xf32>, vector<256x64xf32> -> vector<256x64xf32>
    %c0_4 = arith.constant 0 : index
    %c0_5 = arith.constant 0 : index
    %4 = vector.load %arg3[%c0_4, %c0_5] : memref<1x64xf32, #tpu.memory_space<vmem>>, vector<1x64xf32>
    %5 = vector.broadcast %4 : vector<1x64xf32> to vector<256x64xf32>
    %6 = arith.addf %3, %5 : vector<256x64xf32>
    %cst_6 = arith.constant 0.000000e+00 : f32
    %7 = vector.broadcast %cst_6 : f32 to vector<256x64xf32>
    %8 = arith.maximumf %6, %7 : vector<256x64xf32>
    %c0_7 = arith.constant 0 : index
    %c0_8 = arith.constant 0 : index
    %9 = vector.load %arg11[%c0_7, %c0_8] : memref<904x64xf32, #tpu.memory_space<vmem>>, vector<256x64xf32>
    tpu.vector_store %arg11[%c0_7, %c0_8], %8 {strides = array<i32>} : memref<904x64xf32, #tpu.memory_space<vmem>>, vector<256x64xf32>,
    %c0_9 = arith.constant 0 : index
    %c256 = arith.constant 256 : index
    %c0_10 = arith.constant 0 : index
    %10 = vector.load %arg1[%c0_9, %c256, %c0_10] : memref<1x904x27xf32, #tpu.memory_space<vmem>>, vector<1x256x27xf32>
    %11 = vector.shape_cast %10 : vector<1x256x27xf32> to vector<256x27xf32>
    %c0_11 = arith.constant 0 : index
    %c0_12 = arith.constant 0 : index
    %12 = vector.load %arg2[%c0_11, %c0_12] : memref<27x64xf32, #tpu.memory_space<vmem>>, vector<27x64xf32>
    %cst_13 = arith.constant dense<0.000000e+00> : vector<256x64xf32>
    %13 = tpu.matmul %11, %12, %cst_13 {dimension_numbers = #tpu.dot_dimension_numbers<[1], [0], [0], [1], [0, 0, 1, 1], [], []>} : vector<256x27xf32>, vector<27x64xf32>, vector<256x64xf32> -> vector<256x64xf32>
    %c0_14 = arith.constant 0 : index
    %c0_15 = arith.constant 0 : index
    %14 = vector.load %arg3[%c0_14, %c0_15] : memref<1x64xf32, #tpu.memory_space<vmem>>, vector<1x64xf32>
    %15 = vector.broadcast %14 : vector<1x64xf32> to vector<256x64xf32>
    %16 = arith.addf %13, %15 : vector<256x64xf32>
    %cst_16 = arith.constant 0.000000e+00 : f32
    %17 = vector.broadcast %cst_16 : f32 to vector<256x64xf32>
    %18 = arith.maximumf %16, %17 : vector<256x64xf32>
    %c256_17 = arith.constant 256 : index
    %c0_18 = arith.constant 0 : index
    %19 = vector.load %arg11[%c256_17, %c0_18] : memref<904x64xf32, #tpu.memory_space<vmem>>, vector<256x64xf32>
    tpu.vector_store %arg11[%c256_17, %c0_18], %18 {strides = array<i32>} : memref<904x64xf32, #tpu.memory_space<vmem>>, vector<256x64xf32>,
    %c0_19 = arith.constant 0 : index
    %c512 = arith.constant 512 : index
    %c0_20 = arith.constant 0 : index
    %20 = vector.load %arg1[%c0_19, %c512, %c0_20] : memref<1x904x27xf32, #tpu.memory_space<vmem>>, vector<1x256x27xf32>
    %21 = vector.shape_cast %20 : vector<1x256x27xf32> to vector<256x27xf32>
    %c0_21 = arith.constant 0 : index
    %c0_22 = arith.constant 0 : index
    %22 = vector.load %arg2[%c0_21, %c0_22] : memref<27x64xf32, #tpu.memory_space<vmem>>, vector<27x64xf32>
    %cst_23 = arith.constant dense<0.000000e+00> : vector<256x64xf32>
    %23 = tpu.matmul %21, %22, %cst_23 {dimension_numbers = #tpu.dot_dimension_numbers<[1], [0], [0], [1], [0, 0, 1, 1], [], []>} : vector<256x27xf32>, vector<27x64xf32>, vector<256x64xf32> -> vector<256x64xf32>
    %c0_24 = arith.constant 0 : index
    %c0_25 = arith.constant 0 : index
    %24 = vector.load %arg3[%c0_24, %c0_25] : memref<1x64xf32, #tpu.memory_space<vmem>>, vector<1x64xf32>
    %25 = vector.broadcast %24 : vector<1x64xf32> to vector<256x64xf32>
    %26 = arith.addf %23, %25 : vector<256x64xf32>
    %cst_26 = arith.constant 0.000000e+00 : f32
    %27 = vector.broadcast %cst_26 : f32 to vector<256x64xf32>
    %28 = arith.maximumf %26, %27 : vector<256x64xf32>
    %c512_27 = arith.constant 512 : index
    %c0_28 = arith.constant 0 : index
    %29 = vector.load %arg11[%c512_27, %c0_28] : memref<904x64xf32, #tpu.memory_space<vmem>>, vector<256x64xf32>
    tpu.vector_store %arg11[%c512_27, %c0_28], %28 {strides = array<i32>} : memref<904x64xf32, #tpu.memory_space<vmem>>, vector<256x64xf32>,
    %c0_29 = arith.constant 0 : index
    %c768 = arith.constant 768 : index
    %c0_30 = arith.constant 0 : index
    %30 = vector.load %arg1[%c0_29, %c768, %c0_30] : memref<1x904x27xf32, #tpu.memory_space<vmem>>, vector<1x136x27xf32>
    %31 = vector.shape_cast %30 : vector<1x136x27xf32> to vector<136x27xf32>
    %c0_31 = arith.constant 0 : index
    %c0_32 = arith.constant 0 : index
    %32 = vector.load %arg2[%c0_31, %c0_32] : memref<27x64xf32, #tpu.memory_space<vmem>>, vector<27x64xf32>
    %cst_33 = arith.constant dense<0.000000e+00> : vector<136x64xf32>
    %33 = tpu.matmul %31, %32, %cst_33 {dimension_numbers = #tpu.dot_dimension_numbers<[1], [0], [0], [1], [0, 0, 1, 1], [], []>} : vector<136x27xf32>, vector<27x64xf32>, vector<136x64xf32> -> vector<136x64xf32>
    %c0_34 = arith.constant 0 : index
    %c0_35 = arith.constant 0 : index
    %34 = vector.load %arg3[%c0_34, %c0_35] : memref<1x64xf32, #tpu.memory_space<vmem>>, vector<1x64xf32>
    %35 = vector.broadcast %34 : vector<1x64xf32> to vector<136x64xf32>
    %36 = arith.addf %33, %35 : vector<136x64xf32>
    %cst_36 = arith.constant 0.000000e+00 : f32
    %37 = vector.broadcast %cst_36 : f32 to vector<136x64xf32>
    %38 = arith.maximumf %36, %37 : vector<136x64xf32>
    %c768_37 = arith.constant 768 : index
    %c0_38 = arith.constant 0 : index
    %39 = vector.load %arg11[%c768_37, %c0_38] : memref<904x64xf32, #tpu.memory_space<vmem>>, vector<136x64xf32>
    tpu.vector_store %arg11[%c768_37, %c0_38], %38 {strides = array<i32>} : memref<904x64xf32, #tpu.memory_space<vmem>>, vector<136x64xf32>,
    %c0_39 = arith.constant 0 : index
    %c0_40 = arith.constant 0 : index
    %40 = tpu.strided_load %arg11[%c0_39, %c0_40] {strides = array<i32: 2, 1>} : memref<904x64xf32, #tpu.memory_space<vmem>>, vector<15x64xf32>
    %c1 = arith.constant 1 : index
    %c0_41 = arith.constant 0 : index
    %41 = tpu.strided_load %arg11[%c1, %c0_41] {strides = array<i32: 2, 1>} : memref<904x64xf32, #tpu.memory_space<vmem>>, vector<15x64xf32>
    %c30 = arith.constant 30 : index
    %c0_42 = arith.constant 0 : index
    %42 = tpu.strided_load %arg11[%c30, %c0_42] {strides = array<i32: 2, 1>} : memref<904x64xf32, #tpu.memory_space<vmem>>, vector<15x64xf32>
    %c31 = arith.constant 31 : index
    %c0_43 = arith.constant 0 : index
    %43 = tpu.strided_load %arg11[%c31, %c0_43] {strides = array<i32: 2, 1>} : memref<904x64xf32, #tpu.memory_space<vmem>>, vector<15x64xf32>
    %44 = arith.maximumf %40, %41 : vector<15x64xf32>
    %45 = arith.maximumf %42, %43 : vector<15x64xf32>
    %46 = arith.maximumf %44, %45 : vector<15x64xf32>
    %c0_44 = arith.constant 0 : index
    %c0_45 = arith.constant 0 : index
    %47 = vector.load %arg12[%c0_44, %c0_45] : memref<232x64xf32, #tpu.memory_space<vmem>>, vector<15x64xf32>
    tpu.vector_store %arg12[%c0_44, %c0_45], %46 {strides = array<i32>} : memref<232x64xf32, #tpu.memory_space<vmem>>, vector<15x64xf32>,
    %c60 = arith.constant 60 : index
    %c0_46 = arith.constant 0 : index
    %48 = tpu.strided_load %arg11[%c60, %c0_46] {strides = array<i32: 2, 1>} : memref<904x64xf32, #tpu.memory_space<vmem>>, vector<15x64xf32>
    %c61 = arith.constant 61 : index
    %c0_47 = arith.constant 0 : index
    %49 = tpu.strided_load %arg11[%c61, %c0_47] {strides = array<i32: 2, 1>} : memref<904x64xf32, #tpu.memory_space<vmem>>, vector<15x64xf32>
    %c90 = arith.constant 90 : index
    %c0_48 = arith.constant 0 : index
    %50 = tpu.strided_load %arg11[%c90, %c0_48] {strides = array<i32: 2, 1>} : memref<904x64xf32, #tpu.memory_space<vmem>>, vector<15x64xf32>
    %c91 = arith.constant 91 : index
    %c0_49 = arith.constant 0 : index
    %51 = tpu.strided_load %arg11[%c91, %c0_49] {strides = array<i32: 2, 1>} : memref<904x64xf32, #tpu.memory_space<vmem>>, vector<15x64xf32>
    %52 = arith.maximumf %48, %49 : vector<15x64xf32>
    %53 = arith.maximumf %50, %51 : vector<15x64xf32>
    %54 = arith.maximumf %52, %53 : vector<15x64xf32>
    %c15 = arith.constant 15 : index
    %c0_50 = arith.constant 0 : index
    %55 = vector.load %arg12[%c15, %c0_50] : memref<232x64xf32, #tpu.memory_space<vmem>>, vector<15x64xf32>
    tpu.vector_store %arg12[%c15, %c0_50], %54 {strides = array<i32>} : memref<232x64xf32, #tpu.memory_space<vmem>>, vector<15x64xf32>,
    %c120 = arith.constant 120 : index
    %c0_51 = arith.constant 0 : index
    %56 = tpu.strided_load %arg11[%c120, %c0_51] {strides = array<i32: 2, 1>} : memref<904x64xf32, #tpu.memory_space<vmem>>, vector<15x64xf32>
    %c121 = arith.constant 121 : index
    %c0_52 = arith.constant 0 : index
    %57 = tpu.strided_load %arg11[%c121, %c0_52] {strides = array<i32: 2, 1>} : memref<904x64xf32, #tpu.memory_space<vmem>>, vector<15x64xf32>
    %c150 = arith.constant 150 : index
    %c0_53 = arith.constant 0 : index
    %58 = tpu.strided_load %arg11[%c150, %c0_53] {strides = array<i32: 2, 1>} : memref<904x64xf32, #tpu.memory_space<vmem>>, vector<15x64xf32>
    %c151 = arith.constant 151 : index
    %c0_54 = arith.constant 0 : index
    %59 = tpu.strided_load %arg11[%c151, %c0_54] {strides = array<i32: 2, 1>} : memref<904x64xf32, #tpu.memory_space<vmem>>, vector<15x64xf32>
    %60 = arith.maximumf %56, %57 : vector<15x64xf32>
    %61 = arith.maximumf %58, %59 : vector<15x64xf32>
    %62 = arith.maximumf %60, %61 : vector<15x64xf32>
    %c30_55 = arith.constant 30 : index
    %c0_56 = arith.constant 0 : index
    %63 = vector.load %arg12[%c30_55, %c0_56] : memref<232x64xf32, #tpu.memory_space<vmem>>, vector<15x64xf32>
    tpu.vector_store %arg12[%c30_55, %c0_56], %62 {strides = array<i32>} : memref<232x64xf32, #tpu.memory_space<vmem>>, vector<15x64xf32>,
    %c180 = arith.constant 180 : index
    %c0_57 = arith.constant 0 : index
    %64 = tpu.strided_load %arg11[%c180, %c0_57] {strides = array<i32: 2, 1>} : memref<904x64xf32, #tpu.memory_space<vmem>>, vector<15x64xf32>
    %c181 = arith.constant 181 : index
    %c0_58 = arith.constant 0 : index
    %65 = tpu.strided_load %arg11[%c181, %c0_58] {strides = array<i32: 2, 1>} : memref<904x64xf32, #tpu.memory_space<vmem>>, vector<15x64xf32>
    %c210 = arith.constant 210 : index
    %c0_59 = arith.constant 0 : index
    %66 = tpu.strided_load %arg11[%c210, %c0_59] {strides = array<i32: 2, 1>} : memref<904x64xf32, #tpu.memory_space<vmem>>, vector<15x64xf32>
    %c211 = arith.constant 211 : index
    %c0_60 = arith.constant 0 : index
    %67 = tpu.strided_load %arg11[%c211, %c0_60] {strides = array<i32: 2, 1>} : memref<904x64xf32, #tpu.memory_space<vmem>>, vector<15x64xf32>
    %68 = arith.maximumf %64, %65 : vector<15x64xf32>
    %69 = arith.maximumf %66, %67 : vector<15x64xf32>
    %70 = arith.maximumf %68, %69 : vector<15x64xf32>
    %c45 = arith.constant 45 : index
    %c0_61 = arith.constant 0 : index
    %71 = vector.load %arg12[%c45, %c0_61] : memref<232x64xf32, #tpu.memory_space<vmem>>, vector<15x64xf32>
    tpu.vector_store %arg12[%c45, %c0_61], %70 {strides = array<i32>} : memref<232x64xf32, #tpu.memory_space<vmem>>, vector<15x64xf32>,
    %c240 = arith.constant 240 : index
    %c0_62 = arith.constant 0 : index
    %72 = tpu.strided_load %arg11[%c240, %c0_62] {strides = array<i32: 2, 1>} : memref<904x64xf32, #tpu.memory_space<vmem>>, vector<15x64xf32>
    %c241 = arith.constant 241 : index
    %c0_63 = arith.constant 0 : index
    %73 = tpu.strided_load %arg11[%c241, %c0_63] {strides = array<i32: 2, 1>} : memref<904x64xf32, #tpu.memory_space<vmem>>, vector<15x64xf32>
    %c270 = arith.constant 270 : index
    %c0_64 = arith.constant 0 : index
    %74 = tpu.strided_load %arg11[%c270, %c0_64] {strides = array<i32: 2, 1>} : memref<904x64xf32, #tpu.memory_space<vmem>>, vector<15x64xf32>
    %c271 = arith.constant 271 : index
    %c0_65 = arith.constant 0 : index
    %75 = tpu.strided_load %arg11[%c271, %c0_65] {strides = array<i32: 2, 1>} : memref<904x64xf32, #tpu.memory_space<vmem>>, vector<15x64xf32>
    %76 = arith.maximumf %72, %73 : vector<15x64xf32>
    %77 = arith.maximumf %74, %75 : vector<15x64xf32>
    %78 = arith.maximumf %76, %77 : vector<15x64xf32>
    %c60_66 = arith.constant 60 : index
    %c0_67 = arith.constant 0 : index
    %79 = vector.load %arg12[%c60_66, %c0_67] : memref<232x64xf32, #tpu.memory_space<vmem>>, vector<15x64xf32>
    tpu.vector_store %arg12[%c60_66, %c0_67], %78 {strides = array<i32>} : memref<232x64xf32, #tpu.memory_space<vmem>>, vector<15x64xf32>,
    %c300 = arith.constant 300 : index
    %c0_68 = arith.constant 0 : index
    %80 = tpu.strided_load %arg11[%c300, %c0_68] {strides = array<i32: 2, 1>} : memref<904x64xf32, #tpu.memory_space<vmem>>, vector<15x64xf32>
    %c301 = arith.constant 301 : index
    %c0_69 = arith.constant 0 : index
    %81 = tpu.strided_load %arg11[%c301, %c0_69] {strides = array<i32: 2, 1>} : memref<904x64xf32, #tpu.memory_space<vmem>>, vector<15x64xf32>
    %c330 = arith.constant 330 : index
    %c0_70 = arith.constant 0 : index
    %82 = tpu.strided_load %arg11[%c330, %c0_70] {strides = array<i32: 2, 1>} : memref<904x64xf32, #tpu.memory_space<vmem>>, vector<15x64xf32>
    %c331 = arith.constant 331 : index
    %c0_71 = arith.constant 0 : index
    %83 = tpu.strided_load %arg11[%c331, %c0_71] {strides = array<i32: 2, 1>} : memref<904x64xf32, #tpu.memory_space<vmem>>, vector<15x64xf32>
    %84 = arith.maximumf %80, %81 : vector<15x64xf32>
    %85 = arith.maximumf %82, %83 : vector<15x64xf32>
    %86 = arith.maximumf %84, %85 : vector<15x64xf32>
    %c75 = arith.constant 75 : index
    %c0_72 = arith.constant 0 : index
    %87 = vector.load %arg12[%c75, %c0_72] : memref<232x64xf32, #tpu.memory_space<vmem>>, vector<15x64xf32>
    tpu.vector_store %arg12[%c75, %c0_72], %86 {strides = array<i32>} : memref<232x64xf32, #tpu.memory_space<vmem>>, vector<15x64xf32>,
    %c360 = arith.constant 360 : index
    %c0_73 = arith.constant 0 : index
    %88 = tpu.strided_load %arg11[%c360, %c0_73] {strides = array<i32: 2, 1>} : memref<904x64xf32, #tpu.memory_space<vmem>>, vector<15x64xf32>
    %c361 = arith.constant 361 : index
    %c0_74 = arith.constant 0 : index
    %89 = tpu.strided_load %arg11[%c361, %c0_74] {strides = array<i32: 2, 1>} : memref<904x64xf32, #tpu.memory_space<vmem>>, vector<15x64xf32>
    %c390 = arith.constant 390 : index
    %c0_75 = arith.constant 0 : index
    %90 = tpu.strided_load %arg11[%c390, %c0_75] {strides = array<i32: 2, 1>} : memref<904x64xf32, #tpu.memory_space<vmem>>, vector<15x64xf32>
    %c391 = arith.constant 391 : index
    %c0_76 = arith.constant 0 : index
    %91 = tpu.strided_load %arg11[%c391, %c0_76] {strides = array<i32: 2, 1>} : memref<904x64xf32, #tpu.memory_space<vmem>>, vector<15x64xf32>
    %92 = arith.maximumf %88, %89 : vector<15x64xf32>
    %93 = arith.maximumf %90, %91 : vector<15x64xf32>
    %94 = arith.maximumf %92, %93 : vector<15x64xf32>
    %c90_77 = arith.constant 90 : index
    %c0_78 = arith.constant 0 : index
    %95 = vector.load %arg12[%c90_77, %c0_78] : memref<232x64xf32, #tpu.memory_space<vmem>>, vector<15x64xf32>
    tpu.vector_store %arg12[%c90_77, %c0_78], %94 {strides = array<i32>} : memref<232x64xf32, #tpu.memory_space<vmem>>, vector<15x64xf32>,
    %c420 = arith.constant 420 : index
    %c0_79 = arith.constant 0 : index
    %96 = tpu.strided_load %arg11[%c420, %c0_79] {strides = array<i32: 2, 1>} : memref<904x64xf32, #tpu.memory_space<vmem>>, vector<15x64xf32>
    %c421 = arith.constant 421 : index
    %c0_80 = arith.constant 0 : index
    %97 = tpu.strided_load %arg11[%c421, %c0_80] {strides = array<i32: 2, 1>} : memref<904x64xf32, #tpu.memory_space<vmem>>, vector<15x64xf32>
    %c450 = arith.constant 450 : index
    %c0_81 = arith.constant 0 : index
    %98 = tpu.strided_load %arg11[%c450, %c0_81] {strides = array<i32: 2, 1>} : memref<904x64xf32, #tpu.memory_space<vmem>>, vector<15x64xf32>
    %c451 = arith.constant 451 : index
    %c0_82 = arith.constant 0 : index
    %99 = tpu.strided_load %arg11[%c451, %c0_82] {strides = array<i32: 2, 1>} : memref<904x64xf32, #tpu.memory_space<vmem>>, vector<15x64xf32>
    %100 = arith.maximumf %96, %97 : vector<15x64xf32>
    %101 = arith.maximumf %98, %99 : vector<15x64xf32>
    %102 = arith.maximumf %100, %101 : vector<15x64xf32>
    %c105 = arith.constant 105 : index
    %c0_83 = arith.constant 0 : index
    %103 = vector.load %arg12[%c105, %c0_83] : memref<232x64xf32, #tpu.memory_space<vmem>>, vector<15x64xf32>
    tpu.vector_store %arg12[%c105, %c0_83], %102 {strides = array<i32>} : memref<232x64xf32, #tpu.memory_space<vmem>>, vector<15x64xf32>,
    %c480 = arith.constant 480 : index
    %c0_84 = arith.constant 0 : index
    %104 = tpu.strided_load %arg11[%c480, %c0_84] {strides = array<i32: 2, 1>} : memref<904x64xf32, #tpu.memory_space<vmem>>, vector<15x64xf32>
    %c481 = arith.constant 481 : index
    %c0_85 = arith.constant 0 : index
    %105 = tpu.strided_load %arg11[%c481, %c0_85] {strides = array<i32: 2, 1>} : memref<904x64xf32, #tpu.memory_space<vmem>>, vector<15x64xf32>
    %c510 = arith.constant 510 : index
    %c0_86 = arith.constant 0 : index
    %106 = tpu.strided_load %arg11[%c510, %c0_86] {strides = array<i32: 2, 1>} : memref<904x64xf32, #tpu.memory_space<vmem>>, vector<15x64xf32>
    %c511 = arith.constant 511 : index
    %c0_87 = arith.constant 0 : index
    %107 = tpu.strided_load %arg11[%c511, %c0_87] {strides = array<i32: 2, 1>} : memref<904x64xf32, #tpu.memory_space<vmem>>, vector<15x64xf32>
    %108 = arith.maximumf %104, %105 : vector<15x64xf32>
    %109 = arith.maximumf %106, %107 : vector<15x64xf32>
    %110 = arith.maximumf %108, %109 : vector<15x64xf32>
    %c120_88 = arith.constant 120 : index
    %c0_89 = arith.constant 0 : index
    %111 = vector.load %arg12[%c120_88, %c0_89] : memref<232x64xf32, #tpu.memory_space<vmem>>, vector<15x64xf32>
    tpu.vector_store %arg12[%c120_88, %c0_89], %110 {strides = array<i32>} : memref<232x64xf32, #tpu.memory_space<vmem>>, vector<15x64xf32>,
    %c540 = arith.constant 540 : index
    %c0_90 = arith.constant 0 : index
    %112 = tpu.strided_load %arg11[%c540, %c0_90] {strides = array<i32: 2, 1>} : memref<904x64xf32, #tpu.memory_space<vmem>>, vector<15x64xf32>
    %c541 = arith.constant 541 : index
    %c0_91 = arith.constant 0 : index
    %113 = tpu.strided_load %arg11[%c541, %c0_91] {strides = array<i32: 2, 1>} : memref<904x64xf32, #tpu.memory_space<vmem>>, vector<15x64xf32>
    %c570 = arith.constant 570 : index
    %c0_92 = arith.constant 0 : index
    %114 = tpu.strided_load %arg11[%c570, %c0_92] {strides = array<i32: 2, 1>} : memref<904x64xf32, #tpu.memory_space<vmem>>, vector<15x64xf32>
    %c571 = arith.constant 571 : index
    %c0_93 = arith.constant 0 : index
    %115 = tpu.strided_load %arg11[%c571, %c0_93] {strides = array<i32: 2, 1>} : memref<904x64xf32, #tpu.memory_space<vmem>>, vector<15x64xf32>
    %116 = arith.maximumf %112, %113 : vector<15x64xf32>
    %117 = arith.maximumf %114, %115 : vector<15x64xf32>
    %118 = arith.maximumf %116, %117 : vector<15x64xf32>
    %c135 = arith.constant 135 : index
    %c0_94 = arith.constant 0 : index
    %119 = vector.load %arg12[%c135, %c0_94] : memref<232x64xf32, #tpu.memory_space<vmem>>, vector<15x64xf32>
    tpu.vector_store %arg12[%c135, %c0_94], %118 {strides = array<i32>} : memref<232x64xf32, #tpu.memory_space<vmem>>, vector<15x64xf32>,
    %c600 = arith.constant 600 : index
    %c0_95 = arith.constant 0 : index
    %120 = tpu.strided_load %arg11[%c600, %c0_95] {strides = array<i32: 2, 1>} : memref<904x64xf32, #tpu.memory_space<vmem>>, vector<15x64xf32>
    %c601 = arith.constant 601 : index
    %c0_96 = arith.constant 0 : index
    %121 = tpu.strided_load %arg11[%c601, %c0_96] {strides = array<i32: 2, 1>} : memref<904x64xf32, #tpu.memory_space<vmem>>, vector<15x64xf32>
    %c630 = arith.constant 630 : index
    %c0_97 = arith.constant 0 : index
    %122 = tpu.strided_load %arg11[%c630, %c0_97] {strides = array<i32: 2, 1>} : memref<904x64xf32, #tpu.memory_space<vmem>>, vector<15x64xf32>
    %c631 = arith.constant 631 : index
    %c0_98 = arith.constant 0 : index
    %123 = tpu.strided_load %arg11[%c631, %c0_98] {strides = array<i32: 2, 1>} : memref<904x64xf32, #tpu.memory_space<vmem>>, vector<15x64xf32>
    %124 = arith.maximumf %120, %121 : vector<15x64xf32>
    %125 = arith.maximumf %122, %123 : vector<15x64xf32>
    %126 = arith.maximumf %124, %125 : vector<15x64xf32>
    %c150_99 = arith.constant 150 : index
    %c0_100 = arith.constant 0 : index
    %127 = vector.load %arg12[%c150_99, %c0_100] : memref<232x64xf32, #tpu.memory_space<vmem>>, vector<15x64xf32>
    tpu.vector_store %arg12[%c150_99, %c0_100], %126 {strides = array<i32>} : memref<232x64xf32, #tpu.memory_space<vmem>>, vector<15x64xf32>,
    %c660 = arith.constant 660 : index
    %c0_101 = arith.constant 0 : index
    %128 = tpu.strided_load %arg11[%c660, %c0_101] {strides = array<i32: 2, 1>} : memref<904x64xf32, #tpu.memory_space<vmem>>, vector<15x64xf32>
    %c661 = arith.constant 661 : index
    %c0_102 = arith.constant 0 : index
    %129 = tpu.strided_load %arg11[%c661, %c0_102] {strides = array<i32: 2, 1>} : memref<904x64xf32, #tpu.memory_space<vmem>>, vector<15x64xf32>
    %c690 = arith.constant 690 : index
    %c0_103 = arith.constant 0 : index
    %130 = tpu.strided_load %arg11[%c690, %c0_103] {strides = array<i32: 2, 1>} : memref<904x64xf32, #tpu.memory_space<vmem>>, vector<15x64xf32>
    %c691 = arith.constant 691 : index
    %c0_104 = arith.constant 0 : index
    %131 = tpu.strided_load %arg11[%c691, %c0_104] {strides = array<i32: 2, 1>} : memref<904x64xf32, #tpu.memory_space<vmem>>, vector<15x64xf32>
    %132 = arith.maximumf %128, %129 : vector<15x64xf32>
    %133 = arith.maximumf %130, %131 : vector<15x64xf32>
    %134 = arith.maximumf %132, %133 : vector<15x64xf32>
    %c165 = arith.constant 165 : index
    %c0_105 = arith.constant 0 : index
    %135 = vector.load %arg12[%c165, %c0_105] : memref<232x64xf32, #tpu.memory_space<vmem>>, vector<15x64xf32>
    tpu.vector_store %arg12[%c165, %c0_105], %134 {strides = array<i32>} : memref<232x64xf32, #tpu.memory_space<vmem>>, vector<15x64xf32>,
    %c720 = arith.constant 720 : index
    %c0_106 = arith.constant 0 : index
    %136 = tpu.strided_load %arg11[%c720, %c0_106] {strides = array<i32: 2, 1>} : memref<904x64xf32, #tpu.memory_space<vmem>>, vector<15x64xf32>
    %c721 = arith.constant 721 : index
    %c0_107 = arith.constant 0 : index
    %137 = tpu.strided_load %arg11[%c721, %c0_107] {strides = array<i32: 2, 1>} : memref<904x64xf32, #tpu.memory_space<vmem>>, vector<15x64xf32>
    %c750 = arith.constant 750 : index
    %c0_108 = arith.constant 0 : index
    %138 = tpu.strided_load %arg11[%c750, %c0_108] {strides = array<i32: 2, 1>} : memref<904x64xf32, #tpu.memory_space<vmem>>, vector<15x64xf32>
    %c751 = arith.constant 751 : index
    %c0_109 = arith.constant 0 : index
    %139 = tpu.strided_load %arg11[%c751, %c0_109] {strides = array<i32: 2, 1>} : memref<904x64xf32, #tpu.memory_space<vmem>>, vector<15x64xf32>
    %140 = arith.maximumf %136, %137 : vector<15x64xf32>
    %141 = arith.maximumf %138, %139 : vector<15x64xf32>
    %142 = arith.maximumf %140, %141 : vector<15x64xf32>
    %c180_110 = arith.constant 180 : index
    %c0_111 = arith.constant 0 : index
    %143 = vector.load %arg12[%c180_110, %c0_111] : memref<232x64xf32, #tpu.memory_space<vmem>>, vector<15x64xf32>
    tpu.vector_store %arg12[%c180_110, %c0_111], %142 {strides = array<i32>} : memref<232x64xf32, #tpu.memory_space<vmem>>, vector<15x64xf32>,
    %c780 = arith.constant 780 : index
    %c0_112 = arith.constant 0 : index
    %144 = tpu.strided_load %arg11[%c780, %c0_112] {strides = array<i32: 2, 1>} : memref<904x64xf32, #tpu.memory_space<vmem>>, vector<15x64xf32>
    %c781 = arith.constant 781 : index
    %c0_113 = arith.constant 0 : index
    %145 = tpu.strided_load %arg11[%c781, %c0_113] {strides = array<i32: 2, 1>} : memref<904x64xf32, #tpu.memory_space<vmem>>, vector<15x64xf32>
    %c810 = arith.constant 810 : index
    %c0_114 = arith.constant 0 : index
    %146 = tpu.strided_load %arg11[%c810, %c0_114] {strides = array<i32: 2, 1>} : memref<904x64xf32, #tpu.memory_space<vmem>>, vector<15x64xf32>
    %c811 = arith.constant 811 : index
    %c0_115 = arith.constant 0 : index
    %147 = tpu.strided_load %arg11[%c811, %c0_115] {strides = array<i32: 2, 1>} : memref<904x64xf32, #tpu.memory_space<vmem>>, vector<15x64xf32>
    %148 = arith.maximumf %144, %145 : vector<15x64xf32>
    %149 = arith.maximumf %146, %147 : vector<15x64xf32>
    %150 = arith.maximumf %148, %149 : vector<15x64xf32>
    %c195 = arith.constant 195 : index
    %c0_116 = arith.constant 0 : index
    %151 = vector.load %arg12[%c195, %c0_116] : memref<232x64xf32, #tpu.memory_space<vmem>>, vector<15x64xf32>
    tpu.vector_store %arg12[%c195, %c0_116], %150 {strides = array<i32>} : memref<232x64xf32, #tpu.memory_space<vmem>>, vector<15x64xf32>,
    %c840 = arith.constant 840 : index
    %c0_117 = arith.constant 0 : index
    %152 = tpu.strided_load %arg11[%c840, %c0_117] {strides = array<i32: 2, 1>} : memref<904x64xf32, #tpu.memory_space<vmem>>, vector<15x64xf32>
    %c841 = arith.constant 841 : index
    %c0_118 = arith.constant 0 : index
    %153 = tpu.strided_load %arg11[%c841, %c0_118] {strides = array<i32: 2, 1>} : memref<904x64xf32, #tpu.memory_space<vmem>>, vector<15x64xf32>
    %c870 = arith.constant 870 : index
    %c0_119 = arith.constant 0 : index
    %154 = tpu.strided_load %arg11[%c870, %c0_119] {strides = array<i32: 2, 1>} : memref<904x64xf32, #tpu.memory_space<vmem>>, vector<15x64xf32>
    %c871 = arith.constant 871 : index
    %c0_120 = arith.constant 0 : index
    %155 = tpu.strided_load %arg11[%c871, %c0_120] {strides = array<i32: 2, 1>} : memref<904x64xf32, #tpu.memory_space<vmem>>, vector<15x64xf32>
    %156 = arith.maximumf %152, %153 : vector<15x64xf32>
    %157 = arith.maximumf %154, %155 : vector<15x64xf32>
    %158 = arith.maximumf %156, %157 : vector<15x64xf32>
    %c210_121 = arith.constant 210 : index
    %c0_122 = arith.constant 0 : index
    %159 = vector.load %arg12[%c210_121, %c0_122] : memref<232x64xf32, #tpu.memory_space<vmem>>, vector<15x64xf32>
    tpu.vector_store %arg12[%c210_121, %c0_122], %158 {strides = array<i32>} : memref<232x64xf32, #tpu.memory_space<vmem>>, vector<15x64xf32>,
    %cst_123 = arith.constant 0.000000e+00 : f32
    %160 = vector.broadcast %cst_123 : f32 to vector<7x64xf32>
    %c225 = arith.constant 225 : index
    %c0_124 = arith.constant 0 : index
    %161 = vector.load %arg12[%c225, %c0_124] : memref<232x64xf32, #tpu.memory_space<vmem>>, vector<7x64xf32>
    tpu.vector_store %arg12[%c225, %c0_124], %160 {strides = array<i32>} : memref<232x64xf32, #tpu.memory_space<vmem>>, vector<7x64xf32>,
    %cst_125 = arith.constant 0.000000e+00 : f32
    %162 = vector.broadcast %cst_125 : f32 to vector<128x64xf32>
    %c0_126 = arith.constant 0 : index
    %c0_127 = arith.constant 0 : index
    %163 = vector.load %arg12[%c0_126, %c0_127] : memref<232x64xf32, #tpu.memory_space<vmem>>, vector<128x64xf32>
    %c0_128 = arith.constant 0 : index
    %c0_129 = arith.constant 0 : index
    %c0_130 = arith.constant 0 : index
    %164 = vector.load %arg4[%c0_128, %c0_129, %c0_130] : memref<9x64x64xf32, #tpu.memory_space<vmem>>, vector<1x64x64xf32>
    %165 = vector.shape_cast %164 : vector<1x64x64xf32> to vector<64x64xf32>
    %cst_131 = arith.constant dense<0.000000e+00> : vector<128x64xf32>
    %166 = tpu.matmul %163, %165, %cst_131 {dimension_numbers = #tpu.dot_dimension_numbers<[1], [0], [0], [1], [0, 0, 1, 1], [], []>} : vector<128x64xf32>, vector<64x64xf32>, vector<128x64xf32> -> vector<128x64xf32>
    %167 = arith.addf %162, %166 : vector<128x64xf32>
    %c1_132 = arith.constant 1 : index
    %c0_133 = arith.constant 0 : index
    %168 = vector.load %arg12[%c1_132, %c0_133] : memref<232x64xf32, #tpu.memory_space<vmem>>, vector<128x64xf32>
    %c1_134 = arith.constant 1 : index
    %c0_135 = arith.constant 0 : index
    %c0_136 = arith.constant 0 : index
    %169 = vector.load %arg4[%c1_134, %c0_135, %c0_136] : memref<9x64x64xf32, #tpu.memory_space<vmem>>, vector<1x64x64xf32>
    %170 = vector.shape_cast %169 : vector<1x64x64xf32> to vector<64x64xf32>
    %cst_137 = arith.constant dense<0.000000e+00> : vector<128x64xf32>
    %171 = tpu.matmul %168, %170, %cst_137 {dimension_numbers = #tpu.dot_dimension_numbers<[1], [0], [0], [1], [0, 0, 1, 1], [], []>} : vector<128x64xf32>, vector<64x64xf32>, vector<128x64xf32> -> vector<128x64xf32>
    %172 = arith.addf %167, %171 : vector<128x64xf32>
    %c2 = arith.constant 2 : index
    %c0_138 = arith.constant 0 : index
    %173 = vector.load %arg12[%c2, %c0_138] : memref<232x64xf32, #tpu.memory_space<vmem>>, vector<128x64xf32>
    %c2_139 = arith.constant 2 : index
    %c0_140 = arith.constant 0 : index
    %c0_141 = arith.constant 0 : index
    %174 = vector.load %arg4[%c2_139, %c0_140, %c0_141] : memref<9x64x64xf32, #tpu.memory_space<vmem>>, vector<1x64x64xf32>
    %175 = vector.shape_cast %174 : vector<1x64x64xf32> to vector<64x64xf32>
    %cst_142 = arith.constant dense<0.000000e+00> : vector<128x64xf32>
    %176 = tpu.matmul %173, %175, %cst_142 {dimension_numbers = #tpu.dot_dimension_numbers<[1], [0], [0], [1], [0, 0, 1, 1], [], []>} : vector<128x64xf32>, vector<64x64xf32>, vector<128x64xf32> -> vector<128x64xf32>
    %177 = arith.addf %172, %176 : vector<128x64xf32>
    %c15_143 = arith.constant 15 : index
    %c0_144 = arith.constant 0 : index
    %178 = vector.load %arg12[%c15_143, %c0_144] : memref<232x64xf32, #tpu.memory_space<vmem>>, vector<128x64xf32>
    %c3 = arith.constant 3 : index
    %c0_145 = arith.constant 0 : index
    %c0_146 = arith.constant 0 : index
    %179 = vector.load %arg4[%c3, %c0_145, %c0_146] : memref<9x64x64xf32, #tpu.memory_space<vmem>>, vector<1x64x64xf32>
    %180 = vector.shape_cast %179 : vector<1x64x64xf32> to vector<64x64xf32>
    %cst_147 = arith.constant dense<0.000000e+00> : vector<128x64xf32>
    %181 = tpu.matmul %178, %180, %cst_147 {dimension_numbers = #tpu.dot_dimension_numbers<[1], [0], [0], [1], [0, 0, 1, 1], [], []>} : vector<128x64xf32>, vector<64x64xf32>, vector<128x64xf32> -> vector<128x64xf32>
    %182 = arith.addf %177, %181 : vector<128x64xf32>
    %c16 = arith.constant 16 : index
    %c0_148 = arith.constant 0 : index
    %183 = vector.load %arg12[%c16, %c0_148] : memref<232x64xf32, #tpu.memory_space<vmem>>, vector<128x64xf32>
    %c4 = arith.constant 4 : index
    %c0_149 = arith.constant 0 : index
    %c0_150 = arith.constant 0 : index
    %184 = vector.load %arg4[%c4, %c0_149, %c0_150] : memref<9x64x64xf32, #tpu.memory_space<vmem>>, vector<1x64x64xf32>
    %185 = vector.shape_cast %184 : vector<1x64x64xf32> to vector<64x64xf32>
    %cst_151 = arith.constant dense<0.000000e+00> : vector<128x64xf32>
    %186 = tpu.matmul %183, %185, %cst_151 {dimension_numbers = #tpu.dot_dimension_numbers<[1], [0], [0], [1], [0, 0, 1, 1], [], []>} : vector<128x64xf32>, vector<64x64xf32>, vector<128x64xf32> -> vector<128x64xf32>
    %187 = arith.addf %182, %186 : vector<128x64xf32>
    %c17 = arith.constant 17 : index
    %c0_152 = arith.constant 0 : index
    %188 = vector.load %arg12[%c17, %c0_152] : memref<232x64xf32, #tpu.memory_space<vmem>>, vector<128x64xf32>
    %c5 = arith.constant 5 : index
    %c0_153 = arith.constant 0 : index
    %c0_154 = arith.constant 0 : index
    %189 = vector.load %arg4[%c5, %c0_153, %c0_154] : memref<9x64x64xf32, #tpu.memory_space<vmem>>, vector<1x64x64xf32>
    %190 = vector.shape_cast %189 : vector<1x64x64xf32> to vector<64x64xf32>
    %cst_155 = arith.constant dense<0.000000e+00> : vector<128x64xf32>
    %191 = tpu.matmul %188, %190, %cst_155 {dimension_numbers = #tpu.dot_dimension_numbers<[1], [0], [0], [1], [0, 0, 1, 1], [], []>} : vector<128x64xf32>, vector<64x64xf32>, vector<128x64xf32> -> vector<128x64xf32>
    %192 = arith.addf %187, %191 : vector<128x64xf32>
    %c30_156 = arith.constant 30 : index
    %c0_157 = arith.constant 0 : index
    %193 = vector.load %arg12[%c30_156, %c0_157] : memref<232x64xf32, #tpu.memory_space<vmem>>, vector<128x64xf32>
    %c6 = arith.constant 6 : index
    %c0_158 = arith.constant 0 : index
    %c0_159 = arith.constant 0 : index
    %194 = vector.load %arg4[%c6, %c0_158, %c0_159] : memref<9x64x64xf32, #tpu.memory_space<vmem>>, vector<1x64x64xf32>
    %195 = vector.shape_cast %194 : vector<1x64x64xf32> to vector<64x64xf32>
    %cst_160 = arith.constant dense<0.000000e+00> : vector<128x64xf32>
    %196 = tpu.matmul %193, %195, %cst_160 {dimension_numbers = #tpu.dot_dimension_numbers<[1], [0], [0], [1], [0, 0, 1, 1], [], []>} : vector<128x64xf32>, vector<64x64xf32>, vector<128x64xf32> -> vector<128x64xf32>
    %197 = arith.addf %192, %196 : vector<128x64xf32>
    %c31_161 = arith.constant 31 : index
    %c0_162 = arith.constant 0 : index
    %198 = vector.load %arg12[%c31_161, %c0_162] : memref<232x64xf32, #tpu.memory_space<vmem>>, vector<128x64xf32>
    %c7 = arith.constant 7 : index
    %c0_163 = arith.constant 0 : index
    %c0_164 = arith.constant 0 : index
    %199 = vector.load %arg4[%c7, %c0_163, %c0_164] : memref<9x64x64xf32, #tpu.memory_space<vmem>>, vector<1x64x64xf32>
    %200 = vector.shape_cast %199 : vector<1x64x64xf32> to vector<64x64xf32>
    %cst_165 = arith.constant dense<0.000000e+00> : vector<128x64xf32>
    %201 = tpu.matmul %198, %200, %cst_165 {dimension_numbers = #tpu.dot_dimension_numbers<[1], [0], [0], [1], [0, 0, 1, 1], [], []>} : vector<128x64xf32>, vector<64x64xf32>, vector<128x64xf32> -> vector<128x64xf32>
    %202 = arith.addf %197, %201 : vector<128x64xf32>
    %c32 = arith.constant 32 : index
    %c0_166 = arith.constant 0 : index
    %203 = vector.load %arg12[%c32, %c0_166] : memref<232x64xf32, #tpu.memory_space<vmem>>, vector<128x64xf32>
    %c8 = arith.constant 8 : index
    %c0_167 = arith.constant 0 : index
    %c0_168 = arith.constant 0 : index
    %204 = vector.load %arg4[%c8, %c0_167, %c0_168] : memref<9x64x64xf32, #tpu.memory_space<vmem>>, vector<1x64x64xf32>
    %205 = vector.shape_cast %204 : vector<1x64x64xf32> to vector<64x64xf32>
    %cst_169 = arith.constant dense<0.000000e+00> : vector<128x64xf32>
    %206 = tpu.matmul %203, %205, %cst_169 {dimension_numbers = #tpu.dot_dimension_numbers<[1], [0], [0], [1], [0, 0, 1, 1], [], []>} : vector<128x64xf32>, vector<64x64xf32>, vector<128x64xf32> -> vector<128x64xf32>
    %207 = arith.addf %202, %206 : vector<128x64xf32>
    %c0_170 = arith.constant 0 : index
    %c0_171 = arith.constant 0 : index
    %208 = vector.load %arg5[%c0_170, %c0_171] : memref<1x64xf32, #tpu.memory_space<vmem>>, vector<1x64xf32>
    %209 = vector.broadcast %208 : vector<1x64xf32> to vector<128x64xf32>
    %210 = arith.addf %207, %209 : vector<128x64xf32>
    %cst_172 = arith.constant 0.000000e+00 : f32
    %211 = vector.broadcast %cst_172 : f32 to vector<128x64xf32>
    %212 = arith.maximumf %210, %211 : vector<128x64xf32>
    %c0_173 = arith.constant 0 : index
    %c0_174 = arith.constant 0 : index
    %213 = vector.load %arg11[%c0_173, %c0_174] : memref<904x64xf32, #tpu.memory_space<vmem>>, vector<128x64xf32>
    tpu.vector_store %arg11[%c0_173, %c0_174], %212 {strides = array<i32>} : memref<904x64xf32, #tpu.memory_space<vmem>>, vector<128x64xf32>,
    %cst_175 = arith.constant 0.000000e+00 : f32
    %214 = vector.broadcast %cst_175 : f32 to vector<72x64xf32>
    %c128 = arith.constant 128 : index
    %c0_176 = arith.constant 0 : index
    %215 = vector.load %arg12[%c128, %c0_176] : memref<232x64xf32, #tpu.memory_space<vmem>>, vector<72x64xf32>
    %c0_177 = arith.constant 0 : index
    %c0_178 = arith.constant 0 : index
    %c0_179 = arith.constant 0 : index
    %216 = vector.load %arg4[%c0_177, %c0_178, %c0_179] : memref<9x64x64xf32, #tpu.memory_space<vmem>>, vector<1x64x64xf32>
    %217 = vector.shape_cast %216 : vector<1x64x64xf32> to vector<64x64xf32>
    %cst_180 = arith.constant dense<0.000000e+00> : vector<72x64xf32>
    %218 = tpu.matmul %215, %217, %cst_180 {dimension_numbers = #tpu.dot_dimension_numbers<[1], [0], [0], [1], [0, 0, 1, 1], [], []>} : vector<72x64xf32>, vector<64x64xf32>, vector<72x64xf32> -> vector<72x64xf32>
    %219 = arith.addf %214, %218 : vector<72x64xf32>
    %c129 = arith.constant 129 : index
    %c0_181 = arith.constant 0 : index
    %220 = vector.load %arg12[%c129, %c0_181] : memref<232x64xf32, #tpu.memory_space<vmem>>, vector<72x64xf32>
    %c1_182 = arith.constant 1 : index
    %c0_183 = arith.constant 0 : index
    %c0_184 = arith.constant 0 : index
    %221 = vector.load %arg4[%c1_182, %c0_183, %c0_184] : memref<9x64x64xf32, #tpu.memory_space<vmem>>, vector<1x64x64xf32>
    %222 = vector.shape_cast %221 : vector<1x64x64xf32> to vector<64x64xf32>
    %cst_185 = arith.constant dense<0.000000e+00> : vector<72x64xf32>
    %223 = tpu.matmul %220, %222, %cst_185 {dimension_numbers = #tpu.dot_dimension_numbers<[1], [0], [0], [1], [0, 0, 1, 1], [], []>} : vector<72x64xf32>, vector<64x64xf32>, vector<72x64xf32> -> vector<72x64xf32>
    %224 = arith.addf %219, %223 : vector<72x64xf32>
    %c130 = arith.constant 130 : index
    %c0_186 = arith.constant 0 : index
    %225 = vector.load %arg12[%c130, %c0_186] : memref<232x64xf32, #tpu.memory_space<vmem>>, vector<72x64xf32>
    %c2_187 = arith.constant 2 : index
    %c0_188 = arith.constant 0 : index
    %c0_189 = arith.constant 0 : index
    %226 = vector.load %arg4[%c2_187, %c0_188, %c0_189] : memref<9x64x64xf32, #tpu.memory_space<vmem>>, vector<1x64x64xf32>
    %227 = vector.shape_cast %226 : vector<1x64x64xf32> to vector<64x64xf32>
    %cst_190 = arith.constant dense<0.000000e+00> : vector<72x64xf32>
    %228 = tpu.matmul %225, %227, %cst_190 {dimension_numbers = #tpu.dot_dimension_numbers<[1], [0], [0], [1], [0, 0, 1, 1], [], []>} : vector<72x64xf32>, vector<64x64xf32>, vector<72x64xf32> -> vector<72x64xf32>
    %229 = arith.addf %224, %228 : vector<72x64xf32>
    %c143 = arith.constant 143 : index
    %c0_191 = arith.constant 0 : index
    %230 = vector.load %arg12[%c143, %c0_191] : memref<232x64xf32, #tpu.memory_space<vmem>>, vector<72x64xf32>
    %c3_192 = arith.constant 3 : index
    %c0_193 = arith.constant 0 : index
    %c0_194 = arith.constant 0 : index
    %231 = vector.load %arg4[%c3_192, %c0_193, %c0_194] : memref<9x64x64xf32, #tpu.memory_space<vmem>>, vector<1x64x64xf32>
    %232 = vector.shape_cast %231 : vector<1x64x64xf32> to vector<64x64xf32>
    %cst_195 = arith.constant dense<0.000000e+00> : vector<72x64xf32>
    %233 = tpu.matmul %230, %232, %cst_195 {dimension_numbers = #tpu.dot_dimension_numbers<[1], [0], [0], [1], [0, 0, 1, 1], [], []>} : vector<72x64xf32>, vector<64x64xf32>, vector<72x64xf32> -> vector<72x64xf32>
    %234 = arith.addf %229, %233 : vector<72x64xf32>
    %c144 = arith.constant 144 : index
    %c0_196 = arith.constant 0 : index
    %235 = vector.load %arg12[%c144, %c0_196] : memref<232x64xf32, #tpu.memory_space<vmem>>, vector<72x64xf32>
    %c4_197 = arith.constant 4 : index
    %c0_198 = arith.constant 0 : index
    %c0_199 = arith.constant 0 : index
    %236 = vector.load %arg4[%c4_197, %c0_198, %c0_199] : memref<9x64x64xf32, #tpu.memory_space<vmem>>, vector<1x64x64xf32>
    %237 = vector.shape_cast %236 : vector<1x64x64xf32> to vector<64x64xf32>
    %cst_200 = arith.constant dense<0.000000e+00> : vector<72x64xf32>
    %238 = tpu.matmul %235, %237, %cst_200 {dimension_numbers = #tpu.dot_dimension_numbers<[1], [0], [0], [1], [0, 0, 1, 1], [], []>} : vector<72x64xf32>, vector<64x64xf32>, vector<72x64xf32> -> vector<72x64xf32>
    %239 = arith.addf %234, %238 : vector<72x64xf32>
    %c145 = arith.constant 145 : index
    %c0_201 = arith.constant 0 : index
    %240 = vector.load %arg12[%c145, %c0_201] : memref<232x64xf32, #tpu.memory_space<vmem>>, vector<72x64xf32>
    %c5_202 = arith.constant 5 : index
    %c0_203 = arith.constant 0 : index
    %c0_204 = arith.constant 0 : index
    %241 = vector.load %arg4[%c5_202, %c0_203, %c0_204] : memref<9x64x64xf32, #tpu.memory_space<vmem>>, vector<1x64x64xf32>
    %242 = vector.shape_cast %241 : vector<1x64x64xf32> to vector<64x64xf32>
    %cst_205 = arith.constant dense<0.000000e+00> : vector<72x64xf32>
    %243 = tpu.matmul %240, %242, %cst_205 {dimension_numbers = #tpu.dot_dimension_numbers<[1], [0], [0], [1], [0, 0, 1, 1], [], []>} : vector<72x64xf32>, vector<64x64xf32>, vector<72x64xf32> -> vector<72x64xf32>
    %244 = arith.addf %239, %243 : vector<72x64xf32>
    %c158 = arith.constant 158 : index
    %c0_206 = arith.constant 0 : index
    %245 = vector.load %arg12[%c158, %c0_206] : memref<232x64xf32, #tpu.memory_space<vmem>>, vector<72x64xf32>
    %c6_207 = arith.constant 6 : index
    %c0_208 = arith.constant 0 : index
    %c0_209 = arith.constant 0 : index
    %246 = vector.load %arg4[%c6_207, %c0_208, %c0_209] : memref<9x64x64xf32, #tpu.memory_space<vmem>>, vector<1x64x64xf32>
    %247 = vector.shape_cast %246 : vector<1x64x64xf32> to vector<64x64xf32>
    %cst_210 = arith.constant dense<0.000000e+00> : vector<72x64xf32>
    %248 = tpu.matmul %245, %247, %cst_210 {dimension_numbers = #tpu.dot_dimension_numbers<[1], [0], [0], [1], [0, 0, 1, 1], [], []>} : vector<72x64xf32>, vector<64x64xf32>, vector<72x64xf32> -> vector<72x64xf32>
    %249 = arith.addf %244, %248 : vector<72x64xf32>
    %c159 = arith.constant 159 : index
    %c0_211 = arith.constant 0 : index
    %250 = vector.load %arg12[%c159, %c0_211] : memref<232x64xf32, #tpu.memory_space<vmem>>, vector<72x64xf32>
    %c7_212 = arith.constant 7 : index
    %c0_213 = arith.constant 0 : index
    %c0_214 = arith.constant 0 : index
    %251 = vector.load %arg4[%c7_212, %c0_213, %c0_214] : memref<9x64x64xf32, #tpu.memory_space<vmem>>, vector<1x64x64xf32>
    %252 = vector.shape_cast %251 : vector<1x64x64xf32> to vector<64x64xf32>
    %cst_215 = arith.constant dense<0.000000e+00> : vector<72x64xf32>
    %253 = tpu.matmul %250, %252, %cst_215 {dimension_numbers = #tpu.dot_dimension_numbers<[1], [0], [0], [1], [0, 0, 1, 1], [], []>} : vector<72x64xf32>, vector<64x64xf32>, vector<72x64xf32> -> vector<72x64xf32>
    %254 = arith.addf %249, %253 : vector<72x64xf32>
    %c160 = arith.constant 160 : index
    %c0_216 = arith.constant 0 : index
    %255 = vector.load %arg12[%c160, %c0_216] : memref<232x64xf32, #tpu.memory_space<vmem>>, vector<72x64xf32>
    %c8_217 = arith.constant 8 : index
    %c0_218 = arith.constant 0 : index
    %c0_219 = arith.constant 0 : index
    %256 = vector.load %arg4[%c8_217, %c0_218, %c0_219] : memref<9x64x64xf32, #tpu.memory_space<vmem>>, vector<1x64x64xf32>
    %257 = vector.shape_cast %256 : vector<1x64x64xf32> to vector<64x64xf32>
    %cst_220 = arith.constant dense<0.000000e+00> : vector<72x64xf32>
    %258 = tpu.matmul %255, %257, %cst_220 {dimension_numbers = #tpu.dot_dimension_numbers<[1], [0], [0], [1], [0, 0, 1, 1], [], []>} : vector<72x64xf32>, vector<64x64xf32>, vector<72x64xf32> -> vector<72x64xf32>
    %259 = arith.addf %254, %258 : vector<72x64xf32>
    %c0_221 = arith.constant 0 : index
    %c0_222 = arith.constant 0 : index
    %260 = vector.load %arg5[%c0_221, %c0_222] : memref<1x64xf32, #tpu.memory_space<vmem>>, vector<1x64xf32>
    %261 = vector.broadcast %260 : vector<1x64xf32> to vector<72x64xf32>
    %262 = arith.addf %259, %261 : vector<72x64xf32>
    %cst_223 = arith.constant 0.000000e+00 : f32
    %263 = vector.broadcast %cst_223 : f32 to vector<72x64xf32>
    %264 = arith.maximumf %262, %263 : vector<72x64xf32>
    %c128_224 = arith.constant 128 : index
    %c0_225 = arith.constant 0 : index
    %265 = vector.load %arg11[%c128_224, %c0_225] : memref<904x64xf32, #tpu.memory_space<vmem>>, vector<72x64xf32>
    tpu.vector_store %arg11[%c128_224, %c0_225], %264 {strides = array<i32>} : memref<904x64xf32, #tpu.memory_space<vmem>>, vector<72x64xf32>,
    %c0_226 = arith.constant 0 : index
    %c0_227 = arith.constant 0 : index
    %266 = tpu.strided_load %arg11[%c0_226, %c0_227] {strides = array<i32: 2, 1>} : memref<904x64xf32, #tpu.memory_space<vmem>>, vector<6x64xf32>
    %c1_228 = arith.constant 1 : index
    %c0_229 = arith.constant 0 : index
    %267 = tpu.strided_load %arg11[%c1_228, %c0_229] {strides = array<i32: 2, 1>} : memref<904x64xf32, #tpu.memory_space<vmem>>, vector<6x64xf32>
    %c15_230 = arith.constant 15 : index
    %c0_231 = arith.constant 0 : index
    %268 = tpu.strided_load %arg11[%c15_230, %c0_231] {strides = array<i32: 2, 1>} : memref<904x64xf32, #tpu.memory_space<vmem>>, vector<6x64xf32>
    %c16_232 = arith.constant 16 : index
    %c0_233 = arith.constant 0 : index
    %269 = tpu.strided_load %arg11[%c16_232, %c0_233] {strides = array<i32: 2, 1>} : memref<904x64xf32, #tpu.memory_space<vmem>>, vector<6x64xf32>
    %270 = arith.maximumf %266, %267 : vector<6x64xf32>
    %271 = arith.maximumf %268, %269 : vector<6x64xf32>
    %272 = arith.maximumf %270, %271 : vector<6x64xf32>
    %c0_234 = arith.constant 0 : index
    %c0_235 = arith.constant 0 : index
    %273 = vector.load %arg12[%c0_234, %c0_235] : memref<232x64xf32, #tpu.memory_space<vmem>>, vector<6x64xf32>
    tpu.vector_store %arg12[%c0_234, %c0_235], %272 {strides = array<i32>} : memref<232x64xf32, #tpu.memory_space<vmem>>, vector<6x64xf32>,
    %c30_236 = arith.constant 30 : index
    %c0_237 = arith.constant 0 : index
    %274 = tpu.strided_load %arg11[%c30_236, %c0_237] {strides = array<i32: 2, 1>} : memref<904x64xf32, #tpu.memory_space<vmem>>, vector<6x64xf32>
    %c31_238 = arith.constant 31 : index
    %c0_239 = arith.constant 0 : index
    %275 = tpu.strided_load %arg11[%c31_238, %c0_239] {strides = array<i32: 2, 1>} : memref<904x64xf32, #tpu.memory_space<vmem>>, vector<6x64xf32>
    %c45_240 = arith.constant 45 : index
    %c0_241 = arith.constant 0 : index
    %276 = tpu.strided_load %arg11[%c45_240, %c0_241] {strides = array<i32: 2, 1>} : memref<904x64xf32, #tpu.memory_space<vmem>>, vector<6x64xf32>
    %c46 = arith.constant 46 : index
    %c0_242 = arith.constant 0 : index
    %277 = tpu.strided_load %arg11[%c46, %c0_242] {strides = array<i32: 2, 1>} : memref<904x64xf32, #tpu.memory_space<vmem>>, vector<6x64xf32>
    %278 = arith.maximumf %274, %275 : vector<6x64xf32>
    %279 = arith.maximumf %276, %277 : vector<6x64xf32>
    %280 = arith.maximumf %278, %279 : vector<6x64xf32>
    %c6_243 = arith.constant 6 : index
    %c0_244 = arith.constant 0 : index
    %281 = vector.load %arg12[%c6_243, %c0_244] : memref<232x64xf32, #tpu.memory_space<vmem>>, vector<6x64xf32>
    tpu.vector_store %arg12[%c6_243, %c0_244], %280 {strides = array<i32>} : memref<232x64xf32, #tpu.memory_space<vmem>>, vector<6x64xf32>,
    %c60_245 = arith.constant 60 : index
    %c0_246 = arith.constant 0 : index
    %282 = tpu.strided_load %arg11[%c60_245, %c0_246] {strides = array<i32: 2, 1>} : memref<904x64xf32, #tpu.memory_space<vmem>>, vector<6x64xf32>
    %c61_247 = arith.constant 61 : index
    %c0_248 = arith.constant 0 : index
    %283 = tpu.strided_load %arg11[%c61_247, %c0_248] {strides = array<i32: 2, 1>} : memref<904x64xf32, #tpu.memory_space<vmem>>, vector<6x64xf32>
    %c75_249 = arith.constant 75 : index
    %c0_250 = arith.constant 0 : index
    %284 = tpu.strided_load %arg11[%c75_249, %c0_250] {strides = array<i32: 2, 1>} : memref<904x64xf32, #tpu.memory_space<vmem>>, vector<6x64xf32>
    %c76 = arith.constant 76 : index
    %c0_251 = arith.constant 0 : index
    %285 = tpu.strided_load %arg11[%c76, %c0_251] {strides = array<i32: 2, 1>} : memref<904x64xf32, #tpu.memory_space<vmem>>, vector<6x64xf32>
    %286 = arith.maximumf %282, %283 : vector<6x64xf32>
    %287 = arith.maximumf %284, %285 : vector<6x64xf32>
    %288 = arith.maximumf %286, %287 : vector<6x64xf32>
    %c12 = arith.constant 12 : index
    %c0_252 = arith.constant 0 : index
    %289 = vector.load %arg12[%c12, %c0_252] : memref<232x64xf32, #tpu.memory_space<vmem>>, vector<6x64xf32>
    tpu.vector_store %arg12[%c12, %c0_252], %288 {strides = array<i32>} : memref<232x64xf32, #tpu.memory_space<vmem>>, vector<6x64xf32>,
    %c90_253 = arith.constant 90 : index
    %c0_254 = arith.constant 0 : index
    %290 = tpu.strided_load %arg11[%c90_253, %c0_254] {strides = array<i32: 2, 1>} : memref<904x64xf32, #tpu.memory_space<vmem>>, vector<6x64xf32>
    %c91_255 = arith.constant 91 : index
    %c0_256 = arith.constant 0 : index
    %291 = tpu.strided_load %arg11[%c91_255, %c0_256] {strides = array<i32: 2, 1>} : memref<904x64xf32, #tpu.memory_space<vmem>>, vector<6x64xf32>
    %c105_257 = arith.constant 105 : index
    %c0_258 = arith.constant 0 : index
    %292 = tpu.strided_load %arg11[%c105_257, %c0_258] {strides = array<i32: 2, 1>} : memref<904x64xf32, #tpu.memory_space<vmem>>, vector<6x64xf32>
    %c106 = arith.constant 106 : index
    %c0_259 = arith.constant 0 : index
    %293 = tpu.strided_load %arg11[%c106, %c0_259] {strides = array<i32: 2, 1>} : memref<904x64xf32, #tpu.memory_space<vmem>>, vector<6x64xf32>
    %294 = arith.maximumf %290, %291 : vector<6x64xf32>
    %295 = arith.maximumf %292, %293 : vector<6x64xf32>
    %296 = arith.maximumf %294, %295 : vector<6x64xf32>
    %c18 = arith.constant 18 : index
    %c0_260 = arith.constant 0 : index
    %297 = vector.load %arg12[%c18, %c0_260] : memref<232x64xf32, #tpu.memory_space<vmem>>, vector<6x64xf32>
    tpu.vector_store %arg12[%c18, %c0_260], %296 {strides = array<i32>} : memref<232x64xf32, #tpu.memory_space<vmem>>, vector<6x64xf32>,
    %c120_261 = arith.constant 120 : index
    %c0_262 = arith.constant 0 : index
    %298 = tpu.strided_load %arg11[%c120_261, %c0_262] {strides = array<i32: 2, 1>} : memref<904x64xf32, #tpu.memory_space<vmem>>, vector<6x64xf32>
    %c121_263 = arith.constant 121 : index
    %c0_264 = arith.constant 0 : index
    %299 = tpu.strided_load %arg11[%c121_263, %c0_264] {strides = array<i32: 2, 1>} : memref<904x64xf32, #tpu.memory_space<vmem>>, vector<6x64xf32>
    %c135_265 = arith.constant 135 : index
    %c0_266 = arith.constant 0 : index
    %300 = tpu.strided_load %arg11[%c135_265, %c0_266] {strides = array<i32: 2, 1>} : memref<904x64xf32, #tpu.memory_space<vmem>>, vector<6x64xf32>
    %c136 = arith.constant 136 : index
    %c0_267 = arith.constant 0 : index
    %301 = tpu.strided_load %arg11[%c136, %c0_267] {strides = array<i32: 2, 1>} : memref<904x64xf32, #tpu.memory_space<vmem>>, vector<6x64xf32>
    %302 = arith.maximumf %298, %299 : vector<6x64xf32>
    %303 = arith.maximumf %300, %301 : vector<6x64xf32>
    %304 = arith.maximumf %302, %303 : vector<6x64xf32>
    %c24 = arith.constant 24 : index
    %c0_268 = arith.constant 0 : index
    %305 = vector.load %arg12[%c24, %c0_268] : memref<232x64xf32, #tpu.memory_space<vmem>>, vector<6x64xf32>
    tpu.vector_store %arg12[%c24, %c0_268], %304 {strides = array<i32>} : memref<232x64xf32, #tpu.memory_space<vmem>>, vector<6x64xf32>,
    %c150_269 = arith.constant 150 : index
    %c0_270 = arith.constant 0 : index
    %306 = tpu.strided_load %arg11[%c150_269, %c0_270] {strides = array<i32: 2, 1>} : memref<904x64xf32, #tpu.memory_space<vmem>>, vector<6x64xf32>
    %c151_271 = arith.constant 151 : index
    %c0_272 = arith.constant 0 : index
    %307 = tpu.strided_load %arg11[%c151_271, %c0_272] {strides = array<i32: 2, 1>} : memref<904x64xf32, #tpu.memory_space<vmem>>, vector<6x64xf32>
    %c165_273 = arith.constant 165 : index
    %c0_274 = arith.constant 0 : index
    %308 = tpu.strided_load %arg11[%c165_273, %c0_274] {strides = array<i32: 2, 1>} : memref<904x64xf32, #tpu.memory_space<vmem>>, vector<6x64xf32>
    %c166 = arith.constant 166 : index
    %c0_275 = arith.constant 0 : index
    %309 = tpu.strided_load %arg11[%c166, %c0_275] {strides = array<i32: 2, 1>} : memref<904x64xf32, #tpu.memory_space<vmem>>, vector<6x64xf32>
    %310 = arith.maximumf %306, %307 : vector<6x64xf32>
    %311 = arith.maximumf %308, %309 : vector<6x64xf32>
    %312 = arith.maximumf %310, %311 : vector<6x64xf32>
    %c30_276 = arith.constant 30 : index
    %c0_277 = arith.constant 0 : index
    %313 = vector.load %arg12[%c30_276, %c0_277] : memref<232x64xf32, #tpu.memory_space<vmem>>, vector<6x64xf32>
    tpu.vector_store %arg12[%c30_276, %c0_277], %312 {strides = array<i32>} : memref<232x64xf32, #tpu.memory_space<vmem>>, vector<6x64xf32>,
    %cst_278 = arith.constant 0.000000e+00 : f32
    %314 = vector.broadcast %cst_278 : f32 to vector<4x64xf32>
    %c36 = arith.constant 36 : index
    %c0_279 = arith.constant 0 : index
    %315 = vector.load %arg12[%c36, %c0_279] : memref<232x64xf32, #tpu.memory_space<vmem>>, vector<4x64xf32>
    tpu.vector_store %arg12[%c36, %c0_279], %314 {strides = array<i32>} : memref<232x64xf32, #tpu.memory_space<vmem>>, vector<4x64xf32>,
    %cst_280 = arith.constant 0.000000e+00 : f32
    %316 = vector.broadcast %cst_280 : f32 to vector<24x32xf32>
    %c0_281 = arith.constant 0 : index
    %c0_282 = arith.constant 0 : index
    %317 = vector.load %arg12[%c0_281, %c0_282] : memref<232x64xf32, #tpu.memory_space<vmem>>, vector<24x64xf32>
    %c0_283 = arith.constant 0 : index
    %c0_284 = arith.constant 0 : index
    %c0_285 = arith.constant 0 : index
    %318 = vector.load %arg6[%c0_283, %c0_284, %c0_285] : memref<9x64x32xf32, #tpu.memory_space<vmem>>, vector<1x64x32xf32>
    %319 = vector.shape_cast %318 : vector<1x64x32xf32> to vector<64x32xf32>
    %cst_286 = arith.constant dense<0.000000e+00> : vector<24x32xf32>
    %320 = tpu.matmul %317, %319, %cst_286 {dimension_numbers = #tpu.dot_dimension_numbers<[1], [0], [0], [1], [0, 0, 1, 1], [], []>} : vector<24x64xf32>, vector<64x32xf32>, vector<24x32xf32> -> vector<24x32xf32>
    %321 = arith.addf %316, %320 : vector<24x32xf32>
    %c1_287 = arith.constant 1 : index
    %c0_288 = arith.constant 0 : index
    %322 = vector.load %arg12[%c1_287, %c0_288] : memref<232x64xf32, #tpu.memory_space<vmem>>, vector<24x64xf32>
    %c1_289 = arith.constant 1 : index
    %c0_290 = arith.constant 0 : index
    %c0_291 = arith.constant 0 : index
    %323 = vector.load %arg6[%c1_289, %c0_290, %c0_291] : memref<9x64x32xf32, #tpu.memory_space<vmem>>, vector<1x64x32xf32>
    %324 = vector.shape_cast %323 : vector<1x64x32xf32> to vector<64x32xf32>
    %cst_292 = arith.constant dense<0.000000e+00> : vector<24x32xf32>
    %325 = tpu.matmul %322, %324, %cst_292 {dimension_numbers = #tpu.dot_dimension_numbers<[1], [0], [0], [1], [0, 0, 1, 1], [], []>} : vector<24x64xf32>, vector<64x32xf32>, vector<24x32xf32> -> vector<24x32xf32>
    %326 = arith.addf %321, %325 : vector<24x32xf32>
    %c2_293 = arith.constant 2 : index
    %c0_294 = arith.constant 0 : index
    %327 = vector.load %arg12[%c2_293, %c0_294] : memref<232x64xf32, #tpu.memory_space<vmem>>, vector<24x64xf32>
    %c2_295 = arith.constant 2 : index
    %c0_296 = arith.constant 0 : index
    %c0_297 = arith.constant 0 : index
    %328 = vector.load %arg6[%c2_295, %c0_296, %c0_297] : memref<9x64x32xf32, #tpu.memory_space<vmem>>, vector<1x64x32xf32>
    %329 = vector.shape_cast %328 : vector<1x64x32xf32> to vector<64x32xf32>
    %cst_298 = arith.constant dense<0.000000e+00> : vector<24x32xf32>
    %330 = tpu.matmul %327, %329, %cst_298 {dimension_numbers = #tpu.dot_dimension_numbers<[1], [0], [0], [1], [0, 0, 1, 1], [], []>} : vector<24x64xf32>, vector<64x32xf32>, vector<24x32xf32> -> vector<24x32xf32>
    %331 = arith.addf %326, %330 : vector<24x32xf32>
    %c6_299 = arith.constant 6 : index
    %c0_300 = arith.constant 0 : index
    %332 = vector.load %arg12[%c6_299, %c0_300] : memref<232x64xf32, #tpu.memory_space<vmem>>, vector<24x64xf32>
    %c3_301 = arith.constant 3 : index
    %c0_302 = arith.constant 0 : index
    %c0_303 = arith.constant 0 : index
    %333 = vector.load %arg6[%c3_301, %c0_302, %c0_303] : memref<9x64x32xf32, #tpu.memory_space<vmem>>, vector<1x64x32xf32>
    %334 = vector.shape_cast %333 : vector<1x64x32xf32> to vector<64x32xf32>
    %cst_304 = arith.constant dense<0.000000e+00> : vector<24x32xf32>
    %335 = tpu.matmul %332, %334, %cst_304 {dimension_numbers = #tpu.dot_dimension_numbers<[1], [0], [0], [1], [0, 0, 1, 1], [], []>} : vector<24x64xf32>, vector<64x32xf32>, vector<24x32xf32> -> vector<24x32xf32>
    %336 = arith.addf %331, %335 : vector<24x32xf32>
    %c7_305 = arith.constant 7 : index
    %c0_306 = arith.constant 0 : index
    %337 = vector.load %arg12[%c7_305, %c0_306] : memref<232x64xf32, #tpu.memory_space<vmem>>, vector<24x64xf32>
    %c4_307 = arith.constant 4 : index
    %c0_308 = arith.constant 0 : index
    %c0_309 = arith.constant 0 : index
    %338 = vector.load %arg6[%c4_307, %c0_308, %c0_309] : memref<9x64x32xf32, #tpu.memory_space<vmem>>, vector<1x64x32xf32>
    %339 = vector.shape_cast %338 : vector<1x64x32xf32> to vector<64x32xf32>
    %cst_310 = arith.constant dense<0.000000e+00> : vector<24x32xf32>
    %340 = tpu.matmul %337, %339, %cst_310 {dimension_numbers = #tpu.dot_dimension_numbers<[1], [0], [0], [1], [0, 0, 1, 1], [], []>} : vector<24x64xf32>, vector<64x32xf32>, vector<24x32xf32> -> vector<24x32xf32>
    %341 = arith.addf %336, %340 : vector<24x32xf32>
    %c8_311 = arith.constant 8 : index
    %c0_312 = arith.constant 0 : index
    %342 = vector.load %arg12[%c8_311, %c0_312] : memref<232x64xf32, #tpu.memory_space<vmem>>, vector<24x64xf32>
    %c5_313 = arith.constant 5 : index
    %c0_314 = arith.constant 0 : index
    %c0_315 = arith.constant 0 : index
    %343 = vector.load %arg6[%c5_313, %c0_314, %c0_315] : memref<9x64x32xf32, #tpu.memory_space<vmem>>, vector<1x64x32xf32>
    %344 = vector.shape_cast %343 : vector<1x64x32xf32> to vector<64x32xf32>
    %cst_316 = arith.constant dense<0.000000e+00> : vector<24x32xf32>
    %345 = tpu.matmul %342, %344, %cst_316 {dimension_numbers = #tpu.dot_dimension_numbers<[1], [0], [0], [1], [0, 0, 1, 1], [], []>} : vector<24x64xf32>, vector<64x32xf32>, vector<24x32xf32> -> vector<24x32xf32>
    %346 = arith.addf %341, %345 : vector<24x32xf32>
    %c12_317 = arith.constant 12 : index
    %c0_318 = arith.constant 0 : index
    %347 = vector.load %arg12[%c12_317, %c0_318] : memref<232x64xf32, #tpu.memory_space<vmem>>, vector<24x64xf32>
    %c6_319 = arith.constant 6 : index
    %c0_320 = arith.constant 0 : index
    %c0_321 = arith.constant 0 : index
    %348 = vector.load %arg6[%c6_319, %c0_320, %c0_321] : memref<9x64x32xf32, #tpu.memory_space<vmem>>, vector<1x64x32xf32>
    %349 = vector.shape_cast %348 : vector<1x64x32xf32> to vector<64x32xf32>
    %cst_322 = arith.constant dense<0.000000e+00> : vector<24x32xf32>
    %350 = tpu.matmul %347, %349, %cst_322 {dimension_numbers = #tpu.dot_dimension_numbers<[1], [0], [0], [1], [0, 0, 1, 1], [], []>} : vector<24x64xf32>, vector<64x32xf32>, vector<24x32xf32> -> vector<24x32xf32>
    %351 = arith.addf %346, %350 : vector<24x32xf32>
    %c13 = arith.constant 13 : index
    %c0_323 = arith.constant 0 : index
    %352 = vector.load %arg12[%c13, %c0_323] : memref<232x64xf32, #tpu.memory_space<vmem>>, vector<24x64xf32>
    %c7_324 = arith.constant 7 : index
    %c0_325 = arith.constant 0 : index
    %c0_326 = arith.constant 0 : index
    %353 = vector.load %arg6[%c7_324, %c0_325, %c0_326] : memref<9x64x32xf32, #tpu.memory_space<vmem>>, vector<1x64x32xf32>
    %354 = vector.shape_cast %353 : vector<1x64x32xf32> to vector<64x32xf32>
    %cst_327 = arith.constant dense<0.000000e+00> : vector<24x32xf32>
    %355 = tpu.matmul %352, %354, %cst_327 {dimension_numbers = #tpu.dot_dimension_numbers<[1], [0], [0], [1], [0, 0, 1, 1], [], []>} : vector<24x64xf32>, vector<64x32xf32>, vector<24x32xf32> -> vector<24x32xf32>
    %356 = arith.addf %351, %355 : vector<24x32xf32>
    %c14 = arith.constant 14 : index
    %c0_328 = arith.constant 0 : index
    %357 = vector.load %arg12[%c14, %c0_328] : memref<232x64xf32, #tpu.memory_space<vmem>>, vector<24x64xf32>
    %c8_329 = arith.constant 8 : index
    %c0_330 = arith.constant 0 : index
    %c0_331 = arith.constant 0 : index
    %358 = vector.load %arg6[%c8_329, %c0_330, %c0_331] : memref<9x64x32xf32, #tpu.memory_space<vmem>>, vector<1x64x32xf32>
    %359 = vector.shape_cast %358 : vector<1x64x32xf32> to vector<64x32xf32>
    %cst_332 = arith.constant dense<0.000000e+00> : vector<24x32xf32>
    %360 = tpu.matmul %357, %359, %cst_332 {dimension_numbers = #tpu.dot_dimension_numbers<[1], [0], [0], [1], [0, 0, 1, 1], [], []>} : vector<24x64xf32>, vector<64x32xf32>, vector<24x32xf32> -> vector<24x32xf32>
    %361 = arith.addf %356, %360 : vector<24x32xf32>
    %c0_333 = arith.constant 0 : index
    %c0_334 = arith.constant 0 : index
    %362 = vector.load %arg7[%c0_333, %c0_334] : memref<1x32xf32, #tpu.memory_space<vmem>>, vector<1x32xf32>
    %363 = vector.broadcast %362 : vector<1x32xf32> to vector<24x32xf32>
    %364 = arith.addf %361, %363 : vector<24x32xf32>
    %cst_335 = arith.constant 0.000000e+00 : f32
    %365 = vector.broadcast %cst_335 : f32 to vector<24x32xf32>
    %366 = arith.maximumf %364, %365 : vector<24x32xf32>
    %c0_336 = arith.constant 0 : index
    %c0_337 = arith.constant 0 : index
    %367 = vector.load %arg13[%c0_336, %c0_337] : memref<24x32xf32, #tpu.memory_space<vmem>>, vector<24x32xf32>
    tpu.vector_store %arg13[%c0_336, %c0_337], %366 {strides = array<i32>} : memref<24x32xf32, #tpu.memory_space<vmem>>, vector<24x32xf32>,
    %cst_338 = arith.constant 0.000000e+00 : f32
    %368 = vector.broadcast %cst_338 : f32 to vector<1x32xf32>
    %c0_339 = arith.constant 0 : index
    %c0_340 = arith.constant 0 : index
    %369 = tpu.strided_load %arg13[%c0_339, %c0_340] {strides = array<i32: 2, 1>} : memref<24x32xf32, #tpu.memory_space<vmem>>, vector<2x32xf32>
    %c1_341 = arith.constant 1 : index
    %c0_342 = arith.constant 0 : index
    %370 = tpu.strided_load %arg13[%c1_341, %c0_342] {strides = array<i32: 2, 1>} : memref<24x32xf32, #tpu.memory_space<vmem>>, vector<2x32xf32>
    %c6_343 = arith.constant 6 : index
    %c0_344 = arith.constant 0 : index
    %371 = tpu.strided_load %arg13[%c6_343, %c0_344] {strides = array<i32: 2, 1>} : memref<24x32xf32, #tpu.memory_space<vmem>>, vector<2x32xf32>
    %c7_345 = arith.constant 7 : index
    %c0_346 = arith.constant 0 : index
    %372 = tpu.strided_load %arg13[%c7_345, %c0_346] {strides = array<i32: 2, 1>} : memref<24x32xf32, #tpu.memory_space<vmem>>, vector<2x32xf32>
    %373 = arith.maximumf %369, %370 : vector<2x32xf32>
    %374 = arith.maximumf %371, %372 : vector<2x32xf32>
    %375 = arith.maximumf %373, %374 : vector<2x32xf32>
    %cst_347 = arith.constant dense<0.000000e+00> : vector<32xf32>
    %376 = vector.multi_reduction <add>, %375, %cst_347 [0] : vector<2x32xf32> to vector<32xf32>
    %377 = vector.shape_cast %376 : vector<32xf32> to vector<1x32xf32>
    %378 = arith.addf %368, %377 : vector<1x32xf32>
    %c12_348 = arith.constant 12 : index
    %c0_349 = arith.constant 0 : index
    %379 = tpu.strided_load %arg13[%c12_348, %c0_349] {strides = array<i32: 2, 1>} : memref<24x32xf32, #tpu.memory_space<vmem>>, vector<2x32xf32>
    %c13_350 = arith.constant 13 : index
    %c0_351 = arith.constant 0 : index
    %380 = tpu.strided_load %arg13[%c13_350, %c0_351] {strides = array<i32: 2, 1>} : memref<24x32xf32, #tpu.memory_space<vmem>>, vector<2x32xf32>
    %c18_352 = arith.constant 18 : index
    %c0_353 = arith.constant 0 : index
    %381 = tpu.strided_load %arg13[%c18_352, %c0_353] {strides = array<i32: 2, 1>} : memref<24x32xf32, #tpu.memory_space<vmem>>, vector<2x32xf32>
    %c19 = arith.constant 19 : index
    %c0_354 = arith.constant 0 : index
    %382 = tpu.strided_load %arg13[%c19, %c0_354] {strides = array<i32: 2, 1>} : memref<24x32xf32, #tpu.memory_space<vmem>>, vector<2x32xf32>
    %383 = arith.maximumf %379, %380 : vector<2x32xf32>
    %384 = arith.maximumf %381, %382 : vector<2x32xf32>
    %385 = arith.maximumf %383, %384 : vector<2x32xf32>
    %cst_355 = arith.constant dense<0.000000e+00> : vector<32xf32>
    %386 = vector.multi_reduction <add>, %385, %cst_355 [0] : vector<2x32xf32> to vector<32xf32>
    %387 = vector.shape_cast %386 : vector<32xf32> to vector<1x32xf32>
    %388 = arith.addf %378, %387 : vector<1x32xf32>
    %cst_356 = arith.constant 2.500000e-01 : f32
    %389 = vector.broadcast %cst_356 : f32 to vector<1x32xf32>
    %390 = arith.mulf %388, %389 : vector<1x32xf32>
    %c0_357 = arith.constant 0 : index
    %c0_358 = arith.constant 0 : index
    %391 = vector.load %arg8[%c0_357, %c0_358] : memref<32x8xf32, #tpu.memory_space<vmem>>, vector<32x8xf32>
    %cst_359 = arith.constant dense<0.000000e+00> : vector<1x8xf32>
    %392 = tpu.matmul %390, %391, %cst_359 {dimension_numbers = #tpu.dot_dimension_numbers<[1], [0], [0], [1], [0, 0, 1, 1], [], []>} : vector<1x32xf32>, vector<32x8xf32>, vector<1x8xf32> -> vector<1x8xf32>
    %c0_360 = arith.constant 0 : index
    %c0_361 = arith.constant 0 : index
    %393 = vector.load %arg9[%c0_360, %c0_361] : memref<1x8xf32, #tpu.memory_space<vmem>>, vector<1x8xf32>
    %394 = arith.addf %392, %393 : vector<1x8xf32>
    %395 = math.tanh %394 : vector<1x8xf32>
    %396 = vector.shape_cast %395 : vector<1x8xf32> to vector<1x1x8xf32>
    %c0_362 = arith.constant 0 : index
    %c0_363 = arith.constant 0 : index
    %c0_364 = arith.constant 0 : index
    %397 = vector.load %arg10[%c0_362, %c0_363, %c0_364] : memref<1x1x8xf32, #tpu.memory_space<vmem>>, vector<1x1x8xf32>
    tpu.vector_store %arg10[%c0_362, %c0_363, %c0_364], %396 {strides = array<i32>} : memref<1x1x8xf32, #tpu.memory_space<vmem>>, vector<1x1x8xf32>,
    return
  }
  func.func @transform_0(%arg0: i32) -> (i32, i32, i32) {
    %c0_i32 = arith.constant 0 : i32
    %c0_i32_0 = arith.constant 0 : i32
    %c0_i32_1 = arith.constant 0 : i32
    return %arg0, %c0_i32, %c0_i32_0 : i32, i32, i32
  }
  func.func @transform_1(%arg0: i32) -> (i32, i32) {
    %c0_i32 = arith.constant 0 : i32
    %c0_i32_0 = arith.constant 0 : i32
    %c0_i32_1 = arith.constant 0 : i32
    return %c0_i32, %c0_i32_0 : i32, i32
  }
  func.func @transform_2(%arg0: i32) -> (i32, i32) {
    %c0_i32 = arith.constant 0 : i32
    %c0_i32_0 = arith.constant 0 : i32
    %c0_i32_1 = arith.constant 0 : i32
    return %c0_i32, %c0_i32_0 : i32, i32
  }
  func.func @transform_3(%arg0: i32) -> (i32, i32, i32) {
    %c0_i32 = arith.constant 0 : i32
    %c0_i32_0 = arith.constant 0 : i32
    %c0_i32_1 = arith.constant 0 : i32
    %c0_i32_2 = arith.constant 0 : i32
    return %c0_i32, %c0_i32_0, %c0_i32_1 : i32, i32, i32
  }
  func.func @transform_4(%arg0: i32) -> (i32, i32) {
    %c0_i32 = arith.constant 0 : i32
    %c0_i32_0 = arith.constant 0 : i32
    %c0_i32_1 = arith.constant 0 : i32
    return %c0_i32, %c0_i32_0 : i32, i32
  }
  func.func @transform_5(%arg0: i32) -> (i32, i32, i32) {
    %c0_i32 = arith.constant 0 : i32
    %c0_i32_0 = arith.constant 0 : i32
    %c0_i32_1 = arith.constant 0 : i32
    %c0_i32_2 = arith.constant 0 : i32
    return %c0_i32, %c0_i32_0, %c0_i32_1 : i32, i32, i32
  }
  func.func @transform_6(%arg0: i32) -> (i32, i32) {
    %c0_i32 = arith.constant 0 : i32
    %c0_i32_0 = arith.constant 0 : i32
    %c0_i32_1 = arith.constant 0 : i32
    return %c0_i32, %c0_i32_0 : i32, i32
  }
  func.func @transform_7(%arg0: i32) -> (i32, i32) {
    %c0_i32 = arith.constant 0 : i32
    %c0_i32_0 = arith.constant 0 : i32
    %c0_i32_1 = arith.constant 0 : i32
    return %c0_i32, %c0_i32_0 : i32, i32
  }
  func.func @transform_8(%arg0: i32) -> (i32, i32) {
    %c0_i32 = arith.constant 0 : i32
    %c0_i32_0 = arith.constant 0 : i32
    %c0_i32_1 = arith.constant 0 : i32
    return %c0_i32, %c0_i32_0 : i32, i32
  }
  func.func @transform_9(%arg0: i32) -> (i32, i32, i32) {
    %c0_i32 = arith.constant 0 : i32
    %c0_i32_0 = arith.constant 0 : i32
    %c0_i32_1 = arith.constant 0 : i32
    return %arg0, %c0_i32, %c0_i32_0 : i32, i32, i32
  }
}

</mosaic_0001>

<llo_original>
// kernel: encoder_forward.1
$region0: #{encoder_forward.1}
  #allocation0 [shape = 'u32[]', space=smem, size = 0x4, offset = 0x4, fixed_abs, tag = 'smem constant byte address 0x4 - core index']
  #allocation1 [shape = 'u32[144,128]{1,0:T(1,128)}', space=vmem, size = 0x12000, scoped, tag = 'internal scratch']
  #allocation2 [shape = 'f32[904,64]{1,0:T(8,128)}', space=vmem, size = 0x71000, scoped, tag = 'scratch operand']
  #allocation3 [shape = 'f32[232,64]{1,0:T(8,128)}', space=vmem, size = 0x1d000, scoped, tag = 'scratch operand']
  #allocation4 [shape = 'f32[24,32]{1,0:T(8,128)}', space=vmem, size = 0x3000, scoped, tag = 'scratch operand']
  %s0 = inlined_call_operand.vmem [shape: f32[2,904,27], index: 0, kind: input, shape index: {}]
  %s1 = inlined_call_operand.vmem [shape: f32[27,64], index: 1, kind: input, shape index: {}]
  %s2 = inlined_call_operand.vmem [shape: f32[1,64], index: 2, kind: input, shape index: {}]
  %s3 = inlined_call_operand.vmem [shape: f32[9,64,64], index: 3, kind: input, shape index: {}]
  %s4 = inlined_call_operand.vmem [shape: f32[1,64], index: 4, kind: input, shape index: {}]
  %s5 = inlined_call_operand.vmem [shape: f32[9,64,32], index: 5, kind: input, shape index: {}]
  %s6 = inlined_call_operand.vmem [shape: f32[1,32], index: 6, kind: input, shape index: {}]
  %s7 = inlined_call_operand.vmem [shape: f32[32,8], index: 7, kind: input, shape index: {}]
  %s8 = inlined_call_operand.vmem [shape: f32[1,8], index: 8, kind: input, shape index: {}]
  %s9 = inlined_call_operand.hbm [shape: f32[2,1,8], index: 9, kind: output, shape index: {}]
  %s10 = sld [smem:[#allocation0]]
  $region69: #{encoder_forward.1} parent=0
    _
  %s12 = ssub.s32 1, %s10
  %s13 = scalar_select 0, %s12, %s10
  $region1: #{encoder_forward.1} parent=0
    #allocation5 [shape = 'u8[1024]{0}', space=vmem, size = 0x400, scoped, tag = 'output window, operand 0']
    #allocation6 [shape = 's32[2]{0}', space=sflag, size = 0x8, scoped, tag = 'scoped memory for encoder_forward.1']
    %14 = vsyncpa [#allocation6], 0
    %s15 = scalar_lea.sflag [#allocation6], 1
    %16 = vsyncpa %s15, 0
    loop: start=0, step=1, limit=4
    $region2: #{encoder_forward.1} parent=1 // loop_pre_header
      _
    $region3: #{encoder_forward.1} parent=1 // loop_header
      %s18 = sphi 0, %s22
      %p19 = scmp.ge.s32.totalorder %s18, 4
      %s28 = sphi 0, %s30
      %s31 = sphi 0, %s28
      %s32 = sphi 0, %s31
      %s48 = sphi 0, %s32
      %s52 = sphi 0, %s52
      %s54 = sphi 0, %s52
      %s55 = sphi 0, %s54
      %s69 = sphi 0, %s55
      %s73 = sphi 0, %s73
      %s75 = sphi 0, %s73
      %s76 = sphi 0, %s75
      %s90 = sphi 0, %s76
      %s94 = sphi 0, %s94
      %s96 = sphi 0, %s94
      %s97 = sphi 0, %s96
      %s111 = sphi 0, %s97
      %s115 = sphi 0, %s115
      %s117 = sphi 0, %s115
      %s118 = sphi 0, %s117
      %s132 = sphi 0, %s118
      %s136 = sphi 0, %s136
      %s138 = sphi 0, %s136
      %s139 = sphi 0, %s138
      %s153 = sphi 0, %s139
      %s157 = sphi 0, %s157
      %s159 = sphi 0, %s157
      %s160 = sphi 0, %s159
      %s174 = sphi 0, %s160
      %s178 = sphi 0, %s178
      %s180 = sphi 0, %s178
      %s181 = sphi 0, %s180
      %s195 = sphi 0, %s181
      %s199 = sphi 0, %s199
      %s201 = sphi 0, %s199
      %s202 = sphi 0, %s201
      %s216 = sphi 0, %s202
      %s222 = sphi 0, %s224
      %s225 = sphi 0, %s222
      %s226 = sphi 0, %s225
      %s242 = sphi 0, %s226
    $region4: #{encoder_forward.1} parent=1 // loop_header_branch
      %21 = sbr.rel (%p19) target = $region8
    $region5: #{encoder_forward.1} parent=1 // loop_body
      %s23 = ssub.s32 %s18, 1
      %s24 = ssub.s32 %s18, 2
      %s25 = sadd.s32 %s18, 1
      %s26 = ssub.s32 %s18, %s25
      %p27 = scmp.eq.s32.totalorder %s26, 0
      %s29 = sadd.s32 %s28, 1
      %s30 = scalar_select %p27, %s28, %s29
      %p33 = pneg %p27
      %p34 = scmp.eq.s32.totalorder %s18, 1
      %p35 = por %p33, %p34
      %p36 = scmp.ne.s32.totalorder %s28, %s31
      %p37 = scmp.eq.s32.totalorder %s18, 0
      %p38 = por %p36, %p37
      %p39 = scmp.ne.s32.totalorder %s28, %s31
      %p40 = scmp.eq.s32.totalorder %s23, 1
      %p41 = por %p39, %p40
      %p42 = scmp.ne.s32.totalorder %s31, %s32
      %p43 = scmp.eq.s32.totalorder %s23, 0
      %p44 = por %p42, %p43
      %p45 = scmp.ne.s32.totalorder %s31, %s32
      %p46 = scmp.eq.s32.totalorder %s24, 1
      %p47 = por %p45, %p46
      %p49 = scmp.ne.s32.totalorder %s32, %s48
      %p50 = scmp.eq.s32.totalorder %s24, 0
      %p51 = por %p49, %p50
      %s53 = sadd.s32 %s52, 1
      %p56 = scmp.eq.s32.totalorder %s18, 1
      %p57 = scmp.ne.s32.totalorder %s52, %s54
      %p58 = scmp.eq.s32.totalorder %s18, 0
      %p59 = por %p57, %p58
      %p60 = scmp.ne.s32.totalorder %s52, %s54
      %p61 = scmp.eq.s32.totalorder %s23, 1
      %p62 = por %p60, %p61
      %p63 = scmp.ne.s32.totalorder %s54, %s55
      %p64 = scmp.eq.s32.totalorder %s23, 0
      %p65 = por %p63, %p64
      %p66 = scmp.ne.s32.totalorder %s54, %s55
      %p67 = scmp.eq.s32.totalorder %s24, 1
      %p68 = por %p66, %p67
      %p70 = scmp.ne.s32.totalorder %s55, %s69
      %p71 = scmp.eq.s32.totalorder %s24, 0
      %p72 = por %p70, %p71
      %s74 = sadd.s32 %s73, 1
      %p77 = scmp.eq.s32.totalorder %s18, 1
      %p78 = scmp.ne.s32.totalorder %s73, %s75
      %p79 = scmp.eq.s32.totalorder %s18, 0
      %p80 = por %p78, %p79
      %p81 = scmp.ne.s32.totalorder %s73, %s75
      %p82 = scmp.eq.s32.totalorder %s23, 1
      %p83 = por %p81, %p82
      %p84 = scmp.ne.s32.totalorder %s75, %s76
      %p85 = scmp.eq.s32.totalorder %s23, 0
      %p86 = por %p84, %p85
      %p87 = scmp.ne.s32.totalorder %s75, %s76
      %p88 = scmp.eq.s32.totalorder %s24, 1
      %p89 = por %p87, %p88
      %p91 = scmp.ne.s32.totalorder %s76, %s90
      %p92 = scmp.eq.s32.totalorder %s24, 0
      %p93 = por %p91, %p92
      %s95 = sadd.s32 %s94, 1
      %p98 = scmp.eq.s32.totalorder %s18, 1
      %p99 = scmp.ne.s32.totalorder %s94, %s96
      %p100 = scmp.eq.s32.totalorder %s18, 0
      %p101 = por %p99, %p100
      %p102 = scmp.ne.s32.totalorder %s94, %s96
      %p103 = scmp.eq.s32.totalorder %s23, 1
      %p104 = por %p102, %p103
      %p105 = scmp.ne.s32.totalorder %s96, %s97
      %p106 = scmp.eq.s32.totalorder %s23, 0
      %p107 = por %p105, %p106
      %p108 = scmp.ne.s32.totalorder %s96, %s97
      %p109 = scmp.eq.s32.totalorder %s24, 1
      %p110 = por %p108, %p109
      %p112 = scmp.ne.s32.totalorder %s97, %s111
      %p113 = scmp.eq.s32.totalorder %s24, 0
      %p114 = por %p112, %p113
      %s116 = sadd.s32 %s115, 1
      %p119 = scmp.eq.s32.totalorder %s18, 1
      %p120 = scmp.ne.s32.totalorder %s115, %s117
      %p121 = scmp.eq.s32.totalorder %s18, 0
      %p122 = por %p120, %p121
      %p123 = scmp.ne.s32.totalorder %s115, %s117
      %p124 = scmp.eq.s32.totalorder %s23, 1
      %p125 = por %p123, %p124
      %p126 = scmp.ne.s32.totalorder %s117, %s118
      %p127 = scmp.eq.s32.totalorder %s23, 0
      %p128 = por %p126, %p127
      %p129 = scmp.ne.s32.totalorder %s117, %s118
      %p130 = scmp.eq.s32.totalorder %s24, 1
      %p131 = por %p129, %p130
      %p133 = scmp.ne.s32.totalorder %s118, %s132
      %p134 = scmp.eq.s32.totalorder %s24, 0
      %p135 = por %p133, %p134
      %s137 = sadd.s32 %s136, 1
      %p140 = scmp.eq.s32.totalorder %s18, 1
      %p141 = scmp.ne.s32.totalorder %s136, %s138
      %p142 = scmp.eq.s32.totalorder %s18, 0
      %p143 = por %p141, %p142
      %p144 = scmp.ne.s32.totalorder %s136, %s138
      %p145 = scmp.eq.s32.totalorder %s23, 1
      %p146 = por %p144, %p145
      %p147 = scmp.ne.s32.totalorder %s138, %s139
      %p148 = scmp.eq.s32.totalorder %s23, 0
      %p149 = por %p147, %p148
      %p150 = scmp.ne.s32.totalorder %s138, %s139
      %p151 = scmp.eq.s32.totalorder %s24, 1
      %p152 = por %p150, %p151
      %p154 = scmp.ne.s32.totalorder %s139, %s153
      %p155 = scmp.eq.s32.totalorder %s24, 0
      %p156 = por %p154, %p155
      %s158 = sadd.s32 %s157, 1
      %p161 = scmp.eq.s32.totalorder %s18, 1
      %p162 = scmp.ne.s32.totalorder %s157, %s159
      %p163 = scmp.eq.s32.totalorder %s18, 0
      %p164 = por %p162, %p163
      %p165 = scmp.ne.s32.totalorder %s157, %s159
      %p166 = scmp.eq.s32.totalorder %s23, 1
      %p167 = por %p165, %p166
      %p168 = scmp.ne.s32.totalorder %s159, %s160
      %p169 = scmp.eq.s32.totalorder %s23, 0
      %p170 = por %p168, %p169
      %p171 = scmp.ne.s32.totalorder %s159, %s160
      %p172 = scmp.eq.s32.totalorder %s24, 1
      %p173 = por %p171, %p172
      %p175 = scmp.ne.s32.totalorder %s160, %s174
      %p176 = scmp.eq.s32.totalorder %s24, 0
      %p177 = por %p175, %p176
      %s179 = sadd.s32 %s178, 1
      %p182 = scmp.eq.s32.totalorder %s18, 1
      %p183 = scmp.ne.s32.totalorder %s178, %s180
      %p184 = scmp.eq.s32.totalorder %s18, 0
      %p185 = por %p183, %p184
      %p186 = scmp.ne.s32.totalorder %s178, %s180
      %p187 = scmp.eq.s32.totalorder %s23, 1
      %p188 = por %p186, %p187
      %p189 = scmp.ne.s32.totalorder %s180, %s181
      %p190 = scmp.eq.s32.totalorder %s23, 0
      %p191 = por %p189, %p190
      %p192 = scmp.ne.s32.totalorder %s180, %s181
      %p193 = scmp.eq.s32.totalorder %s24, 1
      %p194 = por %p192, %p193
      %p196 = scmp.ne.s32.totalorder %s181, %s195
      %p197 = scmp.eq.s32.totalorder %s24, 0
      %p198 = por %p196, %p197
      %s200 = sadd.s32 %s199, 1
      %p203 = scmp.eq.s32.totalorder %s18, 1
      %p204 = scmp.ne.s32.totalorder %s199, %s201
      %p205 = scmp.eq.s32.totalorder %s18, 0
      %p206 = por %p204, %p205
      %p207 = scmp.ne.s32.totalorder %s199, %s201
      %p208 = scmp.eq.s32.totalorder %s23, 1
      %p209 = por %p207, %p208
      %p210 = scmp.ne.s32.totalorder %s201, %s202
      %p211 = scmp.eq.s32.totalorder %s23, 0
      %p212 = por %p210, %p211
      %p213 = scmp.ne.s32.totalorder %s201, %s202
      %p214 = scmp.eq.s32.totalorder %s24, 1
      %p215 = por %p213, %p214
      %p217 = scmp.ne.s32.totalorder %s202, %s216
      %p218 = scmp.eq.s32.totalorder %s24, 0
      %p219 = por %p217, %p218
      %s220 = ssub.s32 %s18, %s25
      %p221 = scmp.eq.s32.totalorder %s220, 0
      %s223 = sadd.s32 %s222, 1
      %s224 = scalar_select %p221, %s222, %s223
      %p227 = pneg %p221
      %p228 = scmp.eq.s32.totalorder %s18, 1
      %p229 = por %p227, %p228
      %p230 = scmp.ne.s32.totalorder %s222, %s225
      %p231 = scmp.eq.s32.totalorder %s18, 0
      %p232 = por %p230, %p231
      %p233 = scmp.ne.s32.totalorder %s222, %s225
      %p234 = scmp.eq.s32.totalorder %s23, 1
      %p235 = por %p233, %p234
      %p236 = scmp.ne.s32.totalorder %s225, %s226
      %p237 = scmp.eq.s32.totalorder %s23, 0
      %p238 = por %p236, %p237
      %p239 = scmp.ne.s32.totalorder %s225, %s226
      %p240 = scmp.eq.s32.totalorder %s24, 1
      %p241 = por %p239, %p240
      %p243 = scmp.ne.s32.totalorder %s226, %s242
      %p244 = scmp.eq.s32.totalorder %s24, 0
      %p245 = por %p243, %p244
      %p246 = scmp.le.s32.totalorder 1, %s18
      %p247 = scmp.lt.s32.totalorder %s18, 3
      %p248 = pnand %p246, %p247
      %p249 = pneg %p248
      // Predicated region
      $region9: #{encoder_forward.1} parent=5 // pred_check
        _
      $region10: #{encoder_forward.1} parent=5 // pred_check_branch
        %251 = sbr.rel (%p248) target = $region12
      $region11: #{encoder_forward.1} parent=5 // pred_region
        %s252 = ssub.s32 %s18, 1
        // Predicated region
        $region13: #{encoder_forward.1} parent=11 // pred_check
          %p253 = pneg %p65
        $region14: #{encoder_forward.1} parent=11 // pred_check_branch
          %255 = sbr.rel (%p253) target = $region16
        $region15: #{encoder_forward.1} parent=11 // pred_region
          _
        $region16: #{encoder_forward.1} parent=11 // pred_fallthru
          _
        // Predicated region
        $region17: #{encoder_forward.1} parent=11 // pred_check
          %p256 = pneg %p86
        $region18: #{encoder_forward.1} parent=11 // pred_check_branch
          %258 = sbr.rel (%p256) target = $region20
        $region19: #{encoder_forward.1} parent=11 // pred_region
          _
        $region20: #{encoder_forward.1} parent=11 // pred_fallthru
          _
        // Predicated region
        $region21: #{encoder_forward.1} parent=11 // pred_check
          %p259 = pneg %p107
        $region22: #{encoder_forward.1} parent=11 // pred_check_branch
          %261 = sbr.rel (%p259) target = $region24
        $region23: #{encoder_forward.1} parent=11 // pred_region
          _
        $region24: #{encoder_forward.1} parent=11 // pred_fallthru
          _
        // Predicated region
        $region25: #{encoder_forward.1} parent=11 // pred_check
          %p262 = pneg %p128
        $region26: #{encoder_forward.1} parent=11 // pred_check_branch
          %264 = sbr.rel (%p262) target = $region28
        $region27: #{encoder_forward.1} parent=11 // pred_region
          _
        $region28: #{encoder_forward.1} parent=11 // pred_fallthru
          _
        // Predicated region
        $region29: #{encoder_forward.1} parent=11 // pred_check
          %p265 = pneg %p149
        $region30: #{encoder_forward.1} parent=11 // pred_check_branch
          %267 = sbr.rel (%p265) target = $region32
        $region31: #{encoder_forward.1} parent=11 // pred_region
          _
        $region32: #{encoder_forward.1} parent=11 // pred_fallthru
          _
        // Predicated region
        $region33: #{encoder_forward.1} parent=11 // pred_check
          %p268 = pneg %p170
        $region34: #{encoder_forward.1} parent=11 // pred_check_branch
          %270 = sbr.rel (%p268) target = $region36
        $region35: #{encoder_forward.1} parent=11 // pred_region
          _
        $region36: #{encoder_forward.1} parent=11 // pred_fallthru
          _
        // Predicated region
        $region37: #{encoder_forward.1} parent=11 // pred_check
          %p271 = pneg %p191
        $region38: #{encoder_forward.1} parent=11 // pred_check_branch
          %273 = sbr.rel (%p271) target = $region40
        $region39: #{encoder_forward.1} parent=11 // pred_region
          _
        $region40: #{encoder_forward.1} parent=11 // pred_fallthru
          _
        // Predicated region
        $region41: #{encoder_forward.1} parent=11 // pred_check
          %p274 = pneg %p212
        $region42: #{encoder_forward.1} parent=11 // pred_check_branch
          %276 = sbr.rel (%p274) target = $region44
        $region43: #{encoder_forward.1} parent=11 // pred_region
          _
        $region44: #{encoder_forward.1} parent=11 // pred_fallthru
          _
      $region12: #{encoder_forward.1} parent=5 // pred_fallthru
        _
      %p277 = scmp.lt.s32.totalorder %s18, 2
      // Predicated region
      $region45: #{encoder_forward.1} parent=5 // pred_check
        %p278 = pneg %p277
      $region46: #{encoder_forward.1} parent=5 // pred_check_branch
        %280 = sbr.rel (%p278) target = $region48
      $region47: #{encoder_forward.1} parent=5 // pred_region
        // Predicated region
        $region49: #{encoder_forward.1} parent=47 // pred_check
          %p281 = pneg %p38
        $region50: #{encoder_forward.1} parent=47 // pred_check_branch
          %283 = sbr.rel (%p281) target = $region52
        $region51: #{encoder_forward.1} parent=47 // pred_region
          %p284 = scmp.lt.s32.totalorder %s18, 1
          %s285 = scalar_select %p284, %s18, 1
          %s286 = smul.addr %s285, 113
          %s287 = smul.addr %s286, 8
          %s288 = scalar_lea.vmem %s0, %s287
        $region52: #{encoder_forward.1} parent=47 // pred_fallthru
          _
      $region48: #{encoder_forward.1} parent=5 // pred_fallthru
        _
      %p289 = scmp.le.s32.totalorder 1, %s18
      %p290 = scmp.lt.s32.totalorder %s18, 3
      %p291 = pnand %p289, %p290
      %p292 = pneg %p291
      // Predicated region
      $region53: #{encoder_forward.1} parent=5 // pred_check
        _
      $region54: #{encoder_forward.1} parent=5 // pred_check_branch
        %294 = sbr.rel (%p291) target = $region56
      $region55: #{encoder_forward.1} parent=5 // pred_region
        %s295 = ssub.s32 %s18, 1
        %p296 = scmp.lt.s32.totalorder %s23, 1
        %s297 = scalar_select %p296, %s23, 1
        %s298 = smul.addr %s297, 113
        %s299 = smul.addr %s298, 8
        %s300 = scalar_lea.vmem %s0, %s299
        %p301 = pneg %p44
        %p302 = pneg %p41
        %p303 = pneg %p65
        %p304 = pneg %p62
        %p305 = pneg %p86
        %p306 = pneg %p83
        %p307 = pneg %p107
        %p308 = pneg %p104
        %p309 = pneg %p128
        %p310 = pneg %p125
        %p311 = pneg %p149
        %p312 = pneg %p146
        %p313 = pneg %p170
        %p314 = pneg %p167
        %p315 = pneg %p191
        %p316 = pneg %p188
        %p317 = pneg %p212
        %p318 = pneg %p209
        %p319 = pneg %p238
        %p320 = pneg %p235
        %s321 = sand.u32 %s225, 1
        %s322 = scalar_lea.sflag [#allocation6], %s321
        %s323 = sand.u32 %s225, 1
        %s324 = scalar_lea.vmem [#allocation5], %s323
        %p325 = scmp.lt.s32.totalorder %s23, 1
        %s326 = scalar_select %p325, %s23, 1
        %s327 = smul.addr %s326, 113
        %s328 = smul.addr %s327, 8
        %s329 = scalar_lea.vmem %s0, %s328
        %v330 = vld [vmem:[%s329] sm:$0xff]
        %v331 = vld [vmem:[%s329 + $0x8] sm:$0xff]
        %v332 = vld [vmem:[%s329 + $0x10] sm:$0xff]
        %v333 = vld [vmem:[%s329 + $0x18] sm:$0xff]
        %v334 = vld [vmem:[%s329 + $0x20] sm:$0xff]
        %v335 = vld [vmem:[%s329 + $0x28] sm:$0xff]
        %v336 = vld [vmem:[%s329 + $0x30] sm:$0xff]
        %v337 = vld [vmem:[%s329 + $0x38] sm:$0xff]
        %v338 = vld [vmem:[%s329 + $0x40] sm:$0xff]
        %v339 = vld [vmem:[%s329 + $0x48] sm:$0xff]
        %v340 = vld [vmem:[%s329 + $0x50] sm:$0xff]
        %v341 = vld [vmem:[%s329 + $0x58] sm:$0xff]
        %v342 = vld [vmem:[%s329 + $0x60] sm:$0xff]
        %v343 = vld [vmem:[%s329 + $0x68] sm:$0xff]
        %v344 = vld [vmem:[%s329 + $0x70] sm:$0xff]
        %v345 = vld [vmem:[%s329 + $0x78] sm:$0xff]
        %v346 = vld [vmem:[%s329 + $0x80] sm:$0xff]
        %v347 = vld [vmem:[%s329 + $0x88] sm:$0xff]
        %v348 = vld [vmem:[%s329 + $0x90] sm:$0xff]
        %v349 = vld [vmem:[%s329 + $0x98] sm:$0xff]
        %v350 = vld [vmem:[%s329 + $0xa0] sm:$0xff]
        %v351 = vld [vmem:[%s329 + $0xa8] sm:$0xff]
        %v352 = vld [vmem:[%s329 + $0xb0] sm:$0xff]
        %v353 = vld [vmem:[%s329 + $0xb8] sm:$0xff]
        %v354 = vld [vmem:[%s329 + $0xc0] sm:$0xff]
        %v355 = vld [vmem:[%s329 + $0xc8] sm:$0xff]
        %v356 = vld [vmem:[%s329 + $0xd0] sm:$0xff]
        %v357 = vld [vmem:[%s329 + $0xd8] sm:$0xff]
        %v358 = vld [vmem:[%s329 + $0xe0] sm:$0xff]
        %v359 = vld [vmem:[%s329 + $0xe8] sm:$0xff]
        %v360 = vld [vmem:[%s329 + $0xf0] sm:$0xff]
        %v361 = vld [vmem:[%s329 + $0xf8] sm:$0xff]
        %v362 = vld [vmem:[%s1] sm:$0xff]
        %v363 = vld [vmem:[%s1 + $0x8] sm:$0xff]
        %v364 = vld [vmem:[%s1 + $0x10] sm:$0xff]
        %v365 = vld [vmem:[%s1 + $0x18] sm:$0x7]
        %v366 = vld [vmem:[%s2] sm:$0x1]
        %v368 = vlaneseq
        %v369 = vshrl.u32 %v368, 7
        %v370 = vsub.s32 0, %v369
        %v371 = vrot.slane %v366, %v370
        %vm373 = vcmask 220160
        %v375 = vsel %vm373, %v330, 0
        %v378 = vsel %vm373, %v331, 0
        %v381 = vsel %vm373, %v332, 0
        %v384 = vsel %vm373, %v333, 0
        %v387 = vsel %vm373, %v334, 0
        %v390 = vsel %vm373, %v335, 0
        %v393 = vsel %vm373, %v336, 0
        %v396 = vsel %vm373, %v337, 0
        %v399 = vsel %vm373, %v338, 0
        %v402 = vsel %vm373, %v339, 0
        %v405 = vsel %vm373, %v340, 0
        %v408 = vsel %vm373, %v341, 0
        %v411 = vsel %vm373, %v342, 0
        %v414 = vsel %vm373, %v343, 0
        %v417 = vsel %vm373, %v344, 0
        %v420 = vsel %vm373, %v345, 0
        %v423 = vsel %vm373, %v346, 0
        %v426 = vsel %vm373, %v347, 0
        %v429 = vsel %vm373, %v348, 0
        %v432 = vsel %vm373, %v349, 0
        %v435 = vsel %vm373, %v350, 0
        %v438 = vsel %vm373, %v351, 0
        %v441 = vsel %vm373, %v352, 0
        %v444 = vsel %vm373, %v353, 0
        %v447 = vsel %vm373, %v354, 0
        %v450 = vsel %vm373, %v355, 0
        %v453 = vsel %vm373, %v356, 0
        %v456 = vsel %vm373, %v357, 0
        %v459 = vsel %vm373, %v358, 0
        %v462 = vsel %vm373, %v359, 0
        %v465 = vsel %vm373, %v360, 0
        %v468 = vsel %vm373, %v361, 0
        %vm470 = vcmask 1042432
        %v472 = vsel %vm470, %v365, 0
        %474 = vmatprep.subr.mxu0 0.0
        %475 = vmatpush1.msra.mxu0 %v362
        %476 = vmatprep.subr.mxu0 0.0
        %477 = vmatpush1.msra.mxu0 %v363
        %478 = vmatprep.subr.mxu0 0.0
        %479 = vmatpush1.msra.mxu0 %v364
        %480 = vmatprep.subr.mxu0 0.0
        %481 = vmatpush1.msra.mxu0 %v472
        %482 = vmatprep.subr.mxu0 0.0
        %483 = vmatpush1.msra.mxu0 0.0
        %484 = vmatprep.subr.mxu0 0.0
        %485 = vmatpush1.msra.mxu0 0.0
        %486 = vmatprep.subr.mxu0 0.0
        %487 = vmatpush1.msra.mxu0 0.0
        %488 = vmatprep.subr.mxu0 0.0
        %489 = vmatpush1.msra.mxu0 0.0
        %490 = vmatprep.subr.mxu0 0.0
        %491 = vmatpush1.msra.mxu0 0.0
        %492 = vmatprep.subr.mxu0 0.0
        %493 = vmatpush1.msra.mxu0 0.0
        %494 = vmatprep.subr.mxu0 0.0
        %495 = vmatpush1.msra.mxu0 0.0
        %496 = vmatprep.subr.mxu0 0.0
        %497 = vmatpush1.msra.mxu0 0.0
        %498 = vmatprep.subr.mxu0 0.0
        %499 = vmatpush1.msra.mxu0 0.0
        %500 = vmatprep.subr.mxu0 0.0
        %501 = vmatpush1.msra.mxu0 0.0
        %502 = vmatprep.subr.mxu0 0.0
        %503 = vmatpush1.msra.mxu0 0.0
        %504 = vmatprep.subr.mxu0 0.0
        %505 = vmatpush1.msra.mxu0 0.0
        %506 = vmatprep.subr.mxu0 0.0
        %507 = vmatpush1.msra.mxu0 0.0
        %508 = vmatprep.subr.mxu0 0.0
        %509 = vmatpush1.msra.mxu0 0.0
        %510 = vmatprep.subr.mxu0 0.0
        %511 = vmatpush1.msra.mxu0 0.0
        %512 = vmatprep.subr.mxu0 0.0
        %513 = vmatpush1.msra.mxu0 0.0
        %514 = vmatprep.subr.mxu0 0.0
        %515 = vmatpush1.msra.mxu0 0.0
        %516 = vmatprep.subr.mxu0 0.0
        %517 = vmatpush1.msra.mxu0 0.0
        %518 = vmatprep.subr.mxu0 0.0
        %519 = vmatpush1.msra.mxu0 0.0
        %520 = vmatprep.subr.mxu0 0.0
        %521 = vmatpush1.msra.mxu0 0.0
        %522 = vmatprep.subr.mxu0 0.0
        %523 = vmatpush1.msra.mxu0 0.0
        %524 = vmatprep.subr.mxu0 0.0
        %525 = vmatpush1.msra.mxu0 0.0
        %526 = vmatprep.subr.mxu0 0.0
        %527 = vmatpush1.msra.mxu0 0.0
        %528 = vmatprep.subr.mxu0 0.0
        %529 = vmatpush1.msra.mxu0 0.0
        %530 = vmatprep.subr.mxu0 0.0
        %531 = vmatpush1.msra.mxu0 0.0
        %532 = vmatprep.subr.mxu0 0.0
        %533 = vmatpush1.msra.mxu0 0.0
        %534 = vmatprep.subr.mxu0 0.0
        %535 = vmatpush1.msra.mxu0 0.0
        %536 = vmatprep.subr.mxu0 0.0
        %537 = vmatpush1.msra.mxu0 0.0
        %538 = vmatprep.mubr.f32.mxu0 0.0
        %539 = vmatmul.mubr.f32.gmra.mrb[0].mxu0 %v375
        %v540 = vpop.f32.mrb[0].mxu0
        %v541 = vadd.f32 %v371, %v540
        %v542 = vpop.f32.mrb[0].mxu0
        %543 = vmatprep.mubr.f32.mxu0 0.0
        %544 = vmatmul.mubr.f32.gmra.mrb[0].mxu0 %v378
        %v545 = vpop.f32.mrb[0].mxu0
        %v546 = vadd.f32 %v371, %v545
        %v547 = vpop.f32.mrb[0].mxu0
        %548 = vmatprep.mubr.f32.mxu0 0.0
        %549 = vmatmul.mubr.f32.gmra.mrb[0].mxu0 %v381
        %v550 = vpop.f32.mrb[0].mxu0
        %v551 = vadd.f32 %v371, %v550
        %v552 = vpop.f32.mrb[0].mxu0
        %553 = vmatprep.mubr.f32.mxu0 0.0
        %554 = vmatmul.mubr.f32.gmra.mrb[0].mxu0 %v384
        %v555 = vpop.f32.mrb[0].mxu0
        %v556 = vadd.f32 %v371, %v555
        %v557 = vpop.f32.mrb[0].mxu0
        %558 = vmatprep.mubr.f32.mxu0 0.0
        %559 = vmatmul.mubr.f32.gmra.mrb[0].mxu0 %v387
        %v560 = vpop.f32.mrb[0].mxu0
        %v561 = vadd.f32 %v371, %v560
        %v562 = vpop.f32.mrb[0].mxu0
        %563 = vmatprep.mubr.f32.mxu0 0.0
        %564 = vmatmul.mubr.f32.gmra.mrb[0].mxu0 %v390
        %v565 = vpop.f32.mrb[0].mxu0
        %v566 = vadd.f32 %v371, %v565
        %v567 = vpop.f32.mrb[0].mxu0
        %568 = vmatprep.mubr.f32.mxu0 0.0
        %569 = vmatmul.mubr.f32.gmra.mrb[0].mxu0 %v393
        %v570 = vpop.f32.mrb[0].mxu0
        %v571 = vadd.f32 %v371, %v570
        %v572 = vpop.f32.mrb[0].mxu0
        %573 = vmatprep.mubr.f32.mxu0 0.0
        %574 = vmatmul.mubr.f32.gmra.mrb[0].mxu0 %v396
        %v575 = vpop.f32.mrb[0].mxu0
        %v576 = vadd.f32 %v371, %v575
        %v577 = vpop.f32.mrb[0].mxu0
        %578 = vmatprep.mubr.f32.mxu0 0.0
        %579 = vmatmul.mubr.f32.gmra.mrb[0].mxu0 %v399
        %v580 = vpop.f32.mrb[0].mxu0
        %v581 = vadd.f32 %v371, %v580
        %v582 = vpop.f32.mrb[0].mxu0
        %583 = vmatprep.mubr.f32.mxu0 0.0
        %584 = vmatmul.mubr.f32.gmra.mrb[0].mxu0 %v402
        %v585 = vpop.f32.mrb[0].mxu0
        %v586 = vadd.f32 %v371, %v585
        %v587 = vpop.f32.mrb[0].mxu0
        %588 = vmatprep.mubr.f32.mxu0 0.0
        %589 = vmatmul.mubr.f32.gmra.mrb[0].mxu0 %v405
        %v590 = vpop.f32.mrb[0].mxu0
        %v591 = vadd.f32 %v371, %v590
        %v592 = vpop.f32.mrb[0].mxu0
        %593 = vmatprep.mubr.f32.mxu0 0.0
        %594 = vmatmul.mubr.f32.gmra.mrb[0].mxu0 %v408
        %v595 = vpop.f32.mrb[0].mxu0
        %v596 = vadd.f32 %v371, %v595
        %v597 = vpop.f32.mrb[0].mxu0
        %598 = vmatprep.mubr.f32.mxu0 0.0
        %599 = vmatmul.mubr.f32.gmra.mrb[0].mxu0 %v411
        %v600 = vpop.f32.mrb[0].mxu0
        %v601 = vadd.f32 %v371, %v600
        %v602 = vpop.f32.mrb[0].mxu0
        %603 = vmatprep.mubr.f32.mxu0 0.0
        %604 = vmatmul.mubr.f32.gmra.mrb[0].mxu0 %v414
        %v605 = vpop.f32.mrb[0].mxu0
        %v606 = vadd.f32 %v371, %v605
        %v607 = vpop.f32.mrb[0].mxu0
        %608 = vmatprep.mubr.f32.mxu0 0.0
        %609 = vmatmul.mubr.f32.gmra.mrb[0].mxu0 %v417
        %v610 = vpop.f32.mrb[0].mxu0
        %v611 = vadd.f32 %v371, %v610
        %v612 = vpop.f32.mrb[0].mxu0
        %613 = vmatprep.mubr.f32.mxu0 0.0
        %614 = vmatmul.mubr.f32.gmra.mrb[0].mxu0 %v420
        %v615 = vpop.f32.mrb[0].mxu0
        %v616 = vadd.f32 %v371, %v615
        %v617 = vpop.f32.mrb[0].mxu0
        %618 = vmatprep.mubr.f32.mxu0 0.0
        %619 = vmatmul.mubr.f32.gmra.mrb[0].mxu0 %v423
        %v620 = vpop.f32.mrb[0].mxu0
        %v621 = vadd.f32 %v371, %v620
        %v622 = vpop.f32.mrb[0].mxu0
        %623 = vmatprep.mubr.f32.mxu0 0.0
        %624 = vmatmul.mubr.f32.gmra.mrb[0].mxu0 %v426
        %v625 = vpop.f32.mrb[0].mxu0
        %v626 = vadd.f32 %v371, %v625
        %v627 = vpop.f32.mrb[0].mxu0
        %628 = vmatprep.mubr.f32.mxu0 0.0
        %629 = vmatmul.mubr.f32.gmra.mrb[0].mxu0 %v429
        %v630 = vpop.f32.mrb[0].mxu0
        %v631 = vadd.f32 %v371, %v630
        %v632 = vpop.f32.mrb[0].mxu0
        %633 = vmatprep.mubr.f32.mxu0 0.0
        %634 = vmatmul.mubr.f32.gmra.mrb[0].mxu0 %v432
        %v635 = vpop.f32.mrb[0].mxu0
        %v636 = vadd.f32 %v371, %v635
        %v637 = vpop.f32.mrb[0].mxu0
        %638 = vmatprep.mubr.f32.mxu0 0.0
        %639 = vmatmul.mubr.f32.gmra.mrb[0].mxu0 %v435
        %v640 = vpop.f32.mrb[0].mxu0
        %v641 = vadd.f32 %v371, %v640
        %v642 = vpop.f32.mrb[0].mxu0
        %643 = vmatprep.mubr.f32.mxu0 0.0
        %644 = vmatmul.mubr.f32.gmra.mrb[0].mxu0 %v438
        %v645 = vpop.f32.mrb[0].mxu0
        %v646 = vadd.f32 %v371, %v645
        %v647 = vpop.f32.mrb[0].mxu0
        %648 = vmatprep.mubr.f32.mxu0 0.0
        %649 = vmatmul.mubr.f32.gmra.mrb[0].mxu0 %v441
        %v650 = vpop.f32.mrb[0].mxu0
        %v651 = vadd.f32 %v371, %v650
        %v652 = vpop.f32.mrb[0].mxu0
        %653 = vmatprep.mubr.f32.mxu0 0.0
        %654 = vmatmul.mubr.f32.gmra.mrb[0].mxu0 %v444
        %v655 = vpop.f32.mrb[0].mxu0
        %v656 = vadd.f32 %v371, %v655
        %v657 = vpop.f32.mrb[0].mxu0
        %658 = vmatprep.mubr.f32.mxu0 0.0
        %659 = vmatmul.mubr.f32.gmra.mrb[0].mxu0 %v447
        %v660 = vpop.f32.mrb[0].mxu0
        %v661 = vadd.f32 %v371, %v660
        %v662 = vpop.f32.mrb[0].mxu0
        %663 = vmatprep.mubr.f32.mxu0 0.0
        %664 = vmatmul.mubr.f32.gmra.mrb[0].mxu0 %v450
        %v665 = vpop.f32.mrb[0].mxu0
        %v666 = vadd.f32 %v371, %v665
        %v667 = vpop.f32.mrb[0].mxu0
        %668 = vmatprep.mubr.f32.mxu0 0.0
        %669 = vmatmul.mubr.f32.gmra.mrb[0].mxu0 %v453
        %v670 = vpop.f32.mrb[0].mxu0
        %v671 = vadd.f32 %v371, %v670
        %v672 = vpop.f32.mrb[0].mxu0
        %673 = vmatprep.mubr.f32.mxu0 0.0
        %674 = vmatmul.mubr.f32.gmra.mrb[0].mxu0 %v456
        %v675 = vpop.f32.mrb[0].mxu0
        %v676 = vadd.f32 %v371, %v675
        %v677 = vpop.f32.mrb[0].mxu0
        %678 = vmatprep.mubr.f32.mxu0 0.0
        %679 = vmatmul.mubr.f32.gmra.mrb[0].mxu0 %v459
        %v680 = vpop.f32.mrb[0].mxu0
        %v681 = vadd.f32 %v371, %v680
        %v682 = vpop.f32.mrb[0].mxu0
        %683 = vmatprep.mubr.f32.mxu0 0.0
        %684 = vmatmul.mubr.f32.gmra.mrb[0].mxu0 %v462
        %v685 = vpop.f32.mrb[0].mxu0
        %v686 = vadd.f32 %v371, %v685
        %v687 = vpop.f32.mrb[0].mxu0
        %688 = vmatprep.mubr.f32.mxu0 0.0
        %689 = vmatmul.mubr.f32.gmra.mrb[0].mxu0 %v465
        %v690 = vpop.f32.mrb[0].mxu0
        %v691 = vadd.f32 %v371, %v690
        %v692 = vpop.f32.mrb[0].mxu0
        %693 = vmatprep.mubr.f32.mxu0 0.0
        %694 = vmatmul.mubr.f32.gmra.mrb[0].mxu0 %v468
        %v695 = vpop.f32.mrb[0].mxu0
        %v696 = vadd.f32 %v371, %v695
        %v697 = vpop.f32.mrb[0].mxu0
        %698 = vdwg.mxu0
        %v699 = vmax.f32 %v541, 0.0
        %v700 = vmax.f32 %v546, 0.0
        %v701 = vmax.f32 %v551, 0.0
        %v702 = vmax.f32 %v556, 0.0
        %v703 = vmax.f32 %v561, 0.0
        %v704 = vmax.f32 %v566, 0.0
        %v705 = vmax.f32 %v571, 0.0
        %v706 = vmax.f32 %v576, 0.0
        %v707 = vmax.f32 %v581, 0.0
        %v708 = vmax.f32 %v586, 0.0
        %v709 = vmax.f32 %v591, 0.0
        %v710 = vmax.f32 %v596, 0.0
        %v711 = vmax.f32 %v601, 0.0
        %v712 = vmax.f32 %v606, 0.0
        %v713 = vmax.f32 %v611, 0.0
        %v714 = vmax.f32 %v616, 0.0
        %v715 = vmax.f32 %v621, 0.0
        %v716 = vmax.f32 %v626, 0.0
        %v717 = vmax.f32 %v631, 0.0
        %v718 = vmax.f32 %v636, 0.0
        %v719 = vmax.f32 %v641, 0.0
        %v720 = vmax.f32 %v646, 0.0
        %v721 = vmax.f32 %v651, 0.0
        %v722 = vmax.f32 %v656, 0.0
        %v723 = vmax.f32 %v661, 0.0
        %v724 = vmax.f32 %v666, 0.0
        %v725 = vmax.f32 %v671, 0.0
        %v726 = vmax.f32 %v676, 0.0
        %v727 = vmax.f32 %v681, 0.0
        %v728 = vmax.f32 %v686, 0.0
        %v729 = vmax.f32 %v691, 0.0
        %v730 = vmax.f32 %v696, 0.0
        %vm731 = vcmask 523264
        %732 = vst.msk [vmem:[#allocation2] sm:$0xff] %vm731, %v699
        %733 = vst.msk [vmem:[#allocation2 + $0x8] sm:$0xff] %vm731, %v700
        %734 = vst.msk [vmem:[#allocation2 + $0x10] sm:$0xff] %vm731, %v701
        %735 = vst.msk [vmem:[#allocation2 + $0x18] sm:$0xff] %vm731, %v702
        %736 = vst.msk [vmem:[#allocation2 + $0x20] sm:$0xff] %vm731, %v703
        %737 = vst.msk [vmem:[#allocation2 + $0x28] sm:$0xff] %vm731, %v704
        %738 = vst.msk [vmem:[#allocation2 + $0x30] sm:$0xff] %vm731, %v705
        %739 = vst.msk [vmem:[#allocation2 + $0x38] sm:$0xff] %vm731, %v706
        %740 = vst.msk [vmem:[#allocation2 + $0x40] sm:$0xff] %vm731, %v707
        %741 = vst.msk [vmem:[#allocation2 + $0x48] sm:$0xff] %vm731, %v708
        %742 = vst.msk [vmem:[#allocation2 + $0x50] sm:$0xff] %vm731, %v709
        %743 = vst.msk [vmem:[#allocation2 + $0x58] sm:$0xff] %vm731, %v710
        %744 = vst.msk [vmem:[#allocation2 + $0x60] sm:$0xff] %vm731, %v711
        %745 = vst.msk [vmem:[#allocation2 + $0x68] sm:$0xff] %vm731, %v712
        %746 = vst.msk [vmem:[#allocation2 + $0x70] sm:$0xff] %vm731, %v713
        %747 = vst.msk [vmem:[#allocation2 + $0x78] sm:$0xff] %vm731, %v714
        %748 = vst.msk [vmem:[#allocation2 + $0x80] sm:$0xff] %vm731, %v715
        %749 = vst.msk [vmem:[#allocation2 + $0x88] sm:$0xff] %vm731, %v716
        %750 = vst.msk [vmem:[#allocation2 + $0x90] sm:$0xff] %vm731, %v717
        %751 = vst.msk [vmem:[#allocation2 + $0x98] sm:$0xff] %vm731, %v718
        %752 = vst.msk [vmem:[#allocation2 + $0xa0] sm:$0xff] %vm731, %v719
        %753 = vst.msk [vmem:[#allocation2 + $0xa8] sm:$0xff] %vm731, %v720
        %754 = vst.msk [vmem:[#allocation2 + $0xb0] sm:$0xff] %vm731, %v721
        %755 = vst.msk [vmem:[#allocation2 + $0xb8] sm:$0xff] %vm731, %v722
        %756 = vst.msk [vmem:[#allocation2 + $0xc0] sm:$0xff] %vm731, %v723
        %757 = vst.msk [vmem:[#allocation2 + $0xc8] sm:$0xff] %vm731, %v724
        %758 = vst.msk [vmem:[#allocation2 + $0xd0] sm:$0xff] %vm731, %v725
        %759 = vst.msk [vmem:[#allocation2 + $0xd8] sm:$0xff] %vm731, %v726
        %760 = vst.msk [vmem:[#allocation2 + $0xe0] sm:$0xff] %vm731, %v727
        %761 = vst.msk [vmem:[#allocation2 + $0xe8] sm:$0xff] %vm731, %v728
        %762 = vst.msk [vmem:[#allocation2 + $0xf0] sm:$0xff] %vm731, %v729
        %763 = vst.msk [vmem:[#allocation2 + $0xf8] sm:$0xff] %vm731, %v730
        %v764 = vld [vmem:[%s329 + $0x100] sm:$0xff]
        %v765 = vld [vmem:[%s329 + $0x108] sm:$0xff]
        %v766 = vld [vmem:[%s329 + $0x110] sm:$0xff]
        %v767 = vld [vmem:[%s329 + $0x118] sm:$0xff]
        %v768 = vld [vmem:[%s329 + $0x120] sm:$0xff]
        %v769 = vld [vmem:[%s329 + $0x128] sm:$0xff]
        %v770 = vld [vmem:[%s329 + $0x130] sm:$0xff]
        %v771 = vld [vmem:[%s329 + $0x138] sm:$0xff]
        %v772 = vld [vmem:[%s329 + $0x140] sm:$0xff]
        %v773 = vld [vmem:[%s329 + $0x148] sm:$0xff]
        %v774 = vld [vmem:[%s329 + $0x150] sm:$0xff]
        %v775 = vld [vmem:[%s329 + $0x158] sm:$0xff]
        %v776 = vld [vmem:[%s329 + $0x160] sm:$0xff]
        %v777 = vld [vmem:[%s329 + $0x168] sm:$0xff]
        %v778 = vld [vmem:[%s329 + $0x170] sm:$0xff]
        %v779 = vld [vmem:[%s329 + $0x178] sm:$0xff]
        %v780 = vld [vmem:[%s329 + $0x180] sm:$0xff]
        %v781 = vld [vmem:[%s329 + $0x188] sm:$0xff]
        %v782 = vld [vmem:[%s329 + $0x190] sm:$0xff]
        %v783 = vld [vmem:[%s329 + $0x198] sm:$0xff]
        %v784 = vld [vmem:[%s329 + $0x1a0] sm:$0xff]
        %v785 = vld [vmem:[%s329 + $0x1a8] sm:$0xff]
        %v786 = vld [vmem:[%s329 + $0x1b0] sm:$0xff]
        %v787 = vld [vmem:[%s329 + $0x1b8] sm:$0xff]
        %v788 = vld [vmem:[%s329 + $0x1c0] sm:$0xff]
        %v789 = vld [vmem:[%s329 + $0x1c8] sm:$0xff]
        %v790 = vld [vmem:[%s329 + $0x1d0] sm:$0xff]
        %v791 = vld [vmem:[%s329 + $0x1d8] sm:$0xff]
        %v792 = vld [vmem:[%s329 + $0x1e0] sm:$0xff]
        %v793 = vld [vmem:[%s329 + $0x1e8] sm:$0xff]
        %v794 = vld [vmem:[%s329 + $0x1f0] sm:$0xff]
        %v795 = vld [vmem:[%s329 + $0x1f8] sm:$0xff]
        %v796 = vld [vmem:[%s1] sm:$0xff]
        %v797 = vld [vmem:[%s1 + $0x8] sm:$0xff]
        %v798 = vld [vmem:[%s1 + $0x10] sm:$0xff]
        %v799 = vld [vmem:[%s1 + $0x18] sm:$0x7]
        %v800 = vld [vmem:[%s2] sm:$0x1]
        %v802 = vlaneseq
        %v803 = vshrl.u32 %v802, 7
        %v804 = vsub.s32 0, %v803
        %v805 = vrot.slane %v800, %v804
        %v808 = vsel %vm373, %v764, 0
        %v811 = vsel %vm373, %v765, 0
        %v814 = vsel %vm373, %v766, 0
        %v817 = vsel %vm373, %v767, 0
        %v820 = vsel %vm373, %v768, 0
        %v823 = vsel %vm373, %v769, 0
        %v826 = vsel %vm373, %v770, 0
        %v829 = vsel %vm373, %v771, 0
        %v832 = vsel %vm373, %v772, 0
        %v835 = vsel %vm373, %v773, 0
        %v838 = vsel %vm373, %v774, 0
        %v841 = vsel %vm373, %v775, 0
        %v844 = vsel %vm373, %v776, 0
        %v847 = vsel %vm373, %v777, 0
        %v850 = vsel %vm373, %v778, 0
        %v853 = vsel %vm373, %v779, 0
        %v856 = vsel %vm373, %v780, 0
        %v859 = vsel %vm373, %v781, 0
        %v862 = vsel %vm373, %v782, 0
        %v865 = vsel %vm373, %v783, 0
        %v868 = vsel %vm373, %v784, 0
        %v871 = vsel %vm373, %v785, 0
        %v874 = vsel %vm373, %v786, 0
        %v877 = vsel %vm373, %v787, 0
        %v880 = vsel %vm373, %v788, 0
        %v883 = vsel %vm373, %v789, 0
        %v886 = vsel %vm373, %v790, 0
        %v889 = vsel %vm373, %v791, 0
        %v892 = vsel %vm373, %v792, 0
        %v895 = vsel %vm373, %v793, 0
        %v898 = vsel %vm373, %v794, 0
        %v901 = vsel %vm373, %v795, 0
        %v904 = vsel %vm470, %v799, 0
        %906 = vmatprep.subr.mxu0 0.0
        %907 = vmatpush1.msra.mxu0 %v796
        %908 = vmatprep.subr.mxu0 0.0
        %909 = vmatpush1.msra.mxu0 %v797
        %910 = vmatprep.subr.mxu0 0.0
        %911 = vmatpush1.msra.mxu0 %v798
        %912 = vmatprep.subr.mxu0 0.0
        %913 = vmatpush1.msra.mxu0 %v904
        %914 = vmatprep.subr.mxu0 0.0
        %915 = vmatpush1.msra.mxu0 0.0
        %916 = vmatprep.subr.mxu0 0.0
        %917 = vmatpush1.msra.mxu0 0.0
        %918 = vmatprep.subr.mxu0 0.0
        %919 = vmatpush1.msra.mxu0 0.0
        %920 = vmatprep.subr.mxu0 0.0
        %921 = vmatpush1.msra.mxu0 0.0
        %922 = vmatprep.subr.mxu0 0.0
        %923 = vmatpush1.msra.mxu0 0.0
        %924 = vmatprep.subr.mxu0 0.0
        %925 = vmatpush1.msra.mxu0 0.0
        %926 = vmatprep.subr.mxu0 0.0
        %927 = vmatpush1.msra.mxu0 0.0
        %928 = vmatprep.subr.mxu0 0.0
        %929 = vmatpush1.msra.mxu0 0.0
        %930 = vmatprep.subr.mxu0 0.0
        %931 = vmatpush1.msra.mxu0 0.0
        %932 = vmatprep.subr.mxu0 0.0
        %933 = vmatpush1.msra.mxu0 0.0
        %934 = vmatprep.subr.mxu0 0.0
        %935 = vmatpush1.msra.mxu0 0.0
        %936 = vmatprep.subr.mxu0 0.0
        %937 = vmatpush1.msra.mxu0 0.0
        %938 = vmatprep.subr.mxu0 0.0
        %939 = vmatpush1.msra.mxu0 0.0
        %940 = vmatprep.subr.mxu0 0.0
        %941 = vmatpush1.msra.mxu0 0.0
        %942 = vmatprep.subr.mxu0 0.0
        %943 = vmatpush1.msra.mxu0 0.0
        %944 = vmatprep.subr.mxu0 0.0
        %945 = vmatpush1.msra.mxu0 0.0
        %946 = vmatprep.subr.mxu0 0.0
        %947 = vmatpush1.msra.mxu0 0.0
        %948 = vmatprep.subr.mxu0 0.0
        %949 = vmatpush1.msra.mxu0 0.0
        %950 = vmatprep.subr.mxu0 0.0
        %951 = vmatpush1.msra.mxu0 0.0
        %952 = vmatprep.subr.mxu0 0.0
        %953 = vmatpush1.msra.mxu0 0.0
        %954 = vmatprep.subr.mxu0 0.0
        %955 = vmatpush1.msra.mxu0 0.0
        %956 = vmatprep.subr.mxu0 0.0
        %957 = vmatpush1.msra.mxu0 0.0
        %958 = vmatprep.subr.mxu0 0.0
        %959 = vmatpush1.msra.mxu0 0.0
        %960 = vmatprep.subr.mxu0 0.0
        %961 = vmatpush1.msra.mxu0 0.0
        %962 = vmatprep.subr.mxu0 0.0
        %963 = vmatpush1.msra.mxu0 0.0
        %964 = vmatprep.subr.mxu0 0.0
        %965 = vmatpush1.msra.mxu0 0.0
        %966 = vmatprep.subr.mxu0 0.0
        %967 = vmatpush1.msra.mxu0 0.0
        %968 = vmatprep.subr.mxu0 0.0
        %969 = vmatpush1.msra.mxu0 0.0
        %970 = vmatprep.mubr.f32.mxu0 0.0
        %971 = vmatmul.mubr.f32.gmra.mrb[0].mxu0 %v808
        %v972 = vpop.f32.mrb[0].mxu0
        %v973 = vadd.f32 %v805, %v972
        %v974 = vpop.f32.mrb[0].mxu0
        %975 = vmatprep.mubr.f32.mxu0 0.0
        %976 = vmatmul.mubr.f32.gmra.mrb[0].mxu0 %v811
        %v977 = vpop.f32.mrb[0].mxu0
        %v978 = vadd.f32 %v805, %v977
        %v979 = vpop.f32.mrb[0].mxu0
        %980 = vmatprep.mubr.f32.mxu0 0.0
        %981 = vmatmul.mubr.f32.gmra.mrb[0].mxu0 %v814
        %v982 = vpop.f32.mrb[0].mxu0
        %v983 = vadd.f32 %v805, %v982
        %v984 = vpop.f32.mrb[0].mxu0
        %985 = vmatprep.mubr.f32.mxu0 0.0
        %986 = vmatmul.mubr.f32.gmra.mrb[0].mxu0 %v817
        %v987 = vpop.f32.mrb[0].mxu0
        %v988 = vadd.f32 %v805, %v987
        %v989 = vpop.f32.mrb[0].mxu0
        %990 = vmatprep.mubr.f32.mxu0 0.0
        %991 = vmatmul.mubr.f32.gmra.mrb[0].mxu0 %v820
        %v992 = vpop.f32.mrb[0].mxu0
        %v993 = vadd.f32 %v805, %v992
        %v994 = vpop.f32.mrb[0].mxu0
        %995 = vmatprep.mubr.f32.mxu0 0.0
        %996 = vmatmul.mubr.f32.gmra.mrb[0].mxu0 %v823
        %v997 = vpop.f32.mrb[0].mxu0
        %v998 = vadd.f32 %v805, %v997
        %v999 = vpop.f32.mrb[0].mxu0
        %1000 = vmatprep.mubr.f32.mxu0 0.0
        %1001 = vmatmul.mubr.f32.gmra.mrb[0].mxu0 %v826
        %v1002 = vpop.f32.mrb[0].mxu0
        %v1003 = vadd.f32 %v805, %v1002
        %v1004 = vpop.f32.mrb[0].mxu0
        %1005 = vmatprep.mubr.f32.mxu0 0.0
        %1006 = vmatmul.mubr.f32.gmra.mrb[0].mxu0 %v829
        %v1007 = vpop.f32.mrb[0].mxu0
        %v1008 = vadd.f32 %v805, %v1007
        %v1009 = vpop.f32.mrb[0].mxu0
        %1010 = vmatprep.mubr.f32.mxu0 0.0
        %1011 = vmatmul.mubr.f32.gmra.mrb[0].mxu0 %v832
        %v1012 = vpop.f32.mrb[0].mxu0
        %v1013 = vadd.f32 %v805, %v1012
        %v1014 = vpop.f32.mrb[0].mxu0
        %1015 = vmatprep.mubr.f32.mxu0 0.0
        %1016 = vmatmul.mubr.f32.gmra.mrb[0].mxu0 %v835
        %v1017 = vpop.f32.mrb[0].mxu0
        %v1018 = vadd.f32 %v805, %v1017
        %v1019 = vpop.f32.mrb[0].mxu0
        %1020 = vmatprep.mubr.f32.mxu0 0.0
        %1021 = vmatmul.mubr.f32.gmra.mrb[0].mxu0 %v838
        %v1022 = vpop.f32.mrb[0].mxu0
        %v1023 = vadd.f32 %v805, %v1022
        %v1024 = vpop.f32.mrb[0].mxu0
        %1025 = vmatprep.mubr.f32.mxu0 0.0
        %1026 = vmatmul.mubr.f32.gmra.mrb[0].mxu0 %v841
        %v1027 = vpop.f32.mrb[0].mxu0
        %v1028 = vadd.f32 %v805, %v1027
        %v1029 = vpop.f32.mrb[0].mxu0
        %1030 = vmatprep.mubr.f32.mxu0 0.0
        %1031 = vmatmul.mubr.f32.gmra.mrb[0].mxu0 %v844
        %v1032 = vpop.f32.mrb[0].mxu0
        %v1033 = vadd.f32 %v805, %v1032
        %v1034 = vpop.f32.mrb[0].mxu0
        %1035 = vmatprep.mubr.f32.mxu0 0.0
        %1036 = vmatmul.mubr.f32.gmra.mrb[0].mxu0 %v847
        %v1037 = vpop.f32.mrb[0].mxu0
        %v1038 = vadd.f32 %v805, %v1037
        %v1039 = vpop.f32.mrb[0].mxu0
        %1040 = vmatprep.mubr.f32.mxu0 0.0
        %1041 = vmatmul.mubr.f32.gmra.mrb[0].mxu0 %v850
        %v1042 = vpop.f32.mrb[0].mxu0
        %v1043 = vadd.f32 %v805, %v1042
        %v1044 = vpop.f32.mrb[0].mxu0
        %1045 = vmatprep.mubr.f32.mxu0 0.0
        %1046 = vmatmul.mubr.f32.gmra.mrb[0].mxu0 %v853
        %v1047 = vpop.f32.mrb[0].mxu0
        %v1048 = vadd.f32 %v805, %v1047
        %v1049 = vpop.f32.mrb[0].mxu0
        %1050 = vmatprep.mubr.f32.mxu0 0.0
        %1051 = vmatmul.mubr.f32.gmra.mrb[0].mxu0 %v856
        %v1052 = vpop.f32.mrb[0].mxu0
        %v1053 = vadd.f32 %v805, %v1052
        %v1054 = vpop.f32.mrb[0].mxu0
        %1055 = vmatprep.mubr.f32.mxu0 0.0
        %1056 = vmatmul.mubr.f32.gmra.mrb[0].mxu0 %v859
        %v1057 = vpop.f32.mrb[0].mxu0
        %v1058 = vadd.f32 %v805, %v1057
        %v1059 = vpop.f32.mrb[0].mxu0
        %1060 = vmatprep.mubr.f32.mxu0 0.0
        %1061 = vmatmul.mubr.f32.gmra.mrb[0].mxu0 %v862
        %v1062 = vpop.f32.mrb[0].mxu0
        %v1063 = vadd.f32 %v805, %v1062
        %v1064 = vpop.f32.mrb[0].mxu0
        %1065 = vmatprep.mubr.f32.mxu0 0.0
        %1066 = vmatmul.mubr.f32.gmra.mrb[0].mxu0 %v865
        %v1067 = vpop.f32.mrb[0].mxu0
        %v1068 = vadd.f32 %v805, %v1067
        %v1069 = vpop.f32.mrb[0].mxu0
        %1070 = vmatprep.mubr.f32.mxu0 0.0
        %1071 = vmatmul.mubr.f32.gmra.mrb[0].mxu0 %v868
        %v1072 = vpop.f32.mrb[0].mxu0
        %v1073 = vadd.f32 %v805, %v1072
        %v1074 = vpop.f32.mrb[0].mxu0
        %1075 = vmatprep.mubr.f32.mxu0 0.0
        %1076 = vmatmul.mubr.f32.gmra.mrb[0].mxu0 %v871
        %v1077 = vpop.f32.mrb[0].mxu0
        %v1078 = vadd.f32 %v805, %v1077
        %v1079 = vpop.f32.mrb[0].mxu0
        %1080 = vmatprep.mubr.f32.mxu0 0.0
        %1081 = vmatmul.mubr.f32.gmra.mrb[0].mxu0 %v874
        %v1082 = vpop.f32.mrb[0].mxu0
        %v1083 = vadd.f32 %v805, %v1082
        %v1084 = vpop.f32.mrb[0].mxu0
        %1085 = vmatprep.mubr.f32.mxu0 0.0
        %1086 = vmatmul.mubr.f32.gmra.mrb[0].mxu0 %v877
        %v1087 = vpop.f32.mrb[0].mxu0
        %v1088 = vadd.f32 %v805, %v1087
        %v1089 = vpop.f32.mrb[0].mxu0
        %1090 = vmatprep.mubr.f32.mxu0 0.0
        %1091 = vmatmul.mubr.f32.gmra.mrb[0].mxu0 %v880
        %v1092 = vpop.f32.mrb[0].mxu0
        %v1093 = vadd.f32 %v805, %v1092
        %v1094 = vpop.f32.mrb[0].mxu0
        %1095 = vmatprep.mubr.f32.mxu0 0.0
        %1096 = vmatmul.mubr.f32.gmra.mrb[0].mxu0 %v883
        %v1097 = vpop.f32.mrb[0].mxu0
        %v1098 = vadd.f32 %v805, %v1097
        %v1099 = vpop.f32.mrb[0].mxu0
        %1100 = vmatprep.mubr.f32.mxu0 0.0
        %1101 = vmatmul.mubr.f32.gmra.mrb[0].mxu0 %v886
        %v1102 = vpop.f32.mrb[0].mxu0
        %v1103 = vadd.f32 %v805, %v1102
        %v1104 = vpop.f32.mrb[0].mxu0
        %1105 = vmatprep.mubr.f32.mxu0 0.0
        %1106 = vmatmul.mubr.f32.gmra.mrb[0].mxu0 %v889
        %v1107 = vpop.f32.mrb[0].mxu0
        %v1108 = vadd.f32 %v805, %v1107
        %v1109 = vpop.f32.mrb[0].mxu0
        %1110 = vmatprep.mubr.f32.mxu0 0.0
        %1111 = vmatmul.mubr.f32.gmra.mrb[0].mxu0 %v892
        %v1112 = vpop.f32.mrb[0].mxu0
        %v1113 = vadd.f32 %v805, %v1112
        %v1114 = vpop.f32.mrb[0].mxu0
        %1115 = vmatprep.mubr.f32.mxu0 0.0
        %1116 = vmatmul.mubr.f32.gmra.mrb[0].mxu0 %v895
        %v1117 = vpop.f32.mrb[0].mxu0
        %v1118 = vadd.f32 %v805, %v1117
        %v1119 = vpop.f32.mrb[0].mxu0
        %1120 = vmatprep.mubr.f32.mxu0 0.0
        %1121 = vmatmul.mubr.f32.gmra.mrb[0].mxu0 %v898
        %v1122 = vpop.f32.mrb[0].mxu0
        %v1123 = vadd.f32 %v805, %v1122
        %v1124 = vpop.f32.mrb[0].mxu0
        %1125 = vmatprep.mubr.f32.mxu0 0.0
        %1126 = vmatmul.mubr.f32.gmra.mrb[0].mxu0 %v901
        %v1127 = vpop.f32.mrb[0].mxu0
        %v1128 = vadd.f32 %v805, %v1127
        %v1129 = vpop.f32.mrb[0].mxu0
        %1130 = vdwg.mxu0
        %v1131 = vmax.f32 %v973, 0.0
        %v1132 = vmax.f32 %v978, 0.0
        %v1133 = vmax.f32 %v983, 0.0
        %v1134 = vmax.f32 %v988, 0.0
        %v1135 = vmax.f32 %v993, 0.0
        %v1136 = vmax.f32 %v998, 0.0
        %v1137 = vmax.f32 %v1003, 0.0
        %v1138 = vmax.f32 %v1008, 0.0
        %v1139 = vmax.f32 %v1013, 0.0
        %v1140 = vmax.f32 %v1018, 0.0
        %v1141 = vmax.f32 %v1023, 0.0
        %v1142 = vmax.f32 %v1028, 0.0
        %v1143 = vmax.f32 %v1033, 0.0
        %v1144 = vmax.f32 %v1038, 0.0
        %v1145 = vmax.f32 %v1043, 0.0
        %v1146 = vmax.f32 %v1048, 0.0
        %v1147 = vmax.f32 %v1053, 0.0
        %v1148 = vmax.f32 %v1058, 0.0
        %v1149 = vmax.f32 %v1063, 0.0
        %v1150 = vmax.f32 %v1068, 0.0
        %v1151 = vmax.f32 %v1073, 0.0
        %v1152 = vmax.f32 %v1078, 0.0
        %v1153 = vmax.f32 %v1083, 0.0
        %v1154 = vmax.f32 %v1088, 0.0
        %v1155 = vmax.f32 %v1093, 0.0
        %v1156 = vmax.f32 %v1098, 0.0
        %v1157 = vmax.f32 %v1103, 0.0
        %v1158 = vmax.f32 %v1108, 0.0
        %v1159 = vmax.f32 %v1113, 0.0
        %v1160 = vmax.f32 %v1118, 0.0
        %v1161 = vmax.f32 %v1123, 0.0
        %v1162 = vmax.f32 %v1128, 0.0
        %1163 = vst.msk [vmem:[#allocation2 + $0x100] sm:$0xff] %vm731, %v1131
        %1164 = vst.msk [vmem:[#allocation2 + $0x108] sm:$0xff] %vm731, %v1132
        %1165 = vst.msk [vmem:[#allocation2 + $0x110] sm:$0xff] %vm731, %v1133
        %1166 = vst.msk [vmem:[#allocation2 + $0x118] sm:$0xff] %vm731, %v1134
        %1167 = vst.msk [vmem:[#allocation2 + $0x120] sm:$0xff] %vm731, %v1135
        %1168 = vst.msk [vmem:[#allocation2 + $0x128] sm:$0xff] %vm731, %v1136
        %1169 = vst.msk [vmem:[#allocation2 + $0x130] sm:$0xff] %vm731, %v1137
        %1170 = vst.msk [vmem:[#allocation2 + $0x138] sm:$0xff] %vm731, %v1138
        %1171 = vst.msk [vmem:[#allocation2 + $0x140] sm:$0xff] %vm731, %v1139
        %1172 = vst.msk [vmem:[#allocation2 + $0x148] sm:$0xff] %vm731, %v1140
        %1173 = vst.msk [vmem:[#allocation2 + $0x150] sm:$0xff] %vm731, %v1141
        %1174 = vst.msk [vmem:[#allocation2 + $0x158] sm:$0xff] %vm731, %v1142
        %1175 = vst.msk [vmem:[#allocation2 + $0x160] sm:$0xff] %vm731, %v1143
        %1176 = vst.msk [vmem:[#allocation2 + $0x168] sm:$0xff] %vm731, %v1144
        %1177 = vst.msk [vmem:[#allocation2 + $0x170] sm:$0xff] %vm731, %v1145
        %1178 = vst.msk [vmem:[#allocation2 + $0x178] sm:$0xff] %vm731, %v1146
        %1179 = vst.msk [vmem:[#allocation2 + $0x180] sm:$0xff] %vm731, %v1147
        %1180 = vst.msk [vmem:[#allocation2 + $0x188] sm:$0xff] %vm731, %v1148
        %1181 = vst.msk [vmem:[#allocation2 + $0x190] sm:$0xff] %vm731, %v1149
        %1182 = vst.msk [vmem:[#allocation2 + $0x198] sm:$0xff] %vm731, %v1150
        %1183 = vst.msk [vmem:[#allocation2 + $0x1a0] sm:$0xff] %vm731, %v1151
        %1184 = vst.msk [vmem:[#allocation2 + $0x1a8] sm:$0xff] %vm731, %v1152
        %1185 = vst.msk [vmem:[#allocation2 + $0x1b0] sm:$0xff] %vm731, %v1153
        %1186 = vst.msk [vmem:[#allocation2 + $0x1b8] sm:$0xff] %vm731, %v1154
        %1187 = vst.msk [vmem:[#allocation2 + $0x1c0] sm:$0xff] %vm731, %v1155
        %1188 = vst.msk [vmem:[#allocation2 + $0x1c8] sm:$0xff] %vm731, %v1156
        %1189 = vst.msk [vmem:[#allocation2 + $0x1d0] sm:$0xff] %vm731, %v1157
        %1190 = vst.msk [vmem:[#allocation2 + $0x1d8] sm:$0xff] %vm731, %v1158
        %1191 = vst.msk [vmem:[#allocation2 + $0x1e0] sm:$0xff] %vm731, %v1159
        %1192 = vst.msk [vmem:[#allocation2 + $0x1e8] sm:$0xff] %vm731, %v1160
        %1193 = vst.msk [vmem:[#allocation2 + $0x1f0] sm:$0xff] %vm731, %v1161
        %1194 = vst.msk [vmem:[#allocation2 + $0x1f8] sm:$0xff] %vm731, %v1162
        %v1195 = vld [vmem:[%s329 + $0x200] sm:$0xff]
        %v1196 = vld [vmem:[%s329 + $0x208] sm:$0xff]
        %v1197 = vld [vmem:[%s329 + $0x210] sm:$0xff]
        %v1198 = vld [vmem:[%s329 + $0x218] sm:$0xff]
        %v1199 = vld [vmem:[%s329 + $0x220] sm:$0xff]
        %v1200 = vld [vmem:[%s329 + $0x228] sm:$0xff]
        %v1201 = vld [vmem:[%s329 + $0x230] sm:$0xff]
        %v1202 = vld [vmem:[%s329 + $0x238] sm:$0xff]
        %v1203 = vld [vmem:[%s329 + $0x240] sm:$0xff]
        %v1204 = vld [vmem:[%s329 + $0x248] sm:$0xff]
        %v1205 = vld [vmem:[%s329 + $0x250] sm:$0xff]
        %v1206 = vld [vmem:[%s329 + $0x258] sm:$0xff]
        %v1207 = vld [vmem:[%s329 + $0x260] sm:$0xff]
        %v1208 = vld [vmem:[%s329 + $0x268] sm:$0xff]
        %v1209 = vld [vmem:[%s329 + $0x270] sm:$0xff]
        %v1210 = vld [vmem:[%s329 + $0x278] sm:$0xff]
        %v1211 = vld [vmem:[%s329 + $0x280] sm:$0xff]
        %v1212 = vld [vmem:[%s329 + $0x288] sm:$0xff]
        %v1213 = vld [vmem:[%s329 + $0x290] sm:$0xff]
        %v1214 = vld [vmem:[%s329 + $0x298] sm:$0xff]
        %v1215 = vld [vmem:[%s329 + $0x2a0] sm:$0xff]
        %v1216 = vld [vmem:[%s329 + $0x2a8] sm:$0xff]
        %v1217 = vld [vmem:[%s329 + $0x2b0] sm:$0xff]
        %v1218 = vld [vmem:[%s329 + $0x2b8] sm:$0xff]
        %v1219 = vld [vmem:[%s329 + $0x2c0] sm:$0xff]
        %v1220 = vld [vmem:[%s329 + $0x2c8] sm:$0xff]
        %v1221 = vld [vmem:[%s329 + $0x2d0] sm:$0xff]
        %v1222 = vld [vmem:[%s329 + $0x2d8] sm:$0xff]
        %v1223 = vld [vmem:[%s329 + $0x2e0] sm:$0xff]
        %v1224 = vld [vmem:[%s329 + $0x2e8] sm:$0xff]
        %v1225 = vld [vmem:[%s329 + $0x2f0] sm:$0xff]
        %v1226 = vld [vmem:[%s329 + $0x2f8] sm:$0xff]
        %v1227 = vld [vmem:[%s1] sm:$0xff]
        %v1228 = vld [vmem:[%s1 + $0x8] sm:$0xff]
        %v1229 = vld [vmem:[%s1 + $0x10] sm:$0xff]
        %v1230 = vld [vmem:[%s1 + $0x18] sm:$0x7]
        %v1231 = vld [vmem:[%s2] sm:$0x1]
        %v1233 = vlaneseq
        %v1234 = vshrl.u32 %v1233, 7
        %v1235 = vsub.s32 0, %v1234
        %v1236 = vrot.slane %v1231, %v1235
        %v1239 = vsel %vm373, %v1195, 0
        %v1242 = vsel %vm373, %v1196, 0
        %v1245 = vsel %vm373, %v1197, 0
        %v1248 = vsel %vm373, %v1198, 0
        %v1251 = vsel %vm373, %v1199, 0
        %v1254 = vsel %vm373, %v1200, 0
        %v1257 = vsel %vm373, %v1201, 0
        %v1260 = vsel %vm373, %v1202, 0
        %v1263 = vsel %vm373, %v1203, 0
        %v1266 = vsel %vm373, %v1204, 0
        %v1269 = vsel %vm373, %v1205, 0
        %v1272 = vsel %vm373, %v1206, 0
        %v1275 = vsel %vm373, %v1207, 0
        %v1278 = vsel %vm373, %v1208, 0
        %v1281 = vsel %vm373, %v1209, 0
        %v1284 = vsel %vm373, %v1210, 0
        %v1287 = vsel %vm373, %v1211, 0
        %v1290 = vsel %vm373, %v1212, 0
        %v1293 = vsel %vm373, %v1213, 0
        %v1296 = vsel %vm373, %v1214, 0
        %v1299 = vsel %vm373, %v1215, 0
        %v1302 = vsel %vm373, %v1216, 0
        %v1305 = vsel %vm373, %v1217, 0
        %v1308 = vsel %vm373, %v1218, 0
        %v1311 = vsel %vm373, %v1219, 0
        %v1314 = vsel %vm373, %v1220, 0
        %v1317 = vsel %vm373, %v1221, 0
        %v1320 = vsel %vm373, %v1222, 0
        %v1323 = vsel %vm373, %v1223, 0
        %v1326 = vsel %vm373, %v1224, 0
        %v1329 = vsel %vm373, %v1225, 0
        %v1332 = vsel %vm373, %v1226, 0
        %v1335 = vsel %vm470, %v1230, 0
        %1337 = vmatprep.subr.mxu0 0.0
        %1338 = vmatpush1.msra.mxu0 %v1227
        %1339 = vmatprep.subr.mxu0 0.0
        %1340 = vmatpush1.msra.mxu0 %v1228
        %1341 = vmatprep.subr.mxu0 0.0
        %1342 = vmatpush1.msra.mxu0 %v1229
        %1343 = vmatprep.subr.mxu0 0.0
        %1344 = vmatpush1.msra.mxu0 %v1335
        %1345 = vmatprep.subr.mxu0 0.0
        %1346 = vmatpush1.msra.mxu0 0.0
        %1347 = vmatprep.subr.mxu0 0.0
        %1348 = vmatpush1.msra.mxu0 0.0
        %1349 = vmatprep.subr.mxu0 0.0
        %1350 = vmatpush1.msra.mxu0 0.0
        %1351 = vmatprep.subr.mxu0 0.0
        %1352 = vmatpush1.msra.mxu0 0.0
        %1353 = vmatprep.subr.mxu0 0.0
        %1354 = vmatpush1.msra.mxu0 0.0
        %1355 = vmatprep.subr.mxu0 0.0
        %1356 = vmatpush1.msra.mxu0 0.0
        %1357 = vmatprep.subr.mxu0 0.0
        %1358 = vmatpush1.msra.mxu0 0.0
        %1359 = vmatprep.subr.mxu0 0.0
        %1360 = vmatpush1.msra.mxu0 0.0
        %1361 = vmatprep.subr.mxu0 0.0
        %1362 = vmatpush1.msra.mxu0 0.0
        %1363 = vmatprep.subr.mxu0 0.0
        %1364 = vmatpush1.msra.mxu0 0.0
        %1365 = vmatprep.subr.mxu0 0.0
        %1366 = vmatpush1.msra.mxu0 0.0
        %1367 = vmatprep.subr.mxu0 0.0
        %1368 = vmatpush1.msra.mxu0 0.0
        %1369 = vmatprep.subr.mxu0 0.0
        %1370 = vmatpush1.msra.mxu0 0.0
        %1371 = vmatprep.subr.mxu0 0.0
        %1372 = vmatpush1.msra.mxu0 0.0
        %1373 = vmatprep.subr.mxu0 0.0
        %1374 = vmatpush1.msra.mxu0 0.0
        %1375 = vmatprep.subr.mxu0 0.0
        %1376 = vmatpush1.msra.mxu0 0.0
        %1377 = vmatprep.subr.mxu0 0.0
        %1378 = vmatpush1.msra.mxu0 0.0
        %1379 = vmatprep.subr.mxu0 0.0
        %1380 = vmatpush1.msra.mxu0 0.0
        %1381 = vmatprep.subr.mxu0 0.0
        %1382 = vmatpush1.msra.mxu0 0.0
        %1383 = vmatprep.subr.mxu0 0.0
        %1384 = vmatpush1.msra.mxu0 0.0
        %1385 = vmatprep.subr.mxu0 0.0
        %1386 = vmatpush1.msra.mxu0 0.0
        %1387 = vmatprep.subr.mxu0 0.0
        %1388 = vmatpush1.msra.mxu0 0.0
        %1389 = vmatprep.subr.mxu0 0.0
        %1390 = vmatpush1.msra.mxu0 0.0
        %1391 = vmatprep.subr.mxu0 0.0
        %1392 = vmatpush1.msra.mxu0 0.0
        %1393 = vmatprep.subr.mxu0 0.0
        %1394 = vmatpush1.msra.mxu0 0.0
        %1395 = vmatprep.subr.mxu0 0.0
        %1396 = vmatpush1.msra.mxu0 0.0
        %1397 = vmatprep.subr.mxu0 0.0
        %1398 = vmatpush1.msra.mxu0 0.0
        %1399 = vmatprep.subr.mxu0 0.0
        %1400 = vmatpush1.msra.mxu0 0.0
        %1401 = vmatprep.mubr.f32.mxu0 0.0
        %1402 = vmatmul.mubr.f32.gmra.mrb[0].mxu0 %v1239
        %v1403 = vpop.f32.mrb[0].mxu0
        %v1404 = vadd.f32 %v1236, %v1403
        %v1405 = vpop.f32.mrb[0].mxu0
        %1406 = vmatprep.mubr.f32.mxu0 0.0
        %1407 = vmatmul.mubr.f32.gmra.mrb[0].mxu0 %v1242
        %v1408 = vpop.f32.mrb[0].mxu0
        %v1409 = vadd.f32 %v1236, %v1408
        %v1410 = vpop.f32.mrb[0].mxu0
        %1411 = vmatprep.mubr.f32.mxu0 0.0
        %1412 = vmatmul.mubr.f32.gmra.mrb[0].mxu0 %v1245
        %v1413 = vpop.f32.mrb[0].mxu0
        %v1414 = vadd.f32 %v1236, %v1413
        %v1415 = vpop.f32.mrb[0].mxu0
        %1416 = vmatprep.mubr.f32.mxu0 0.0
        %1417 = vmatmul.mubr.f32.gmra.mrb[0].mxu0 %v1248
        %v1418 = vpop.f32.mrb[0].mxu0
        %v1419 = vadd.f32 %v1236, %v1418
        %v1420 = vpop.f32.mrb[0].mxu0
        %1421 = vmatprep.mubr.f32.mxu0 0.0
        %1422 = vmatmul.mubr.f32.gmra.mrb[0].mxu0 %v1251
        %v1423 = vpop.f32.mrb[0].mxu0
        %v1424 = vadd.f32 %v1236, %v1423
        %v1425 = vpop.f32.mrb[0].mxu0
        %1426 = vmatprep.mubr.f32.mxu0 0.0
        %1427 = vmatmul.mubr.f32.gmra.mrb[0].mxu0 %v1254
        %v1428 = vpop.f32.mrb[0].mxu0
        %v1429 = vadd.f32 %v1236, %v1428
        %v1430 = vpop.f32.mrb[0].mxu0
        %1431 = vmatprep.mubr.f32.mxu0 0.0
        %1432 = vmatmul.mubr.f32.gmra.mrb[0].mxu0 %v1257
        %v1433 = vpop.f32.mrb[0].mxu0
        %v1434 = vadd.f32 %v1236, %v1433
        %v1435 = vpop.f32.mrb[0].mxu0
        %1436 = vmatprep.mubr.f32.mxu0 0.0
        %1437 = vmatmul.mubr.f32.gmra.mrb[0].mxu0 %v1260
        %v1438 = vpop.f32.mrb[0].mxu0
        %v1439 = vadd.f32 %v1236, %v1438
        %v1440 = vpop.f32.mrb[0].mxu0
        %1441 = vmatprep.mubr.f32.mxu0 0.0
        %1442 = vmatmul.mubr.f32.gmra.mrb[0].mxu0 %v1263
        %v1443 = vpop.f32.mrb[0].mxu0
        %v1444 = vadd.f32 %v1236, %v1443
        %v1445 = vpop.f32.mrb[0].mxu0
        %1446 = vmatprep.mubr.f32.mxu0 0.0
        %1447 = vmatmul.mubr.f32.gmra.mrb[0].mxu0 %v1266
        %v1448 = vpop.f32.mrb[0].mxu0
        %v1449 = vadd.f32 %v1236, %v1448
        %v1450 = vpop.f32.mrb[0].mxu0
        %1451 = vmatprep.mubr.f32.mxu0 0.0
        %1452 = vmatmul.mubr.f32.gmra.mrb[0].mxu0 %v1269
        %v1453 = vpop.f32.mrb[0].mxu0
        %v1454 = vadd.f32 %v1236, %v1453
        %v1455 = vpop.f32.mrb[0].mxu0
        %1456 = vmatprep.mubr.f32.mxu0 0.0
        %1457 = vmatmul.mubr.f32.gmra.mrb[0].mxu0 %v1272
        %v1458 = vpop.f32.mrb[0].mxu0
        %v1459 = vadd.f32 %v1236, %v1458
        %v1460 = vpop.f32.mrb[0].mxu0
        %1461 = vmatprep.mubr.f32.mxu0 0.0
        %1462 = vmatmul.mubr.f32.gmra.mrb[0].mxu0 %v1275
        %v1463 = vpop.f32.mrb[0].mxu0
        %v1464 = vadd.f32 %v1236, %v1463
        %v1465 = vpop.f32.mrb[0].mxu0
        %1466 = vmatprep.mubr.f32.mxu0 0.0
        %1467 = vmatmul.mubr.f32.gmra.mrb[0].mxu0 %v1278
        %v1468 = vpop.f32.mrb[0].mxu0
        %v1469 = vadd.f32 %v1236, %v1468
        %v1470 = vpop.f32.mrb[0].mxu0
        %1471 = vmatprep.mubr.f32.mxu0 0.0
        %1472 = vmatmul.mubr.f32.gmra.mrb[0].mxu0 %v1281
        %v1473 = vpop.f32.mrb[0].mxu0
        %v1474 = vadd.f32 %v1236, %v1473
        %v1475 = vpop.f32.mrb[0].mxu0
        %1476 = vmatprep.mubr.f32.mxu0 0.0
        %1477 = vmatmul.mubr.f32.gmra.mrb[0].mxu0 %v1284
        %v1478 = vpop.f32.mrb[0].mxu0
        %v1479 = vadd.f32 %v1236, %v1478
        %v1480 = vpop.f32.mrb[0].mxu0
        %1481 = vmatprep.mubr.f32.mxu0 0.0
        %1482 = vmatmul.mubr.f32.gmra.mrb[0].mxu0 %v1287
        %v1483 = vpop.f32.mrb[0].mxu0
        %v1484 = vadd.f32 %v1236, %v1483
        %v1485 = vpop.f32.mrb[0].mxu0
        %1486 = vmatprep.mubr.f32.mxu0 0.0
        %1487 = vmatmul.mubr.f32.gmra.mrb[0].mxu0 %v1290
        %v1488 = vpop.f32.mrb[0].mxu0
        %v1489 = vadd.f32 %v1236, %v1488
        %v1490 = vpop.f32.mrb[0].mxu0
        %1491 = vmatprep.mubr.f32.mxu0 0.0
        %1492 = vmatmul.mubr.f32.gmra.mrb[0].mxu0 %v1293
        %v1493 = vpop.f32.mrb[0].mxu0
        %v1494 = vadd.f32 %v1236, %v1493
        %v1495 = vpop.f32.mrb[0].mxu0
        %1496 = vmatprep.mubr.f32.mxu0 0.0
        %1497 = vmatmul.mubr.f32.gmra.mrb[0].mxu0 %v1296
        %v1498 = vpop.f32.mrb[0].mxu0
        %v1499 = vadd.f32 %v1236, %v1498
        %v1500 = vpop.f32.mrb[0].mxu0
        %1501 = vmatprep.mubr.f32.mxu0 0.0
        %1502 = vmatmul.mubr.f32.gmra.mrb[0].mxu0 %v1299
        %v1503 = vpop.f32.mrb[0].mxu0
        %v1504 = vadd.f32 %v1236, %v1503
        %v1505 = vpop.f32.mrb[0].mxu0
        %1506 = vmatprep.mubr.f32.mxu0 0.0
        %1507 = vmatmul.mubr.f32.gmra.mrb[0].mxu0 %v1302
        %v1508 = vpop.f32.mrb[0].mxu0
        %v1509 = vadd.f32 %v1236, %v1508
        %v1510 = vpop.f32.mrb[0].mxu0
        %1511 = vmatprep.mubr.f32.mxu0 0.0
        %1512 = vmatmul.mubr.f32.gmra.mrb[0].mxu0 %v1305
        %v1513 = vpop.f32.mrb[0].mxu0
        %v1514 = vadd.f32 %v1236, %v1513
        %v1515 = vpop.f32.mrb[0].mxu0
        %1516 = vmatprep.mubr.f32.mxu0 0.0
        %1517 = vmatmul.mubr.f32.gmra.mrb[0].mxu0 %v1308
        %v1518 = vpop.f32.mrb[0].mxu0
        %v1519 = vadd.f32 %v1236, %v1518
        %v1520 = vpop.f32.mrb[0].mxu0
        %1521 = vmatprep.mubr.f32.mxu0 0.0
        %1522 = vmatmul.mubr.f32.gmra.mrb[0].mxu0 %v1311
        %v1523 = vpop.f32.mrb[0].mxu0
        %v1524 = vadd.f32 %v1236, %v1523
        %v1525 = vpop.f32.mrb[0].mxu0
        %1526 = vmatprep.mubr.f32.mxu0 0.0
        %1527 = vmatmul.mubr.f32.gmra.mrb[0].mxu0 %v1314
        %v1528 = vpop.f32.mrb[0].mxu0
        %v1529 = vadd.f32 %v1236, %v1528
        %v1530 = vpop.f32.mrb[0].mxu0
        %1531 = vmatprep.mubr.f32.mxu0 0.0
        %1532 = vmatmul.mubr.f32.gmra.mrb[0].mxu0 %v1317
        %v1533 = vpop.f32.mrb[0].mxu0
        %v1534 = vadd.f32 %v1236, %v1533
        %v1535 = vpop.f32.mrb[0].mxu0
        %1536 = vmatprep.mubr.f32.mxu0 0.0
        %1537 = vmatmul.mubr.f32.gmra.mrb[0].mxu0 %v1320
        %v1538 = vpop.f32.mrb[0].mxu0
        %v1539 = vadd.f32 %v1236, %v1538
        %v1540 = vpop.f32.mrb[0].mxu0
        %1541 = vmatprep.mubr.f32.mxu0 0.0
        %1542 = vmatmul.mubr.f32.gmra.mrb[0].mxu0 %v1323
        %v1543 = vpop.f32.mrb[0].mxu0
        %v1544 = vadd.f32 %v1236, %v1543
        %v1545 = vpop.f32.mrb[0].mxu0
        %1546 = vmatprep.mubr.f32.mxu0 0.0
        %1547 = vmatmul.mubr.f32.gmra.mrb[0].mxu0 %v1326
        %v1548 = vpop.f32.mrb[0].mxu0
        %v1549 = vadd.f32 %v1236, %v1548
        %v1550 = vpop.f32.mrb[0].mxu0
        %1551 = vmatprep.mubr.f32.mxu0 0.0
        %1552 = vmatmul.mubr.f32.gmra.mrb[0].mxu0 %v1329
        %v1553 = vpop.f32.mrb[0].mxu0
        %v1554 = vadd.f32 %v1236, %v1553
        %v1555 = vpop.f32.mrb[0].mxu0
        %1556 = vmatprep.mubr.f32.mxu0 0.0
        %1557 = vmatmul.mubr.f32.gmra.mrb[0].mxu0 %v1332
        %v1558 = vpop.f32.mrb[0].mxu0
        %v1559 = vadd.f32 %v1236, %v1558
        %v1560 = vpop.f32.mrb[0].mxu0
        %1561 = vdwg.mxu0
        %v1562 = vmax.f32 %v1404, 0.0
        %v1563 = vmax.f32 %v1409, 0.0
        %v1564 = vmax.f32 %v1414, 0.0
        %v1565 = vmax.f32 %v1419, 0.0
        %v1566 = vmax.f32 %v1424, 0.0
        %v1567 = vmax.f32 %v1429, 0.0
        %v1568 = vmax.f32 %v1434, 0.0
        %v1569 = vmax.f32 %v1439, 0.0
        %v1570 = vmax.f32 %v1444, 0.0
        %v1571 = vmax.f32 %v1449, 0.0
        %v1572 = vmax.f32 %v1454, 0.0
        %v1573 = vmax.f32 %v1459, 0.0
        %v1574 = vmax.f32 %v1464, 0.0
        %v1575 = vmax.f32 %v1469, 0.0
        %v1576 = vmax.f32 %v1474, 0.0
        %v1577 = vmax.f32 %v1479, 0.0
        %v1578 = vmax.f32 %v1484, 0.0
        %v1579 = vmax.f32 %v1489, 0.0
        %v1580 = vmax.f32 %v1494, 0.0
        %v1581 = vmax.f32 %v1499, 0.0
        %v1582 = vmax.f32 %v1504, 0.0
        %v1583 = vmax.f32 %v1509, 0.0
        %v1584 = vmax.f32 %v1514, 0.0
        %v1585 = vmax.f32 %v1519, 0.0
        %v1586 = vmax.f32 %v1524, 0.0
        %v1587 = vmax.f32 %v1529, 0.0
        %v1588 = vmax.f32 %v1534, 0.0
        %v1589 = vmax.f32 %v1539, 0.0
        %v1590 = vmax.f32 %v1544, 0.0
        %v1591 = vmax.f32 %v1549, 0.0
        %v1592 = vmax.f32 %v1554, 0.0
        %v1593 = vmax.f32 %v1559, 0.0
        %1594 = vst.msk [vmem:[#allocation2 + $0x200] sm:$0xff] %vm731, %v1562
        %1595 = vst.msk [vmem:[#allocation2 + $0x208] sm:$0xff] %vm731, %v1563
        %1596 = vst.msk [vmem:[#allocation2 + $0x210] sm:$0xff] %vm731, %v1564
        %1597 = vst.msk [vmem:[#allocation2 + $0x218] sm:$0xff] %vm731, %v1565
        %1598 = vst.msk [vmem:[#allocation2 + $0x220] sm:$0xff] %vm731, %v1566
        %1599 = vst.msk [vmem:[#allocation2 + $0x228] sm:$0xff] %vm731, %v1567
        %1600 = vst.msk [vmem:[#allocation2 + $0x230] sm:$0xff] %vm731, %v1568
        %1601 = vst.msk [vmem:[#allocation2 + $0x238] sm:$0xff] %vm731, %v1569
        %1602 = vst.msk [vmem:[#allocation2 + $0x240] sm:$0xff] %vm731, %v1570
        %1603 = vst.msk [vmem:[#allocation2 + $0x248] sm:$0xff] %vm731, %v1571
        %1604 = vst.msk [vmem:[#allocation2 + $0x250] sm:$0xff] %vm731, %v1572
        %1605 = vst.msk [vmem:[#allocation2 + $0x258] sm:$0xff] %vm731, %v1573
        %1606 = vst.msk [vmem:[#allocation2 + $0x260] sm:$0xff] %vm731, %v1574
        %1607 = vst.msk [vmem:[#allocation2 + $0x268] sm:$0xff] %vm731, %v1575
        %1608 = vst.msk [vmem:[#allocation2 + $0x270] sm:$0xff] %vm731, %v1576
        %1609 = vst.msk [vmem:[#allocation2 + $0x278] sm:$0xff] %vm731, %v1577
        %1610 = vst.msk [vmem:[#allocation2 + $0x280] sm:$0xff] %vm731, %v1578
        %1611 = vst.msk [vmem:[#allocation2 + $0x288] sm:$0xff] %vm731, %v1579
        %1612 = vst.msk [vmem:[#allocation2 + $0x290] sm:$0xff] %vm731, %v1580
        %1613 = vst.msk [vmem:[#allocation2 + $0x298] sm:$0xff] %vm731, %v1581
        %1614 = vst.msk [vmem:[#allocation2 + $0x2a0] sm:$0xff] %vm731, %v1582
        %1615 = vst.msk [vmem:[#allocation2 + $0x2a8] sm:$0xff] %vm731, %v1583
        %1616 = vst.msk [vmem:[#allocation2 + $0x2b0] sm:$0xff] %vm731, %v1584
        %1617 = vst.msk [vmem:[#allocation2 + $0x2b8] sm:$0xff] %vm731, %v1585
        %1618 = vst.msk [vmem:[#allocation2 + $0x2c0] sm:$0xff] %vm731, %v1586
        %1619 = vst.msk [vmem:[#allocation2 + $0x2c8] sm:$0xff] %vm731, %v1587
        %1620 = vst.msk [vmem:[#allocation2 + $0x2d0] sm:$0xff] %vm731, %v1588
        %1621 = vst.msk [vmem:[#allocation2 + $0x2d8] sm:$0xff] %vm731, %v1589
        %1622 = vst.msk [vmem:[#allocation2 + $0x2e0] sm:$0xff] %vm731, %v1590
        %1623 = vst.msk [vmem:[#allocation2 + $0x2e8] sm:$0xff] %vm731, %v1591
        %1624 = vst.msk [vmem:[#allocation2 + $0x2f0] sm:$0xff] %vm731, %v1592
        %1625 = vst.msk [vmem:[#allocation2 + $0x2f8] sm:$0xff] %vm731, %v1593
        %v1626 = vld [vmem:[%s329 + $0x300] sm:$0xff]
        %v1627 = vld [vmem:[%s329 + $0x308] sm:$0xff]
        %v1628 = vld [vmem:[%s329 + $0x310] sm:$0xff]
        %v1629 = vld [vmem:[%s329 + $0x318] sm:$0xff]
        %v1630 = vld [vmem:[%s329 + $0x320] sm:$0xff]
        %v1631 = vld [vmem:[%s329 + $0x328] sm:$0xff]
        %v1632 = vld [vmem:[%s329 + $0x330] sm:$0xff]
        %v1633 = vld [vmem:[%s329 + $0x338] sm:$0xff]
        %v1634 = vld [vmem:[%s329 + $0x340] sm:$0xff]
        %v1635 = vld [vmem:[%s329 + $0x348] sm:$0xff]
        %v1636 = vld [vmem:[%s329 + $0x350] sm:$0xff]
        %v1637 = vld [vmem:[%s329 + $0x358] sm:$0xff]
        %v1638 = vld [vmem:[%s329 + $0x360] sm:$0xff]
        %v1639 = vld [vmem:[%s329 + $0x368] sm:$0xff]
        %v1640 = vld [vmem:[%s329 + $0x370] sm:$0xff]
        %v1641 = vld [vmem:[%s329 + $0x378] sm:$0xff]
        %v1642 = vld [vmem:[%s329 + $0x380] sm:$0xff]
        %v1643 = vld [vmem:[%s1] sm:$0xff]
        %v1644 = vld [vmem:[%s1 + $0x8] sm:$0xff]
        %v1645 = vld [vmem:[%s1 + $0x10] sm:$0xff]
        %v1646 = vld [vmem:[%s1 + $0x18] sm:$0x7]
        %v1647 = vld [vmem:[%s2] sm:$0x1]
        %v1649 = vlaneseq
        %v1650 = vshrl.u32 %v1649, 7
        %v1651 = vsub.s32 0, %v1650
        %v1652 = vrot.slane %v1647, %v1651
        %v1655 = vsel %vm373, %v1626, 0
        %v1658 = vsel %vm373, %v1627, 0
        %v1661 = vsel %vm373, %v1628, 0
        %v1664 = vsel %vm373, %v1629, 0
        %v1667 = vsel %vm373, %v1630, 0
        %v1670 = vsel %vm373, %v1631, 0
        %v1673 = vsel %vm373, %v1632, 0
        %v1676 = vsel %vm373, %v1633, 0
        %v1679 = vsel %vm373, %v1634, 0
        %v1682 = vsel %vm373, %v1635, 0
        %v1685 = vsel %vm373, %v1636, 0
        %v1688 = vsel %vm373, %v1637, 0
        %v1691 = vsel %vm373, %v1638, 0
        %v1694 = vsel %vm373, %v1639, 0
        %v1697 = vsel %vm373, %v1640, 0
        %v1700 = vsel %vm373, %v1641, 0
        %v1703 = vsel %vm373, %v1642, 0
        %v1706 = vsel %vm470, %v1646, 0
        %1708 = vmatprep.subr.mxu0 0.0
        %1709 = vmatpush1.msra.mxu0 %v1643
        %1710 = vmatprep.subr.mxu0 0.0
        %1711 = vmatpush1.msra.mxu0 %v1644
        %1712 = vmatprep.subr.mxu0 0.0
        %1713 = vmatpush1.msra.mxu0 %v1645
        %1714 = vmatprep.subr.mxu0 0.0
        %1715 = vmatpush1.msra.mxu0 %v1706
        %1716 = vmatprep.subr.mxu0 0.0
        %1717 = vmatpush1.msra.mxu0 0.0
        %1718 = vmatprep.subr.mxu0 0.0
        %1719 = vmatpush1.msra.mxu0 0.0
        %1720 = vmatprep.subr.mxu0 0.0
        %1721 = vmatpush1.msra.mxu0 0.0
        %1722 = vmatprep.subr.mxu0 0.0
        %1723 = vmatpush1.msra.mxu0 0.0
        %1724 = vmatprep.subr.mxu0 0.0
        %1725 = vmatpush1.msra.mxu0 0.0
        %1726 = vmatprep.subr.mxu0 0.0
        %1727 = vmatpush1.msra.mxu0 0.0
        %1728 = vmatprep.subr.mxu0 0.0
        %1729 = vmatpush1.msra.mxu0 0.0
        %1730 = vmatprep.subr.mxu0 0.0
        %1731 = vmatpush1.msra.mxu0 0.0
        %1732 = vmatprep.subr.mxu0 0.0
        %1733 = vmatpush1.msra.mxu0 0.0
        %1734 = vmatprep.subr.mxu0 0.0
        %1735 = vmatpush1.msra.mxu0 0.0
        %1736 = vmatprep.subr.mxu0 0.0
        %1737 = vmatpush1.msra.mxu0 0.0
        %1738 = vmatprep.subr.mxu0 0.0
        %1739 = vmatpush1.msra.mxu0 0.0
        %1740 = vmatprep.subr.mxu0 0.0
        %1741 = vmatpush1.msra.mxu0 0.0
        %1742 = vmatprep.subr.mxu0 0.0
        %1743 = vmatpush1.msra.mxu0 0.0
        %1744 = vmatprep.subr.mxu0 0.0
        %1745 = vmatpush1.msra.mxu0 0.0
        %1746 = vmatprep.subr.mxu0 0.0
        %1747 = vmatpush1.msra.mxu0 0.0
        %1748 = vmatprep.subr.mxu0 0.0
        %1749 = vmatpush1.msra.mxu0 0.0
        %1750 = vmatprep.subr.mxu0 0.0
        %1751 = vmatpush1.msra.mxu0 0.0
        %1752 = vmatprep.subr.mxu0 0.0
        %1753 = vmatpush1.msra.mxu0 0.0
        %1754 = vmatprep.subr.mxu0 0.0
        %1755 = vmatpush1.msra.mxu0 0.0
        %1756 = vmatprep.subr.mxu0 0.0
        %1757 = vmatpush1.msra.mxu0 0.0
        %1758 = vmatprep.subr.mxu0 0.0
        %1759 = vmatpush1.msra.mxu0 0.0
        %1760 = vmatprep.subr.mxu0 0.0
        %1761 = vmatpush1.msra.mxu0 0.0
        %1762 = vmatprep.subr.mxu0 0.0
        %1763 = vmatpush1.msra.mxu0 0.0
        %1764 = vmatprep.subr.mxu0 0.0
        %1765 = vmatpush1.msra.mxu0 0.0
        %1766 = vmatprep.subr.mxu0 0.0
        %1767 = vmatpush1.msra.mxu0 0.0
        %1768 = vmatprep.subr.mxu0 0.0
        %1769 = vmatpush1.msra.mxu0 0.0
        %1770 = vmatprep.subr.mxu0 0.0
        %1771 = vmatpush1.msra.mxu0 0.0
        %1772 = vmatprep.mubr.f32.mxu0 0.0
        %1773 = vmatmul.mubr.f32.gmra.mrb[0].mxu0 %v1655
        %v1774 = vpop.f32.mrb[0].mxu0
        %v1775 = vadd.f32 %v1652, %v1774
        %v1776 = vpop.f32.mrb[0].mxu0
        %1777 = vmatprep.mubr.f32.mxu0 0.0
        %1778 = vmatmul.mubr.f32.gmra.mrb[0].mxu0 %v1658
        %v1779 = vpop.f32.mrb[0].mxu0
        %v1780 = vadd.f32 %v1652, %v1779
        %v1781 = vpop.f32.mrb[0].mxu0
        %1782 = vmatprep.mubr.f32.mxu0 0.0
        %1783 = vmatmul.mubr.f32.gmra.mrb[0].mxu0 %v1661
        %v1784 = vpop.f32.mrb[0].mxu0
        %v1785 = vadd.f32 %v1652, %v1784
        %v1786 = vpop.f32.mrb[0].mxu0
        %1787 = vmatprep.mubr.f32.mxu0 0.0
        %1788 = vmatmul.mubr.f32.gmra.mrb[0].mxu0 %v1664
        %v1789 = vpop.f32.mrb[0].mxu0
        %v1790 = vadd.f32 %v1652, %v1789
        %v1791 = vpop.f32.mrb[0].mxu0
        %1792 = vmatprep.mubr.f32.mxu0 0.0
        %1793 = vmatmul.mubr.f32.gmra.mrb[0].mxu0 %v1667
        %v1794 = vpop.f32.mrb[0].mxu0
        %v1795 = vadd.f32 %v1652, %v1794
        %v1796 = vpop.f32.mrb[0].mxu0
        %1797 = vmatprep.mubr.f32.mxu0 0.0
        %1798 = vmatmul.mubr.f32.gmra.mrb[0].mxu0 %v1670
        %v1799 = vpop.f32.mrb[0].mxu0
        %v1800 = vadd.f32 %v1652, %v1799
        %v1801 = vpop.f32.mrb[0].mxu0
        %1802 = vmatprep.mubr.f32.mxu0 0.0
        %1803 = vmatmul.mubr.f32.gmra.mrb[0].mxu0 %v1673
        %v1804 = vpop.f32.mrb[0].mxu0
        %v1805 = vadd.f32 %v1652, %v1804
        %v1806 = vpop.f32.mrb[0].mxu0
        %1807 = vmatprep.mubr.f32.mxu0 0.0
        %1808 = vmatmul.mubr.f32.gmra.mrb[0].mxu0 %v1676
        %v1809 = vpop.f32.mrb[0].mxu0
        %v1810 = vadd.f32 %v1652, %v1809
        %v1811 = vpop.f32.mrb[0].mxu0
        %1812 = vmatprep.mubr.f32.mxu0 0.0
        %1813 = vmatmul.mubr.f32.gmra.mrb[0].mxu0 %v1679
        %v1814 = vpop.f32.mrb[0].mxu0
        %v1815 = vadd.f32 %v1652, %v1814
        %v1816 = vpop.f32.mrb[0].mxu0
        %1817 = vmatprep.mubr.f32.mxu0 0.0
        %1818 = vmatmul.mubr.f32.gmra.mrb[0].mxu0 %v1682
        %v1819 = vpop.f32.mrb[0].mxu0
        %v1820 = vadd.f32 %v1652, %v1819
        %v1821 = vpop.f32.mrb[0].mxu0
        %1822 = vmatprep.mubr.f32.mxu0 0.0
        %1823 = vmatmul.mubr.f32.gmra.mrb[0].mxu0 %v1685
        %v1824 = vpop.f32.mrb[0].mxu0
        %v1825 = vadd.f32 %v1652, %v1824
        %v1826 = vpop.f32.mrb[0].mxu0
        %1827 = vmatprep.mubr.f32.mxu0 0.0
        %1828 = vmatmul.mubr.f32.gmra.mrb[0].mxu0 %v1688
        %v1829 = vpop.f32.mrb[0].mxu0
        %v1830 = vadd.f32 %v1652, %v1829
        %v1831 = vpop.f32.mrb[0].mxu0
        %1832 = vmatprep.mubr.f32.mxu0 0.0
        %1833 = vmatmul.mubr.f32.gmra.mrb[0].mxu0 %v1691
        %v1834 = vpop.f32.mrb[0].mxu0
        %v1835 = vadd.f32 %v1652, %v1834
        %v1836 = vpop.f32.mrb[0].mxu0
        %1837 = vmatprep.mubr.f32.mxu0 0.0
        %1838 = vmatmul.mubr.f32.gmra.mrb[0].mxu0 %v1694
        %v1839 = vpop.f32.mrb[0].mxu0
        %v1840 = vadd.f32 %v1652, %v1839
        %v1841 = vpop.f32.mrb[0].mxu0
        %1842 = vmatprep.mubr.f32.mxu0 0.0
        %1843 = vmatmul.mubr.f32.gmra.mrb[0].mxu0 %v1697
        %v1844 = vpop.f32.mrb[0].mxu0
        %v1845 = vadd.f32 %v1652, %v1844
        %v1846 = vpop.f32.mrb[0].mxu0
        %1847 = vmatprep.mubr.f32.mxu0 0.0
        %1848 = vmatmul.mubr.f32.gmra.mrb[0].mxu0 %v1700
        %v1849 = vpop.f32.mrb[0].mxu0
        %v1850 = vadd.f32 %v1652, %v1849
        %v1851 = vpop.f32.mrb[0].mxu0
        %1852 = vmatprep.mubr.f32.mxu0 0.0
        %1853 = vmatmul.mubr.f32.gmra.mrb[0].mxu0 %v1703
        %v1854 = vpop.f32.mrb[0].mxu0
        %v1855 = vadd.f32 %v1652, %v1854
        %v1856 = vpop.f32.mrb[0].mxu0
        %1857 = vdwg.mxu0
        %v1858 = vmax.f32 %v1775, 0.0
        %v1859 = vmax.f32 %v1780, 0.0
        %v1860 = vmax.f32 %v1785, 0.0
        %v1861 = vmax.f32 %v1790, 0.0
        %v1862 = vmax.f32 %v1795, 0.0
        %v1863 = vmax.f32 %v1800, 0.0
        %v1864 = vmax.f32 %v1805, 0.0
        %v1865 = vmax.f32 %v1810, 0.0
        %v1866 = vmax.f32 %v1815, 0.0
        %v1867 = vmax.f32 %v1820, 0.0
        %v1868 = vmax.f32 %v1825, 0.0
        %v1869 = vmax.f32 %v1830, 0.0
        %v1870 = vmax.f32 %v1835, 0.0
        %v1871 = vmax.f32 %v1840, 0.0
        %v1872 = vmax.f32 %v1845, 0.0
        %v1873 = vmax.f32 %v1850, 0.0
        %v1874 = vmax.f32 %v1855, 0.0
        %1875 = vst.msk [vmem:[#allocation2 + $0x300] sm:$0xff] %vm731, %v1858
        %1876 = vst.msk [vmem:[#allocation2 + $0x308] sm:$0xff] %vm731, %v1859
        %1877 = vst.msk [vmem:[#allocation2 + $0x310] sm:$0xff] %vm731, %v1860
        %1878 = vst.msk [vmem:[#allocation2 + $0x318] sm:$0xff] %vm731, %v1861
        %1879 = vst.msk [vmem:[#allocation2 + $0x320] sm:$0xff] %vm731, %v1862
        %1880 = vst.msk [vmem:[#allocation2 + $0x328] sm:$0xff] %vm731, %v1863
        %1881 = vst.msk [vmem:[#allocation2 + $0x330] sm:$0xff] %vm731, %v1864
        %1882 = vst.msk [vmem:[#allocation2 + $0x338] sm:$0xff] %vm731, %v1865
        %1883 = vst.msk [vmem:[#allocation2 + $0x340] sm:$0xff] %vm731, %v1866
        %1884 = vst.msk [vmem:[#allocation2 + $0x348] sm:$0xff] %vm731, %v1867
        %1885 = vst.msk [vmem:[#allocation2 + $0x350] sm:$0xff] %vm731, %v1868
        %1886 = vst.msk [vmem:[#allocation2 + $0x358] sm:$0xff] %vm731, %v1869
        %1887 = vst.msk [vmem:[#allocation2 + $0x360] sm:$0xff] %vm731, %v1870
        %1888 = vst.msk [vmem:[#allocation2 + $0x368] sm:$0xff] %vm731, %v1871
        %1889 = vst.msk [vmem:[#allocation2 + $0x370] sm:$0xff] %vm731, %v1872
        %1890 = vst.msk [vmem:[#allocation2 + $0x378] sm:$0xff] %vm731, %v1873
        %1891 = vst.msk [vmem:[#allocation2 + $0x380] sm:$0xff] %vm731, %v1874
        %v1892 = vld [vmem:[#allocation2] ss:$2 sm:$0xff]
        %s1893 = scalar_lea.vmem [#allocation2], 16
        %v1894 = vld [vmem:[%s1893] ss:$2 sm:$0x7f]
        %s1895 = scalar_lea.vmem [#allocation2], 1
        %v1896 = vld [vmem:[%s1895] ss:$2 sm:$0xff]
        %s1897 = scalar_lea.vmem [#allocation2], 17
        %v1898 = vld [vmem:[%s1897] ss:$2 sm:$0x7f]
        %s1899 = scalar_lea.vmem [#allocation2], 30
        %v1900 = vld [vmem:[%s1899] ss:$2 sm:$0xff]
        %s1901 = scalar_lea.vmem [#allocation2], 46
        %v1902 = vld [vmem:[%s1901] ss:$2 sm:$0x7f]
        %s1903 = scalar_lea.vmem [#allocation2], 31
        %v1904 = vld [vmem:[%s1903] ss:$2 sm:$0xff]
        %s1905 = scalar_lea.vmem [#allocation2], 47
        %v1906 = vld [vmem:[%s1905] ss:$2 sm:$0x7f]
        %v1907 = vmax.f32 %v1892, %v1896
        %v1908 = vmax.f32 %v1894, %v1898
        %v1909 = vmax.f32 %v1900, %v1904
        %v1910 = vmax.f32 %v1902, %v1906
        %v1911 = vmax.f32 %v1907, %v1909
        %v1912 = vmax.f32 %v1908, %v1910
        %1913 = vst.msk [vmem:[#allocation3] sm:$0xff] %vm731, %v1911
        %vm1914 = vcmask 522240
        %1915 = vst.msk [vmem:[#allocation3 + $0x8] sm:$0x7f] %vm1914, %v1912
        %s1916 = scalar_lea.vmem [#allocation2], 60
        %v1917 = vld [vmem:[%s1916] ss:$2 sm:$0xff]
        %s1918 = scalar_lea.vmem [#allocation2], 76
        %v1919 = vld [vmem:[%s1918] ss:$2 sm:$0x7f]
        %s1920 = scalar_lea.vmem [#allocation2], 61
        %v1921 = vld [vmem:[%s1920] ss:$2 sm:$0xff]
        %s1922 = scalar_lea.vmem [#allocation2], 77
        %v1923 = vld [vmem:[%s1922] ss:$2 sm:$0x7f]
        %s1924 = scalar_lea.vmem [#allocation2], 90
        %v1925 = vld [vmem:[%s1924] ss:$2 sm:$0xff]
        %s1926 = scalar_lea.vmem [#allocation2], 106
        %v1927 = vld [vmem:[%s1926] ss:$2 sm:$0x7f]
        %s1928 = scalar_lea.vmem [#allocation2], 91
        %v1929 = vld [vmem:[%s1928] ss:$2 sm:$0xff]
        %s1930 = scalar_lea.vmem [#allocation2], 107
        %v1931 = vld [vmem:[%s1930] ss:$2 sm:$0x7f]
        %v1932 = vmax.f32 %v1917, %v1921
        %v1933 = vmax.f32 %v1919, %v1923
        %v1934 = vmax.f32 %v1925, %v1929
        %v1935 = vmax.f32 %v1927, %v1931
        %v1936 = vmax.f32 %v1932, %v1934
        %v1937 = vmax.f32 %v1933, %v1935
        %1938 = vst.msk [vmem:[#allocation3 + $0xf] sm:$0xff] %vm731, %v1936
        %1939 = vst.msk [vmem:[#allocation3 + $0x17] sm:$0x7f] %vm1914, %v1937
        %s1940 = scalar_lea.vmem [#allocation2], 120
        %v1941 = vld [vmem:[%s1940] ss:$2 sm:$0xff]
        %s1942 = scalar_lea.vmem [#allocation2], 136
        %v1943 = vld [vmem:[%s1942] ss:$2 sm:$0x7f]
        %s1944 = scalar_lea.vmem [#allocation2], 121
        %v1945 = vld [vmem:[%s1944] ss:$2 sm:$0xff]
        %s1946 = scalar_lea.vmem [#allocation2], 137
        %v1947 = vld [vmem:[%s1946] ss:$2 sm:$0x7f]
        %s1948 = scalar_lea.vmem [#allocation2], 150
        %v1949 = vld [vmem:[%s1948] ss:$2 sm:$0xff]
        %s1950 = scalar_lea.vmem [#allocation2], 166
        %v1951 = vld [vmem:[%s1950] ss:$2 sm:$0x7f]
        %s1952 = scalar_lea.vmem [#allocation2], 151
        %v1953 = vld [vmem:[%s1952] ss:$2 sm:$0xff]
        %s1954 = scalar_lea.vmem [#allocation2], 167
        %v1955 = vld [vmem:[%s1954] ss:$2 sm:$0x7f]
        %v1956 = vmax.f32 %v1941, %v1945
        %v1957 = vmax.f32 %v1943, %v1947
        %v1958 = vmax.f32 %v1949, %v1953
        %v1959 = vmax.f32 %v1951, %v1955
        %v1960 = vmax.f32 %v1956, %v1958
        %v1961 = vmax.f32 %v1957, %v1959
        %1962 = vst.msk [vmem:[#allocation3 + $0x1e] sm:$0xff] %vm731, %v1960
        %1963 = vst.msk [vmem:[#allocation3 + $0x26] sm:$0x7f] %vm1914, %v1961
        %s1964 = scalar_lea.vmem [#allocation2], 180
        %v1965 = vld [vmem:[%s1964] ss:$2 sm:$0xff]
        %s1966 = scalar_lea.vmem [#allocation2], 196
        %v1967 = vld [vmem:[%s1966] ss:$2 sm:$0x7f]
        %s1968 = scalar_lea.vmem [#allocation2], 181
        %v1969 = vld [vmem:[%s1968] ss:$2 sm:$0xff]
        %s1970 = scalar_lea.vmem [#allocation2], 197
        %v1971 = vld [vmem:[%s1970] ss:$2 sm:$0x7f]
        %s1972 = scalar_lea.vmem [#allocation2], 210
        %v1973 = vld [vmem:[%s1972] ss:$2 sm:$0xff]
        %s1974 = scalar_lea.vmem [#allocation2], 226
        %v1975 = vld [vmem:[%s1974] ss:$2 sm:$0x7f]
        %s1976 = scalar_lea.vmem [#allocation2], 211
        %v1977 = vld [vmem:[%s1976] ss:$2 sm:$0xff]
        %s1978 = scalar_lea.vmem [#allocation2], 227
        %v1979 = vld [vmem:[%s1978] ss:$2 sm:$0x7f]
        %v1980 = vmax.f32 %v1965, %v1969
        %v1981 = vmax.f32 %v1967, %v1971
        %v1982 = vmax.f32 %v1973, %v1977
        %v1983 = vmax.f32 %v1975, %v1979
        %v1984 = vmax.f32 %v1980, %v1982
        %v1985 = vmax.f32 %v1981, %v1983
        %1986 = vst.msk [vmem:[#allocation3 + $0x2d] sm:$0xff] %vm731, %v1984
        %1987 = vst.msk [vmem:[#allocation3 + $0x35] sm:$0x7f] %vm1914, %v1985
        %s1988 = scalar_lea.vmem [#allocation2], 240
        %v1989 = vld [vmem:[%s1988] ss:$2 sm:$0xff]
        %s1990 = scalar_lea.vmem [#allocation2], 256
        %v1991 = vld [vmem:[%s1990] ss:$2 sm:$0x7f]
        %s1992 = scalar_lea.vmem [#allocation2], 241
        %v1993 = vld [vmem:[%s1992] ss:$2 sm:$0xff]
        %s1994 = scalar_lea.vmem [#allocation2], 257
        %v1995 = vld [vmem:[%s1994] ss:$2 sm:$0x7f]
        %s1996 = scalar_lea.vmem [#allocation2], 270
        %v1997 = vld [vmem:[%s1996] ss:$2 sm:$0xff]
        %s1998 = scalar_lea.vmem [#allocation2], 286
        %v1999 = vld [vmem:[%s1998] ss:$2 sm:$0x7f]
        %s2000 = scalar_lea.vmem [#allocation2], 271
        %v2001 = vld [vmem:[%s2000] ss:$2 sm:$0xff]
        %s2002 = scalar_lea.vmem [#allocation2], 287
        %v2003 = vld [vmem:[%s2002] ss:$2 sm:$0x7f]
        %v2004 = vmax.f32 %v1989, %v1993
        %v2005 = vmax.f32 %v1991, %v1995
        %v2006 = vmax.f32 %v1997, %v2001
        %v2007 = vmax.f32 %v1999, %v2003
        %v2008 = vmax.f32 %v2004, %v2006
        %v2009 = vmax.f32 %v2005, %v2007
        %2010 = vst.msk [vmem:[#allocation3 + $0x3c] sm:$0xff] %vm731, %v2008
        %2011 = vst.msk [vmem:[#allocation3 + $0x44] sm:$0x7f] %vm1914, %v2009
        %s2012 = scalar_lea.vmem [#allocation2], 300
        %v2013 = vld [vmem:[%s2012] ss:$2 sm:$0xff]
        %s2014 = scalar_lea.vmem [#allocation2], 316
        %v2015 = vld [vmem:[%s2014] ss:$2 sm:$0x7f]
        %s2016 = scalar_lea.vmem [#allocation2], 301
        %v2017 = vld [vmem:[%s2016] ss:$2 sm:$0xff]
        %s2018 = scalar_lea.vmem [#allocation2], 317
        %v2019 = vld [vmem:[%s2018] ss:$2 sm:$0x7f]
        %s2020 = scalar_lea.vmem [#allocation2], 330
        %v2021 = vld [vmem:[%s2020] ss:$2 sm:$0xff]
        %s2022 = scalar_lea.vmem [#allocation2], 346
        %v2023 = vld [vmem:[%s2022] ss:$2 sm:$0x7f]
        %s2024 = scalar_lea.vmem [#allocation2], 331
        %v2025 = vld [vmem:[%s2024] ss:$2 sm:$0xff]
        %s2026 = scalar_lea.vmem [#allocation2], 347
        %v2027 = vld [vmem:[%s2026] ss:$2 sm:$0x7f]
        %v2028 = vmax.f32 %v2013, %v2017
        %v2029 = vmax.f32 %v2015, %v2019
        %v2030 = vmax.f32 %v2021, %v2025
        %v2031 = vmax.f32 %v2023, %v2027
        %v2032 = vmax.f32 %v2028, %v2030
        %v2033 = vmax.f32 %v2029, %v2031
        %2034 = vst.msk [vmem:[#allocation3 + $0x4b] sm:$0xff] %vm731, %v2032
        %2035 = vst.msk [vmem:[#allocation3 + $0x53] sm:$0x7f] %vm1914, %v2033
        %s2036 = scalar_lea.vmem [#allocation2], 360
        %v2037 = vld [vmem:[%s2036] ss:$2 sm:$0xff]
        %s2038 = scalar_lea.vmem [#allocation2], 376
        %v2039 = vld [vmem:[%s2038] ss:$2 sm:$0x7f]
        %s2040 = scalar_lea.vmem [#allocation2], 361
        %v2041 = vld [vmem:[%s2040] ss:$2 sm:$0xff]
        %s2042 = scalar_lea.vmem [#allocation2], 377
        %v2043 = vld [vmem:[%s2042] ss:$2 sm:$0x7f]
        %s2044 = scalar_lea.vmem [#allocation2], 390
        %v2045 = vld [vmem:[%s2044] ss:$2 sm:$0xff]
        %s2046 = scalar_lea.vmem [#allocation2], 406
        %v2047 = vld [vmem:[%s2046] ss:$2 sm:$0x7f]
        %s2048 = scalar_lea.vmem [#allocation2], 391
        %v2049 = vld [vmem:[%s2048] ss:$2 sm:$0xff]
        %s2050 = scalar_lea.vmem [#allocation2], 407
        %v2051 = vld [vmem:[%s2050] ss:$2 sm:$0x7f]
        %v2052 = vmax.f32 %v2037, %v2041
        %v2053 = vmax.f32 %v2039, %v2043
        %v2054 = vmax.f32 %v2045, %v2049
        %v2055 = vmax.f32 %v2047, %v2051
        %v2056 = vmax.f32 %v2052, %v2054
        %v2057 = vmax.f32 %v2053, %v2055
        %2058 = vst.msk [vmem:[#allocation3 + $0x5a] sm:$0xff] %vm731, %v2056
        %2059 = vst.msk [vmem:[#allocation3 + $0x62] sm:$0x7f] %vm1914, %v2057
        %s2060 = scalar_lea.vmem [#allocation2], 420
        %v2061 = vld [vmem:[%s2060] ss:$2 sm:$0xff]
        %s2062 = scalar_lea.vmem [#allocation2], 436
        %v2063 = vld [vmem:[%s2062] ss:$2 sm:$0x7f]
        %s2064 = scalar_lea.vmem [#allocation2], 421
        %v2065 = vld [vmem:[%s2064] ss:$2 sm:$0xff]
        %s2066 = scalar_lea.vmem [#allocation2], 437
        %v2067 = vld [vmem:[%s2066] ss:$2 sm:$0x7f]
        %s2068 = scalar_lea.vmem [#allocation2], 450
        %v2069 = vld [vmem:[%s2068] ss:$2 sm:$0xff]
        %s2070 = scalar_lea.vmem [#allocation2], 466
        %v2071 = vld [vmem:[%s2070] ss:$2 sm:$0x7f]
        %s2072 = scalar_lea.vmem [#allocation2], 451
        %v2073 = vld [vmem:[%s2072] ss:$2 sm:$0xff]
        %s2074 = scalar_lea.vmem [#allocation2], 467
        %v2075 = vld [vmem:[%s2074] ss:$2 sm:$0x7f]
        %v2076 = vmax.f32 %v2061, %v2065
        %v2077 = vmax.f32 %v2063, %v2067
        %v2078 = vmax.f32 %v2069, %v2073
        %v2079 = vmax.f32 %v2071, %v2075
        %v2080 = vmax.f32 %v2076, %v2078
        %v2081 = vmax.f32 %v2077, %v2079
        %2082 = vst.msk [vmem:[#allocation3 + $0x69] sm:$0xff] %vm731, %v2080
        %2083 = vst.msk [vmem:[#allocation3 + $0x71] sm:$0x7f] %vm1914, %v2081
        %s2084 = scalar_lea.vmem [#allocation2], 480
        %v2085 = vld [vmem:[%s2084] ss:$2 sm:$0xff]
        %s2086 = scalar_lea.vmem [#allocation2], 496
        %v2087 = vld [vmem:[%s2086] ss:$2 sm:$0x7f]
        %s2088 = scalar_lea.vmem [#allocation2], 481
        %v2089 = vld [vmem:[%s2088] ss:$2 sm:$0xff]
        %s2090 = scalar_lea.vmem [#allocation2], 497
        %v2091 = vld [vmem:[%s2090] ss:$2 sm:$0x7f]
        %s2092 = scalar_lea.vmem [#allocation2], 510
        %v2093 = vld [vmem:[%s2092] ss:$2 sm:$0xff]
        %s2094 = scalar_lea.vmem [#allocation2], 526
        %v2095 = vld [vmem:[%s2094] ss:$2 sm:$0x7f]
        %s2096 = scalar_lea.vmem [#allocation2], 511
        %v2097 = vld [vmem:[%s2096] ss:$2 sm:$0xff]
        %s2098 = scalar_lea.vmem [#allocation2], 527
        %v2099 = vld [vmem:[%s2098] ss:$2 sm:$0x7f]
        %v2100 = vmax.f32 %v2085, %v2089
        %v2101 = vmax.f32 %v2087, %v2091
        %v2102 = vmax.f32 %v2093, %v2097
        %v2103 = vmax.f32 %v2095, %v2099
        %v2104 = vmax.f32 %v2100, %v2102
        %v2105 = vmax.f32 %v2101, %v2103
        %2106 = vst.msk [vmem:[#allocation3 + $0x78] sm:$0xff] %vm731, %v2104
        %2107 = vst.msk [vmem:[#allocation3 + $0x80] sm:$0x7f] %vm1914, %v2105
        %s2108 = scalar_lea.vmem [#allocation2], 540
        %v2109 = vld [vmem:[%s2108] ss:$2 sm:$0xff]
        %s2110 = scalar_lea.vmem [#allocation2], 556
        %v2111 = vld [vmem:[%s2110] ss:$2 sm:$0x7f]
        %s2112 = scalar_lea.vmem [#allocation2], 541
        %v2113 = vld [vmem:[%s2112] ss:$2 sm:$0xff]
        %s2114 = scalar_lea.vmem [#allocation2], 557
        %v2115 = vld [vmem:[%s2114] ss:$2 sm:$0x7f]
        %s2116 = scalar_lea.vmem [#allocation2], 570
        %v2117 = vld [vmem:[%s2116] ss:$2 sm:$0xff]
        %s2118 = scalar_lea.vmem [#allocation2], 586
        %v2119 = vld [vmem:[%s2118] ss:$2 sm:$0x7f]
        %s2120 = scalar_lea.vmem [#allocation2], 571
        %v2121 = vld [vmem:[%s2120] ss:$2 sm:$0xff]
        %s2122 = scalar_lea.vmem [#allocation2], 587
        %v2123 = vld [vmem:[%s2122] ss:$2 sm:$0x7f]
        %v2124 = vmax.f32 %v2109, %v2113
        %v2125 = vmax.f32 %v2111, %v2115
        %v2126 = vmax.f32 %v2117, %v2121
        %v2127 = vmax.f32 %v2119, %v2123
        %v2128 = vmax.f32 %v2124, %v2126
        %v2129 = vmax.f32 %v2125, %v2127
        %2130 = vst.msk [vmem:[#allocation3 + $0x87] sm:$0xff] %vm731, %v2128
        %2131 = vst.msk [vmem:[#allocation3 + $0x8f] sm:$0x7f] %vm1914, %v2129
        %s2132 = scalar_lea.vmem [#allocation2], 600
        %v2133 = vld [vmem:[%s2132] ss:$2 sm:$0xff]
        %s2134 = scalar_lea.vmem [#allocation2], 616
        %v2135 = vld [vmem:[%s2134] ss:$2 sm:$0x7f]
        %s2136 = scalar_lea.vmem [#allocation2], 601
        %v2137 = vld [vmem:[%s2136] ss:$2 sm:$0xff]
        %s2138 = scalar_lea.vmem [#allocation2], 617
        %v2139 = vld [vmem:[%s2138] ss:$2 sm:$0x7f]
        %s2140 = scalar_lea.vmem [#allocation2], 630
        %v2141 = vld [vmem:[%s2140] ss:$2 sm:$0xff]
        %s2142 = scalar_lea.vmem [#allocation2], 646
        %v2143 = vld [vmem:[%s2142] ss:$2 sm:$0x7f]
        %s2144 = scalar_lea.vmem [#allocation2], 631
        %v2145 = vld [vmem:[%s2144] ss:$2 sm:$0xff]
        %s2146 = scalar_lea.vmem [#allocation2], 647
        %v2147 = vld [vmem:[%s2146] ss:$2 sm:$0x7f]
        %v2148 = vmax.f32 %v2133, %v2137
        %v2149 = vmax.f32 %v2135, %v2139
        %v2150 = vmax.f32 %v2141, %v2145
        %v2151 = vmax.f32 %v2143, %v2147
        %v2152 = vmax.f32 %v2148, %v2150
        %v2153 = vmax.f32 %v2149, %v2151
        %2154 = vst.msk [vmem:[#allocation3 + $0x96] sm:$0xff] %vm731, %v2152
        %2155 = vst.msk [vmem:[#allocation3 + $0x9e] sm:$0x7f] %vm1914, %v2153
        %s2156 = scalar_lea.vmem [#allocation2], 660
        %v2157 = vld [vmem:[%s2156] ss:$2 sm:$0xff]
        %s2158 = scalar_lea.vmem [#allocation2], 676
        %v2159 = vld [vmem:[%s2158] ss:$2 sm:$0x7f]
        %s2160 = scalar_lea.vmem [#allocation2], 661
        %v2161 = vld [vmem:[%s2160] ss:$2 sm:$0xff]
        %s2162 = scalar_lea.vmem [#allocation2], 677
        %v2163 = vld [vmem:[%s2162] ss:$2 sm:$0x7f]
        %s2164 = scalar_lea.vmem [#allocation2], 690
        %v2165 = vld [vmem:[%s2164] ss:$2 sm:$0xff]
        %s2166 = scalar_lea.vmem [#allocation2], 706
        %v2167 = vld [vmem:[%s2166] ss:$2 sm:$0x7f]
        %s2168 = scalar_lea.vmem [#allocation2], 691
        %v2169 = vld [vmem:[%s2168] ss:$2 sm:$0xff]
        %s2170 = scalar_lea.vmem [#allocation2], 707
        %v2171 = vld [vmem:[%s2170] ss:$2 sm:$0x7f]
        %v2172 = vmax.f32 %v2157, %v2161
        %v2173 = vmax.f32 %v2159, %v2163
        %v2174 = vmax.f32 %v2165, %v2169
        %v2175 = vmax.f32 %v2167, %v2171
        %v2176 = vmax.f32 %v2172, %v2174
        %v2177 = vmax.f32 %v2173, %v2175
        %2178 = vst.msk [vmem:[#allocation3 + $0xa5] sm:$0xff] %vm731, %v2176
        %2179 = vst.msk [vmem:[#allocation3 + $0xad] sm:$0x7f] %vm1914, %v2177
        %s2180 = scalar_lea.vmem [#allocation2], 720
        %v2181 = vld [vmem:[%s2180] ss:$2 sm:$0xff]
        %s2182 = scalar_lea.vmem [#allocation2], 736
        %v2183 = vld [vmem:[%s2182] ss:$2 sm:$0x7f]
        %s2184 = scalar_lea.vmem [#allocation2], 721
        %v2185 = vld [vmem:[%s2184] ss:$2 sm:$0xff]
        %s2186 = scalar_lea.vmem [#allocation2], 737
        %v2187 = vld [vmem:[%s2186] ss:$2 sm:$0x7f]
        %s2188 = scalar_lea.vmem [#allocation2], 750
        %v2189 = vld [vmem:[%s2188] ss:$2 sm:$0xff]
        %s2190 = scalar_lea.vmem [#allocation2], 766
        %v2191 = vld [vmem:[%s2190] ss:$2 sm:$0x7f]
        %s2192 = scalar_lea.vmem [#allocation2], 751
        %v2193 = vld [vmem:[%s2192] ss:$2 sm:$0xff]
        %s2194 = scalar_lea.vmem [#allocation2], 767
        %v2195 = vld [vmem:[%s2194] ss:$2 sm:$0x7f]
        %v2196 = vmax.f32 %v2181, %v2185
        %v2197 = vmax.f32 %v2183, %v2187
        %v2198 = vmax.f32 %v2189, %v2193
        %v2199 = vmax.f32 %v2191, %v2195
        %v2200 = vmax.f32 %v2196, %v2198
        %v2201 = vmax.f32 %v2197, %v2199
        %2202 = vst.msk [vmem:[#allocation3 + $0xb4] sm:$0xff] %vm731, %v2200
        %2203 = vst.msk [vmem:[#allocation3 + $0xbc] sm:$0x7f] %vm1914, %v2201
        %s2204 = scalar_lea.vmem [#allocation2], 780
        %v2205 = vld [vmem:[%s2204] ss:$2 sm:$0xff]
        %s2206 = scalar_lea.vmem [#allocation2], 796
        %v2207 = vld [vmem:[%s2206] ss:$2 sm:$0x7f]
        %s2208 = scalar_lea.vmem [#allocation2], 781
        %v2209 = vld [vmem:[%s2208] ss:$2 sm:$0xff]
        %s2210 = scalar_lea.vmem [#allocation2], 797
        %v2211 = vld [vmem:[%s2210] ss:$2 sm:$0x7f]
        %s2212 = scalar_lea.vmem [#allocation2], 810
        %v2213 = vld [vmem:[%s2212] ss:$2 sm:$0xff]
        %s2214 = scalar_lea.vmem [#allocation2], 826
        %v2215 = vld [vmem:[%s2214] ss:$2 sm:$0x7f]
        %s2216 = scalar_lea.vmem [#allocation2], 811
        %v2217 = vld [vmem:[%s2216] ss:$2 sm:$0xff]
        %s2218 = scalar_lea.vmem [#allocation2], 827
        %v2219 = vld [vmem:[%s2218] ss:$2 sm:$0x7f]
        %v2220 = vmax.f32 %v2205, %v2209
        %v2221 = vmax.f32 %v2207, %v2211
        %v2222 = vmax.f32 %v2213, %v2217
        %v2223 = vmax.f32 %v2215, %v2219
        %v2224 = vmax.f32 %v2220, %v2222
        %v2225 = vmax.f32 %v2221, %v2223
        %2226 = vst.msk [vmem:[#allocation3 + $0xc3] sm:$0xff] %vm731, %v2224
        %2227 = vst.msk [vmem:[#allocation3 + $0xcb] sm:$0x7f] %vm1914, %v2225
        %s2228 = scalar_lea.vmem [#allocation2], 840
        %v2229 = vld [vmem:[%s2228] ss:$2 sm:$0xff]
        %s2230 = scalar_lea.vmem [#allocation2], 856
        %v2231 = vld [vmem:[%s2230] ss:$2 sm:$0x7f]
        %s2232 = scalar_lea.vmem [#allocation2], 841
        %v2233 = vld [vmem:[%s2232] ss:$2 sm:$0xff]
        %s2234 = scalar_lea.vmem [#allocation2], 857
        %v2235 = vld [vmem:[%s2234] ss:$2 sm:$0x7f]
        %s2236 = scalar_lea.vmem [#allocation2], 870
        %v2237 = vld [vmem:[%s2236] ss:$2 sm:$0xff]
        %s2238 = scalar_lea.vmem [#allocation2], 886
        %v2239 = vld [vmem:[%s2238] ss:$2 sm:$0x7f]
        %s2240 = scalar_lea.vmem [#allocation2], 871
        %v2241 = vld [vmem:[%s2240] ss:$2 sm:$0xff]
        %s2242 = scalar_lea.vmem [#allocation2], 887
        %v2243 = vld [vmem:[%s2242] ss:$2 sm:$0x7f]
        %v2244 = vmax.f32 %v2229, %v2233
        %v2245 = vmax.f32 %v2231, %v2235
        %v2246 = vmax.f32 %v2237, %v2241
        %v2247 = vmax.f32 %v2239, %v2243
        %v2248 = vmax.f32 %v2244, %v2246
        %v2249 = vmax.f32 %v2245, %v2247
        %2250 = vst.msk [vmem:[#allocation3 + $0xd2] sm:$0xff] %vm731, %v2248
        %2251 = vst.msk [vmem:[#allocation3 + $0xda] sm:$0x7f] %vm1914, %v2249
        %2252 = vst.msk [vmem:[#allocation3 + $0xe1] sm:$0x7f] %vm1914, 0.0
        %v2253 = vld [vmem:[#allocation3] sm:$0xff]
        %v2254 = vld [vmem:[#allocation3 + $0x8] sm:$0xff]
        %v2255 = vld [vmem:[#allocation3 + $0x10] sm:$0xff]
        %v2256 = vld [vmem:[#allocation3 + $0x18] sm:$0xff]
        %v2257 = vld [vmem:[#allocation3 + $0x20] sm:$0xff]
        %v2258 = vld [vmem:[#allocation3 + $0x28] sm:$0xff]
        %v2259 = vld [vmem:[#allocation3 + $0x30] sm:$0xff]
        %v2260 = vld [vmem:[#allocation3 + $0x38] sm:$0xff]
        %v2261 = vld [vmem:[#allocation3 + $0x40] sm:$0xff]
        %v2262 = vld [vmem:[#allocation3 + $0x48] sm:$0xff]
        %v2263 = vld [vmem:[#allocation3 + $0x50] sm:$0xff]
        %v2264 = vld [vmem:[#allocation3 + $0x58] sm:$0xff]
        %v2265 = vld [vmem:[#allocation3 + $0x60] sm:$0xff]
        %v2266 = vld [vmem:[#allocation3 + $0x68] sm:$0xff]
        %v2267 = vld [vmem:[#allocation3 + $0x70] sm:$0xff]
        %v2268 = vld [vmem:[#allocation3 + $0x78] sm:$0xff]
        %v2269 = vld [vmem:[%s3] sm:$0xff]
        %v2270 = vld [vmem:[%s3 + $0x8] sm:$0xff]
        %v2271 = vld [vmem:[%s3 + $0x10] sm:$0xff]
        %v2272 = vld [vmem:[%s3 + $0x18] sm:$0xff]
        %v2273 = vld [vmem:[%s3 + $0x20] sm:$0xff]
        %v2274 = vld [vmem:[%s3 + $0x28] sm:$0xff]
        %v2275 = vld [vmem:[%s3 + $0x30] sm:$0xff]
        %v2276 = vld [vmem:[%s3 + $0x38] sm:$0xff]
        %v2277 = vld [vmem:[#allocation3 + $0x1] sm:$0xff]
        %v2278 = vld [vmem:[#allocation3 + $0x9] sm:$0xff]
        %v2279 = vld [vmem:[#allocation3 + $0x11] sm:$0xff]
        %v2280 = vld [vmem:[#allocation3 + $0x19] sm:$0xff]
        %v2281 = vld [vmem:[#allocation3 + $0x21] sm:$0xff]
        %v2282 = vld [vmem:[#allocation3 + $0x29] sm:$0xff]
        %v2283 = vld [vmem:[#allocation3 + $0x31] sm:$0xff]
        %v2284 = vld [vmem:[#allocation3 + $0x39] sm:$0xff]
        %v2285 = vld [vmem:[#allocation3 + $0x41] sm:$0xff]
        %v2286 = vld [vmem:[#allocation3 + $0x49] sm:$0xff]
        %v2287 = vld [vmem:[#allocation3 + $0x51] sm:$0xff]
        %v2288 = vld [vmem:[#allocation3 + $0x59] sm:$0xff]
        %v2289 = vld [vmem:[#allocation3 + $0x61] sm:$0xff]
        %v2290 = vld [vmem:[#allocation3 + $0x69] sm:$0xff]
        %v2291 = vld [vmem:[#allocation3 + $0x71] sm:$0xff]
        %v2292 = vld [vmem:[#allocation3 + $0x79] sm:$0xff]
        %s2293 = scalar_lea.vmem %s3, 64
        %v2294 = vld [vmem:[%s2293] sm:$0xff]
        %v2295 = vld [vmem:[%s2293 + $0x8] sm:$0xff]
        %v2296 = vld [vmem:[%s2293 + $0x10] sm:$0xff]
        %v2297 = vld [vmem:[%s2293 + $0x18] sm:$0xff]
        %v2298 = vld [vmem:[%s2293 + $0x20] sm:$0xff]
        %v2299 = vld [vmem:[%s2293 + $0x28] sm:$0xff]
        %v2300 = vld [vmem:[%s2293 + $0x30] sm:$0xff]
        %v2301 = vld [vmem:[%s2293 + $0x38] sm:$0xff]
        %v2303 = vsel %vm731, %v2277, 0
        %v2306 = vsel %vm731, %v2278, 0
        %v2309 = vsel %vm731, %v2279, 0
        %v2312 = vsel %vm731, %v2280, 0
        %v2315 = vsel %vm731, %v2281, 0
        %v2318 = vsel %vm731, %v2282, 0
        %v2321 = vsel %vm731, %v2283, 0
        %v2324 = vsel %vm731, %v2284, 0
        %v2327 = vsel %vm731, %v2285, 0
        %v2330 = vsel %vm731, %v2286, 0
        %v2333 = vsel %vm731, %v2287, 0
        %v2336 = vsel %vm731, %v2288, 0
        %v2339 = vsel %vm731, %v2289, 0
        %v2342 = vsel %vm731, %v2290, 0
        %v2345 = vsel %vm731, %v2291, 0
        %v2348 = vsel %vm731, %v2292, 0
        %2350 = vmatprep.subr.mxu0 0.0
        %2351 = vmatpush1.msra.mxu0 %v2294
        %2352 = vmatprep.subr.mxu0 0.0
        %2353 = vmatpush1.msra.mxu0 %v2295
        %2354 = vmatprep.subr.mxu0 0.0
        %2355 = vmatpush1.msra.mxu0 %v2296
        %2356 = vmatprep.subr.mxu0 0.0
        %2357 = vmatpush1.msra.mxu0 %v2297
        %2358 = vmatprep.subr.mxu0 0.0
        %2359 = vmatpush1.msra.mxu0 %v2298
        %2360 = vmatprep.subr.mxu0 0.0
        %2361 = vmatpush1.msra.mxu0 %v2299
        %2362 = vmatprep.subr.mxu0 0.0
        %2363 = vmatpush1.msra.mxu0 %v2300
        %2364 = vmatprep.subr.mxu0 0.0
        %2365 = vmatpush1.msra.mxu0 %v2301
        %2366 = vmatprep.subr.mxu0 0.0
        %2367 = vmatpush1.msra.mxu0 0.0
        %2368 = vmatprep.subr.mxu0 0.0
        %2369 = vmatpush1.msra.mxu0 0.0
        %2370 = vmatprep.subr.mxu0 0.0
        %2371 = vmatpush1.msra.mxu0 0.0
        %2372 = vmatprep.subr.mxu0 0.0
        %2373 = vmatpush1.msra.mxu0 0.0
        %2374 = vmatprep.subr.mxu0 0.0
        %2375 = vmatpush1.msra.mxu0 0.0
        %2376 = vmatprep.subr.mxu0 0.0
        %2377 = vmatpush1.msra.mxu0 0.0
        %2378 = vmatprep.subr.mxu0 0.0
        %2379 = vmatpush1.msra.mxu0 0.0
        %2380 = vmatprep.subr.mxu0 0.0
        %2381 = vmatpush1.msra.mxu0 0.0
        %2382 = vmatprep.subr.mxu0 0.0
        %2383 = vmatpush1.msra.mxu0 0.0
        %2384 = vmatprep.subr.mxu0 0.0
        %2385 = vmatpush1.msra.mxu0 0.0
        %2386 = vmatprep.subr.mxu0 0.0
        %2387 = vmatpush1.msra.mxu0 0.0
        %2388 = vmatprep.subr.mxu0 0.0
        %2389 = vmatpush1.msra.mxu0 0.0
        %2390 = vmatprep.subr.mxu0 0.0
        %2391 = vmatpush1.msra.mxu0 0.0
        %2392 = vmatprep.subr.mxu0 0.0
        %2393 = vmatpush1.msra.mxu0 0.0
        %2394 = vmatprep.subr.mxu0 0.0
        %2395 = vmatpush1.msra.mxu0 0.0
        %2396 = vmatprep.subr.mxu0 0.0
        %2397 = vmatpush1.msra.mxu0 0.0
        %2398 = vmatprep.subr.mxu0 0.0
        %2399 = vmatpush1.msra.mxu0 0.0
        %2400 = vmatprep.subr.mxu0 0.0
        %2401 = vmatpush1.msra.mxu0 0.0
        %2402 = vmatprep.subr.mxu0 0.0
        %2403 = vmatpush1.msra.mxu0 0.0
        %2404 = vmatprep.subr.mxu0 0.0
        %2405 = vmatpush1.msra.mxu0 0.0
        %2406 = vmatprep.subr.mxu0 0.0
        %2407 = vmatpush1.msra.mxu0 0.0
        %2408 = vmatprep.subr.mxu0 0.0
        %2409 = vmatpush1.msra.mxu0 0.0
        %2410 = vmatprep.subr.mxu0 0.0
        %2411 = vmatpush1.msra.mxu0 0.0
        %2412 = vmatprep.subr.mxu0 0.0
        %2413 = vmatpush1.msra.mxu0 0.0
        %2414 = vmatprep.mubr.f32.mxu0 0.0
        %2415 = vmatmul.mubr.f32.gmra.mrb[0].mxu0 %v2303
        %v2416 = vpop.f32.mrb[0].mxu0
        %v2417 = vadd.f32 0.0, %v2416
        %v2418 = vpop.f32.mrb[0].mxu0
        %2419 = vmatprep.mubr.f32.mxu0 0.0
        %2420 = vmatmul.mubr.f32.gmra.mrb[0].mxu0 %v2306
        %v2421 = vpop.f32.mrb[0].mxu0
        %v2422 = vadd.f32 0.0, %v2421
        %v2423 = vpop.f32.mrb[0].mxu0
        %2424 = vmatprep.mubr.f32.mxu0 0.0
        %2425 = vmatmul.mubr.f32.gmra.mrb[0].mxu0 %v2309
        %v2426 = vpop.f32.mrb[0].mxu0
        %v2427 = vadd.f32 0.0, %v2426
        %v2428 = vpop.f32.mrb[0].mxu0
        %2429 = vmatprep.mubr.f32.mxu0 0.0
        %2430 = vmatmul.mubr.f32.gmra.mrb[0].mxu0 %v2312
        %v2431 = vpop.f32.mrb[0].mxu0
        %v2432 = vadd.f32 0.0, %v2431
        %v2433 = vpop.f32.mrb[0].mxu0
        %2434 = vmatprep.mubr.f32.mxu0 0.0
        %2435 = vmatmul.mubr.f32.gmra.mrb[0].mxu0 %v2315
        %v2436 = vpop.f32.mrb[0].mxu0
        %v2437 = vadd.f32 0.0, %v2436
        %v2438 = vpop.f32.mrb[0].mxu0
        %2439 = vmatprep.mubr.f32.mxu0 0.0
        %2440 = vmatmul.mubr.f32.gmra.mrb[0].mxu0 %v2318
        %v2441 = vpop.f32.mrb[0].mxu0
        %v2442 = vadd.f32 0.0, %v2441
        %v2443 = vpop.f32.mrb[0].mxu0
        %2444 = vmatprep.mubr.f32.mxu0 0.0
        %2445 = vmatmul.mubr.f32.gmra.mrb[0].mxu0 %v2321
        %v2446 = vpop.f32.mrb[0].mxu0
        %v2447 = vadd.f32 0.0, %v2446
        %v2448 = vpop.f32.mrb[0].mxu0
        %2449 = vmatprep.mubr.f32.mxu0 0.0
        %2450 = vmatmul.mubr.f32.gmra.mrb[0].mxu0 %v2324
        %v2451 = vpop.f32.mrb[0].mxu0
        %v2452 = vadd.f32 0.0, %v2451
        %v2453 = vpop.f32.mrb[0].mxu0
        %2454 = vmatprep.mubr.f32.mxu0 0.0
        %2455 = vmatmul.mubr.f32.gmra.mrb[0].mxu0 %v2327
        %v2456 = vpop.f32.mrb[0].mxu0
        %v2457 = vadd.f32 0.0, %v2456
        %v2458 = vpop.f32.mrb[0].mxu0
        %2459 = vmatprep.mubr.f32.mxu0 0.0
        %2460 = vmatmul.mubr.f32.gmra.mrb[0].mxu0 %v2330
        %v2461 = vpop.f32.mrb[0].mxu0
        %v2462 = vadd.f32 0.0, %v2461
        %v2463 = vpop.f32.mrb[0].mxu0
        %2464 = vmatprep.mubr.f32.mxu0 0.0
        %2465 = vmatmul.mubr.f32.gmra.mrb[0].mxu0 %v2333
        %v2466 = vpop.f32.mrb[0].mxu0
        %v2467 = vadd.f32 0.0, %v2466
        %v2468 = vpop.f32.mrb[0].mxu0
        %2469 = vmatprep.mubr.f32.mxu0 0.0
        %2470 = vmatmul.mubr.f32.gmra.mrb[0].mxu0 %v2336
        %v2471 = vpop.f32.mrb[0].mxu0
        %v2472 = vadd.f32 0.0, %v2471
        %v2473 = vpop.f32.mrb[0].mxu0
        %2474 = vmatprep.mubr.f32.mxu0 0.0
        %2475 = vmatmul.mubr.f32.gmra.mrb[0].mxu0 %v2339
        %v2476 = vpop.f32.mrb[0].mxu0
        %v2477 = vadd.f32 0.0, %v2476
        %v2478 = vpop.f32.mrb[0].mxu0
        %2479 = vmatprep.mubr.f32.mxu0 0.0
        %2480 = vmatmul.mubr.f32.gmra.mrb[0].mxu0 %v2342
        %v2481 = vpop.f32.mrb[0].mxu0
        %v2482 = vadd.f32 0.0, %v2481
        %v2483 = vpop.f32.mrb[0].mxu0
        %2484 = vmatprep.mubr.f32.mxu0 0.0
        %2485 = vmatmul.mubr.f32.gmra.mrb[0].mxu0 %v2345
        %v2486 = vpop.f32.mrb[0].mxu0
        %v2487 = vadd.f32 0.0, %v2486
        %v2488 = vpop.f32.mrb[0].mxu0
        %2489 = vmatprep.mubr.f32.mxu0 0.0
        %2490 = vmatmul.mubr.f32.gmra.mrb[0].mxu0 %v2348
        %v2491 = vpop.f32.mrb[0].mxu0
        %v2492 = vadd.f32 0.0, %v2491
        %v2493 = vpop.f32.mrb[0].mxu0
        %2494 = vdwg.mxu0
        %v2496 = vsel %vm731, %v2253, 0
        %v2499 = vsel %vm731, %v2254, 0
        %v2502 = vsel %vm731, %v2255, 0
        %v2505 = vsel %vm731, %v2256, 0
        %v2508 = vsel %vm731, %v2257, 0
        %v2511 = vsel %vm731, %v2258, 0
        %v2514 = vsel %vm731, %v2259, 0
        %v2517 = vsel %vm731, %v2260, 0
        %v2520 = vsel %vm731, %v2261, 0
        %v2523 = vsel %vm731, %v2262, 0
        %v2526 = vsel %vm731, %v2263, 0
        %v2529 = vsel %vm731, %v2264, 0
        %v2532 = vsel %vm731, %v2265, 0
        %v2535 = vsel %vm731, %v2266, 0
        %v2538 = vsel %vm731, %v2267, 0
        %v2541 = vsel %vm731, %v2268, 0
        %2543 = vmatprep.subr.mxu0 0.0
        %2544 = vmatpush1.msra.mxu0 %v2269
        %2545 = vmatprep.subr.mxu0 0.0
        %2546 = vmatpush1.msra.mxu0 %v2270
        %2547 = vmatprep.subr.mxu0 0.0
        %2548 = vmatpush1.msra.mxu0 %v2271
        %2549 = vmatprep.subr.mxu0 0.0
        %2550 = vmatpush1.msra.mxu0 %v2272
        %2551 = vmatprep.subr.mxu0 0.0
        %2552 = vmatpush1.msra.mxu0 %v2273
        %2553 = vmatprep.subr.mxu0 0.0
        %2554 = vmatpush1.msra.mxu0 %v2274
        %2555 = vmatprep.subr.mxu0 0.0
        %2556 = vmatpush1.msra.mxu0 %v2275
        %2557 = vmatprep.subr.mxu0 0.0
        %2558 = vmatpush1.msra.mxu0 %v2276
        %2559 = vmatprep.subr.mxu0 0.0
        %2560 = vmatpush1.msra.mxu0 0.0
        %2561 = vmatprep.subr.mxu0 0.0
        %2562 = vmatpush1.msra.mxu0 0.0
        %2563 = vmatprep.subr.mxu0 0.0
        %2564 = vmatpush1.msra.mxu0 0.0
        %2565 = vmatprep.subr.mxu0 0.0
        %2566 = vmatpush1.msra.mxu0 0.0
        %2567 = vmatprep.subr.mxu0 0.0
        %2568 = vmatpush1.msra.mxu0 0.0
        %2569 = vmatprep.subr.mxu0 0.0
        %2570 = vmatpush1.msra.mxu0 0.0
        %2571 = vmatprep.subr.mxu0 0.0
        %2572 = vmatpush1.msra.mxu0 0.0
        %2573 = vmatprep.subr.mxu0 0.0
        %2574 = vmatpush1.msra.mxu0 0.0
        %2575 = vmatprep.subr.mxu0 0.0
        %2576 = vmatpush1.msra.mxu0 0.0
        %2577 = vmatprep.subr.mxu0 0.0
        %2578 = vmatpush1.msra.mxu0 0.0
        %2579 = vmatprep.subr.mxu0 0.0
        %2580 = vmatpush1.msra.mxu0 0.0
        %2581 = vmatprep.subr.mxu0 0.0
        %2582 = vmatpush1.msra.mxu0 0.0
        %2583 = vmatprep.subr.mxu0 0.0
        %2584 = vmatpush1.msra.mxu0 0.0
        %2585 = vmatprep.subr.mxu0 0.0
        %2586 = vmatpush1.msra.mxu0 0.0
        %2587 = vmatprep.subr.mxu0 0.0
        %2588 = vmatpush1.msra.mxu0 0.0
        %2589 = vmatprep.subr.mxu0 0.0
        %2590 = vmatpush1.msra.mxu0 0.0
        %2591 = vmatprep.subr.mxu0 0.0
        %2592 = vmatpush1.msra.mxu0 0.0
        %2593 = vmatprep.subr.mxu0 0.0
        %2594 = vmatpush1.msra.mxu0 0.0
        %2595 = vmatprep.subr.mxu0 0.0
        %2596 = vmatpush1.msra.mxu0 0.0
        %2597 = vmatprep.subr.mxu0 0.0
        %2598 = vmatpush1.msra.mxu0 0.0
        %2599 = vmatprep.subr.mxu0 0.0
        %2600 = vmatpush1.msra.mxu0 0.0
        %2601 = vmatprep.subr.mxu0 0.0
        %2602 = vmatpush1.msra.mxu0 0.0
        %2603 = vmatprep.subr.mxu0 0.0
        %2604 = vmatpush1.msra.mxu0 0.0
        %2605 = vmatprep.subr.mxu0 0.0
        %2606 = vmatpush1.msra.mxu0 0.0
        %2607 = vmatprep.mubr.f32.mxu0 0.0
        %2608 = vmatmul.mubr.f32.gmra.mrb[0].mxu0 %v2496
        %v2609 = vpop.f32.mrb[0].mxu0
        %v2610 = vadd.f32 %v2417, %v2609
        %v2611 = vpop.f32.mrb[0].mxu0
        %2612 = vmatprep.mubr.f32.mxu0 0.0
        %2613 = vmatmul.mubr.f32.gmra.mrb[0].mxu0 %v2499
        %v2614 = vpop.f32.mrb[0].mxu0
        %v2615 = vadd.f32 %v2422, %v2614
        %v2616 = vpop.f32.mrb[0].mxu0
        %2617 = vmatprep.mubr.f32.mxu0 0.0
        %2618 = vmatmul.mubr.f32.gmra.mrb[0].mxu0 %v2502
        %v2619 = vpop.f32.mrb[0].mxu0
        %v2620 = vadd.f32 %v2427, %v2619
        %v2621 = vpop.f32.mrb[0].mxu0
        %2622 = vmatprep.mubr.f32.mxu0 0.0
        %2623 = vmatmul.mubr.f32.gmra.mrb[0].mxu0 %v2505
        %v2624 = vpop.f32.mrb[0].mxu0
        %v2625 = vadd.f32 %v2432, %v2624
        %v2626 = vpop.f32.mrb[0].mxu0
        %2627 = vmatprep.mubr.f32.mxu0 0.0
        %2628 = vmatmul.mubr.f32.gmra.mrb[0].mxu0 %v2508
        %v2629 = vpop.f32.mrb[0].mxu0
        %v2630 = vadd.f32 %v2437, %v2629
        %v2631 = vpop.f32.mrb[0].mxu0
        %2632 = vmatprep.mubr.f32.mxu0 0.0
        %2633 = vmatmul.mubr.f32.gmra.mrb[0].mxu0 %v2511
        %v2634 = vpop.f32.mrb[0].mxu0
        %v2635 = vadd.f32 %v2442, %v2634
        %v2636 = vpop.f32.mrb[0].mxu0
        %2637 = vmatprep.mubr.f32.mxu0 0.0
        %2638 = vmatmul.mubr.f32.gmra.mrb[0].mxu0 %v2514
        %v2639 = vpop.f32.mrb[0].mxu0
        %v2640 = vadd.f32 %v2447, %v2639
        %v2641 = vpop.f32.mrb[0].mxu0
        %2642 = vmatprep.mubr.f32.mxu0 0.0
        %2643 = vmatmul.mubr.f32.gmra.mrb[0].mxu0 %v2517
        %v2644 = vpop.f32.mrb[0].mxu0
        %v2645 = vadd.f32 %v2452, %v2644
        %v2646 = vpop.f32.mrb[0].mxu0
        %2647 = vmatprep.mubr.f32.mxu0 0.0
        %2648 = vmatmul.mubr.f32.gmra.mrb[0].mxu0 %v2520
        %v2649 = vpop.f32.mrb[0].mxu0
        %v2650 = vadd.f32 %v2457, %v2649
        %v2651 = vpop.f32.mrb[0].mxu0
        %2652 = vmatprep.mubr.f32.mxu0 0.0
        %2653 = vmatmul.mubr.f32.gmra.mrb[0].mxu0 %v2523
        %v2654 = vpop.f32.mrb[0].mxu0
        %v2655 = vadd.f32 %v2462, %v2654
        %v2656 = vpop.f32.mrb[0].mxu0
        %2657 = vmatprep.mubr.f32.mxu0 0.0
        %2658 = vmatmul.mubr.f32.gmra.mrb[0].mxu0 %v2526
        %v2659 = vpop.f32.mrb[0].mxu0
        %v2660 = vadd.f32 %v2467, %v2659
        %v2661 = vpop.f32.mrb[0].mxu0
        %2662 = vmatprep.mubr.f32.mxu0 0.0
        %2663 = vmatmul.mubr.f32.gmra.mrb[0].mxu0 %v2529
        %v2664 = vpop.f32.mrb[0].mxu0
        %v2665 = vadd.f32 %v2472, %v2664
        %v2666 = vpop.f32.mrb[0].mxu0
        %2667 = vmatprep.mubr.f32.mxu0 0.0
        %2668 = vmatmul.mubr.f32.gmra.mrb[0].mxu0 %v2532
        %v2669 = vpop.f32.mrb[0].mxu0
        %v2670 = vadd.f32 %v2477, %v2669
        %v2671 = vpop.f32.mrb[0].mxu0
        %2672 = vmatprep.mubr.f32.mxu0 0.0
        %2673 = vmatmul.mubr.f32.gmra.mrb[0].mxu0 %v2535
        %v2674 = vpop.f32.mrb[0].mxu0
        %v2675 = vadd.f32 %v2482, %v2674
        %v2676 = vpop.f32.mrb[0].mxu0
        %2677 = vmatprep.mubr.f32.mxu0 0.0
        %2678 = vmatmul.mubr.f32.gmra.mrb[0].mxu0 %v2538
        %v2679 = vpop.f32.mrb[0].mxu0
        %v2680 = vadd.f32 %v2487, %v2679
        %v2681 = vpop.f32.mrb[0].mxu0
        %2682 = vmatprep.mubr.f32.mxu0 0.0
        %2683 = vmatmul.mubr.f32.gmra.mrb[0].mxu0 %v2541
        %v2684 = vpop.f32.mrb[0].mxu0
        %v2685 = vadd.f32 %v2492, %v2684
        %v2686 = vpop.f32.mrb[0].mxu0
        %2687 = vdwg.mxu0
        %v2688 = vld [vmem:[#allocation3 + $0x2] sm:$0xff]
        %v2689 = vld [vmem:[#allocation3 + $0xa] sm:$0xff]
        %v2690 = vld [vmem:[#allocation3 + $0x12] sm:$0xff]
        %v2691 = vld [vmem:[#allocation3 + $0x1a] sm:$0xff]
        %v2692 = vld [vmem:[#allocation3 + $0x22] sm:$0xff]
        %v2693 = vld [vmem:[#allocation3 + $0x2a] sm:$0xff]
        %v2694 = vld [vmem:[#allocation3 + $0x32] sm:$0xff]
        %v2695 = vld [vmem:[#allocation3 + $0x3a] sm:$0xff]
        %v2696 = vld [vmem:[#allocation3 + $0x42] sm:$0xff]
        %v2697 = vld [vmem:[#allocation3 + $0x4a] sm:$0xff]
        %v2698 = vld [vmem:[#allocation3 + $0x52] sm:$0xff]
        %v2699 = vld [vmem:[#allocation3 + $0x5a] sm:$0xff]
        %v2700 = vld [vmem:[#allocation3 + $0x62] sm:$0xff]
        %v2701 = vld [vmem:[#allocation3 + $0x6a] sm:$0xff]
        %v2702 = vld [vmem:[#allocation3 + $0x72] sm:$0xff]
        %v2703 = vld [vmem:[#allocation3 + $0x7a] sm:$0xff]
        %s2704 = scalar_lea.vmem %s3, 128
        %v2705 = vld [vmem:[%s2704] sm:$0xff]
        %v2706 = vld [vmem:[%s2704 + $0x8] sm:$0xff]
        %v2707 = vld [vmem:[%s2704 + $0x10] sm:$0xff]
        %v2708 = vld [vmem:[%s2704 + $0x18] sm:$0xff]
        %v2709 = vld [vmem:[%s2704 + $0x20] sm:$0xff]
        %v2710 = vld [vmem:[%s2704 + $0x28] sm:$0xff]
        %v2711 = vld [vmem:[%s2704 + $0x30] sm:$0xff]
        %v2712 = vld [vmem:[%s2704 + $0x38] sm:$0xff]
        %v2714 = vsel %vm731, %v2688, 0
        %v2717 = vsel %vm731, %v2689, 0
        %v2720 = vsel %vm731, %v2690, 0
        %v2723 = vsel %vm731, %v2691, 0
        %v2726 = vsel %vm731, %v2692, 0
        %v2729 = vsel %vm731, %v2693, 0
        %v2732 = vsel %vm731, %v2694, 0
        %v2735 = vsel %vm731, %v2695, 0
        %v2738 = vsel %vm731, %v2696, 0
        %v2741 = vsel %vm731, %v2697, 0
        %v2744 = vsel %vm731, %v2698, 0
        %v2747 = vsel %vm731, %v2699, 0
        %v2750 = vsel %vm731, %v2700, 0
        %v2753 = vsel %vm731, %v2701, 0
        %v2756 = vsel %vm731, %v2702, 0
        %v2759 = vsel %vm731, %v2703, 0
        %2761 = vmatprep.subr.mxu0 0.0
        %2762 = vmatpush1.msra.mxu0 %v2705
        %2763 = vmatprep.subr.mxu0 0.0
        %2764 = vmatpush1.msra.mxu0 %v2706
        %2765 = vmatprep.subr.mxu0 0.0
        %2766 = vmatpush1.msra.mxu0 %v2707
        %2767 = vmatprep.subr.mxu0 0.0
        %2768 = vmatpush1.msra.mxu0 %v2708
        %2769 = vmatprep.subr.mxu0 0.0
        %2770 = vmatpush1.msra.mxu0 %v2709
        %2771 = vmatprep.subr.mxu0 0.0
        %2772 = vmatpush1.msra.mxu0 %v2710
        %2773 = vmatprep.subr.mxu0 0.0
        %2774 = vmatpush1.msra.mxu0 %v2711
        %2775 = vmatprep.subr.mxu0 0.0
        %2776 = vmatpush1.msra.mxu0 %v2712
        %2777 = vmatprep.subr.mxu0 0.0
        %2778 = vmatpush1.msra.mxu0 0.0
        %2779 = vmatprep.subr.mxu0 0.0
        %2780 = vmatpush1.msra.mxu0 0.0
        %2781 = vmatprep.subr.mxu0 0.0
        %2782 = vmatpush1.msra.mxu0 0.0
        %2783 = vmatprep.subr.mxu0 0.0
        %2784 = vmatpush1.msra.mxu0 0.0
        %2785 = vmatprep.subr.mxu0 0.0
        %2786 = vmatpush1.msra.mxu0 0.0
        %2787 = vmatprep.subr.mxu0 0.0
        %2788 = vmatpush1.msra.mxu0 0.0
        %2789 = vmatprep.subr.mxu0 0.0
        %2790 = vmatpush1.msra.mxu0 0.0
        %2791 = vmatprep.subr.mxu0 0.0
        %2792 = vmatpush1.msra.mxu0 0.0
        %2793 = vmatprep.subr.mxu0 0.0
        %2794 = vmatpush1.msra.mxu0 0.0
        %2795 = vmatprep.subr.mxu0 0.0
        %2796 = vmatpush1.msra.mxu0 0.0
        %2797 = vmatprep.subr.mxu0 0.0
        %2798 = vmatpush1.msra.mxu0 0.0
        %2799 = vmatprep.subr.mxu0 0.0
        %2800 = vmatpush1.msra.mxu0 0.0
        %2801 = vmatprep.subr.mxu0 0.0
        %2802 = vmatpush1.msra.mxu0 0.0
        %2803 = vmatprep.subr.mxu0 0.0
        %2804 = vmatpush1.msra.mxu0 0.0
        %2805 = vmatprep.subr.mxu0 0.0
        %2806 = vmatpush1.msra.mxu0 0.0
        %2807 = vmatprep.subr.mxu0 0.0
        %2808 = vmatpush1.msra.mxu0 0.0
        %2809 = vmatprep.subr.mxu0 0.0
        %2810 = vmatpush1.msra.mxu0 0.0
        %2811 = vmatprep.subr.mxu0 0.0
        %2812 = vmatpush1.msra.mxu0 0.0
        %2813 = vmatprep.subr.mxu0 0.0
        %2814 = vmatpush1.msra.mxu0 0.0
        %2815 = vmatprep.subr.mxu0 0.0
        %2816 = vmatpush1.msra.mxu0 0.0
        %2817 = vmatprep.subr.mxu0 0.0
        %2818 = vmatpush1.msra.mxu0 0.0
        %2819 = vmatprep.subr.mxu0 0.0
        %2820 = vmatpush1.msra.mxu0 0.0
        %2821 = vmatprep.subr.mxu0 0.0
        %2822 = vmatpush1.msra.mxu0 0.0
        %2823 = vmatprep.subr.mxu0 0.0
        %2824 = vmatpush1.msra.mxu0 0.0
        %2825 = vmatprep.mubr.f32.mxu0 0.0
        %2826 = vmatmul.mubr.f32.gmra.mrb[0].mxu0 %v2714
        %v2827 = vpop.f32.mrb[0].mxu0
        %v2828 = vadd.f32 0.0, %v2827
        %v2829 = vpop.f32.mrb[0].mxu0
        %2830 = vmatprep.mubr.f32.mxu0 0.0
        %2831 = vmatmul.mubr.f32.gmra.mrb[0].mxu0 %v2717
        %v2832 = vpop.f32.mrb[0].mxu0
        %v2833 = vadd.f32 0.0, %v2832
        %v2834 = vpop.f32.mrb[0].mxu0
        %2835 = vmatprep.mubr.f32.mxu0 0.0
        %2836 = vmatmul.mubr.f32.gmra.mrb[0].mxu0 %v2720
        %v2837 = vpop.f32.mrb[0].mxu0
        %v2838 = vadd.f32 0.0, %v2837
        %v2839 = vpop.f32.mrb[0].mxu0
        %2840 = vmatprep.mubr.f32.mxu0 0.0
        %2841 = vmatmul.mubr.f32.gmra.mrb[0].mxu0 %v2723
        %v2842 = vpop.f32.mrb[0].mxu0
        %v2843 = vadd.f32 0.0, %v2842
        %v2844 = vpop.f32.mrb[0].mxu0
        %2845 = vmatprep.mubr.f32.mxu0 0.0
        %2846 = vmatmul.mubr.f32.gmra.mrb[0].mxu0 %v2726
        %v2847 = vpop.f32.mrb[0].mxu0
        %v2848 = vadd.f32 0.0, %v2847
        %v2849 = vpop.f32.mrb[0].mxu0
        %2850 = vmatprep.mubr.f32.mxu0 0.0
        %2851 = vmatmul.mubr.f32.gmra.mrb[0].mxu0 %v2729
        %v2852 = vpop.f32.mrb[0].mxu0
        %v2853 = vadd.f32 0.0, %v2852
        %v2854 = vpop.f32.mrb[0].mxu0
        %2855 = vmatprep.mubr.f32.mxu0 0.0
        %2856 = vmatmul.mubr.f32.gmra.mrb[0].mxu0 %v2732
        %v2857 = vpop.f32.mrb[0].mxu0
        %v2858 = vadd.f32 0.0, %v2857
        %v2859 = vpop.f32.mrb[0].mxu0
        %2860 = vmatprep.mubr.f32.mxu0 0.0
        %2861 = vmatmul.mubr.f32.gmra.mrb[0].mxu0 %v2735
        %v2862 = vpop.f32.mrb[0].mxu0
        %v2863 = vadd.f32 0.0, %v2862
        %v2864 = vpop.f32.mrb[0].mxu0
        %2865 = vmatprep.mubr.f32.mxu0 0.0
        %2866 = vmatmul.mubr.f32.gmra.mrb[0].mxu0 %v2738
        %v2867 = vpop.f32.mrb[0].mxu0
        %v2868 = vadd.f32 0.0, %v2867
        %v2869 = vpop.f32.mrb[0].mxu0
        %2870 = vmatprep.mubr.f32.mxu0 0.0
        %2871 = vmatmul.mubr.f32.gmra.mrb[0].mxu0 %v2741
        %v2872 = vpop.f32.mrb[0].mxu0
        %v2873 = vadd.f32 0.0, %v2872
        %v2874 = vpop.f32.mrb[0].mxu0
        %2875 = vmatprep.mubr.f32.mxu0 0.0
        %2876 = vmatmul.mubr.f32.gmra.mrb[0].mxu0 %v2744
        %v2877 = vpop.f32.mrb[0].mxu0
        %v2878 = vadd.f32 0.0, %v2877
        %v2879 = vpop.f32.mrb[0].mxu0
        %2880 = vmatprep.mubr.f32.mxu0 0.0
        %2881 = vmatmul.mubr.f32.gmra.mrb[0].mxu0 %v2747
        %v2882 = vpop.f32.mrb[0].mxu0
        %v2883 = vadd.f32 0.0, %v2882
        %v2884 = vpop.f32.mrb[0].mxu0
        %2885 = vmatprep.mubr.f32.mxu0 0.0
        %2886 = vmatmul.mubr.f32.gmra.mrb[0].mxu0 %v2750
        %v2887 = vpop.f32.mrb[0].mxu0
        %v2888 = vadd.f32 0.0, %v2887
        %v2889 = vpop.f32.mrb[0].mxu0
        %2890 = vmatprep.mubr.f32.mxu0 0.0
        %2891 = vmatmul.mubr.f32.gmra.mrb[0].mxu0 %v2753
        %v2892 = vpop.f32.mrb[0].mxu0
        %v2893 = vadd.f32 0.0, %v2892
        %v2894 = vpop.f32.mrb[0].mxu0
        %2895 = vmatprep.mubr.f32.mxu0 0.0
        %2896 = vmatmul.mubr.f32.gmra.mrb[0].mxu0 %v2756
        %v2897 = vpop.f32.mrb[0].mxu0
        %v2898 = vadd.f32 0.0, %v2897
        %v2899 = vpop.f32.mrb[0].mxu0
        %2900 = vmatprep.mubr.f32.mxu0 0.0
        %2901 = vmatmul.mubr.f32.gmra.mrb[0].mxu0 %v2759
        %v2902 = vpop.f32.mrb[0].mxu0
        %v2903 = vadd.f32 0.0, %v2902
        %v2904 = vpop.f32.mrb[0].mxu0
        %2905 = vdwg.mxu0
        %v2906 = vadd.f32 %v2610, %v2828
        %v2907 = vadd.f32 %v2615, %v2833
        %v2908 = vadd.f32 %v2620, %v2838
        %v2909 = vadd.f32 %v2625, %v2843
        %v2910 = vadd.f32 %v2630, %v2848
        %v2911 = vadd.f32 %v2635, %v2853
        %v2912 = vadd.f32 %v2640, %v2858
        %v2913 = vadd.f32 %v2645, %v2863
        %v2914 = vadd.f32 %v2650, %v2868
        %v2915 = vadd.f32 %v2655, %v2873
        %v2916 = vadd.f32 %v2660, %v2878
        %v2917 = vadd.f32 %v2665, %v2883
        %v2918 = vadd.f32 %v2670, %v2888
        %v2919 = vadd.f32 %v2675, %v2893
        %v2920 = vadd.f32 %v2680, %v2898
        %v2921 = vadd.f32 %v2685, %v2903
        %v2922 = vld [vmem:[#allocation3 + $0xf] sm:$0xff]
        %v2923 = vld [vmem:[#allocation3 + $0x17] sm:$0xff]
        %v2924 = vld [vmem:[#allocation3 + $0x1f] sm:$0xff]
        %v2925 = vld [vmem:[#allocation3 + $0x27] sm:$0xff]
        %v2926 = vld [vmem:[#allocation3 + $0x2f] sm:$0xff]
        %v2927 = vld [vmem:[#allocation3 + $0x37] sm:$0xff]
        %v2928 = vld [vmem:[#allocation3 + $0x3f] sm:$0xff]
        %v2929 = vld [vmem:[#allocation3 + $0x47] sm:$0xff]
        %v2930 = vld [vmem:[#allocation3 + $0x4f] sm:$0xff]
        %v2931 = vld [vmem:[#allocation3 + $0x57] sm:$0xff]
        %v2932 = vld [vmem:[#allocation3 + $0x5f] sm:$0xff]
        %v2933 = vld [vmem:[#allocation3 + $0x67] sm:$0xff]
        %v2934 = vld [vmem:[#allocation3 + $0x6f] sm:$0xff]
        %v2935 = vld [vmem:[#allocation3 + $0x77] sm:$0xff]
        %v2936 = vld [vmem:[#allocation3 + $0x7f] sm:$0xff]
        %v2937 = vld [vmem:[#allocation3 + $0x87] sm:$0xff]
        %s2938 = scalar_lea.vmem %s3, 192
        %v2939 = vld [vmem:[%s2938] sm:$0xff]
        %v2940 = vld [vmem:[%s2938 + $0x8] sm:$0xff]
        %v2941 = vld [vmem:[%s2938 + $0x10] sm:$0xff]
        %v2942 = vld [vmem:[%s2938 + $0x18] sm:$0xff]
        %v2943 = vld [vmem:[%s2938 + $0x20] sm:$0xff]
        %v2944 = vld [vmem:[%s2938 + $0x28] sm:$0xff]
        %v2945 = vld [vmem:[%s2938 + $0x30] sm:$0xff]
        %v2946 = vld [vmem:[%s2938 + $0x38] sm:$0xff]
        %v2948 = vsel %vm731, %v2922, 0
        %v2951 = vsel %vm731, %v2923, 0
        %v2954 = vsel %vm731, %v2924, 0
        %v2957 = vsel %vm731, %v2925, 0
        %v2960 = vsel %vm731, %v2926, 0
        %v2963 = vsel %vm731, %v2927, 0
        %v2966 = vsel %vm731, %v2928, 0
        %v2969 = vsel %vm731, %v2929, 0
        %v2972 = vsel %vm731, %v2930, 0
        %v2975 = vsel %vm731, %v2931, 0
        %v2978 = vsel %vm731, %v2932, 0
        %v2981 = vsel %vm731, %v2933, 0
        %v2984 = vsel %vm731, %v2934, 0
        %v2987 = vsel %vm731, %v2935, 0
        %v2990 = vsel %vm731, %v2936, 0
        %v2993 = vsel %vm731, %v2937, 0
        %2995 = vmatprep.subr.mxu0 0.0
        %2996 = vmatpush1.msra.mxu0 %v2939
        %2997 = vmatprep.subr.mxu0 0.0
        %2998 = vmatpush1.msra.mxu0 %v2940
        %2999 = vmatprep.subr.mxu0 0.0
        %3000 = vmatpush1.msra.mxu0 %v2941
        %3001 = vmatprep.subr.mxu0 0.0
        %3002 = vmatpush1.msra.mxu0 %v2942
        %3003 = vmatprep.subr.mxu0 0.0
        %3004 = vmatpush1.msra.mxu0 %v2943
        %3005 = vmatprep.subr.mxu0 0.0
        %3006 = vmatpush1.msra.mxu0 %v2944
        %3007 = vmatprep.subr.mxu0 0.0
        %3008 = vmatpush1.msra.mxu0 %v2945
        %3009 = vmatprep.subr.mxu0 0.0
        %3010 = vmatpush1.msra.mxu0 %v2946
        %3011 = vmatprep.subr.mxu0 0.0
        %3012 = vmatpush1.msra.mxu0 0.0
        %3013 = vmatprep.subr.mxu0 0.0
        %3014 = vmatpush1.msra.mxu0 0.0
        %3015 = vmatprep.subr.mxu0 0.0
        %3016 = vmatpush1.msra.mxu0 0.0
        %3017 = vmatprep.subr.mxu0 0.0
        %3018 = vmatpush1.msra.mxu0 0.0
        %3019 = vmatprep.subr.mxu0 0.0
        %3020 = vmatpush1.msra.mxu0 0.0
        %3021 = vmatprep.subr.mxu0 0.0
        %3022 = vmatpush1.msra.mxu0 0.0
        %3023 = vmatprep.subr.mxu0 0.0
        %3024 = vmatpush1.msra.mxu0 0.0
        %3025 = vmatprep.subr.mxu0 0.0
        %3026 = vmatpush1.msra.mxu0 0.0
        %3027 = vmatprep.subr.mxu0 0.0
        %3028 = vmatpush1.msra.mxu0 0.0
        %3029 = vmatprep.subr.mxu0 0.0
        %3030 = vmatpush1.msra.mxu0 0.0
        %3031 = vmatprep.subr.mxu0 0.0
        %3032 = vmatpush1.msra.mxu0 0.0
        %3033 = vmatprep.subr.mxu0 0.0
        %3034 = vmatpush1.msra.mxu0 0.0
        %3035 = vmatprep.subr.mxu0 0.0
        %3036 = vmatpush1.msra.mxu0 0.0
        %3037 = vmatprep.subr.mxu0 0.0
        %3038 = vmatpush1.msra.mxu0 0.0
        %3039 = vmatprep.subr.mxu0 0.0
        %3040 = vmatpush1.msra.mxu0 0.0
        %3041 = vmatprep.subr.mxu0 0.0
        %3042 = vmatpush1.msra.mxu0 0.0
        %3043 = vmatprep.subr.mxu0 0.0
        %3044 = vmatpush1.msra.mxu0 0.0
        %3045 = vmatprep.subr.mxu0 0.0
        %3046 = vmatpush1.msra.mxu0 0.0
        %3047 = vmatprep.subr.mxu0 0.0
        %3048 = vmatpush1.msra.mxu0 0.0
        %3049 = vmatprep.subr.mxu0 0.0
        %3050 = vmatpush1.msra.mxu0 0.0
        %3051 = vmatprep.subr.mxu0 0.0
        %3052 = vmatpush1.msra.mxu0 0.0
        %3053 = vmatprep.subr.mxu0 0.0
        %3054 = vmatpush1.msra.mxu0 0.0
        %3055 = vmatprep.subr.mxu0 0.0
        %3056 = vmatpush1.msra.mxu0 0.0
        %3057 = vmatprep.subr.mxu0 0.0
        %3058 = vmatpush1.msra.mxu0 0.0
        %3059 = vmatprep.mubr.f32.mxu0 0.0
        %3060 = vmatmul.mubr.f32.gmra.mrb[0].mxu0 %v2948
        %v3061 = vpop.f32.mrb[0].mxu0
        %v3062 = vadd.f32 0.0, %v3061
        %v3063 = vpop.f32.mrb[0].mxu0
        %3064 = vmatprep.mubr.f32.mxu0 0.0
        %3065 = vmatmul.mubr.f32.gmra.mrb[0].mxu0 %v2951
        %v3066 = vpop.f32.mrb[0].mxu0
        %v3067 = vadd.f32 0.0, %v3066
        %v3068 = vpop.f32.mrb[0].mxu0
        %3069 = vmatprep.mubr.f32.mxu0 0.0
        %3070 = vmatmul.mubr.f32.gmra.mrb[0].mxu0 %v2954
        %v3071 = vpop.f32.mrb[0].mxu0
        %v3072 = vadd.f32 0.0, %v3071
        %v3073 = vpop.f32.mrb[0].mxu0
        %3074 = vmatprep.mubr.f32.mxu0 0.0
        %3075 = vmatmul.mubr.f32.gmra.mrb[0].mxu0 %v2957
        %v3076 = vpop.f32.mrb[0].mxu0
        %v3077 = vadd.f32 0.0, %v3076
        %v3078 = vpop.f32.mrb[0].mxu0
        %3079 = vmatprep.mubr.f32.mxu0 0.0
        %3080 = vmatmul.mubr.f32.gmra.mrb[0].mxu0 %v2960
        %v3081 = vpop.f32.mrb[0].mxu0
        %v3082 = vadd.f32 0.0, %v3081
        %v3083 = vpop.f32.mrb[0].mxu0
        %3084 = vmatprep.mubr.f32.mxu0 0.0
        %3085 = vmatmul.mubr.f32.gmra.mrb[0].mxu0 %v2963
        %v3086 = vpop.f32.mrb[0].mxu0
        %v3087 = vadd.f32 0.0, %v3086
        %v3088 = vpop.f32.mrb[0].mxu0
        %3089 = vmatprep.mubr.f32.mxu0 0.0
        %3090 = vmatmul.mubr.f32.gmra.mrb[0].mxu0 %v2966
        %v3091 = vpop.f32.mrb[0].mxu0
        %v3092 = vadd.f32 0.0, %v3091
        %v3093 = vpop.f32.mrb[0].mxu0
        %3094 = vmatprep.mubr.f32.mxu0 0.0
        %3095 = vmatmul.mubr.f32.gmra.mrb[0].mxu0 %v2969
        %v3096 = vpop.f32.mrb[0].mxu0
        %v3097 = vadd.f32 0.0, %v3096
        %v3098 = vpop.f32.mrb[0].mxu0
        %3099 = vmatprep.mubr.f32.mxu0 0.0
        %3100 = vmatmul.mubr.f32.gmra.mrb[0].mxu0 %v2972
        %v3101 = vpop.f32.mrb[0].mxu0
        %v3102 = vadd.f32 0.0, %v3101
        %v3103 = vpop.f32.mrb[0].mxu0
        %3104 = vmatprep.mubr.f32.mxu0 0.0
        %3105 = vmatmul.mubr.f32.gmra.mrb[0].mxu0 %v2975
        %v3106 = vpop.f32.mrb[0].mxu0
        %v3107 = vadd.f32 0.0, %v3106
        %v3108 = vpop.f32.mrb[0].mxu0
        %3109 = vmatprep.mubr.f32.mxu0 0.0
        %3110 = vmatmul.mubr.f32.gmra.mrb[0].mxu0 %v2978
        %v3111 = vpop.f32.mrb[0].mxu0
        %v3112 = vadd.f32 0.0, %v3111
        %v3113 = vpop.f32.mrb[0].mxu0
        %3114 = vmatprep.mubr.f32.mxu0 0.0
        %3115 = vmatmul.mubr.f32.gmra.mrb[0].mxu0 %v2981
        %v3116 = vpop.f32.mrb[0].mxu0
        %v3117 = vadd.f32 0.0, %v3116
        %v3118 = vpop.f32.mrb[0].mxu0
        %3119 = vmatprep.mubr.f32.mxu0 0.0
        %3120 = vmatmul.mubr.f32.gmra.mrb[0].mxu0 %v2984
        %v3121 = vpop.f32.mrb[0].mxu0
        %v3122 = vadd.f32 0.0, %v3121
        %v3123 = vpop.f32.mrb[0].mxu0
        %3124 = vmatprep.mubr.f32.mxu0 0.0
        %3125 = vmatmul.mubr.f32.gmra.mrb[0].mxu0 %v2987
        %v3126 = vpop.f32.mrb[0].mxu0
        %v3127 = vadd.f32 0.0, %v3126
        %v3128 = vpop.f32.mrb[0].mxu0
        %3129 = vmatprep.mubr.f32.mxu0 0.0
        %3130 = vmatmul.mubr.f32.gmra.mrb[0].mxu0 %v2990
        %v3131 = vpop.f32.mrb[0].mxu0
        %v3132 = vadd.f32 0.0, %v3131
        %v3133 = vpop.f32.mrb[0].mxu0
        %3134 = vmatprep.mubr.f32.mxu0 0.0
        %3135 = vmatmul.mubr.f32.gmra.mrb[0].mxu0 %v2993
        %v3136 = vpop.f32.mrb[0].mxu0
        %v3137 = vadd.f32 0.0, %v3136
        %v3138 = vpop.f32.mrb[0].mxu0
        %3139 = vdwg.mxu0
        %v3140 = vadd.f32 %v2906, %v3062
        %v3141 = vadd.f32 %v2907, %v3067
        %v3142 = vadd.f32 %v2908, %v3072
        %v3143 = vadd.f32 %v2909, %v3077
        %v3144 = vadd.f32 %v2910, %v3082
        %v3145 = vadd.f32 %v2911, %v3087
        %v3146 = vadd.f32 %v2912, %v3092
        %v3147 = vadd.f32 %v2913, %v3097
        %v3148 = vadd.f32 %v2914, %v3102
        %v3149 = vadd.f32 %v2915, %v3107
        %v3150 = vadd.f32 %v2916, %v3112
        %v3151 = vadd.f32 %v2917, %v3117
        %v3152 = vadd.f32 %v2918, %v3122
        %v3153 = vadd.f32 %v2919, %v3127
        %v3154 = vadd.f32 %v2920, %v3132
        %v3155 = vadd.f32 %v2921, %v3137
        %v3156 = vld [vmem:[#allocation3 + $0x10] sm:$0xff]
        %v3157 = vld [vmem:[#allocation3 + $0x18] sm:$0xff]
        %v3158 = vld [vmem:[#allocation3 + $0x20] sm:$0xff]
        %v3159 = vld [vmem:[#allocation3 + $0x28] sm:$0xff]
        %v3160 = vld [vmem:[#allocation3 + $0x30] sm:$0xff]
        %v3161 = vld [vmem:[#allocation3 + $0x38] sm:$0xff]
        %v3162 = vld [vmem:[#allocation3 + $0x40] sm:$0xff]
        %v3163 = vld [vmem:[#allocation3 + $0x48] sm:$0xff]
        %v3164 = vld [vmem:[#allocation3 + $0x50] sm:$0xff]
        %v3165 = vld [vmem:[#allocation3 + $0x58] sm:$0xff]
        %v3166 = vld [vmem:[#allocation3 + $0x60] sm:$0xff]
        %v3167 = vld [vmem:[#allocation3 + $0x68] sm:$0xff]
        %v3168 = vld [vmem:[#allocation3 + $0x70] sm:$0xff]
        %v3169 = vld [vmem:[#allocation3 + $0x78] sm:$0xff]
        %v3170 = vld [vmem:[#allocation3 + $0x80] sm:$0xff]
        %v3171 = vld [vmem:[#allocation3 + $0x88] sm:$0xff]
        %s3172 = scalar_lea.vmem %s3, 256
        %v3173 = vld [vmem:[%s3172] sm:$0xff]
        %v3174 = vld [vmem:[%s3172 + $0x8] sm:$0xff]
        %v3175 = vld [vmem:[%s3172 + $0x10] sm:$0xff]
        %v3176 = vld [vmem:[%s3172 + $0x18] sm:$0xff]
        %v3177 = vld [vmem:[%s3172 + $0x20] sm:$0xff]
        %v3178 = vld [vmem:[%s3172 + $0x28] sm:$0xff]
        %v3179 = vld [vmem:[%s3172 + $0x30] sm:$0xff]
        %v3180 = vld [vmem:[%s3172 + $0x38] sm:$0xff]
        %v3182 = vsel %vm731, %v3156, 0
        %v3185 = vsel %vm731, %v3157, 0
        %v3188 = vsel %vm731, %v3158, 0
        %v3191 = vsel %vm731, %v3159, 0
        %v3194 = vsel %vm731, %v3160, 0
        %v3197 = vsel %vm731, %v3161, 0
        %v3200 = vsel %vm731, %v3162, 0
        %v3203 = vsel %vm731, %v3163, 0
        %v3206 = vsel %vm731, %v3164, 0
        %v3209 = vsel %vm731, %v3165, 0
        %v3212 = vsel %vm731, %v3166, 0
        %v3215 = vsel %vm731, %v3167, 0
        %v3218 = vsel %vm731, %v3168, 0
        %v3221 = vsel %vm731, %v3169, 0
        %v3224 = vsel %vm731, %v3170, 0
        %v3227 = vsel %vm731, %v3171, 0
        %3229 = vmatprep.subr.mxu0 0.0
        %3230 = vmatpush1.msra.mxu0 %v3173
        %3231 = vmatprep.subr.mxu0 0.0
        %3232 = vmatpush1.msra.mxu0 %v3174
        %3233 = vmatprep.subr.mxu0 0.0
        %3234 = vmatpush1.msra.mxu0 %v3175
        %3235 = vmatprep.subr.mxu0 0.0
        %3236 = vmatpush1.msra.mxu0 %v3176
        %3237 = vmatprep.subr.mxu0 0.0
        %3238 = vmatpush1.msra.mxu0 %v3177
        %3239 = vmatprep.subr.mxu0 0.0
        %3240 = vmatpush1.msra.mxu0 %v3178
        %3241 = vmatprep.subr.mxu0 0.0
        %3242 = vmatpush1.msra.mxu0 %v3179
        %3243 = vmatprep.subr.mxu0 0.0
        %3244 = vmatpush1.msra.mxu0 %v3180
        %3245 = vmatprep.subr.mxu0 0.0
        %3246 = vmatpush1.msra.mxu0 0.0
        %3247 = vmatprep.subr.mxu0 0.0
        %3248 = vmatpush1.msra.mxu0 0.0
        %3249 = vmatprep.subr.mxu0 0.0
        %3250 = vmatpush1.msra.mxu0 0.0
        %3251 = vmatprep.subr.mxu0 0.0
        %3252 = vmatpush1.msra.mxu0 0.0
        %3253 = vmatprep.subr.mxu0 0.0
        %3254 = vmatpush1.msra.mxu0 0.0
        %3255 = vmatprep.subr.mxu0 0.0
        %3256 = vmatpush1.msra.mxu0 0.0
        %3257 = vmatprep.subr.mxu0 0.0
        %3258 = vmatpush1.msra.mxu0 0.0
        %3259 = vmatprep.subr.mxu0 0.0
        %3260 = vmatpush1.msra.mxu0 0.0
        %3261 = vmatprep.subr.mxu0 0.0
        %3262 = vmatpush1.msra.mxu0 0.0
        %3263 = vmatprep.subr.mxu0 0.0
        %3264 = vmatpush1.msra.mxu0 0.0
        %3265 = vmatprep.subr.mxu0 0.0
        %3266 = vmatpush1.msra.mxu0 0.0
        %3267 = vmatprep.subr.mxu0 0.0
        %3268 = vmatpush1.msra.mxu0 0.0
        %3269 = vmatprep.subr.mxu0 0.0
        %3270 = vmatpush1.msra.mxu0 0.0
        %3271 = vmatprep.subr.mxu0 0.0
        %3272 = vmatpush1.msra.mxu0 0.0
        %3273 = vmatprep.subr.mxu0 0.0
        %3274 = vmatpush1.msra.mxu0 0.0
        %3275 = vmatprep.subr.mxu0 0.0
        %3276 = vmatpush1.msra.mxu0 0.0
        %3277 = vmatprep.subr.mxu0 0.0
        %3278 = vmatpush1.msra.mxu0 0.0
        %3279 = vmatprep.subr.mxu0 0.0
        %3280 = vmatpush1.msra.mxu0 0.0
        %3281 = vmatprep.subr.mxu0 0.0
        %3282 = vmatpush1.msra.mxu0 0.0
        %3283 = vmatprep.subr.mxu0 0.0
        %3284 = vmatpush1.msra.mxu0 0.0
        %3285 = vmatprep.subr.mxu0 0.0
        %3286 = vmatpush1.msra.mxu0 0.0
        %3287 = vmatprep.subr.mxu0 0.0
        %3288 = vmatpush1.msra.mxu0 0.0
        %3289 = vmatprep.subr.mxu0 0.0
        %3290 = vmatpush1.msra.mxu0 0.0
        %3291 = vmatprep.subr.mxu0 0.0
        %3292 = vmatpush1.msra.mxu0 0.0
        %3293 = vmatprep.mubr.f32.mxu0 0.0
        %3294 = vmatmul.mubr.f32.gmra.mrb[0].mxu0 %v3182
        %v3295 = vpop.f32.mrb[0].mxu0
        %v3296 = vadd.f32 0.0, %v3295
        %v3297 = vpop.f32.mrb[0].mxu0
        %3298 = vmatprep.mubr.f32.mxu0 0.0
        %3299 = vmatmul.mubr.f32.gmra.mrb[0].mxu0 %v3185
        %v3300 = vpop.f32.mrb[0].mxu0
        %v3301 = vadd.f32 0.0, %v3300
        %v3302 = vpop.f32.mrb[0].mxu0
        %3303 = vmatprep.mubr.f32.mxu0 0.0
        %3304 = vmatmul.mubr.f32.gmra.mrb[0].mxu0 %v3188
        %v3305 = vpop.f32.mrb[0].mxu0
        %v3306 = vadd.f32 0.0, %v3305
        %v3307 = vpop.f32.mrb[0].mxu0
        %3308 = vmatprep.mubr.f32.mxu0 0.0
        %3309 = vmatmul.mubr.f32.gmra.mrb[0].mxu0 %v3191
        %v3310 = vpop.f32.mrb[0].mxu0
        %v3311 = vadd.f32 0.0, %v3310
        %v3312 = vpop.f32.mrb[0].mxu0
        %3313 = vmatprep.mubr.f32.mxu0 0.0
        %3314 = vmatmul.mubr.f32.gmra.mrb[0].mxu0 %v3194
        %v3315 = vpop.f32.mrb[0].mxu0
        %v3316 = vadd.f32 0.0, %v3315
        %v3317 = vpop.f32.mrb[0].mxu0
        %3318 = vmatprep.mubr.f32.mxu0 0.0
        %3319 = vmatmul.mubr.f32.gmra.mrb[0].mxu0 %v3197
        %v3320 = vpop.f32.mrb[0].mxu0
        %v3321 = vadd.f32 0.0, %v3320
        %v3322 = vpop.f32.mrb[0].mxu0
        %3323 = vmatprep.mubr.f32.mxu0 0.0
        %3324 = vmatmul.mubr.f32.gmra.mrb[0].mxu0 %v3200
        %v3325 = vpop.f32.mrb[0].mxu0
        %v3326 = vadd.f32 0.0, %v3325
        %v3327 = vpop.f32.mrb[0].mxu0
        %3328 = vmatprep.mubr.f32.mxu0 0.0
        %3329 = vmatmul.mubr.f32.gmra.mrb[0].mxu0 %v3203
        %v3330 = vpop.f32.mrb[0].mxu0
        %v3331 = vadd.f32 0.0, %v3330
        %v3332 = vpop.f32.mrb[0].mxu0
        %3333 = vmatprep.mubr.f32.mxu0 0.0
        %3334 = vmatmul.mubr.f32.gmra.mrb[0].mxu0 %v3206
        %v3335 = vpop.f32.mrb[0].mxu0
        %v3336 = vadd.f32 0.0, %v3335
        %v3337 = vpop.f32.mrb[0].mxu0
        %3338 = vmatprep.mubr.f32.mxu0 0.0
        %3339 = vmatmul.mubr.f32.gmra.mrb[0].mxu0 %v3209
        %v3340 = vpop.f32.mrb[0].mxu0
        %v3341 = vadd.f32 0.0, %v3340
        %v3342 = vpop.f32.mrb[0].mxu0
        %3343 = vmatprep.mubr.f32.mxu0 0.0
        %3344 = vmatmul.mubr.f32.gmra.mrb[0].mxu0 %v3212
        %v3345 = vpop.f32.mrb[0].mxu0
        %v3346 = vadd.f32 0.0, %v3345
        %v3347 = vpop.f32.mrb[0].mxu0
        %3348 = vmatprep.mubr.f32.mxu0 0.0
        %3349 = vmatmul.mubr.f32.gmra.mrb[0].mxu0 %v3215
        %v3350 = vpop.f32.mrb[0].mxu0
        %v3351 = vadd.f32 0.0, %v3350
        %v3352 = vpop.f32.mrb[0].mxu0
        %3353 = vmatprep.mubr.f32.mxu0 0.0
        %3354 = vmatmul.mubr.f32.gmra.mrb[0].mxu0 %v3218
        %v3355 = vpop.f32.mrb[0].mxu0
        %v3356 = vadd.f32 0.0, %v3355
        %v3357 = vpop.f32.mrb[0].mxu0
        %3358 = vmatprep.mubr.f32.mxu0 0.0
        %3359 = vmatmul.mubr.f32.gmra.mrb[0].mxu0 %v3221
        %v3360 = vpop.f32.mrb[0].mxu0
        %v3361 = vadd.f32 0.0, %v3360
        %v3362 = vpop.f32.mrb[0].mxu0
        %3363 = vmatprep.mubr.f32.mxu0 0.0
        %3364 = vmatmul.mubr.f32.gmra.mrb[0].mxu0 %v3224
        %v3365 = vpop.f32.mrb[0].mxu0
        %v3366 = vadd.f32 0.0, %v3365
        %v3367 = vpop.f32.mrb[0].mxu0
        %3368 = vmatprep.mubr.f32.mxu0 0.0
        %3369 = vmatmul.mubr.f32.gmra.mrb[0].mxu0 %v3227
        %v3370 = vpop.f32.mrb[0].mxu0
        %v3371 = vadd.f32 0.0, %v3370
        %v3372 = vpop.f32.mrb[0].mxu0
        %3373 = vdwg.mxu0
        %v3374 = vadd.f32 %v3140, %v3296
        %v3375 = vadd.f32 %v3141, %v3301
        %v3376 = vadd.f32 %v3142, %v3306
        %v3377 = vadd.f32 %v3143, %v3311
        %v3378 = vadd.f32 %v3144, %v3316
        %v3379 = vadd.f32 %v3145, %v3321
        %v3380 = vadd.f32 %v3146, %v3326
        %v3381 = vadd.f32 %v3147, %v3331
        %v3382 = vadd.f32 %v3148, %v3336
        %v3383 = vadd.f32 %v3149, %v3341
        %v3384 = vadd.f32 %v3150, %v3346
        %v3385 = vadd.f32 %v3151, %v3351
        %v3386 = vadd.f32 %v3152, %v3356
        %v3387 = vadd.f32 %v3153, %v3361
        %v3388 = vadd.f32 %v3154, %v3366
        %v3389 = vadd.f32 %v3155, %v3371
        %v3390 = vld [vmem:[#allocation3 + $0x11] sm:$0xff]
        %v3391 = vld [vmem:[#allocation3 + $0x19] sm:$0xff]
        %v3392 = vld [vmem:[#allocation3 + $0x21] sm:$0xff]
        %v3393 = vld [vmem:[#allocation3 + $0x29] sm:$0xff]
        %v3394 = vld [vmem:[#allocation3 + $0x31] sm:$0xff]
        %v3395 = vld [vmem:[#allocation3 + $0x39] sm:$0xff]
        %v3396 = vld [vmem:[#allocation3 + $0x41] sm:$0xff]
        %v3397 = vld [vmem:[#allocation3 + $0x49] sm:$0xff]
        %v3398 = vld [vmem:[#allocation3 + $0x51] sm:$0xff]
        %v3399 = vld [vmem:[#allocation3 + $0x59] sm:$0xff]
        %v3400 = vld [vmem:[#allocation3 + $0x61] sm:$0xff]
        %v3401 = vld [vmem:[#allocation3 + $0x69] sm:$0xff]
        %v3402 = vld [vmem:[#allocation3 + $0x71] sm:$0xff]
        %v3403 = vld [vmem:[#allocation3 + $0x79] sm:$0xff]
        %v3404 = vld [vmem:[#allocation3 + $0x81] sm:$0xff]
        %v3405 = vld [vmem:[#allocation3 + $0x89] sm:$0xff]
        %s3406 = scalar_lea.vmem %s3, 320
        %v3407 = vld [vmem:[%s3406] sm:$0xff]
        %v3408 = vld [vmem:[%s3406 + $0x8] sm:$0xff]
        %v3409 = vld [vmem:[%s3406 + $0x10] sm:$0xff]
        %v3410 = vld [vmem:[%s3406 + $0x18] sm:$0xff]
        %v3411 = vld [vmem:[%s3406 + $0x20] sm:$0xff]
        %v3412 = vld [vmem:[%s3406 + $0x28] sm:$0xff]
        %v3413 = vld [vmem:[%s3406 + $0x30] sm:$0xff]
        %v3414 = vld [vmem:[%s3406 + $0x38] sm:$0xff]
        %v3416 = vsel %vm731, %v3390, 0
        %v3419 = vsel %vm731, %v3391, 0
        %v3422 = vsel %vm731, %v3392, 0
        %v3425 = vsel %vm731, %v3393, 0
        %v3428 = vsel %vm731, %v3394, 0
        %v3431 = vsel %vm731, %v3395, 0
        %v3434 = vsel %vm731, %v3396, 0
        %v3437 = vsel %vm731, %v3397, 0
        %v3440 = vsel %vm731, %v3398, 0
        %v3443 = vsel %vm731, %v3399, 0
        %v3446 = vsel %vm731, %v3400, 0
        %v3449 = vsel %vm731, %v3401, 0
        %v3452 = vsel %vm731, %v3402, 0
        %v3455 = vsel %vm731, %v3403, 0
        %v3458 = vsel %vm731, %v3404, 0
        %v3461 = vsel %vm731, %v3405, 0
        %3463 = vmatprep.subr.mxu0 0.0
        %3464 = vmatpush1.msra.mxu0 %v3407
        %3465 = vmatprep.subr.mxu0 0.0
        %3466 = vmatpush1.msra.mxu0 %v3408
        %3467 = vmatprep.subr.mxu0 0.0
        %3468 = vmatpush1.msra.mxu0 %v3409
        %3469 = vmatprep.subr.mxu0 0.0
        %3470 = vmatpush1.msra.mxu0 %v3410
        %3471 = vmatprep.subr.mxu0 0.0
        %3472 = vmatpush1.msra.mxu0 %v3411
        %3473 = vmatprep.subr.mxu0 0.0
        %3474 = vmatpush1.msra.mxu0 %v3412
        %3475 = vmatprep.subr.mxu0 0.0
        %3476 = vmatpush1.msra.mxu0 %v3413
        %3477 = vmatprep.subr.mxu0 0.0
        %3478 = vmatpush1.msra.mxu0 %v3414
        %3479 = vmatprep.subr.mxu0 0.0
        %3480 = vmatpush1.msra.mxu0 0.0
        %3481 = vmatprep.subr.mxu0 0.0
        %3482 = vmatpush1.msra.mxu0 0.0
        %3483 = vmatprep.subr.mxu0 0.0
        %3484 = vmatpush1.msra.mxu0 0.0
        %3485 = vmatprep.subr.mxu0 0.0
        %3486 = vmatpush1.msra.mxu0 0.0
        %3487 = vmatprep.subr.mxu0 0.0
        %3488 = vmatpush1.msra.mxu0 0.0
        %3489 = vmatprep.subr.mxu0 0.0
        %3490 = vmatpush1.msra.mxu0 0.0
        %3491 = vmatprep.subr.mxu0 0.0
        %3492 = vmatpush1.msra.mxu0 0.0
        %3493 = vmatprep.subr.mxu0 0.0
        %3494 = vmatpush1.msra.mxu0 0.0
        %3495 = vmatprep.subr.mxu0 0.0
        %3496 = vmatpush1.msra.mxu0 0.0
        %3497 = vmatprep.subr.mxu0 0.0
        %3498 = vmatpush1.msra.mxu0 0.0
        %3499 = vmatprep.subr.mxu0 0.0
        %3500 = vmatpush1.msra.mxu0 0.0
        %3501 = vmatprep.subr.mxu0 0.0
        %3502 = vmatpush1.msra.mxu0 0.0
        %3503 = vmatprep.subr.mxu0 0.0
        %3504 = vmatpush1.msra.mxu0 0.0
        %3505 = vmatprep.subr.mxu0 0.0
        %3506 = vmatpush1.msra.mxu0 0.0
        %3507 = vmatprep.subr.mxu0 0.0
        %3508 = vmatpush1.msra.mxu0 0.0
        %3509 = vmatprep.subr.mxu0 0.0
        %3510 = vmatpush1.msra.mxu0 0.0
        %3511 = vmatprep.subr.mxu0 0.0
        %3512 = vmatpush1.msra.mxu0 0.0
        %3513 = vmatprep.subr.mxu0 0.0
        %3514 = vmatpush1.msra.mxu0 0.0
        %3515 = vmatprep.subr.mxu0 0.0
        %3516 = vmatpush1.msra.mxu0 0.0
        %3517 = vmatprep.subr.mxu0 0.0
        %3518 = vmatpush1.msra.mxu0 0.0
        %3519 = vmatprep.subr.mxu0 0.0
        %3520 = vmatpush1.msra.mxu0 0.0
        %3521 = vmatprep.subr.mxu0 0.0
        %3522 = vmatpush1.msra.mxu0 0.0
        %3523 = vmatprep.subr.mxu0 0.0
        %3524 = vmatpush1.msra.mxu0 0.0
        %3525 = vmatprep.subr.mxu0 0.0
        %3526 = vmatpush1.msra.mxu0 0.0
        %3527 = vmatprep.mubr.f32.mxu0 0.0
        %3528 = vmatmul.mubr.f32.gmra.mrb[0].mxu0 %v3416
        %v3529 = vpop.f32.mrb[0].mxu0
        %v3530 = vadd.f32 0.0, %v3529
        %v3531 = vpop.f32.mrb[0].mxu0
        %3532 = vmatprep.mubr.f32.mxu0 0.0
        %3533 = vmatmul.mubr.f32.gmra.mrb[0].mxu0 %v3419
        %v3534 = vpop.f32.mrb[0].mxu0
        %v3535 = vadd.f32 0.0, %v3534
        %v3536 = vpop.f32.mrb[0].mxu0
        %3537 = vmatprep.mubr.f32.mxu0 0.0
        %3538 = vmatmul.mubr.f32.gmra.mrb[0].mxu0 %v3422
        %v3539 = vpop.f32.mrb[0].mxu0
        %v3540 = vadd.f32 0.0, %v3539
        %v3541 = vpop.f32.mrb[0].mxu0
        %3542 = vmatprep.mubr.f32.mxu0 0.0
        %3543 = vmatmul.mubr.f32.gmra.mrb[0].mxu0 %v3425
        %v3544 = vpop.f32.mrb[0].mxu0
        %v3545 = vadd.f32 0.0, %v3544
        %v3546 = vpop.f32.mrb[0].mxu0
        %3547 = vmatprep.mubr.f32.mxu0 0.0
        %3548 = vmatmul.mubr.f32.gmra.mrb[0].mxu0 %v3428
        %v3549 = vpop.f32.mrb[0].mxu0
        %v3550 = vadd.f32 0.0, %v3549
        %v3551 = vpop.f32.mrb[0].mxu0
        %3552 = vmatprep.mubr.f32.mxu0 0.0
        %3553 = vmatmul.mubr.f32.gmra.mrb[0].mxu0 %v3431
        %v3554 = vpop.f32.mrb[0].mxu0
        %v3555 = vadd.f32 0.0, %v3554
        %v3556 = vpop.f32.mrb[0].mxu0
        %3557 = vmatprep.mubr.f32.mxu0 0.0
        %3558 = vmatmul.mubr.f32.gmra.mrb[0].mxu0 %v3434
        %v3559 = vpop.f32.mrb[0].mxu0
        %v3560 = vadd.f32 0.0, %v3559
        %v3561 = vpop.f32.mrb[0].mxu0
        %3562 = vmatprep.mubr.f32.mxu0 0.0
        %3563 = vmatmul.mubr.f32.gmra.mrb[0].mxu0 %v3437
        %v3564 = vpop.f32.mrb[0].mxu0
        %v3565 = vadd.f32 0.0, %v3564
        %v3566 = vpop.f32.mrb[0].mxu0
        %3567 = vmatprep.mubr.f32.mxu0 0.0
        %3568 = vmatmul.mubr.f32.gmra.mrb[0].mxu0 %v3440
        %v3569 = vpop.f32.mrb[0].mxu0
        %v3570 = vadd.f32 0.0, %v3569
        %v3571 = vpop.f32.mrb[0].mxu0
        %3572 = vmatprep.mubr.f32.mxu0 0.0
        %3573 = vmatmul.mubr.f32.gmra.mrb[0].mxu0 %v3443
        %v3574 = vpop.f32.mrb[0].mxu0
        %v3575 = vadd.f32 0.0, %v3574
        %v3576 = vpop.f32.mrb[0].mxu0
        %3577 = vmatprep.mubr.f32.mxu0 0.0
        %3578 = vmatmul.mubr.f32.gmra.mrb[0].mxu0 %v3446
        %v3579 = vpop.f32.mrb[0].mxu0
        %v3580 = vadd.f32 0.0, %v3579
        %v3581 = vpop.f32.mrb[0].mxu0
        %3582 = vmatprep.mubr.f32.mxu0 0.0
        %3583 = vmatmul.mubr.f32.gmra.mrb[0].mxu0 %v3449
        %v3584 = vpop.f32.mrb[0].mxu0
        %v3585 = vadd.f32 0.0, %v3584
        %v3586 = vpop.f32.mrb[0].mxu0
        %3587 = vmatprep.mubr.f32.mxu0 0.0
        %3588 = vmatmul.mubr.f32.gmra.mrb[0].mxu0 %v3452
        %v3589 = vpop.f32.mrb[0].mxu0
        %v3590 = vadd.f32 0.0, %v3589
        %v3591 = vpop.f32.mrb[0].mxu0
        %3592 = vmatprep.mubr.f32.mxu0 0.0
        %3593 = vmatmul.mubr.f32.gmra.mrb[0].mxu0 %v3455
        %v3594 = vpop.f32.mrb[0].mxu0
        %v3595 = vadd.f32 0.0, %v3594
        %v3596 = vpop.f32.mrb[0].mxu0
        %3597 = vmatprep.mubr.f32.mxu0 0.0
        %3598 = vmatmul.mubr.f32.gmra.mrb[0].mxu0 %v3458
        %v3599 = vpop.f32.mrb[0].mxu0
        %v3600 = vadd.f32 0.0, %v3599
        %v3601 = vpop.f32.mrb[0].mxu0
        %3602 = vmatprep.mubr.f32.mxu0 0.0
        %3603 = vmatmul.mubr.f32.gmra.mrb[0].mxu0 %v3461
        %v3604 = vpop.f32.mrb[0].mxu0
        %v3605 = vadd.f32 0.0, %v3604
        %v3606 = vpop.f32.mrb[0].mxu0
        %3607 = vdwg.mxu0
        %v3608 = vadd.f32 %v3374, %v3530
        %v3609 = vadd.f32 %v3375, %v3535
        %v3610 = vadd.f32 %v3376, %v3540
        %v3611 = vadd.f32 %v3377, %v3545
        %v3612 = vadd.f32 %v3378, %v3550
        %v3613 = vadd.f32 %v3379, %v3555
        %v3614 = vadd.f32 %v3380, %v3560
        %v3615 = vadd.f32 %v3381, %v3565
        %v3616 = vadd.f32 %v3382, %v3570
        %v3617 = vadd.f32 %v3383, %v3575
        %v3618 = vadd.f32 %v3384, %v3580
        %v3619 = vadd.f32 %v3385, %v3585
        %v3620 = vadd.f32 %v3386, %v3590
        %v3621 = vadd.f32 %v3387, %v3595
        %v3622 = vadd.f32 %v3388, %v3600
        %v3623 = vadd.f32 %v3389, %v3605
        %v3624 = vld [vmem:[#allocation3 + $0x1e] sm:$0xff]
        %v3625 = vld [vmem:[#allocation3 + $0x26] sm:$0xff]
        %v3626 = vld [vmem:[#allocation3 + $0x2e] sm:$0xff]
        %v3627 = vld [vmem:[#allocation3 + $0x36] sm:$0xff]
        %v3628 = vld [vmem:[#allocation3 + $0x3e] sm:$0xff]
        %v3629 = vld [vmem:[#allocation3 + $0x46] sm:$0xff]
        %v3630 = vld [vmem:[#allocation3 + $0x4e] sm:$0xff]
        %v3631 = vld [vmem:[#allocation3 + $0x56] sm:$0xff]
        %v3632 = vld [vmem:[#allocation3 + $0x5e] sm:$0xff]
        %v3633 = vld [vmem:[#allocation3 + $0x66] sm:$0xff]
        %v3634 = vld [vmem:[#allocation3 + $0x6e] sm:$0xff]
        %v3635 = vld [vmem:[#allocation3 + $0x76] sm:$0xff]
        %v3636 = vld [vmem:[#allocation3 + $0x7e] sm:$0xff]
        %v3637 = vld [vmem:[#allocation3 + $0x86] sm:$0xff]
        %v3638 = vld [vmem:[#allocation3 + $0x8e] sm:$0xff]
        %v3639 = vld [vmem:[#allocation3 + $0x96] sm:$0xff]
        %s3640 = scalar_lea.vmem %s3, 384
        %v3641 = vld [vmem:[%s3640] sm:$0xff]
        %v3642 = vld [vmem:[%s3640 + $0x8] sm:$0xff]
        %v3643 = vld [vmem:[%s3640 + $0x10] sm:$0xff]
        %v3644 = vld [vmem:[%s3640 + $0x18] sm:$0xff]
        %v3645 = vld [vmem:[%s3640 + $0x20] sm:$0xff]
        %v3646 = vld [vmem:[%s3640 + $0x28] sm:$0xff]
        %v3647 = vld [vmem:[%s3640 + $0x30] sm:$0xff]
        %v3648 = vld [vmem:[%s3640 + $0x38] sm:$0xff]
        %v3650 = vsel %vm731, %v3624, 0
        %v3653 = vsel %vm731, %v3625, 0
        %v3656 = vsel %vm731, %v3626, 0
        %v3659 = vsel %vm731, %v3627, 0
        %v3662 = vsel %vm731, %v3628, 0
        %v3665 = vsel %vm731, %v3629, 0
        %v3668 = vsel %vm731, %v3630, 0
        %v3671 = vsel %vm731, %v3631, 0
        %v3674 = vsel %vm731, %v3632, 0
        %v3677 = vsel %vm731, %v3633, 0
        %v3680 = vsel %vm731, %v3634, 0
        %v3683 = vsel %vm731, %v3635, 0
        %v3686 = vsel %vm731, %v3636, 0
        %v3689 = vsel %vm731, %v3637, 0
        %v3692 = vsel %vm731, %v3638, 0
        %v3695 = vsel %vm731, %v3639, 0
        %3697 = vmatprep.subr.mxu0 0.0
        %3698 = vmatpush1.msra.mxu0 %v3641
        %3699 = vmatprep.subr.mxu0 0.0
        %3700 = vmatpush1.msra.mxu0 %v3642
        %3701 = vmatprep.subr.mxu0 0.0
        %3702 = vmatpush1.msra.mxu0 %v3643
        %3703 = vmatprep.subr.mxu0 0.0
        %3704 = vmatpush1.msra.mxu0 %v3644
        %3705 = vmatprep.subr.mxu0 0.0
        %3706 = vmatpush1.msra.mxu0 %v3645
        %3707 = vmatprep.subr.mxu0 0.0
        %3708 = vmatpush1.msra.mxu0 %v3646
        %3709 = vmatprep.subr.mxu0 0.0
        %3710 = vmatpush1.msra.mxu0 %v3647
        %3711 = vmatprep.subr.mxu0 0.0
        %3712 = vmatpush1.msra.mxu0 %v3648
        %3713 = vmatprep.subr.mxu0 0.0
        %3714 = vmatpush1.msra.mxu0 0.0
        %3715 = vmatprep.subr.mxu0 0.0
        %3716 = vmatpush1.msra.mxu0 0.0
        %3717 = vmatprep.subr.mxu0 0.0
        %3718 = vmatpush1.msra.mxu0 0.0
        %3719 = vmatprep.subr.mxu0 0.0
        %3720 = vmatpush1.msra.mxu0 0.0
        %3721 = vmatprep.subr.mxu0 0.0
        %3722 = vmatpush1.msra.mxu0 0.0
        %3723 = vmatprep.subr.mxu0 0.0
        %3724 = vmatpush1.msra.mxu0 0.0
        %3725 = vmatprep.subr.mxu0 0.0
        %3726 = vmatpush1.msra.mxu0 0.0
        %3727 = vmatprep.subr.mxu0 0.0
        %3728 = vmatpush1.msra.mxu0 0.0
        %3729 = vmatprep.subr.mxu0 0.0
        %3730 = vmatpush1.msra.mxu0 0.0
        %3731 = vmatprep.subr.mxu0 0.0
        %3732 = vmatpush1.msra.mxu0 0.0
        %3733 = vmatprep.subr.mxu0 0.0
        %3734 = vmatpush1.msra.mxu0 0.0
        %3735 = vmatprep.subr.mxu0 0.0
        %3736 = vmatpush1.msra.mxu0 0.0
        %3737 = vmatprep.subr.mxu0 0.0
        %3738 = vmatpush1.msra.mxu0 0.0
        %3739 = vmatprep.subr.mxu0 0.0
        %3740 = vmatpush1.msra.mxu0 0.0
        %3741 = vmatprep.subr.mxu0 0.0
        %3742 = vmatpush1.msra.mxu0 0.0
        %3743 = vmatprep.subr.mxu0 0.0
        %3744 = vmatpush1.msra.mxu0 0.0
        %3745 = vmatprep.subr.mxu0 0.0
        %3746 = vmatpush1.msra.mxu0 0.0
        %3747 = vmatprep.subr.mxu0 0.0
        %3748 = vmatpush1.msra.mxu0 0.0
        %3749 = vmatprep.subr.mxu0 0.0
        %3750 = vmatpush1.msra.mxu0 0.0
        %3751 = vmatprep.subr.mxu0 0.0
        %3752 = vmatpush1.msra.mxu0 0.0
        %3753 = vmatprep.subr.mxu0 0.0
        %3754 = vmatpush1.msra.mxu0 0.0
        %3755 = vmatprep.subr.mxu0 0.0
        %3756 = vmatpush1.msra.mxu0 0.0
        %3757 = vmatprep.subr.mxu0 0.0
        %3758 = vmatpush1.msra.mxu0 0.0
        %3759 = vmatprep.subr.mxu0 0.0
        %3760 = vmatpush1.msra.mxu0 0.0
        %3761 = vmatprep.mubr.f32.mxu0 0.0
        %3762 = vmatmul.mubr.f32.gmra.mrb[0].mxu0 %v3650
        %v3763 = vpop.f32.mrb[0].mxu0
        %v3764 = vadd.f32 0.0, %v3763
        %v3765 = vpop.f32.mrb[0].mxu0
        %3766 = vmatprep.mubr.f32.mxu0 0.0
        %3767 = vmatmul.mubr.f32.gmra.mrb[0].mxu0 %v3653
        %v3768 = vpop.f32.mrb[0].mxu0
        %v3769 = vadd.f32 0.0, %v3768
        %v3770 = vpop.f32.mrb[0].mxu0
        %3771 = vmatprep.mubr.f32.mxu0 0.0
        %3772 = vmatmul.mubr.f32.gmra.mrb[0].mxu0 %v3656
        %v3773 = vpop.f32.mrb[0].mxu0
        %v3774 = vadd.f32 0.0, %v3773
        %v3775 = vpop.f32.mrb[0].mxu0
        %3776 = vmatprep.mubr.f32.mxu0 0.0
        %3777 = vmatmul.mubr.f32.gmra.mrb[0].mxu0 %v3659
        %v3778 = vpop.f32.mrb[0].mxu0
        %v3779 = vadd.f32 0.0, %v3778
        %v3780 = vpop.f32.mrb[0].mxu0
        %3781 = vmatprep.mubr.f32.mxu0 0.0
        %3782 = vmatmul.mubr.f32.gmra.mrb[0].mxu0 %v3662
        %v3783 = vpop.f32.mrb[0].mxu0
        %v3784 = vadd.f32 0.0, %v3783
        %v3785 = vpop.f32.mrb[0].mxu0
        %3786 = vmatprep.mubr.f32.mxu0 0.0
        %3787 = vmatmul.mubr.f32.gmra.mrb[0].mxu0 %v3665
        %v3788 = vpop.f32.mrb[0].mxu0
        %v3789 = vadd.f32 0.0, %v3788
        %v3790 = vpop.f32.mrb[0].mxu0
        %3791 = vmatprep.mubr.f32.mxu0 0.0
        %3792 = vmatmul.mubr.f32.gmra.mrb[0].mxu0 %v3668
        %v3793 = vpop.f32.mrb[0].mxu0
        %v3794 = vadd.f32 0.0, %v3793
        %v3795 = vpop.f32.mrb[0].mxu0
        %3796 = vmatprep.mubr.f32.mxu0 0.0
        %3797 = vmatmul.mubr.f32.gmra.mrb[0].mxu0 %v3671
        %v3798 = vpop.f32.mrb[0].mxu0
        %v3799 = vadd.f32 0.0, %v3798
        %v3800 = vpop.f32.mrb[0].mxu0
        %3801 = vmatprep.mubr.f32.mxu0 0.0
        %3802 = vmatmul.mubr.f32.gmra.mrb[0].mxu0 %v3674
        %v3803 = vpop.f32.mrb[0].mxu0
        %v3804 = vadd.f32 0.0, %v3803
        %v3805 = vpop.f32.mrb[0].mxu0
        %3806 = vmatprep.mubr.f32.mxu0 0.0
        %3807 = vmatmul.mubr.f32.gmra.mrb[0].mxu0 %v3677
        %v3808 = vpop.f32.mrb[0].mxu0
        %v3809 = vadd.f32 0.0, %v3808
        %v3810 = vpop.f32.mrb[0].mxu0
        %3811 = vmatprep.mubr.f32.mxu0 0.0
        %3812 = vmatmul.mubr.f32.gmra.mrb[0].mxu0 %v3680
        %v3813 = vpop.f32.mrb[0].mxu0
        %v3814 = vadd.f32 0.0, %v3813
        %v3815 = vpop.f32.mrb[0].mxu0
        %3816 = vmatprep.mubr.f32.mxu0 0.0
        %3817 = vmatmul.mubr.f32.gmra.mrb[0].mxu0 %v3683
        %v3818 = vpop.f32.mrb[0].mxu0
        %v3819 = vadd.f32 0.0, %v3818
        %v3820 = vpop.f32.mrb[0].mxu0
        %3821 = vmatprep.mubr.f32.mxu0 0.0
        %3822 = vmatmul.mubr.f32.gmra.mrb[0].mxu0 %v3686
        %v3823 = vpop.f32.mrb[0].mxu0
        %v3824 = vadd.f32 0.0, %v3823
        %v3825 = vpop.f32.mrb[0].mxu0
        %3826 = vmatprep.mubr.f32.mxu0 0.0
        %3827 = vmatmul.mubr.f32.gmra.mrb[0].mxu0 %v3689
        %v3828 = vpop.f32.mrb[0].mxu0
        %v3829 = vadd.f32 0.0, %v3828
        %v3830 = vpop.f32.mrb[0].mxu0
        %3831 = vmatprep.mubr.f32.mxu0 0.0
        %3832 = vmatmul.mubr.f32.gmra.mrb[0].mxu0 %v3692
        %v3833 = vpop.f32.mrb[0].mxu0
        %v3834 = vadd.f32 0.0, %v3833
        %v3835 = vpop.f32.mrb[0].mxu0
        %3836 = vmatprep.mubr.f32.mxu0 0.0
        %3837 = vmatmul.mubr.f32.gmra.mrb[0].mxu0 %v3695
        %v3838 = vpop.f32.mrb[0].mxu0
        %v3839 = vadd.f32 0.0, %v3838
        %v3840 = vpop.f32.mrb[0].mxu0
        %3841 = vdwg.mxu0
        %v3842 = vadd.f32 %v3608, %v3764
        %v3843 = vadd.f32 %v3609, %v3769
        %v3844 = vadd.f32 %v3610, %v3774
        %v3845 = vadd.f32 %v3611, %v3779
        %v3846 = vadd.f32 %v3612, %v3784
        %v3847 = vadd.f32 %v3613, %v3789
        %v3848 = vadd.f32 %v3614, %v3794
        %v3849 = vadd.f32 %v3615, %v3799
        %v3850 = vadd.f32 %v3616, %v3804
        %v3851 = vadd.f32 %v3617, %v3809
        %v3852 = vadd.f32 %v3618, %v3814
        %v3853 = vadd.f32 %v3619, %v3819
        %v3854 = vadd.f32 %v3620, %v3824
        %v3855 = vadd.f32 %v3621, %v3829
        %v3856 = vadd.f32 %v3622, %v3834
        %v3857 = vadd.f32 %v3623, %v3839
        %v3858 = vld [vmem:[#allocation3 + $0x1f] sm:$0xff]
        %v3859 = vld [vmem:[#allocation3 + $0x27] sm:$0xff]
        %v3860 = vld [vmem:[#allocation3 + $0x2f] sm:$0xff]
        %v3861 = vld [vmem:[#allocation3 + $0x37] sm:$0xff]
        %v3862 = vld [vmem:[#allocation3 + $0x3f] sm:$0xff]
        %v3863 = vld [vmem:[#allocation3 + $0x47] sm:$0xff]
        %v3864 = vld [vmem:[#allocation3 + $0x4f] sm:$0xff]
        %v3865 = vld [vmem:[#allocation3 + $0x57] sm:$0xff]
        %v3866 = vld [vmem:[#allocation3 + $0x5f] sm:$0xff]
        %v3867 = vld [vmem:[#allocation3 + $0x67] sm:$0xff]
        %v3868 = vld [vmem:[#allocation3 + $0x6f] sm:$0xff]
        %v3869 = vld [vmem:[#allocation3 + $0x77] sm:$0xff]
        %v3870 = vld [vmem:[#allocation3 + $0x7f] sm:$0xff]
        %v3871 = vld [vmem:[#allocation3 + $0x87] sm:$0xff]
        %v3872 = vld [vmem:[#allocation3 + $0x8f] sm:$0xff]
        %v3873 = vld [vmem:[#allocation3 + $0x97] sm:$0xff]
        %s3874 = scalar_lea.vmem %s3, 448
        %v3875 = vld [vmem:[%s3874] sm:$0xff]
        %v3876 = vld [vmem:[%s3874 + $0x8] sm:$0xff]
        %v3877 = vld [vmem:[%s3874 + $0x10] sm:$0xff]
        %v3878 = vld [vmem:[%s3874 + $0x18] sm:$0xff]
        %v3879 = vld [vmem:[%s3874 + $0x20] sm:$0xff]
        %v3880 = vld [vmem:[%s3874 + $0x28] sm:$0xff]
        %v3881 = vld [vmem:[%s3874 + $0x30] sm:$0xff]
        %v3882 = vld [vmem:[%s3874 + $0x38] sm:$0xff]
        %v3884 = vsel %vm731, %v3858, 0
        %v3887 = vsel %vm731, %v3859, 0
        %v3890 = vsel %vm731, %v3860, 0
        %v3893 = vsel %vm731, %v3861, 0
        %v3896 = vsel %vm731, %v3862, 0
        %v3899 = vsel %vm731, %v3863, 0
        %v3902 = vsel %vm731, %v3864, 0
        %v3905 = vsel %vm731, %v3865, 0
        %v3908 = vsel %vm731, %v3866, 0
        %v3911 = vsel %vm731, %v3867, 0
        %v3914 = vsel %vm731, %v3868, 0
        %v3917 = vsel %vm731, %v3869, 0
        %v3920 = vsel %vm731, %v3870, 0
        %v3923 = vsel %vm731, %v3871, 0
        %v3926 = vsel %vm731, %v3872, 0
        %v3929 = vsel %vm731, %v3873, 0
        %3931 = vmatprep.subr.mxu0 0.0
        %3932 = vmatpush1.msra.mxu0 %v3875
        %3933 = vmatprep.subr.mxu0 0.0
        %3934 = vmatpush1.msra.mxu0 %v3876
        %3935 = vmatprep.subr.mxu0 0.0
        %3936 = vmatpush1.msra.mxu0 %v3877
        %3937 = vmatprep.subr.mxu0 0.0
        %3938 = vmatpush1.msra.mxu0 %v3878
        %3939 = vmatprep.subr.mxu0 0.0
        %3940 = vmatpush1.msra.mxu0 %v3879
        %3941 = vmatprep.subr.mxu0 0.0
        %3942 = vmatpush1.msra.mxu0 %v3880
        %3943 = vmatprep.subr.mxu0 0.0
        %3944 = vmatpush1.msra.mxu0 %v3881
        %3945 = vmatprep.subr.mxu0 0.0
        %3946 = vmatpush1.msra.mxu0 %v3882
        %3947 = vmatprep.subr.mxu0 0.0
        %3948 = vmatpush1.msra.mxu0 0.0
        %3949 = vmatprep.subr.mxu0 0.0
        %3950 = vmatpush1.msra.mxu0 0.0
        %3951 = vmatprep.subr.mxu0 0.0
        %3952 = vmatpush1.msra.mxu0 0.0
        %3953 = vmatprep.subr.mxu0 0.0
        %3954 = vmatpush1.msra.mxu0 0.0
        %3955 = vmatprep.subr.mxu0 0.0
        %3956 = vmatpush1.msra.mxu0 0.0
        %3957 = vmatprep.subr.mxu0 0.0
        %3958 = vmatpush1.msra.mxu0 0.0
        %3959 = vmatprep.subr.mxu0 0.0
        %3960 = vmatpush1.msra.mxu0 0.0
        %3961 = vmatprep.subr.mxu0 0.0
        %3962 = vmatpush1.msra.mxu0 0.0
        %3963 = vmatprep.subr.mxu0 0.0
        %3964 = vmatpush1.msra.mxu0 0.0
        %3965 = vmatprep.subr.mxu0 0.0
        %3966 = vmatpush1.msra.mxu0 0.0
        %3967 = vmatprep.subr.mxu0 0.0
        %3968 = vmatpush1.msra.mxu0 0.0
        %3969 = vmatprep.subr.mxu0 0.0
        %3970 = vmatpush1.msra.mxu0 0.0
        %3971 = vmatprep.subr.mxu0 0.0
        %3972 = vmatpush1.msra.mxu0 0.0
        %3973 = vmatprep.subr.mxu0 0.0
        %3974 = vmatpush1.msra.mxu0 0.0
        %3975 = vmatprep.subr.mxu0 0.0
        %3976 = vmatpush1.msra.mxu0 0.0
        %3977 = vmatprep.subr.mxu0 0.0
        %3978 = vmatpush1.msra.mxu0 0.0
        %3979 = vmatprep.subr.mxu0 0.0
        %3980 = vmatpush1.msra.mxu0 0.0
        %3981 = vmatprep.subr.mxu0 0.0
        %3982 = vmatpush1.msra.mxu0 0.0
        %3983 = vmatprep.subr.mxu0 0.0
        %3984 = vmatpush1.msra.mxu0 0.0
        %3985 = vmatprep.subr.mxu0 0.0
        %3986 = vmatpush1.msra.mxu0 0.0
        %3987 = vmatprep.subr.mxu0 0.0
        %3988 = vmatpush1.msra.mxu0 0.0
        %3989 = vmatprep.subr.mxu0 0.0
        %3990 = vmatpush1.msra.mxu0 0.0
        %3991 = vmatprep.subr.mxu0 0.0
        %3992 = vmatpush1.msra.mxu0 0.0
        %3993 = vmatprep.subr.mxu0 0.0
        %3994 = vmatpush1.msra.mxu0 0.0
        %3995 = vmatprep.mubr.f32.mxu0 0.0
        %3996 = vmatmul.mubr.f32.gmra.mrb[0].mxu0 %v3884
        %v3997 = vpop.f32.mrb[0].mxu0
        %v3998 = vadd.f32 0.0, %v3997
        %v3999 = vpop.f32.mrb[0].mxu0
        %4000 = vmatprep.mubr.f32.mxu0 0.0
        %4001 = vmatmul.mubr.f32.gmra.mrb[0].mxu0 %v3887
        %v4002 = vpop.f32.mrb[0].mxu0
        %v4003 = vadd.f32 0.0, %v4002
        %v4004 = vpop.f32.mrb[0].mxu0
        %4005 = vmatprep.mubr.f32.mxu0 0.0
        %4006 = vmatmul.mubr.f32.gmra.mrb[0].mxu0 %v3890
        %v4007 = vpop.f32.mrb[0].mxu0
        %v4008 = vadd.f32 0.0, %v4007
        %v4009 = vpop.f32.mrb[0].mxu0
        %4010 = vmatprep.mubr.f32.mxu0 0.0
        %4011 = vmatmul.mubr.f32.gmra.mrb[0].mxu0 %v3893
        %v4012 = vpop.f32.mrb[0].mxu0
        %v4013 = vadd.f32 0.0, %v4012
        %v4014 = vpop.f32.mrb[0].mxu0
        %4015 = vmatprep.mubr.f32.mxu0 0.0
        %4016 = vmatmul.mubr.f32.gmra.mrb[0].mxu0 %v3896
        %v4017 = vpop.f32.mrb[0].mxu0
        %v4018 = vadd.f32 0.0, %v4017
        %v4019 = vpop.f32.mrb[0].mxu0
        %4020 = vmatprep.mubr.f32.mxu0 0.0
        %4021 = vmatmul.mubr.f32.gmra.mrb[0].mxu0 %v3899
        %v4022 = vpop.f32.mrb[0].mxu0
        %v4023 = vadd.f32 0.0, %v4022
        %v4024 = vpop.f32.mrb[0].mxu0
        %4025 = vmatprep.mubr.f32.mxu0 0.0
        %4026 = vmatmul.mubr.f32.gmra.mrb[0].mxu0 %v3902
        %v4027 = vpop.f32.mrb[0].mxu0
        %v4028 = vadd.f32 0.0, %v4027
        %v4029 = vpop.f32.mrb[0].mxu0
        %4030 = vmatprep.mubr.f32.mxu0 0.0
        %4031 = vmatmul.mubr.f32.gmra.mrb[0].mxu0 %v3905
        %v4032 = vpop.f32.mrb[0].mxu0
        %v4033 = vadd.f32 0.0, %v4032
        %v4034 = vpop.f32.mrb[0].mxu0
        %4035 = vmatprep.mubr.f32.mxu0 0.0
        %4036 = vmatmul.mubr.f32.gmra.mrb[0].mxu0 %v3908
        %v4037 = vpop.f32.mrb[0].mxu0
        %v4038 = vadd.f32 0.0, %v4037
        %v4039 = vpop.f32.mrb[0].mxu0
        %4040 = vmatprep.mubr.f32.mxu0 0.0
        %4041 = vmatmul.mubr.f32.gmra.mrb[0].mxu0 %v3911
        %v4042 = vpop.f32.mrb[0].mxu0
        %v4043 = vadd.f32 0.0, %v4042
        %v4044 = vpop.f32.mrb[0].mxu0
        %4045 = vmatprep.mubr.f32.mxu0 0.0
        %4046 = vmatmul.mubr.f32.gmra.mrb[0].mxu0 %v3914
        %v4047 = vpop.f32.mrb[0].mxu0
        %v4048 = vadd.f32 0.0, %v4047
        %v4049 = vpop.f32.mrb[0].mxu0
        %4050 = vmatprep.mubr.f32.mxu0 0.0
        %4051 = vmatmul.mubr.f32.gmra.mrb[0].mxu0 %v3917
        %v4052 = vpop.f32.mrb[0].mxu0
        %v4053 = vadd.f32 0.0, %v4052
        %v4054 = vpop.f32.mrb[0].mxu0
        %4055 = vmatprep.mubr.f32.mxu0 0.0
        %4056 = vmatmul.mubr.f32.gmra.mrb[0].mxu0 %v3920
        %v4057 = vpop.f32.mrb[0].mxu0
        %v4058 = vadd.f32 0.0, %v4057
        %v4059 = vpop.f32.mrb[0].mxu0
        %4060 = vmatprep.mubr.f32.mxu0 0.0
        %4061 = vmatmul.mubr.f32.gmra.mrb[0].mxu0 %v3923
        %v4062 = vpop.f32.mrb[0].mxu0
        %v4063 = vadd.f32 0.0, %v4062
        %v4064 = vpop.f32.mrb[0].mxu0
        %4065 = vmatprep.mubr.f32.mxu0 0.0
        %4066 = vmatmul.mubr.f32.gmra.mrb[0].mxu0 %v3926
        %v4067 = vpop.f32.mrb[0].mxu0
        %v4068 = vadd.f32 0.0, %v4067
        %v4069 = vpop.f32.mrb[0].mxu0
        %4070 = vmatprep.mubr.f32.mxu0 0.0
        %4071 = vmatmul.mubr.f32.gmra.mrb[0].mxu0 %v3929
        %v4072 = vpop.f32.mrb[0].mxu0
        %v4073 = vadd.f32 0.0, %v4072
        %v4074 = vpop.f32.mrb[0].mxu0
        %4075 = vdwg.mxu0
        %v4076 = vadd.f32 %v3842, %v3998
        %v4077 = vadd.f32 %v3843, %v4003
        %v4078 = vadd.f32 %v3844, %v4008
        %v4079 = vadd.f32 %v3845, %v4013
        %v4080 = vadd.f32 %v3846, %v4018
        %v4081 = vadd.f32 %v3847, %v4023
        %v4082 = vadd.f32 %v3848, %v4028
        %v4083 = vadd.f32 %v3849, %v4033
        %v4084 = vadd.f32 %v3850, %v4038
        %v4085 = vadd.f32 %v3851, %v4043
        %v4086 = vadd.f32 %v3852, %v4048
        %v4087 = vadd.f32 %v3853, %v4053
        %v4088 = vadd.f32 %v3854, %v4058
        %v4089 = vadd.f32 %v3855, %v4063
        %v4090 = vadd.f32 %v3856, %v4068
        %v4091 = vadd.f32 %v3857, %v4073
        %v4092 = vld [vmem:[#allocation3 + $0x20] sm:$0xff]
        %v4093 = vld [vmem:[#allocation3 + $0x28] sm:$0xff]
        %v4094 = vld [vmem:[#allocation3 + $0x30] sm:$0xff]
        %v4095 = vld [vmem:[#allocation3 + $0x38] sm:$0xff]
        %v4096 = vld [vmem:[#allocation3 + $0x40] sm:$0xff]
        %v4097 = vld [vmem:[#allocation3 + $0x48] sm:$0xff]
        %v4098 = vld [vmem:[#allocation3 + $0x50] sm:$0xff]
        %v4099 = vld [vmem:[#allocation3 + $0x58] sm:$0xff]
        %v4100 = vld [vmem:[#allocation3 + $0x60] sm:$0xff]
        %v4101 = vld [vmem:[#allocation3 + $0x68] sm:$0xff]
        %v4102 = vld [vmem:[#allocation3 + $0x70] sm:$0xff]
        %v4103 = vld [vmem:[#allocation3 + $0x78] sm:$0xff]
        %v4104 = vld [vmem:[#allocation3 + $0x80] sm:$0xff]
        %v4105 = vld [vmem:[#allocation3 + $0x88] sm:$0xff]
        %v4106 = vld [vmem:[#allocation3 + $0x90] sm:$0xff]
        %v4107 = vld [vmem:[#allocation3 + $0x98] sm:$0xff]
        %s4108 = scalar_lea.vmem %s3, 512
        %v4109 = vld [vmem:[%s4108] sm:$0xff]
        %v4110 = vld [vmem:[%s4108 + $0x8] sm:$0xff]
        %v4111 = vld [vmem:[%s4108 + $0x10] sm:$0xff]
        %v4112 = vld [vmem:[%s4108 + $0x18] sm:$0xff]
        %v4113 = vld [vmem:[%s4108 + $0x20] sm:$0xff]
        %v4114 = vld [vmem:[%s4108 + $0x28] sm:$0xff]
        %v4115 = vld [vmem:[%s4108 + $0x30] sm:$0xff]
        %v4116 = vld [vmem:[%s4108 + $0x38] sm:$0xff]
        %v4118 = vsel %vm731, %v4092, 0
        %v4121 = vsel %vm731, %v4093, 0
        %v4124 = vsel %vm731, %v4094, 0
        %v4127 = vsel %vm731, %v4095, 0
        %v4130 = vsel %vm731, %v4096, 0
        %v4133 = vsel %vm731, %v4097, 0
        %v4136 = vsel %vm731, %v4098, 0
        %v4139 = vsel %vm731, %v4099, 0
        %v4142 = vsel %vm731, %v4100, 0
        %v4145 = vsel %vm731, %v4101, 0
        %v4148 = vsel %vm731, %v4102, 0
        %v4151 = vsel %vm731, %v4103, 0
        %v4154 = vsel %vm731, %v4104, 0
        %v4157 = vsel %vm731, %v4105, 0
        %v4160 = vsel %vm731, %v4106, 0
        %v4163 = vsel %vm731, %v4107, 0
        %4165 = vmatprep.subr.mxu0 0.0
        %4166 = vmatpush1.msra.mxu0 %v4109
        %4167 = vmatprep.subr.mxu0 0.0
        %4168 = vmatpush1.msra.mxu0 %v4110
        %4169 = vmatprep.subr.mxu0 0.0
        %4170 = vmatpush1.msra.mxu0 %v4111
        %4171 = vmatprep.subr.mxu0 0.0
        %4172 = vmatpush1.msra.mxu0 %v4112
        %4173 = vmatprep.subr.mxu0 0.0
        %4174 = vmatpush1.msra.mxu0 %v4113
        %4175 = vmatprep.subr.mxu0 0.0
        %4176 = vmatpush1.msra.mxu0 %v4114
        %4177 = vmatprep.subr.mxu0 0.0
        %4178 = vmatpush1.msra.mxu0 %v4115
        %4179 = vmatprep.subr.mxu0 0.0
        %4180 = vmatpush1.msra.mxu0 %v4116
        %4181 = vmatprep.subr.mxu0 0.0
        %4182 = vmatpush1.msra.mxu0 0.0
        %4183 = vmatprep.subr.mxu0 0.0
        %4184 = vmatpush1.msra.mxu0 0.0
        %4185 = vmatprep.subr.mxu0 0.0
        %4186 = vmatpush1.msra.mxu0 0.0
        %4187 = vmatprep.subr.mxu0 0.0
        %4188 = vmatpush1.msra.mxu0 0.0
        %4189 = vmatprep.subr.mxu0 0.0
        %4190 = vmatpush1.msra.mxu0 0.0
        %4191 = vmatprep.subr.mxu0 0.0
        %4192 = vmatpush1.msra.mxu0 0.0
        %4193 = vmatprep.subr.mxu0 0.0
        %4194 = vmatpush1.msra.mxu0 0.0
        %4195 = vmatprep.subr.mxu0 0.0
        %4196 = vmatpush1.msra.mxu0 0.0
        %4197 = vmatprep.subr.mxu0 0.0
        %4198 = vmatpush1.msra.mxu0 0.0
        %4199 = vmatprep.subr.mxu0 0.0
        %4200 = vmatpush1.msra.mxu0 0.0
        %4201 = vmatprep.subr.mxu0 0.0
        %4202 = vmatpush1.msra.mxu0 0.0
        %4203 = vmatprep.subr.mxu0 0.0
        %4204 = vmatpush1.msra.mxu0 0.0
        %4205 = vmatprep.subr.mxu0 0.0
        %4206 = vmatpush1.msra.mxu0 0.0
        %4207 = vmatprep.subr.mxu0 0.0
        %4208 = vmatpush1.msra.mxu0 0.0
        %4209 = vmatprep.subr.mxu0 0.0
        %4210 = vmatpush1.msra.mxu0 0.0
        %4211 = vmatprep.subr.mxu0 0.0
        %4212 = vmatpush1.msra.mxu0 0.0
        %4213 = vmatprep.subr.mxu0 0.0
        %4214 = vmatpush1.msra.mxu0 0.0
        %4215 = vmatprep.subr.mxu0 0.0
        %4216 = vmatpush1.msra.mxu0 0.0
        %4217 = vmatprep.subr.mxu0 0.0
        %4218 = vmatpush1.msra.mxu0 0.0
        %4219 = vmatprep.subr.mxu0 0.0
        %4220 = vmatpush1.msra.mxu0 0.0
        %4221 = vmatprep.subr.mxu0 0.0
        %4222 = vmatpush1.msra.mxu0 0.0
        %4223 = vmatprep.subr.mxu0 0.0
        %4224 = vmatpush1.msra.mxu0 0.0
        %4225 = vmatprep.subr.mxu0 0.0
        %4226 = vmatpush1.msra.mxu0 0.0
        %4227 = vmatprep.subr.mxu0 0.0
        %4228 = vmatpush1.msra.mxu0 0.0
        %4229 = vmatprep.mubr.f32.mxu0 0.0
        %4230 = vmatmul.mubr.f32.gmra.mrb[0].mxu0 %v4118
        %v4231 = vpop.f32.mrb[0].mxu0
        %v4232 = vadd.f32 0.0, %v4231
        %v4233 = vpop.f32.mrb[0].mxu0
        %4234 = vmatprep.mubr.f32.mxu0 0.0
        %4235 = vmatmul.mubr.f32.gmra.mrb[0].mxu0 %v4121
        %v4236 = vpop.f32.mrb[0].mxu0
        %v4237 = vadd.f32 0.0, %v4236
        %v4238 = vpop.f32.mrb[0].mxu0
        %4239 = vmatprep.mubr.f32.mxu0 0.0
        %4240 = vmatmul.mubr.f32.gmra.mrb[0].mxu0 %v4124
        %v4241 = vpop.f32.mrb[0].mxu0
        %v4242 = vadd.f32 0.0, %v4241
        %v4243 = vpop.f32.mrb[0].mxu0
        %4244 = vmatprep.mubr.f32.mxu0 0.0
        %4245 = vmatmul.mubr.f32.gmra.mrb[0].mxu0 %v4127
        %v4246 = vpop.f32.mrb[0].mxu0
        %v4247 = vadd.f32 0.0, %v4246
        %v4248 = vpop.f32.mrb[0].mxu0
        %4249 = vmatprep.mubr.f32.mxu0 0.0
        %4250 = vmatmul.mubr.f32.gmra.mrb[0].mxu0 %v4130
        %v4251 = vpop.f32.mrb[0].mxu0
        %v4252 = vadd.f32 0.0, %v4251
        %v4253 = vpop.f32.mrb[0].mxu0
        %4254 = vmatprep.mubr.f32.mxu0 0.0
        %4255 = vmatmul.mubr.f32.gmra.mrb[0].mxu0 %v4133
        %v4256 = vpop.f32.mrb[0].mxu0
        %v4257 = vadd.f32 0.0, %v4256
        %v4258 = vpop.f32.mrb[0].mxu0
        %4259 = vmatprep.mubr.f32.mxu0 0.0
        %4260 = vmatmul.mubr.f32.gmra.mrb[0].mxu0 %v4136
        %v4261 = vpop.f32.mrb[0].mxu0
        %v4262 = vadd.f32 0.0, %v4261
        %v4263 = vpop.f32.mrb[0].mxu0
        %4264 = vmatprep.mubr.f32.mxu0 0.0
        %4265 = vmatmul.mubr.f32.gmra.mrb[0].mxu0 %v4139
        %v4266 = vpop.f32.mrb[0].mxu0
        %v4267 = vadd.f32 0.0, %v4266
        %v4268 = vpop.f32.mrb[0].mxu0
        %4269 = vmatprep.mubr.f32.mxu0 0.0
        %4270 = vmatmul.mubr.f32.gmra.mrb[0].mxu0 %v4142
        %v4271 = vpop.f32.mrb[0].mxu0
        %v4272 = vadd.f32 0.0, %v4271
        %v4273 = vpop.f32.mrb[0].mxu0
        %4274 = vmatprep.mubr.f32.mxu0 0.0
        %4275 = vmatmul.mubr.f32.gmra.mrb[0].mxu0 %v4145
        %v4276 = vpop.f32.mrb[0].mxu0
        %v4277 = vadd.f32 0.0, %v4276
        %v4278 = vpop.f32.mrb[0].mxu0
        %4279 = vmatprep.mubr.f32.mxu0 0.0
        %4280 = vmatmul.mubr.f32.gmra.mrb[0].mxu0 %v4148
        %v4281 = vpop.f32.mrb[0].mxu0
        %v4282 = vadd.f32 0.0, %v4281
        %v4283 = vpop.f32.mrb[0].mxu0
        %4284 = vmatprep.mubr.f32.mxu0 0.0
        %4285 = vmatmul.mubr.f32.gmra.mrb[0].mxu0 %v4151
        %v4286 = vpop.f32.mrb[0].mxu0
        %v4287 = vadd.f32 0.0, %v4286
        %v4288 = vpop.f32.mrb[0].mxu0
        %4289 = vmatprep.mubr.f32.mxu0 0.0
        %4290 = vmatmul.mubr.f32.gmra.mrb[0].mxu0 %v4154
        %v4291 = vpop.f32.mrb[0].mxu0
        %v4292 = vadd.f32 0.0, %v4291
        %v4293 = vpop.f32.mrb[0].mxu0
        %4294 = vmatprep.mubr.f32.mxu0 0.0
        %4295 = vmatmul.mubr.f32.gmra.mrb[0].mxu0 %v4157
        %v4296 = vpop.f32.mrb[0].mxu0
        %v4297 = vadd.f32 0.0, %v4296
        %v4298 = vpop.f32.mrb[0].mxu0
        %4299 = vmatprep.mubr.f32.mxu0 0.0
        %4300 = vmatmul.mubr.f32.gmra.mrb[0].mxu0 %v4160
        %v4301 = vpop.f32.mrb[0].mxu0
        %v4302 = vadd.f32 0.0, %v4301
        %v4303 = vpop.f32.mrb[0].mxu0
        %4304 = vmatprep.mubr.f32.mxu0 0.0
        %4305 = vmatmul.mubr.f32.gmra.mrb[0].mxu0 %v4163
        %v4306 = vpop.f32.mrb[0].mxu0
        %v4307 = vadd.f32 0.0, %v4306
        %v4308 = vpop.f32.mrb[0].mxu0
        %4309 = vdwg.mxu0
        %v4310 = vadd.f32 %v4076, %v4232
        %v4311 = vadd.f32 %v4077, %v4237
        %v4312 = vadd.f32 %v4078, %v4242
        %v4313 = vadd.f32 %v4079, %v4247
        %v4314 = vadd.f32 %v4080, %v4252
        %v4315 = vadd.f32 %v4081, %v4257
        %v4316 = vadd.f32 %v4082, %v4262
        %v4317 = vadd.f32 %v4083, %v4267
        %v4318 = vadd.f32 %v4084, %v4272
        %v4319 = vadd.f32 %v4085, %v4277
        %v4320 = vadd.f32 %v4086, %v4282
        %v4321 = vadd.f32 %v4087, %v4287
        %v4322 = vadd.f32 %v4088, %v4292
        %v4323 = vadd.f32 %v4089, %v4297
        %v4324 = vadd.f32 %v4090, %v4302
        %v4325 = vadd.f32 %v4091, %v4307
        %v4326 = vld [vmem:[%s4] sm:$0x1]
        %v4328 = vlaneseq
        %v4329 = vshrl.u32 %v4328, 7
        %v4330 = vsub.s32 0, %v4329
        %v4331 = vrot.slane %v4326, %v4330
        %v4333 = vadd.f32 %v4310, %v4331
        %v4334 = vadd.f32 %v4311, %v4331
        %v4335 = vadd.f32 %v4312, %v4331
        %v4336 = vadd.f32 %v4313, %v4331
        %v4337 = vadd.f32 %v4314, %v4331
        %v4338 = vadd.f32 %v4315, %v4331
        %v4339 = vadd.f32 %v4316, %v4331
        %v4340 = vadd.f32 %v4317, %v4331
        %v4341 = vadd.f32 %v4318, %v4331
        %v4342 = vadd.f32 %v4319, %v4331
        %v4343 = vadd.f32 %v4320, %v4331
        %v4344 = vadd.f32 %v4321, %v4331
        %v4345 = vadd.f32 %v4322, %v4331
        %v4346 = vadd.f32 %v4323, %v4331
        %v4347 = vadd.f32 %v4324, %v4331
        %v4348 = vadd.f32 %v4325, %v4331
        %v4349 = vmax.f32 %v4333, 0.0
        %v4350 = vmax.f32 %v4334, 0.0
        %v4351 = vmax.f32 %v4335, 0.0
        %v4352 = vmax.f32 %v4336, 0.0
        %v4353 = vmax.f32 %v4337, 0.0
        %v4354 = vmax.f32 %v4338, 0.0
        %v4355 = vmax.f32 %v4339, 0.0
        %v4356 = vmax.f32 %v4340, 0.0
        %v4357 = vmax.f32 %v4341, 0.0
        %v4358 = vmax.f32 %v4342, 0.0
        %v4359 = vmax.f32 %v4343, 0.0
        %v4360 = vmax.f32 %v4344, 0.0
        %v4361 = vmax.f32 %v4345, 0.0
        %v4362 = vmax.f32 %v4346, 0.0
        %v4363 = vmax.f32 %v4347, 0.0
        %v4364 = vmax.f32 %v4348, 0.0
        %4365 = vst.msk [vmem:[#allocation2] sm:$0xff] %vm731, %v4349
        %4366 = vst.msk [vmem:[#allocation2 + $0x8] sm:$0xff] %vm731, %v4350
        %4367 = vst.msk [vmem:[#allocation2 + $0x10] sm:$0xff] %vm731, %v4351
        %4368 = vst.msk [vmem:[#allocation2 + $0x18] sm:$0xff] %vm731, %v4352
        %4369 = vst.msk [vmem:[#allocation2 + $0x20] sm:$0xff] %vm731, %v4353
        %4370 = vst.msk [vmem:[#allocation2 + $0x28] sm:$0xff] %vm731, %v4354
        %4371 = vst.msk [vmem:[#allocation2 + $0x30] sm:$0xff] %vm731, %v4355
        %4372 = vst.msk [vmem:[#allocation2 + $0x38] sm:$0xff] %vm731, %v4356
        %4373 = vst.msk [vmem:[#allocation2 + $0x40] sm:$0xff] %vm731, %v4357
        %4374 = vst.msk [vmem:[#allocation2 + $0x48] sm:$0xff] %vm731, %v4358
        %4375 = vst.msk [vmem:[#allocation2 + $0x50] sm:$0xff] %vm731, %v4359
        %4376 = vst.msk [vmem:[#allocation2 + $0x58] sm:$0xff] %vm731, %v4360
        %4377 = vst.msk [vmem:[#allocation2 + $0x60] sm:$0xff] %vm731, %v4361
        %4378 = vst.msk [vmem:[#allocation2 + $0x68] sm:$0xff] %vm731, %v4362
        %4379 = vst.msk [vmem:[#allocation2 + $0x70] sm:$0xff] %vm731, %v4363
        %4380 = vst.msk [vmem:[#allocation2 + $0x78] sm:$0xff] %vm731, %v4364
        %v4381 = vld [vmem:[#allocation3 + $0x80] sm:$0xff]
        %v4382 = vld [vmem:[#allocation3 + $0x88] sm:$0xff]
        %v4383 = vld [vmem:[#allocation3 + $0x90] sm:$0xff]
        %v4384 = vld [vmem:[#allocation3 + $0x98] sm:$0xff]
        %v4385 = vld [vmem:[#allocation3 + $0xa0] sm:$0xff]
        %v4386 = vld [vmem:[#allocation3 + $0xa8] sm:$0xff]
        %v4387 = vld [vmem:[#allocation3 + $0xb0] sm:$0xff]
        %v4388 = vld [vmem:[#allocation3 + $0xb8] sm:$0xff]
        %v4389 = vld [vmem:[#allocation3 + $0xc0] sm:$0xff]
        %v4390 = vld [vmem:[%s3] sm:$0xff]
        %v4391 = vld [vmem:[%s3 + $0x8] sm:$0xff]
        %v4392 = vld [vmem:[%s3 + $0x10] sm:$0xff]
        %v4393 = vld [vmem:[%s3 + $0x18] sm:$0xff]
        %v4394 = vld [vmem:[%s3 + $0x20] sm:$0xff]
        %v4395 = vld [vmem:[%s3 + $0x28] sm:$0xff]
        %v4396 = vld [vmem:[%s3 + $0x30] sm:$0xff]
        %v4397 = vld [vmem:[%s3 + $0x38] sm:$0xff]
        %v4398 = vld [vmem:[#allocation3 + $0x81] sm:$0xff]
        %v4399 = vld [vmem:[#allocation3 + $0x89] sm:$0xff]
        %v4400 = vld [vmem:[#allocation3 + $0x91] sm:$0xff]
        %v4401 = vld [vmem:[#allocation3 + $0x99] sm:$0xff]
        %v4402 = vld [vmem:[#allocation3 + $0xa1] sm:$0xff]
        %v4403 = vld [vmem:[#allocation3 + $0xa9] sm:$0xff]
        %v4404 = vld [vmem:[#allocation3 + $0xb1] sm:$0xff]
        %v4405 = vld [vmem:[#allocation3 + $0xb9] sm:$0xff]
        %v4406 = vld [vmem:[#allocation3 + $0xc1] sm:$0xff]
        %v4407 = vld [vmem:[%s2293] sm:$0xff]
        %v4408 = vld [vmem:[%s2293 + $0x8] sm:$0xff]
        %v4409 = vld [vmem:[%s2293 + $0x10] sm:$0xff]
        %v4410 = vld [vmem:[%s2293 + $0x18] sm:$0xff]
        %v4411 = vld [vmem:[%s2293 + $0x20] sm:$0xff]
        %v4412 = vld [vmem:[%s2293 + $0x28] sm:$0xff]
        %v4413 = vld [vmem:[%s2293 + $0x30] sm:$0xff]
        %v4414 = vld [vmem:[%s2293 + $0x38] sm:$0xff]
        %v4416 = vsel %vm731, %v4398, 0
        %v4419 = vsel %vm731, %v4399, 0
        %v4422 = vsel %vm731, %v4400, 0
        %v4425 = vsel %vm731, %v4401, 0
        %v4428 = vsel %vm731, %v4402, 0
        %v4431 = vsel %vm731, %v4403, 0
        %v4434 = vsel %vm731, %v4404, 0
        %v4437 = vsel %vm731, %v4405, 0
        %v4440 = vsel %vm731, %v4406, 0
        %4442 = vmatprep.subr.mxu0 0.0
        %4443 = vmatpush1.msra.mxu0 %v4407
        %4444 = vmatprep.subr.mxu0 0.0
        %4445 = vmatpush1.msra.mxu0 %v4408
        %4446 = vmatprep.subr.mxu0 0.0
        %4447 = vmatpush1.msra.mxu0 %v4409
        %4448 = vmatprep.subr.mxu0 0.0
        %4449 = vmatpush1.msra.mxu0 %v4410
        %4450 = vmatprep.subr.mxu0 0.0
        %4451 = vmatpush1.msra.mxu0 %v4411
        %4452 = vmatprep.subr.mxu0 0.0
        %4453 = vmatpush1.msra.mxu0 %v4412
        %4454 = vmatprep.subr.mxu0 0.0
        %4455 = vmatpush1.msra.mxu0 %v4413
        %4456 = vmatprep.subr.mxu0 0.0
        %4457 = vmatpush1.msra.mxu0 %v4414
        %4458 = vmatprep.subr.mxu0 0.0
        %4459 = vmatpush1.msra.mxu0 0.0
        %4460 = vmatprep.subr.mxu0 0.0
        %4461 = vmatpush1.msra.mxu0 0.0
        %4462 = vmatprep.subr.mxu0 0.0
        %4463 = vmatpush1.msra.mxu0 0.0
        %4464 = vmatprep.subr.mxu0 0.0
        %4465 = vmatpush1.msra.mxu0 0.0
        %4466 = vmatprep.subr.mxu0 0.0
        %4467 = vmatpush1.msra.mxu0 0.0
        %4468 = vmatprep.subr.mxu0 0.0
        %4469 = vmatpush1.msra.mxu0 0.0
        %4470 = vmatprep.subr.mxu0 0.0
        %4471 = vmatpush1.msra.mxu0 0.0
        %4472 = vmatprep.subr.mxu0 0.0
        %4473 = vmatpush1.msra.mxu0 0.0
        %4474 = vmatprep.subr.mxu0 0.0
        %4475 = vmatpush1.msra.mxu0 0.0
        %4476 = vmatprep.subr.mxu0 0.0
        %4477 = vmatpush1.msra.mxu0 0.0
        %4478 = vmatprep.subr.mxu0 0.0
        %4479 = vmatpush1.msra.mxu0 0.0
        %4480 = vmatprep.subr.mxu0 0.0
        %4481 = vmatpush1.msra.mxu0 0.0
        %4482 = vmatprep.subr.mxu0 0.0
        %4483 = vmatpush1.msra.mxu0 0.0
        %4484 = vmatprep.subr.mxu0 0.0
        %4485 = vmatpush1.msra.mxu0 0.0
        %4486 = vmatprep.subr.mxu0 0.0
        %4487 = vmatpush1.msra.mxu0 0.0
        %4488 = vmatprep.subr.mxu0 0.0
        %4489 = vmatpush1.msra.mxu0 0.0
        %4490 = vmatprep.subr.mxu0 0.0
        %4491 = vmatpush1.msra.mxu0 0.0
        %4492 = vmatprep.subr.mxu0 0.0
        %4493 = vmatpush1.msra.mxu0 0.0
        %4494 = vmatprep.subr.mxu0 0.0
        %4495 = vmatpush1.msra.mxu0 0.0
        %4496 = vmatprep.subr.mxu0 0.0
        %4497 = vmatpush1.msra.mxu0 0.0
        %4498 = vmatprep.subr.mxu0 0.0
        %4499 = vmatpush1.msra.mxu0 0.0
        %4500 = vmatprep.subr.mxu0 0.0
        %4501 = vmatpush1.msra.mxu0 0.0
        %4502 = vmatprep.subr.mxu0 0.0
        %4503 = vmatpush1.msra.mxu0 0.0
        %4504 = vmatprep.subr.mxu0 0.0
        %4505 = vmatpush1.msra.mxu0 0.0
        %4506 = vmatprep.mubr.f32.mxu0 0.0
        %4507 = vmatmul.mubr.f32.gmra.mrb[0].mxu0 %v4416
        %v4508 = vpop.f32.mrb[0].mxu0
        %v4509 = vadd.f32 0.0, %v4508
        %v4510 = vpop.f32.mrb[0].mxu0
        %4511 = vmatprep.mubr.f32.mxu0 0.0
        %4512 = vmatmul.mubr.f32.gmra.mrb[0].mxu0 %v4419
        %v4513 = vpop.f32.mrb[0].mxu0
        %v4514 = vadd.f32 0.0, %v4513
        %v4515 = vpop.f32.mrb[0].mxu0
        %4516 = vmatprep.mubr.f32.mxu0 0.0
        %4517 = vmatmul.mubr.f32.gmra.mrb[0].mxu0 %v4422
        %v4518 = vpop.f32.mrb[0].mxu0
        %v4519 = vadd.f32 0.0, %v4518
        %v4520 = vpop.f32.mrb[0].mxu0
        %4521 = vmatprep.mubr.f32.mxu0 0.0
        %4522 = vmatmul.mubr.f32.gmra.mrb[0].mxu0 %v4425
        %v4523 = vpop.f32.mrb[0].mxu0
        %v4524 = vadd.f32 0.0, %v4523
        %v4525 = vpop.f32.mrb[0].mxu0
        %4526 = vmatprep.mubr.f32.mxu0 0.0
        %4527 = vmatmul.mubr.f32.gmra.mrb[0].mxu0 %v4428
        %v4528 = vpop.f32.mrb[0].mxu0
        %v4529 = vadd.f32 0.0, %v4528
        %v4530 = vpop.f32.mrb[0].mxu0
        %4531 = vmatprep.mubr.f32.mxu0 0.0
        %4532 = vmatmul.mubr.f32.gmra.mrb[0].mxu0 %v4431
        %v4533 = vpop.f32.mrb[0].mxu0
        %v4534 = vadd.f32 0.0, %v4533
        %v4535 = vpop.f32.mrb[0].mxu0
        %4536 = vmatprep.mubr.f32.mxu0 0.0
        %4537 = vmatmul.mubr.f32.gmra.mrb[0].mxu0 %v4434
        %v4538 = vpop.f32.mrb[0].mxu0
        %v4539 = vadd.f32 0.0, %v4538
        %v4540 = vpop.f32.mrb[0].mxu0
        %4541 = vmatprep.mubr.f32.mxu0 0.0
        %4542 = vmatmul.mubr.f32.gmra.mrb[0].mxu0 %v4437
        %v4543 = vpop.f32.mrb[0].mxu0
        %v4544 = vadd.f32 0.0, %v4543
        %v4545 = vpop.f32.mrb[0].mxu0
        %4546 = vmatprep.mubr.f32.mxu0 0.0
        %4547 = vmatmul.mubr.f32.gmra.mrb[0].mxu0 %v4440
        %v4548 = vpop.f32.mrb[0].mxu0
        %v4549 = vadd.f32 0.0, %v4548
        %v4550 = vpop.f32.mrb[0].mxu0
        %4551 = vdwg.mxu0
        %v4553 = vsel %vm731, %v4381, 0
        %v4556 = vsel %vm731, %v4382, 0
        %v4559 = vsel %vm731, %v4383, 0
        %v4562 = vsel %vm731, %v4384, 0
        %v4565 = vsel %vm731, %v4385, 0
        %v4568 = vsel %vm731, %v4386, 0
        %v4571 = vsel %vm731, %v4387, 0
        %v4574 = vsel %vm731, %v4388, 0
        %v4577 = vsel %vm731, %v4389, 0
        %4579 = vmatprep.subr.mxu0 0.0
        %4580 = vmatpush1.msra.mxu0 %v4390
        %4581 = vmatprep.subr.mxu0 0.0
        %4582 = vmatpush1.msra.mxu0 %v4391
        %4583 = vmatprep.subr.mxu0 0.0
        %4584 = vmatpush1.msra.mxu0 %v4392
        %4585 = vmatprep.subr.mxu0 0.0
        %4586 = vmatpush1.msra.mxu0 %v4393
        %4587 = vmatprep.subr.mxu0 0.0
        %4588 = vmatpush1.msra.mxu0 %v4394
        %4589 = vmatprep.subr.mxu0 0.0
        %4590 = vmatpush1.msra.mxu0 %v4395
        %4591 = vmatprep.subr.mxu0 0.0
        %4592 = vmatpush1.msra.mxu0 %v4396
        %4593 = vmatprep.subr.mxu0 0.0
        %4594 = vmatpush1.msra.mxu0 %v4397
        %4595 = vmatprep.subr.mxu0 0.0
        %4596 = vmatpush1.msra.mxu0 0.0
        %4597 = vmatprep.subr.mxu0 0.0
        %4598 = vmatpush1.msra.mxu0 0.0
        %4599 = vmatprep.subr.mxu0 0.0
        %4600 = vmatpush1.msra.mxu0 0.0
        %4601 = vmatprep.subr.mxu0 0.0
        %4602 = vmatpush1.msra.mxu0 0.0
        %4603 = vmatprep.subr.mxu0 0.0
        %4604 = vmatpush1.msra.mxu0 0.0
        %4605 = vmatprep.subr.mxu0 0.0
        %4606 = vmatpush1.msra.mxu0 0.0
        %4607 = vmatprep.subr.mxu0 0.0
        %4608 = vmatpush1.msra.mxu0 0.0
        %4609 = vmatprep.subr.mxu0 0.0
        %4610 = vmatpush1.msra.mxu0 0.0
        %4611 = vmatprep.subr.mxu0 0.0
        %4612 = vmatpush1.msra.mxu0 0.0
        %4613 = vmatprep.subr.mxu0 0.0
        %4614 = vmatpush1.msra.mxu0 0.0
        %4615 = vmatprep.subr.mxu0 0.0
        %4616 = vmatpush1.msra.mxu0 0.0
        %4617 = vmatprep.subr.mxu0 0.0
        %4618 = vmatpush1.msra.mxu0 0.0
        %4619 = vmatprep.subr.mxu0 0.0
        %4620 = vmatpush1.msra.mxu0 0.0
        %4621 = vmatprep.subr.mxu0 0.0
        %4622 = vmatpush1.msra.mxu0 0.0
        %4623 = vmatprep.subr.mxu0 0.0
        %4624 = vmatpush1.msra.mxu0 0.0
        %4625 = vmatprep.subr.mxu0 0.0
        %4626 = vmatpush1.msra.mxu0 0.0
        %4627 = vmatprep.subr.mxu0 0.0
        %4628 = vmatpush1.msra.mxu0 0.0
        %4629 = vmatprep.subr.mxu0 0.0
        %4630 = vmatpush1.msra.mxu0 0.0
        %4631 = vmatprep.subr.mxu0 0.0
        %4632 = vmatpush1.msra.mxu0 0.0
        %4633 = vmatprep.subr.mxu0 0.0
        %4634 = vmatpush1.msra.mxu0 0.0
        %4635 = vmatprep.subr.mxu0 0.0
        %4636 = vmatpush1.msra.mxu0 0.0
        %4637 = vmatprep.subr.mxu0 0.0
        %4638 = vmatpush1.msra.mxu0 0.0
        %4639 = vmatprep.subr.mxu0 0.0
        %4640 = vmatpush1.msra.mxu0 0.0
        %4641 = vmatprep.subr.mxu0 0.0
        %4642 = vmatpush1.msra.mxu0 0.0
        %4643 = vmatprep.mubr.f32.mxu0 0.0
        %4644 = vmatmul.mubr.f32.gmra.mrb[0].mxu0 %v4553
        %v4645 = vpop.f32.mrb[0].mxu0
        %v4646 = vadd.f32 %v4509, %v4645
        %v4647 = vpop.f32.mrb[0].mxu0
        %4648 = vmatprep.mubr.f32.mxu0 0.0
        %4649 = vmatmul.mubr.f32.gmra.mrb[0].mxu0 %v4556
        %v4650 = vpop.f32.mrb[0].mxu0
        %v4651 = vadd.f32 %v4514, %v4650
        %v4652 = vpop.f32.mrb[0].mxu0
        %4653 = vmatprep.mubr.f32.mxu0 0.0
        %4654 = vmatmul.mubr.f32.gmra.mrb[0].mxu0 %v4559
        %v4655 = vpop.f32.mrb[0].mxu0
        %v4656 = vadd.f32 %v4519, %v4655
        %v4657 = vpop.f32.mrb[0].mxu0
        %4658 = vmatprep.mubr.f32.mxu0 0.0
        %4659 = vmatmul.mubr.f32.gmra.mrb[0].mxu0 %v4562
        %v4660 = vpop.f32.mrb[0].mxu0
        %v4661 = vadd.f32 %v4524, %v4660
        %v4662 = vpop.f32.mrb[0].mxu0
        %4663 = vmatprep.mubr.f32.mxu0 0.0
        %4664 = vmatmul.mubr.f32.gmra.mrb[0].mxu0 %v4565
        %v4665 = vpop.f32.mrb[0].mxu0
        %v4666 = vadd.f32 %v4529, %v4665
        %v4667 = vpop.f32.mrb[0].mxu0
        %4668 = vmatprep.mubr.f32.mxu0 0.0
        %4669 = vmatmul.mubr.f32.gmra.mrb[0].mxu0 %v4568
        %v4670 = vpop.f32.mrb[0].mxu0
        %v4671 = vadd.f32 %v4534, %v4670
        %v4672 = vpop.f32.mrb[0].mxu0
        %4673 = vmatprep.mubr.f32.mxu0 0.0
        %4674 = vmatmul.mubr.f32.gmra.mrb[0].mxu0 %v4571
        %v4675 = vpop.f32.mrb[0].mxu0
        %v4676 = vadd.f32 %v4539, %v4675
        %v4677 = vpop.f32.mrb[0].mxu0
        %4678 = vmatprep.mubr.f32.mxu0 0.0
        %4679 = vmatmul.mubr.f32.gmra.mrb[0].mxu0 %v4574
        %v4680 = vpop.f32.mrb[0].mxu0
        %v4681 = vadd.f32 %v4544, %v4680
        %v4682 = vpop.f32.mrb[0].mxu0
        %4683 = vmatprep.mubr.f32.mxu0 0.0
        %4684 = vmatmul.mubr.f32.gmra.mrb[0].mxu0 %v4577
        %v4685 = vpop.f32.mrb[0].mxu0
        %v4686 = vadd.f32 %v4549, %v4685
        %v4687 = vpop.f32.mrb[0].mxu0
        %4688 = vdwg.mxu0
        %v4689 = vld [vmem:[#allocation3 + $0x82] sm:$0xff]
        %v4690 = vld [vmem:[#allocation3 + $0x8a] sm:$0xff]
        %v4691 = vld [vmem:[#allocation3 + $0x92] sm:$0xff]
        %v4692 = vld [vmem:[#allocation3 + $0x9a] sm:$0xff]
        %v4693 = vld [vmem:[#allocation3 + $0xa2] sm:$0xff]
        %v4694 = vld [vmem:[#allocation3 + $0xaa] sm:$0xff]
        %v4695 = vld [vmem:[#allocation3 + $0xb2] sm:$0xff]
        %v4696 = vld [vmem:[#allocation3 + $0xba] sm:$0xff]
        %v4697 = vld [vmem:[#allocation3 + $0xc2] sm:$0xff]
        %v4698 = vld [vmem:[%s2704] sm:$0xff]
        %v4699 = vld [vmem:[%s2704 + $0x8] sm:$0xff]
        %v4700 = vld [vmem:[%s2704 + $0x10] sm:$0xff]
        %v4701 = vld [vmem:[%s2704 + $0x18] sm:$0xff]
        %v4702 = vld [vmem:[%s2704 + $0x20] sm:$0xff]
        %v4703 = vld [vmem:[%s2704 + $0x28] sm:$0xff]
        %v4704 = vld [vmem:[%s2704 + $0x30] sm:$0xff]
        %v4705 = vld [vmem:[%s2704 + $0x38] sm:$0xff]
        %v4707 = vsel %vm731, %v4689, 0
        %v4710 = vsel %vm731, %v4690, 0
        %v4713 = vsel %vm731, %v4691, 0
        %v4716 = vsel %vm731, %v4692, 0
        %v4719 = vsel %vm731, %v4693, 0
        %v4722 = vsel %vm731, %v4694, 0
        %v4725 = vsel %vm731, %v4695, 0
        %v4728 = vsel %vm731, %v4696, 0
        %v4731 = vsel %vm731, %v4697, 0
        %4733 = vmatprep.subr.mxu0 0.0
        %4734 = vmatpush1.msra.mxu0 %v4698
        %4735 = vmatprep.subr.mxu0 0.0
        %4736 = vmatpush1.msra.mxu0 %v4699
        %4737 = vmatprep.subr.mxu0 0.0
        %4738 = vmatpush1.msra.mxu0 %v4700
        %4739 = vmatprep.subr.mxu0 0.0
        %4740 = vmatpush1.msra.mxu0 %v4701
        %4741 = vmatprep.subr.mxu0 0.0
        %4742 = vmatpush1.msra.mxu0 %v4702
        %4743 = vmatprep.subr.mxu0 0.0
        %4744 = vmatpush1.msra.mxu0 %v4703
        %4745 = vmatprep.subr.mxu0 0.0
        %4746 = vmatpush1.msra.mxu0 %v4704
        %4747 = vmatprep.subr.mxu0 0.0
        %4748 = vmatpush1.msra.mxu0 %v4705
        %4749 = vmatprep.subr.mxu0 0.0
        %4750 = vmatpush1.msra.mxu0 0.0
        %4751 = vmatprep.subr.mxu0 0.0
        %4752 = vmatpush1.msra.mxu0 0.0
        %4753 = vmatprep.subr.mxu0 0.0
        %4754 = vmatpush1.msra.mxu0 0.0
        %4755 = vmatprep.subr.mxu0 0.0
        %4756 = vmatpush1.msra.mxu0 0.0
        %4757 = vmatprep.subr.mxu0 0.0
        %4758 = vmatpush1.msra.mxu0 0.0
        %4759 = vmatprep.subr.mxu0 0.0
        %4760 = vmatpush1.msra.mxu0 0.0
        %4761 = vmatprep.subr.mxu0 0.0
        %4762 = vmatpush1.msra.mxu0 0.0
        %4763 = vmatprep.subr.mxu0 0.0
        %4764 = vmatpush1.msra.mxu0 0.0
        %4765 = vmatprep.subr.mxu0 0.0
        %4766 = vmatpush1.msra.mxu0 0.0
        %4767 = vmatprep.subr.mxu0 0.0
        %4768 = vmatpush1.msra.mxu0 0.0
        %4769 = vmatprep.subr.mxu0 0.0
        %4770 = vmatpush1.msra.mxu0 0.0
        %4771 = vmatprep.subr.mxu0 0.0
        %4772 = vmatpush1.msra.mxu0 0.0
        %4773 = vmatprep.subr.mxu0 0.0
        %4774 = vmatpush1.msra.mxu0 0.0
        %4775 = vmatprep.subr.mxu0 0.0
        %4776 = vmatpush1.msra.mxu0 0.0
        %4777 = vmatprep.subr.mxu0 0.0
        %4778 = vmatpush1.msra.mxu0 0.0
        %4779 = vmatprep.subr.mxu0 0.0
        %4780 = vmatpush1.msra.mxu0 0.0
        %4781 = vmatprep.subr.mxu0 0.0
        %4782 = vmatpush1.msra.mxu0 0.0
        %4783 = vmatprep.subr.mxu0 0.0
        %4784 = vmatpush1.msra.mxu0 0.0
        %4785 = vmatprep.subr.mxu0 0.0
        %4786 = vmatpush1.msra.mxu0 0.0
        %4787 = vmatprep.subr.mxu0 0.0
        %4788 = vmatpush1.msra.mxu0 0.0
        %4789 = vmatprep.subr.mxu0 0.0
        %4790 = vmatpush1.msra.mxu0 0.0
        %4791 = vmatprep.subr.mxu0 0.0
        %4792 = vmatpush1.msra.mxu0 0.0
        %4793 = vmatprep.subr.mxu0 0.0
        %4794 = vmatpush1.msra.mxu0 0.0
        %4795 = vmatprep.subr.mxu0 0.0
        %4796 = vmatpush1.msra.mxu0 0.0
        %4797 = vmatprep.mubr.f32.mxu0 0.0
        %4798 = vmatmul.mubr.f32.gmra.mrb[0].mxu0 %v4707
        %v4799 = vpop.f32.mrb[0].mxu0
        %v4800 = vadd.f32 0.0, %v4799
        %v4801 = vpop.f32.mrb[0].mxu0
        %4802 = vmatprep.mubr.f32.mxu0 0.0
        %4803 = vmatmul.mubr.f32.gmra.mrb[0].mxu0 %v4710
        %v4804 = vpop.f32.mrb[0].mxu0
        %v4805 = vadd.f32 0.0, %v4804
        %v4806 = vpop.f32.mrb[0].mxu0
        %4807 = vmatprep.mubr.f32.mxu0 0.0
        %4808 = vmatmul.mubr.f32.gmra.mrb[0].mxu0 %v4713
        %v4809 = vpop.f32.mrb[0].mxu0
        %v4810 = vadd.f32 0.0, %v4809
        %v4811 = vpop.f32.mrb[0].mxu0
        %4812 = vmatprep.mubr.f32.mxu0 0.0
        %4813 = vmatmul.mubr.f32.gmra.mrb[0].mxu0 %v4716
        %v4814 = vpop.f32.mrb[0].mxu0
        %v4815 = vadd.f32 0.0, %v4814
        %v4816 = vpop.f32.mrb[0].mxu0
        %4817 = vmatprep.mubr.f32.mxu0 0.0
        %4818 = vmatmul.mubr.f32.gmra.mrb[0].mxu0 %v4719
        %v4819 = vpop.f32.mrb[0].mxu0
        %v4820 = vadd.f32 0.0, %v4819
        %v4821 = vpop.f32.mrb[0].mxu0
        %4822 = vmatprep.mubr.f32.mxu0 0.0
        %4823 = vmatmul.mubr.f32.gmra.mrb[0].mxu0 %v4722
        %v4824 = vpop.f32.mrb[0].mxu0
        %v4825 = vadd.f32 0.0, %v4824
        %v4826 = vpop.f32.mrb[0].mxu0
        %4827 = vmatprep.mubr.f32.mxu0 0.0
        %4828 = vmatmul.mubr.f32.gmra.mrb[0].mxu0 %v4725
        %v4829 = vpop.f32.mrb[0].mxu0
        %v4830 = vadd.f32 0.0, %v4829
        %v4831 = vpop.f32.mrb[0].mxu0
        %4832 = vmatprep.mubr.f32.mxu0 0.0
        %4833 = vmatmul.mubr.f32.gmra.mrb[0].mxu0 %v4728
        %v4834 = vpop.f32.mrb[0].mxu0
        %v4835 = vadd.f32 0.0, %v4834
        %v4836 = vpop.f32.mrb[0].mxu0
        %4837 = vmatprep.mubr.f32.mxu0 0.0
        %4838 = vmatmul.mubr.f32.gmra.mrb[0].mxu0 %v4731
        %v4839 = vpop.f32.mrb[0].mxu0
        %v4840 = vadd.f32 0.0, %v4839
        %v4841 = vpop.f32.mrb[0].mxu0
        %4842 = vdwg.mxu0
        %v4843 = vadd.f32 %v4646, %v4800
        %v4844 = vadd.f32 %v4651, %v4805
        %v4845 = vadd.f32 %v4656, %v4810
        %v4846 = vadd.f32 %v4661, %v4815
        %v4847 = vadd.f32 %v4666, %v4820
        %v4848 = vadd.f32 %v4671, %v4825
        %v4849 = vadd.f32 %v4676, %v4830
        %v4850 = vadd.f32 %v4681, %v4835
        %v4851 = vadd.f32 %v4686, %v4840
        %v4852 = vld [vmem:[#allocation3 + $0x8f] sm:$0xff]
        %v4853 = vld [vmem:[#allocation3 + $0x97] sm:$0xff]
        %v4854 = vld [vmem:[#allocation3 + $0x9f] sm:$0xff]
        %v4855 = vld [vmem:[#allocation3 + $0xa7] sm:$0xff]
        %v4856 = vld [vmem:[#allocation3 + $0xaf] sm:$0xff]
        %v4857 = vld [vmem:[#allocation3 + $0xb7] sm:$0xff]
        %v4858 = vld [vmem:[#allocation3 + $0xbf] sm:$0xff]
        %v4859 = vld [vmem:[#allocation3 + $0xc7] sm:$0xff]
        %v4860 = vld [vmem:[#allocation3 + $0xcf] sm:$0xff]
        %v4861 = vld [vmem:[%s2938] sm:$0xff]
        %v4862 = vld [vmem:[%s2938 + $0x8] sm:$0xff]
        %v4863 = vld [vmem:[%s2938 + $0x10] sm:$0xff]
        %v4864 = vld [vmem:[%s2938 + $0x18] sm:$0xff]
        %v4865 = vld [vmem:[%s2938 + $0x20] sm:$0xff]
        %v4866 = vld [vmem:[%s2938 + $0x28] sm:$0xff]
        %v4867 = vld [vmem:[%s2938 + $0x30] sm:$0xff]
        %v4868 = vld [vmem:[%s2938 + $0x38] sm:$0xff]
        %v4870 = vsel %vm731, %v4852, 0
        %v4873 = vsel %vm731, %v4853, 0
        %v4876 = vsel %vm731, %v4854, 0
        %v4879 = vsel %vm731, %v4855, 0
        %v4882 = vsel %vm731, %v4856, 0
        %v4885 = vsel %vm731, %v4857, 0
        %v4888 = vsel %vm731, %v4858, 0
        %v4891 = vsel %vm731, %v4859, 0
        %v4894 = vsel %vm731, %v4860, 0
        %4896 = vmatprep.subr.mxu0 0.0
        %4897 = vmatpush1.msra.mxu0 %v4861
        %4898 = vmatprep.subr.mxu0 0.0
        %4899 = vmatpush1.msra.mxu0 %v4862
        %4900 = vmatprep.subr.mxu0 0.0
        %4901 = vmatpush1.msra.mxu0 %v4863
        %4902 = vmatprep.subr.mxu0 0.0
        %4903 = vmatpush1.msra.mxu0 %v4864
        %4904 = vmatprep.subr.mxu0 0.0
        %4905 = vmatpush1.msra.mxu0 %v4865
        %4906 = vmatprep.subr.mxu0 0.0
        %4907 = vmatpush1.msra.mxu0 %v4866
        %4908 = vmatprep.subr.mxu0 0.0
        %4909 = vmatpush1.msra.mxu0 %v4867
        %4910 = vmatprep.subr.mxu0 0.0
        %4911 = vmatpush1.msra.mxu0 %v4868
        %4912 = vmatprep.subr.mxu0 0.0
        %4913 = vmatpush1.msra.mxu0 0.0
        %4914 = vmatprep.subr.mxu0 0.0
        %4915 = vmatpush1.msra.mxu0 0.0
        %4916 = vmatprep.subr.mxu0 0.0
        %4917 = vmatpush1.msra.mxu0 0.0
        %4918 = vmatprep.subr.mxu0 0.0
        %4919 = vmatpush1.msra.mxu0 0.0
        %4920 = vmatprep.subr.mxu0 0.0
        %4921 = vmatpush1.msra.mxu0 0.0
        %4922 = vmatprep.subr.mxu0 0.0
        %4923 = vmatpush1.msra.mxu0 0.0
        %4924 = vmatprep.subr.mxu0 0.0
        %4925 = vmatpush1.msra.mxu0 0.0
        %4926 = vmatprep.subr.mxu0 0.0
        %4927 = vmatpush1.msra.mxu0 0.0
        %4928 = vmatprep.subr.mxu0 0.0
        %4929 = vmatpush1.msra.mxu0 0.0
        %4930 = vmatprep.subr.mxu0 0.0
        %4931 = vmatpush1.msra.mxu0 0.0
        %4932 = vmatprep.subr.mxu0 0.0
        %4933 = vmatpush1.msra.mxu0 0.0
        %4934 = vmatprep.subr.mxu0 0.0
        %4935 = vmatpush1.msra.mxu0 0.0
        %4936 = vmatprep.subr.mxu0 0.0
        %4937 = vmatpush1.msra.mxu0 0.0
        %4938 = vmatprep.subr.mxu0 0.0
        %4939 = vmatpush1.msra.mxu0 0.0
        %4940 = vmatprep.subr.mxu0 0.0
        %4941 = vmatpush1.msra.mxu0 0.0
        %4942 = vmatprep.subr.mxu0 0.0
        %4943 = vmatpush1.msra.mxu0 0.0
        %4944 = vmatprep.subr.mxu0 0.0
        %4945 = vmatpush1.msra.mxu0 0.0
        %4946 = vmatprep.subr.mxu0 0.0
        %4947 = vmatpush1.msra.mxu0 0.0
        %4948 = vmatprep.subr.mxu0 0.0
        %4949 = vmatpush1.msra.mxu0 0.0
        %4950 = vmatprep.subr.mxu0 0.0
        %4951 = vmatpush1.msra.mxu0 0.0
        %4952 = vmatprep.subr.mxu0 0.0
        %4953 = vmatpush1.msra.mxu0 0.0
        %4954 = vmatprep.subr.mxu0 0.0
        %4955 = vmatpush1.msra.mxu0 0.0
        %4956 = vmatprep.subr.mxu0 0.0
        %4957 = vmatpush1.msra.mxu0 0.0
        %4958 = vmatprep.subr.mxu0 0.0
        %4959 = vmatpush1.msra.mxu0 0.0
        %4960 = vmatprep.mubr.f32.mxu0 0.0
        %4961 = vmatmul.mubr.f32.gmra.mrb[0].mxu0 %v4870
        %v4962 = vpop.f32.mrb[0].mxu0
        %v4963 = vadd.f32 0.0, %v4962
        %v4964 = vpop.f32.mrb[0].mxu0
        %4965 = vmatprep.mubr.f32.mxu0 0.0
        %4966 = vmatmul.mubr.f32.gmra.mrb[0].mxu0 %v4873
        %v4967 = vpop.f32.mrb[0].mxu0
        %v4968 = vadd.f32 0.0, %v4967
        %v4969 = vpop.f32.mrb[0].mxu0
        %4970 = vmatprep.mubr.f32.mxu0 0.0
        %4971 = vmatmul.mubr.f32.gmra.mrb[0].mxu0 %v4876
        %v4972 = vpop.f32.mrb[0].mxu0
        %v4973 = vadd.f32 0.0, %v4972
        %v4974 = vpop.f32.mrb[0].mxu0
        %4975 = vmatprep.mubr.f32.mxu0 0.0
        %4976 = vmatmul.mubr.f32.gmra.mrb[0].mxu0 %v4879
        %v4977 = vpop.f32.mrb[0].mxu0
        %v4978 = vadd.f32 0.0, %v4977
        %v4979 = vpop.f32.mrb[0].mxu0
        %4980 = vmatprep.mubr.f32.mxu0 0.0
        %4981 = vmatmul.mubr.f32.gmra.mrb[0].mxu0 %v4882
        %v4982 = vpop.f32.mrb[0].mxu0
        %v4983 = vadd.f32 0.0, %v4982
        %v4984 = vpop.f32.mrb[0].mxu0
        %4985 = vmatprep.mubr.f32.mxu0 0.0
        %4986 = vmatmul.mubr.f32.gmra.mrb[0].mxu0 %v4885
        %v4987 = vpop.f32.mrb[0].mxu0
        %v4988 = vadd.f32 0.0, %v4987
        %v4989 = vpop.f32.mrb[0].mxu0
        %4990 = vmatprep.mubr.f32.mxu0 0.0
        %4991 = vmatmul.mubr.f32.gmra.mrb[0].mxu0 %v4888
        %v4992 = vpop.f32.mrb[0].mxu0
        %v4993 = vadd.f32 0.0, %v4992
        %v4994 = vpop.f32.mrb[0].mxu0
        %4995 = vmatprep.mubr.f32.mxu0 0.0
        %4996 = vmatmul.mubr.f32.gmra.mrb[0].mxu0 %v4891
        %v4997 = vpop.f32.mrb[0].mxu0
        %v4998 = vadd.f32 0.0, %v4997
        %v4999 = vpop.f32.mrb[0].mxu0
        %5000 = vmatprep.mubr.f32.mxu0 0.0
        %5001 = vmatmul.mubr.f32.gmra.mrb[0].mxu0 %v4894
        %v5002 = vpop.f32.mrb[0].mxu0
        %v5003 = vadd.f32 0.0, %v5002
        %v5004 = vpop.f32.mrb[0].mxu0
        %5005 = vdwg.mxu0
        %v5006 = vadd.f32 %v4843, %v4963
        %v5007 = vadd.f32 %v4844, %v4968
        %v5008 = vadd.f32 %v4845, %v4973
        %v5009 = vadd.f32 %v4846, %v4978
        %v5010 = vadd.f32 %v4847, %v4983
        %v5011 = vadd.f32 %v4848, %v4988
        %v5012 = vadd.f32 %v4849, %v4993
        %v5013 = vadd.f32 %v4850, %v4998
        %v5014 = vadd.f32 %v4851, %v5003
        %v5015 = vld [vmem:[#allocation3 + $0x90] sm:$0xff]
        %v5016 = vld [vmem:[#allocation3 + $0x98] sm:$0xff]
        %v5017 = vld [vmem:[#allocation3 + $0xa0] sm:$0xff]
        %v5018 = vld [vmem:[#allocation3 + $0xa8] sm:$0xff]
        %v5019 = vld [vmem:[#allocation3 + $0xb0] sm:$0xff]
        %v5020 = vld [vmem:[#allocation3 + $0xb8] sm:$0xff]
        %v5021 = vld [vmem:[#allocation3 + $0xc0] sm:$0xff]
        %v5022 = vld [vmem:[#allocation3 + $0xc8] sm:$0xff]
        %v5023 = vld [vmem:[#allocation3 + $0xd0] sm:$0xff]
        %v5024 = vld [vmem:[%s3172] sm:$0xff]
        %v5025 = vld [vmem:[%s3172 + $0x8] sm:$0xff]
        %v5026 = vld [vmem:[%s3172 + $0x10] sm:$0xff]
        %v5027 = vld [vmem:[%s3172 + $0x18] sm:$0xff]
        %v5028 = vld [vmem:[%s3172 + $0x20] sm:$0xff]
        %v5029 = vld [vmem:[%s3172 + $0x28] sm:$0xff]
        %v5030 = vld [vmem:[%s3172 + $0x30] sm:$0xff]
        %v5031 = vld [vmem:[%s3172 + $0x38] sm:$0xff]
        %v5033 = vsel %vm731, %v5015, 0
        %v5036 = vsel %vm731, %v5016, 0
        %v5039 = vsel %vm731, %v5017, 0
        %v5042 = vsel %vm731, %v5018, 0
        %v5045 = vsel %vm731, %v5019, 0
        %v5048 = vsel %vm731, %v5020, 0
        %v5051 = vsel %vm731, %v5021, 0
        %v5054 = vsel %vm731, %v5022, 0
        %v5057 = vsel %vm731, %v5023, 0
        %5059 = vmatprep.subr.mxu0 0.0
        %5060 = vmatpush1.msra.mxu0 %v5024
        %5061 = vmatprep.subr.mxu0 0.0
        %5062 = vmatpush1.msra.mxu0 %v5025
        %5063 = vmatprep.subr.mxu0 0.0
        %5064 = vmatpush1.msra.mxu0 %v5026
        %5065 = vmatprep.subr.mxu0 0.0
        %5066 = vmatpush1.msra.mxu0 %v5027
        %5067 = vmatprep.subr.mxu0 0.0
        %5068 = vmatpush1.msra.mxu0 %v5028
        %5069 = vmatprep.subr.mxu0 0.0
        %5070 = vmatpush1.msra.mxu0 %v5029
        %5071 = vmatprep.subr.mxu0 0.0
        %5072 = vmatpush1.msra.mxu0 %v5030
        %5073 = vmatprep.subr.mxu0 0.0
        %5074 = vmatpush1.msra.mxu0 %v5031
        %5075 = vmatprep.subr.mxu0 0.0
        %5076 = vmatpush1.msra.mxu0 0.0
        %5077 = vmatprep.subr.mxu0 0.0
        %5078 = vmatpush1.msra.mxu0 0.0
        %5079 = vmatprep.subr.mxu0 0.0
        %5080 = vmatpush1.msra.mxu0 0.0
        %5081 = vmatprep.subr.mxu0 0.0
        %5082 = vmatpush1.msra.mxu0 0.0
        %5083 = vmatprep.subr.mxu0 0.0
        %5084 = vmatpush1.msra.mxu0 0.0
        %5085 = vmatprep.subr.mxu0 0.0
        %5086 = vmatpush1.msra.mxu0 0.0
        %5087 = vmatprep.subr.mxu0 0.0
        %5088 = vmatpush1.msra.mxu0 0.0
        %5089 = vmatprep.subr.mxu0 0.0
        %5090 = vmatpush1.msra.mxu0 0.0
        %5091 = vmatprep.subr.mxu0 0.0
        %5092 = vmatpush1.msra.mxu0 0.0
        %5093 = vmatprep.subr.mxu0 0.0
        %5094 = vmatpush1.msra.mxu0 0.0
        %5095 = vmatprep.subr.mxu0 0.0
        %5096 = vmatpush1.msra.mxu0 0.0
        %5097 = vmatprep.subr.mxu0 0.0
        %5098 = vmatpush1.msra.mxu0 0.0
        %5099 = vmatprep.subr.mxu0 0.0
        %5100 = vmatpush1.msra.mxu0 0.0
        %5101 = vmatprep.subr.mxu0 0.0
        %5102 = vmatpush1.msra.mxu0 0.0
        %5103 = vmatprep.subr.mxu0 0.0
        %5104 = vmatpush1.msra.mxu0 0.0
        %5105 = vmatprep.subr.mxu0 0.0
        %5106 = vmatpush1.msra.mxu0 0.0
        %5107 = vmatprep.subr.mxu0 0.0
        %5108 = vmatpush1.msra.mxu0 0.0
        %5109 = vmatprep.subr.mxu0 0.0
        %5110 = vmatpush1.msra.mxu0 0.0
        %5111 = vmatprep.subr.mxu0 0.0
        %5112 = vmatpush1.msra.mxu0 0.0
        %5113 = vmatprep.subr.mxu0 0.0
        %5114 = vmatpush1.msra.mxu0 0.0
        %5115 = vmatprep.subr.mxu0 0.0
        %5116 = vmatpush1.msra.mxu0 0.0
        %5117 = vmatprep.subr.mxu0 0.0
        %5118 = vmatpush1.msra.mxu0 0.0
        %5119 = vmatprep.subr.mxu0 0.0
        %5120 = vmatpush1.msra.mxu0 0.0
        %5121 = vmatprep.subr.mxu0 0.0
        %5122 = vmatpush1.msra.mxu0 0.0
        %5123 = vmatprep.mubr.f32.mxu0 0.0
        %5124 = vmatmul.mubr.f32.gmra.mrb[0].mxu0 %v5033
        %v5125 = vpop.f32.mrb[0].mxu0
        %v5126 = vadd.f32 0.0, %v5125
        %v5127 = vpop.f32.mrb[0].mxu0
        %5128 = vmatprep.mubr.f32.mxu0 0.0
        %5129 = vmatmul.mubr.f32.gmra.mrb[0].mxu0 %v5036
        %v5130 = vpop.f32.mrb[0].mxu0
        %v5131 = vadd.f32 0.0, %v5130
        %v5132 = vpop.f32.mrb[0].mxu0
        %5133 = vmatprep.mubr.f32.mxu0 0.0
        %5134 = vmatmul.mubr.f32.gmra.mrb[0].mxu0 %v5039
        %v5135 = vpop.f32.mrb[0].mxu0
        %v5136 = vadd.f32 0.0, %v5135
        %v5137 = vpop.f32.mrb[0].mxu0
        %5138 = vmatprep.mubr.f32.mxu0 0.0
        %5139 = vmatmul.mubr.f32.gmra.mrb[0].mxu0 %v5042
        %v5140 = vpop.f32.mrb[0].mxu0
        %v5141 = vadd.f32 0.0, %v5140
        %v5142 = vpop.f32.mrb[0].mxu0
        %5143 = vmatprep.mubr.f32.mxu0 0.0
        %5144 = vmatmul.mubr.f32.gmra.mrb[0].mxu0 %v5045
        %v5145 = vpop.f32.mrb[0].mxu0
        %v5146 = vadd.f32 0.0, %v5145
        %v5147 = vpop.f32.mrb[0].mxu0
        %5148 = vmatprep.mubr.f32.mxu0 0.0
        %5149 = vmatmul.mubr.f32.gmra.mrb[0].mxu0 %v5048
        %v5150 = vpop.f32.mrb[0].mxu0
        %v5151 = vadd.f32 0.0, %v5150
        %v5152 = vpop.f32.mrb[0].mxu0
        %5153 = vmatprep.mubr.f32.mxu0 0.0
        %5154 = vmatmul.mubr.f32.gmra.mrb[0].mxu0 %v5051
        %v5155 = vpop.f32.mrb[0].mxu0
        %v5156 = vadd.f32 0.0, %v5155
        %v5157 = vpop.f32.mrb[0].mxu0
        %5158 = vmatprep.mubr.f32.mxu0 0.0
        %5159 = vmatmul.mubr.f32.gmra.mrb[0].mxu0 %v5054
        %v5160 = vpop.f32.mrb[0].mxu0
        %v5161 = vadd.f32 0.0, %v5160
        %v5162 = vpop.f32.mrb[0].mxu0
        %5163 = vmatprep.mubr.f32.mxu0 0.0
        %5164 = vmatmul.mubr.f32.gmra.mrb[0].mxu0 %v5057
        %v5165 = vpop.f32.mrb[0].mxu0
        %v5166 = vadd.f32 0.0, %v5165
        %v5167 = vpop.f32.mrb[0].mxu0
        %5168 = vdwg.mxu0
        %v5169 = vadd.f32 %v5006, %v5126
        %v5170 = vadd.f32 %v5007, %v5131
        %v5171 = vadd.f32 %v5008, %v5136
        %v5172 = vadd.f32 %v5009, %v5141
        %v5173 = vadd.f32 %v5010, %v5146
        %v5174 = vadd.f32 %v5011, %v5151
        %v5175 = vadd.f32 %v5012, %v5156
        %v5176 = vadd.f32 %v5013, %v5161
        %v5177 = vadd.f32 %v5014, %v5166
        %v5178 = vld [vmem:[#allocation3 + $0x91] sm:$0xff]
        %v5179 = vld [vmem:[#allocation3 + $0x99] sm:$0xff]
        %v5180 = vld [vmem:[#allocation3 + $0xa1] sm:$0xff]
        %v5181 = vld [vmem:[#allocation3 + $0xa9] sm:$0xff]
        %v5182 = vld [vmem:[#allocation3 + $0xb1] sm:$0xff]
        %v5183 = vld [vmem:[#allocation3 + $0xb9] sm:$0xff]
        %v5184 = vld [vmem:[#allocation3 + $0xc1] sm:$0xff]
        %v5185 = vld [vmem:[#allocation3 + $0xc9] sm:$0xff]
        %v5186 = vld [vmem:[#allocation3 + $0xd1] sm:$0xff]
        %v5187 = vld [vmem:[%s3406] sm:$0xff]
        %v5188 = vld [vmem:[%s3406 + $0x8] sm:$0xff]
        %v5189 = vld [vmem:[%s3406 + $0x10] sm:$0xff]
        %v5190 = vld [vmem:[%s3406 + $0x18] sm:$0xff]
        %v5191 = vld [vmem:[%s3406 + $0x20] sm:$0xff]
        %v5192 = vld [vmem:[%s3406 + $0x28] sm:$0xff]
        %v5193 = vld [vmem:[%s3406 + $0x30] sm:$0xff]
        %v5194 = vld [vmem:[%s3406 + $0x38] sm:$0xff]
        %v5196 = vsel %vm731, %v5178, 0
        %v5199 = vsel %vm731, %v5179, 0
        %v5202 = vsel %vm731, %v5180, 0
        %v5205 = vsel %vm731, %v5181, 0
        %v5208 = vsel %vm731, %v5182, 0
        %v5211 = vsel %vm731, %v5183, 0
        %v5214 = vsel %vm731, %v5184, 0
        %v5217 = vsel %vm731, %v5185, 0
        %v5220 = vsel %vm731, %v5186, 0
        %5222 = vmatprep.subr.mxu0 0.0
        %5223 = vmatpush1.msra.mxu0 %v5187
        %5224 = vmatprep.subr.mxu0 0.0
        %5225 = vmatpush1.msra.mxu0 %v5188
        %5226 = vmatprep.subr.mxu0 0.0
        %5227 = vmatpush1.msra.mxu0 %v5189
        %5228 = vmatprep.subr.mxu0 0.0
        %5229 = vmatpush1.msra.mxu0 %v5190
        %5230 = vmatprep.subr.mxu0 0.0
        %5231 = vmatpush1.msra.mxu0 %v5191
        %5232 = vmatprep.subr.mxu0 0.0
        %5233 = vmatpush1.msra.mxu0 %v5192
        %5234 = vmatprep.subr.mxu0 0.0
        %5235 = vmatpush1.msra.mxu0 %v5193
        %5236 = vmatprep.subr.mxu0 0.0
        %5237 = vmatpush1.msra.mxu0 %v5194
        %5238 = vmatprep.subr.mxu0 0.0
        %5239 = vmatpush1.msra.mxu0 0.0
        %5240 = vmatprep.subr.mxu0 0.0
        %5241 = vmatpush1.msra.mxu0 0.0
        %5242 = vmatprep.subr.mxu0 0.0
        %5243 = vmatpush1.msra.mxu0 0.0
        %5244 = vmatprep.subr.mxu0 0.0
        %5245 = vmatpush1.msra.mxu0 0.0
        %5246 = vmatprep.subr.mxu0 0.0
        %5247 = vmatpush1.msra.mxu0 0.0
        %5248 = vmatprep.subr.mxu0 0.0
        %5249 = vmatpush1.msra.mxu0 0.0
        %5250 = vmatprep.subr.mxu0 0.0
        %5251 = vmatpush1.msra.mxu0 0.0
        %5252 = vmatprep.subr.mxu0 0.0
        %5253 = vmatpush1.msra.mxu0 0.0
        %5254 = vmatprep.subr.mxu0 0.0
        %5255 = vmatpush1.msra.mxu0 0.0
        %5256 = vmatprep.subr.mxu0 0.0
        %5257 = vmatpush1.msra.mxu0 0.0
        %5258 = vmatprep.subr.mxu0 0.0
        %5259 = vmatpush1.msra.mxu0 0.0
        %5260 = vmatprep.subr.mxu0 0.0
        %5261 = vmatpush1.msra.mxu0 0.0
        %5262 = vmatprep.subr.mxu0 0.0
        %5263 = vmatpush1.msra.mxu0 0.0
        %5264 = vmatprep.subr.mxu0 0.0
        %5265 = vmatpush1.msra.mxu0 0.0
        %5266 = vmatprep.subr.mxu0 0.0
        %5267 = vmatpush1.msra.mxu0 0.0
        %5268 = vmatprep.subr.mxu0 0.0
        %5269 = vmatpush1.msra.mxu0 0.0
        %5270 = vmatprep.subr.mxu0 0.0
        %5271 = vmatpush1.msra.mxu0 0.0
        %5272 = vmatprep.subr.mxu0 0.0
        %5273 = vmatpush1.msra.mxu0 0.0
        %5274 = vmatprep.subr.mxu0 0.0
        %5275 = vmatpush1.msra.mxu0 0.0
        %5276 = vmatprep.subr.mxu0 0.0
        %5277 = vmatpush1.msra.mxu0 0.0
        %5278 = vmatprep.subr.mxu0 0.0
        %5279 = vmatpush1.msra.mxu0 0.0
        %5280 = vmatprep.subr.mxu0 0.0
        %5281 = vmatpush1.msra.mxu0 0.0
        %5282 = vmatprep.subr.mxu0 0.0
        %5283 = vmatpush1.msra.mxu0 0.0
        %5284 = vmatprep.subr.mxu0 0.0
        %5285 = vmatpush1.msra.mxu0 0.0
        %5286 = vmatprep.mubr.f32.mxu0 0.0
        %5287 = vmatmul.mubr.f32.gmra.mrb[0].mxu0 %v5196
        %v5288 = vpop.f32.mrb[0].mxu0
        %v5289 = vadd.f32 0.0, %v5288
        %v5290 = vpop.f32.mrb[0].mxu0
        %5291 = vmatprep.mubr.f32.mxu0 0.0
        %5292 = vmatmul.mubr.f32.gmra.mrb[0].mxu0 %v5199
        %v5293 = vpop.f32.mrb[0].mxu0
        %v5294 = vadd.f32 0.0, %v5293
        %v5295 = vpop.f32.mrb[0].mxu0
        %5296 = vmatprep.mubr.f32.mxu0 0.0
        %5297 = vmatmul.mubr.f32.gmra.mrb[0].mxu0 %v5202
        %v5298 = vpop.f32.mrb[0].mxu0
        %v5299 = vadd.f32 0.0, %v5298
        %v5300 = vpop.f32.mrb[0].mxu0
        %5301 = vmatprep.mubr.f32.mxu0 0.0
        %5302 = vmatmul.mubr.f32.gmra.mrb[0].mxu0 %v5205
        %v5303 = vpop.f32.mrb[0].mxu0
        %v5304 = vadd.f32 0.0, %v5303
        %v5305 = vpop.f32.mrb[0].mxu0
        %5306 = vmatprep.mubr.f32.mxu0 0.0
        %5307 = vmatmul.mubr.f32.gmra.mrb[0].mxu0 %v5208
        %v5308 = vpop.f32.mrb[0].mxu0
        %v5309 = vadd.f32 0.0, %v5308
        %v5310 = vpop.f32.mrb[0].mxu0
        %5311 = vmatprep.mubr.f32.mxu0 0.0
        %5312 = vmatmul.mubr.f32.gmra.mrb[0].mxu0 %v5211
        %v5313 = vpop.f32.mrb[0].mxu0
        %v5314 = vadd.f32 0.0, %v5313
        %v5315 = vpop.f32.mrb[0].mxu0
        %5316 = vmatprep.mubr.f32.mxu0 0.0
        %5317 = vmatmul.mubr.f32.gmra.mrb[0].mxu0 %v5214
        %v5318 = vpop.f32.mrb[0].mxu0
        %v5319 = vadd.f32 0.0, %v5318
        %v5320 = vpop.f32.mrb[0].mxu0
        %5321 = vmatprep.mubr.f32.mxu0 0.0
        %5322 = vmatmul.mubr.f32.gmra.mrb[0].mxu0 %v5217
        %v5323 = vpop.f32.mrb[0].mxu0
        %v5324 = vadd.f32 0.0, %v5323
        %v5325 = vpop.f32.mrb[0].mxu0
        %5326 = vmatprep.mubr.f32.mxu0 0.0
        %5327 = vmatmul.mubr.f32.gmra.mrb[0].mxu0 %v5220
        %v5328 = vpop.f32.mrb[0].mxu0
        %v5329 = vadd.f32 0.0, %v5328
        %v5330 = vpop.f32.mrb[0].mxu0
        %5331 = vdwg.mxu0
        %v5332 = vadd.f32 %v5169, %v5289
        %v5333 = vadd.f32 %v5170, %v5294
        %v5334 = vadd.f32 %v5171, %v5299
        %v5335 = vadd.f32 %v5172, %v5304
        %v5336 = vadd.f32 %v5173, %v5309
        %v5337 = vadd.f32 %v5174, %v5314
        %v5338 = vadd.f32 %v5175, %v5319
        %v5339 = vadd.f32 %v5176, %v5324
        %v5340 = vadd.f32 %v5177, %v5329
        %v5341 = vld [vmem:[#allocation3 + $0x9e] sm:$0xff]
        %v5342 = vld [vmem:[#allocation3 + $0xa6] sm:$0xff]
        %v5343 = vld [vmem:[#allocation3 + $0xae] sm:$0xff]
        %v5344 = vld [vmem:[#allocation3 + $0xb6] sm:$0xff]
        %v5345 = vld [vmem:[#allocation3 + $0xbe] sm:$0xff]
        %v5346 = vld [vmem:[#allocation3 + $0xc6] sm:$0xff]
        %v5347 = vld [vmem:[#allocation3 + $0xce] sm:$0xff]
        %v5348 = vld [vmem:[#allocation3 + $0xd6] sm:$0xff]
        %v5349 = vld [vmem:[#allocation3 + $0xde] sm:$0xff]
        %v5350 = vld [vmem:[%s3640] sm:$0xff]
        %v5351 = vld [vmem:[%s3640 + $0x8] sm:$0xff]
        %v5352 = vld [vmem:[%s3640 + $0x10] sm:$0xff]
        %v5353 = vld [vmem:[%s3640 + $0x18] sm:$0xff]
        %v5354 = vld [vmem:[%s3640 + $0x20] sm:$0xff]
        %v5355 = vld [vmem:[%s3640 + $0x28] sm:$0xff]
        %v5356 = vld [vmem:[%s3640 + $0x30] sm:$0xff]
        %v5357 = vld [vmem:[%s3640 + $0x38] sm:$0xff]
        %v5359 = vsel %vm731, %v5341, 0
        %v5362 = vsel %vm731, %v5342, 0
        %v5365 = vsel %vm731, %v5343, 0
        %v5368 = vsel %vm731, %v5344, 0
        %v5371 = vsel %vm731, %v5345, 0
        %v5374 = vsel %vm731, %v5346, 0
        %v5377 = vsel %vm731, %v5347, 0
        %v5380 = vsel %vm731, %v5348, 0
        %v5383 = vsel %vm731, %v5349, 0
        %5385 = vmatprep.subr.mxu0 0.0
        %5386 = vmatpush1.msra.mxu0 %v5350
        %5387 = vmatprep.subr.mxu0 0.0
        %5388 = vmatpush1.msra.mxu0 %v5351
        %5389 = vmatprep.subr.mxu0 0.0
        %5390 = vmatpush1.msra.mxu0 %v5352
        %5391 = vmatprep.subr.mxu0 0.0
        %5392 = vmatpush1.msra.mxu0 %v5353
        %5393 = vmatprep.subr.mxu0 0.0
        %5394 = vmatpush1.msra.mxu0 %v5354
        %5395 = vmatprep.subr.mxu0 0.0
        %5396 = vmatpush1.msra.mxu0 %v5355
        %5397 = vmatprep.subr.mxu0 0.0
        %5398 = vmatpush1.msra.mxu0 %v5356
        %5399 = vmatprep.subr.mxu0 0.0
        %5400 = vmatpush1.msra.mxu0 %v5357
        %5401 = vmatprep.subr.mxu0 0.0
        %5402 = vmatpush1.msra.mxu0 0.0
        %5403 = vmatprep.subr.mxu0 0.0
        %5404 = vmatpush1.msra.mxu0 0.0
        %5405 = vmatprep.subr.mxu0 0.0
        %5406 = vmatpush1.msra.mxu0 0.0
        %5407 = vmatprep.subr.mxu0 0.0
        %5408 = vmatpush1.msra.mxu0 0.0
        %5409 = vmatprep.subr.mxu0 0.0
        %5410 = vmatpush1.msra.mxu0 0.0
        %5411 = vmatprep.subr.mxu0 0.0
        %5412 = vmatpush1.msra.mxu0 0.0
        %5413 = vmatprep.subr.mxu0 0.0
        %5414 = vmatpush1.msra.mxu0 0.0
        %5415 = vmatprep.subr.mxu0 0.0
        %5416 = vmatpush1.msra.mxu0 0.0
        %5417 = vmatprep.subr.mxu0 0.0
        %5418 = vmatpush1.msra.mxu0 0.0
        %5419 = vmatprep.subr.mxu0 0.0
        %5420 = vmatpush1.msra.mxu0 0.0
        %5421 = vmatprep.subr.mxu0 0.0
        %5422 = vmatpush1.msra.mxu0 0.0
        %5423 = vmatprep.subr.mxu0 0.0
        %5424 = vmatpush1.msra.mxu0 0.0
        %5425 = vmatprep.subr.mxu0 0.0
        %5426 = vmatpush1.msra.mxu0 0.0
        %5427 = vmatprep.subr.mxu0 0.0
        %5428 = vmatpush1.msra.mxu0 0.0
        %5429 = vmatprep.subr.mxu0 0.0
        %5430 = vmatpush1.msra.mxu0 0.0
        %5431 = vmatprep.subr.mxu0 0.0
        %5432 = vmatpush1.msra.mxu0 0.0
        %5433 = vmatprep.subr.mxu0 0.0
        %5434 = vmatpush1.msra.mxu0 0.0
        %5435 = vmatprep.subr.mxu0 0.0
        %5436 = vmatpush1.msra.mxu0 0.0
        %5437 = vmatprep.subr.mxu0 0.0
        %5438 = vmatpush1.msra.mxu0 0.0
        %5439 = vmatprep.subr.mxu0 0.0
        %5440 = vmatpush1.msra.mxu0 0.0
        %5441 = vmatprep.subr.mxu0 0.0
        %5442 = vmatpush1.msra.mxu0 0.0
        %5443 = vmatprep.subr.mxu0 0.0
        %5444 = vmatpush1.msra.mxu0 0.0
        %5445 = vmatprep.subr.mxu0 0.0
        %5446 = vmatpush1.msra.mxu0 0.0
        %5447 = vmatprep.subr.mxu0 0.0
        %5448 = vmatpush1.msra.mxu0 0.0
        %5449 = vmatprep.mubr.f32.mxu0 0.0
        %5450 = vmatmul.mubr.f32.gmra.mrb[0].mxu0 %v5359
        %v5451 = vpop.f32.mrb[0].mxu0
        %v5452 = vadd.f32 0.0, %v5451
        %v5453 = vpop.f32.mrb[0].mxu0
        %5454 = vmatprep.mubr.f32.mxu0 0.0
        %5455 = vmatmul.mubr.f32.gmra.mrb[0].mxu0 %v5362
        %v5456 = vpop.f32.mrb[0].mxu0
        %v5457 = vadd.f32 0.0, %v5456
        %v5458 = vpop.f32.mrb[0].mxu0
        %5459 = vmatprep.mubr.f32.mxu0 0.0
        %5460 = vmatmul.mubr.f32.gmra.mrb[0].mxu0 %v5365
        %v5461 = vpop.f32.mrb[0].mxu0
        %v5462 = vadd.f32 0.0, %v5461
        %v5463 = vpop.f32.mrb[0].mxu0
        %5464 = vmatprep.mubr.f32.mxu0 0.0
        %5465 = vmatmul.mubr.f32.gmra.mrb[0].mxu0 %v5368
        %v5466 = vpop.f32.mrb[0].mxu0
        %v5467 = vadd.f32 0.0, %v5466
        %v5468 = vpop.f32.mrb[0].mxu0
        %5469 = vmatprep.mubr.f32.mxu0 0.0
        %5470 = vmatmul.mubr.f32.gmra.mrb[0].mxu0 %v5371
        %v5471 = vpop.f32.mrb[0].mxu0
        %v5472 = vadd.f32 0.0, %v5471
        %v5473 = vpop.f32.mrb[0].mxu0
        %5474 = vmatprep.mubr.f32.mxu0 0.0
        %5475 = vmatmul.mubr.f32.gmra.mrb[0].mxu0 %v5374
        %v5476 = vpop.f32.mrb[0].mxu0
        %v5477 = vadd.f32 0.0, %v5476
        %v5478 = vpop.f32.mrb[0].mxu0
        %5479 = vmatprep.mubr.f32.mxu0 0.0
        %5480 = vmatmul.mubr.f32.gmra.mrb[0].mxu0 %v5377
        %v5481 = vpop.f32.mrb[0].mxu0
        %v5482 = vadd.f32 0.0, %v5481
        %v5483 = vpop.f32.mrb[0].mxu0
        %5484 = vmatprep.mubr.f32.mxu0 0.0
        %5485 = vmatmul.mubr.f32.gmra.mrb[0].mxu0 %v5380
        %v5486 = vpop.f32.mrb[0].mxu0
        %v5487 = vadd.f32 0.0, %v5486
        %v5488 = vpop.f32.mrb[0].mxu0
        %5489 = vmatprep.mubr.f32.mxu0 0.0
        %5490 = vmatmul.mubr.f32.gmra.mrb[0].mxu0 %v5383
        %v5491 = vpop.f32.mrb[0].mxu0
        %v5492 = vadd.f32 0.0, %v5491
        %v5493 = vpop.f32.mrb[0].mxu0
        %5494 = vdwg.mxu0
        %v5495 = vadd.f32 %v5332, %v5452
        %v5496 = vadd.f32 %v5333, %v5457
        %v5497 = vadd.f32 %v5334, %v5462
        %v5498 = vadd.f32 %v5335, %v5467
        %v5499 = vadd.f32 %v5336, %v5472
        %v5500 = vadd.f32 %v5337, %v5477
        %v5501 = vadd.f32 %v5338, %v5482
        %v5502 = vadd.f32 %v5339, %v5487
        %v5503 = vadd.f32 %v5340, %v5492
        %v5504 = vld [vmem:[#allocation3 + $0x9f] sm:$0xff]
        %v5505 = vld [vmem:[#allocation3 + $0xa7] sm:$0xff]
        %v5506 = vld [vmem:[#allocation3 + $0xaf] sm:$0xff]
        %v5507 = vld [vmem:[#allocation3 + $0xb7] sm:$0xff]
        %v5508 = vld [vmem:[#allocation3 + $0xbf] sm:$0xff]
        %v5509 = vld [vmem:[#allocation3 + $0xc7] sm:$0xff]
        %v5510 = vld [vmem:[#allocation3 + $0xcf] sm:$0xff]
        %v5511 = vld [vmem:[#allocation3 + $0xd7] sm:$0xff]
        %v5512 = vld [vmem:[#allocation3 + $0xdf] sm:$0xff]
        %v5513 = vld [vmem:[%s3874] sm:$0xff]
        %v5514 = vld [vmem:[%s3874 + $0x8] sm:$0xff]
        %v5515 = vld [vmem:[%s3874 + $0x10] sm:$0xff]
        %v5516 = vld [vmem:[%s3874 + $0x18] sm:$0xff]
        %v5517 = vld [vmem:[%s3874 + $0x20] sm:$0xff]
        %v5518 = vld [vmem:[%s3874 + $0x28] sm:$0xff]
        %v5519 = vld [vmem:[%s3874 + $0x30] sm:$0xff]
        %v5520 = vld [vmem:[%s3874 + $0x38] sm:$0xff]
        %v5522 = vsel %vm731, %v5504, 0
        %v5525 = vsel %vm731, %v5505, 0
        %v5528 = vsel %vm731, %v5506, 0
        %v5531 = vsel %vm731, %v5507, 0
        %v5534 = vsel %vm731, %v5508, 0
        %v5537 = vsel %vm731, %v5509, 0
        %v5540 = vsel %vm731, %v5510, 0
        %v5543 = vsel %vm731, %v5511, 0
        %v5546 = vsel %vm731, %v5512, 0
        %5548 = vmatprep.subr.mxu0 0.0
        %5549 = vmatpush1.msra.mxu0 %v5513
        %5550 = vmatprep.subr.mxu0 0.0
        %5551 = vmatpush1.msra.mxu0 %v5514
        %5552 = vmatprep.subr.mxu0 0.0
        %5553 = vmatpush1.msra.mxu0 %v5515
        %5554 = vmatprep.subr.mxu0 0.0
        %5555 = vmatpush1.msra.mxu0 %v5516
        %5556 = vmatprep.subr.mxu0 0.0
        %5557 = vmatpush1.msra.mxu0 %v5517
        %5558 = vmatprep.subr.mxu0 0.0
        %5559 = vmatpush1.msra.mxu0 %v5518
        %5560 = vmatprep.subr.mxu0 0.0
        %5561 = vmatpush1.msra.mxu0 %v5519
        %5562 = vmatprep.subr.mxu0 0.0
        %5563 = vmatpush1.msra.mxu0 %v5520
        %5564 = vmatprep.subr.mxu0 0.0
        %5565 = vmatpush1.msra.mxu0 0.0
        %5566 = vmatprep.subr.mxu0 0.0
        %5567 = vmatpush1.msra.mxu0 0.0
        %5568 = vmatprep.subr.mxu0 0.0
        %5569 = vmatpush1.msra.mxu0 0.0
        %5570 = vmatprep.subr.mxu0 0.0
        %5571 = vmatpush1.msra.mxu0 0.0
        %5572 = vmatprep.subr.mxu0 0.0
        %5573 = vmatpush1.msra.mxu0 0.0
        %5574 = vmatprep.subr.mxu0 0.0
        %5575 = vmatpush1.msra.mxu0 0.0
        %5576 = vmatprep.subr.mxu0 0.0
        %5577 = vmatpush1.msra.mxu0 0.0
        %5578 = vmatprep.subr.mxu0 0.0
        %5579 = vmatpush1.msra.mxu0 0.0
        %5580 = vmatprep.subr.mxu0 0.0
        %5581 = vmatpush1.msra.mxu0 0.0
        %5582 = vmatprep.subr.mxu0 0.0
        %5583 = vmatpush1.msra.mxu0 0.0
        %5584 = vmatprep.subr.mxu0 0.0
        %5585 = vmatpush1.msra.mxu0 0.0
        %5586 = vmatprep.subr.mxu0 0.0
        %5587 = vmatpush1.msra.mxu0 0.0
        %5588 = vmatprep.subr.mxu0 0.0
        %5589 = vmatpush1.msra.mxu0 0.0
        %5590 = vmatprep.subr.mxu0 0.0
        %5591 = vmatpush1.msra.mxu0 0.0
        %5592 = vmatprep.subr.mxu0 0.0
        %5593 = vmatpush1.msra.mxu0 0.0
        %5594 = vmatprep.subr.mxu0 0.0
        %5595 = vmatpush1.msra.mxu0 0.0
        %5596 = vmatprep.subr.mxu0 0.0
        %5597 = vmatpush1.msra.mxu0 0.0
        %5598 = vmatprep.subr.mxu0 0.0
        %5599 = vmatpush1.msra.mxu0 0.0
        %5600 = vmatprep.subr.mxu0 0.0
        %5601 = vmatpush1.msra.mxu0 0.0
        %5602 = vmatprep.subr.mxu0 0.0
        %5603 = vmatpush1.msra.mxu0 0.0
        %5604 = vmatprep.subr.mxu0 0.0
        %5605 = vmatpush1.msra.mxu0 0.0
        %5606 = vmatprep.subr.mxu0 0.0
        %5607 = vmatpush1.msra.mxu0 0.0
        %5608 = vmatprep.subr.mxu0 0.0
        %5609 = vmatpush1.msra.mxu0 0.0
        %5610 = vmatprep.subr.mxu0 0.0
        %5611 = vmatpush1.msra.mxu0 0.0
        %5612 = vmatprep.mubr.f32.mxu0 0.0
        %5613 = vmatmul.mubr.f32.gmra.mrb[0].mxu0 %v5522
        %v5614 = vpop.f32.mrb[0].mxu0
        %v5615 = vadd.f32 0.0, %v5614
        %v5616 = vpop.f32.mrb[0].mxu0
        %5617 = vmatprep.mubr.f32.mxu0 0.0
        %5618 = vmatmul.mubr.f32.gmra.mrb[0].mxu0 %v5525
        %v5619 = vpop.f32.mrb[0].mxu0
        %v5620 = vadd.f32 0.0, %v5619
        %v5621 = vpop.f32.mrb[0].mxu0
        %5622 = vmatprep.mubr.f32.mxu0 0.0
        %5623 = vmatmul.mubr.f32.gmra.mrb[0].mxu0 %v5528
        %v5624 = vpop.f32.mrb[0].mxu0
        %v5625 = vadd.f32 0.0, %v5624
        %v5626 = vpop.f32.mrb[0].mxu0
        %5627 = vmatprep.mubr.f32.mxu0 0.0
        %5628 = vmatmul.mubr.f32.gmra.mrb[0].mxu0 %v5531
        %v5629 = vpop.f32.mrb[0].mxu0
        %v5630 = vadd.f32 0.0, %v5629
        %v5631 = vpop.f32.mrb[0].mxu0
        %5632 = vmatprep.mubr.f32.mxu0 0.0
        %5633 = vmatmul.mubr.f32.gmra.mrb[0].mxu0 %v5534
        %v5634 = vpop.f32.mrb[0].mxu0
        %v5635 = vadd.f32 0.0, %v5634
        %v5636 = vpop.f32.mrb[0].mxu0
        %5637 = vmatprep.mubr.f32.mxu0 0.0
        %5638 = vmatmul.mubr.f32.gmra.mrb[0].mxu0 %v5537
        %v5639 = vpop.f32.mrb[0].mxu0
        %v5640 = vadd.f32 0.0, %v5639
        %v5641 = vpop.f32.mrb[0].mxu0
        %5642 = vmatprep.mubr.f32.mxu0 0.0
        %5643 = vmatmul.mubr.f32.gmra.mrb[0].mxu0 %v5540
        %v5644 = vpop.f32.mrb[0].mxu0
        %v5645 = vadd.f32 0.0, %v5644
        %v5646 = vpop.f32.mrb[0].mxu0
        %5647 = vmatprep.mubr.f32.mxu0 0.0
        %5648 = vmatmul.mubr.f32.gmra.mrb[0].mxu0 %v5543
        %v5649 = vpop.f32.mrb[0].mxu0
        %v5650 = vadd.f32 0.0, %v5649
        %v5651 = vpop.f32.mrb[0].mxu0
        %5652 = vmatprep.mubr.f32.mxu0 0.0
        %5653 = vmatmul.mubr.f32.gmra.mrb[0].mxu0 %v5546
        %v5654 = vpop.f32.mrb[0].mxu0
        %v5655 = vadd.f32 0.0, %v5654
        %v5656 = vpop.f32.mrb[0].mxu0
        %5657 = vdwg.mxu0
        %v5658 = vadd.f32 %v5495, %v5615
        %v5659 = vadd.f32 %v5496, %v5620
        %v5660 = vadd.f32 %v5497, %v5625
        %v5661 = vadd.f32 %v5498, %v5630
        %v5662 = vadd.f32 %v5499, %v5635
        %v5663 = vadd.f32 %v5500, %v5640
        %v5664 = vadd.f32 %v5501, %v5645
        %v5665 = vadd.f32 %v5502, %v5650
        %v5666 = vadd.f32 %v5503, %v5655
        %v5667 = vld [vmem:[#allocation3 + $0xa0] sm:$0xff]
        %v5668 = vld [vmem:[#allocation3 + $0xa8] sm:$0xff]
        %v5669 = vld [vmem:[#allocation3 + $0xb0] sm:$0xff]
        %v5670 = vld [vmem:[#allocation3 + $0xb8] sm:$0xff]
        %v5671 = vld [vmem:[#allocation3 + $0xc0] sm:$0xff]
        %v5672 = vld [vmem:[#allocation3 + $0xc8] sm:$0xff]
        %v5673 = vld [vmem:[#allocation3 + $0xd0] sm:$0xff]
        %v5674 = vld [vmem:[#allocation3 + $0xd8] sm:$0xff]
        %v5675 = vld [vmem:[#allocation3 + $0xe0] sm:$0xff]
        %v5676 = vld [vmem:[%s4108] sm:$0xff]
        %v5677 = vld [vmem:[%s4108 + $0x8] sm:$0xff]
        %v5678 = vld [vmem:[%s4108 + $0x10] sm:$0xff]
        %v5679 = vld [vmem:[%s4108 + $0x18] sm:$0xff]
        %v5680 = vld [vmem:[%s4108 + $0x20] sm:$0xff]
        %v5681 = vld [vmem:[%s4108 + $0x28] sm:$0xff]
        %v5682 = vld [vmem:[%s4108 + $0x30] sm:$0xff]
        %v5683 = vld [vmem:[%s4108 + $0x38] sm:$0xff]
        %v5685 = vsel %vm731, %v5667, 0
        %v5688 = vsel %vm731, %v5668, 0
        %v5691 = vsel %vm731, %v5669, 0
        %v5694 = vsel %vm731, %v5670, 0
        %v5697 = vsel %vm731, %v5671, 0
        %v5700 = vsel %vm731, %v5672, 0
        %v5703 = vsel %vm731, %v5673, 0
        %v5706 = vsel %vm731, %v5674, 0
        %v5709 = vsel %vm731, %v5675, 0
        %5711 = vmatprep.subr.mxu0 0.0
        %5712 = vmatpush1.msra.mxu0 %v5676
        %5713 = vmatprep.subr.mxu0 0.0
        %5714 = vmatpush1.msra.mxu0 %v5677
        %5715 = vmatprep.subr.mxu0 0.0
        %5716 = vmatpush1.msra.mxu0 %v5678
        %5717 = vmatprep.subr.mxu0 0.0
        %5718 = vmatpush1.msra.mxu0 %v5679
        %5719 = vmatprep.subr.mxu0 0.0
        %5720 = vmatpush1.msra.mxu0 %v5680
        %5721 = vmatprep.subr.mxu0 0.0
        %5722 = vmatpush1.msra.mxu0 %v5681
        %5723 = vmatprep.subr.mxu0 0.0
        %5724 = vmatpush1.msra.mxu0 %v5682
        %5725 = vmatprep.subr.mxu0 0.0
        %5726 = vmatpush1.msra.mxu0 %v5683
        %5727 = vmatprep.subr.mxu0 0.0
        %5728 = vmatpush1.msra.mxu0 0.0
        %5729 = vmatprep.subr.mxu0 0.0
        %5730 = vmatpush1.msra.mxu0 0.0
        %5731 = vmatprep.subr.mxu0 0.0
        %5732 = vmatpush1.msra.mxu0 0.0
        %5733 = vmatprep.subr.mxu0 0.0
        %5734 = vmatpush1.msra.mxu0 0.0
        %5735 = vmatprep.subr.mxu0 0.0
        %5736 = vmatpush1.msra.mxu0 0.0
        %5737 = vmatprep.subr.mxu0 0.0
        %5738 = vmatpush1.msra.mxu0 0.0
        %5739 = vmatprep.subr.mxu0 0.0
        %5740 = vmatpush1.msra.mxu0 0.0
        %5741 = vmatprep.subr.mxu0 0.0
        %5742 = vmatpush1.msra.mxu0 0.0
        %5743 = vmatprep.subr.mxu0 0.0
        %5744 = vmatpush1.msra.mxu0 0.0
        %5745 = vmatprep.subr.mxu0 0.0
        %5746 = vmatpush1.msra.mxu0 0.0
        %5747 = vmatprep.subr.mxu0 0.0
        %5748 = vmatpush1.msra.mxu0 0.0
        %5749 = vmatprep.subr.mxu0 0.0
        %5750 = vmatpush1.msra.mxu0 0.0
        %5751 = vmatprep.subr.mxu0 0.0
        %5752 = vmatpush1.msra.mxu0 0.0
        %5753 = vmatprep.subr.mxu0 0.0
        %5754 = vmatpush1.msra.mxu0 0.0
        %5755 = vmatprep.subr.mxu0 0.0
        %5756 = vmatpush1.msra.mxu0 0.0
        %5757 = vmatprep.subr.mxu0 0.0
        %5758 = vmatpush1.msra.mxu0 0.0
        %5759 = vmatprep.subr.mxu0 0.0
        %5760 = vmatpush1.msra.mxu0 0.0
        %5761 = vmatprep.subr.mxu0 0.0
        %5762 = vmatpush1.msra.mxu0 0.0
        %5763 = vmatprep.subr.mxu0 0.0
        %5764 = vmatpush1.msra.mxu0 0.0
        %5765 = vmatprep.subr.mxu0 0.0
        %5766 = vmatpush1.msra.mxu0 0.0
        %5767 = vmatprep.subr.mxu0 0.0
        %5768 = vmatpush1.msra.mxu0 0.0
        %5769 = vmatprep.subr.mxu0 0.0
        %5770 = vmatpush1.msra.mxu0 0.0
        %5771 = vmatprep.subr.mxu0 0.0
        %5772 = vmatpush1.msra.mxu0 0.0
        %5773 = vmatprep.subr.mxu0 0.0
        %5774 = vmatpush1.msra.mxu0 0.0
        %5775 = vmatprep.mubr.f32.mxu0 0.0
        %5776 = vmatmul.mubr.f32.gmra.mrb[0].mxu0 %v5685
        %v5777 = vpop.f32.mrb[0].mxu0
        %v5778 = vadd.f32 0.0, %v5777
        %v5779 = vpop.f32.mrb[0].mxu0
        %5780 = vmatprep.mubr.f32.mxu0 0.0
        %5781 = vmatmul.mubr.f32.gmra.mrb[0].mxu0 %v5688
        %v5782 = vpop.f32.mrb[0].mxu0
        %v5783 = vadd.f32 0.0, %v5782
        %v5784 = vpop.f32.mrb[0].mxu0
        %5785 = vmatprep.mubr.f32.mxu0 0.0
        %5786 = vmatmul.mubr.f32.gmra.mrb[0].mxu0 %v5691
        %v5787 = vpop.f32.mrb[0].mxu0
        %v5788 = vadd.f32 0.0, %v5787
        %v5789 = vpop.f32.mrb[0].mxu0
        %5790 = vmatprep.mubr.f32.mxu0 0.0
        %5791 = vmatmul.mubr.f32.gmra.mrb[0].mxu0 %v5694
        %v5792 = vpop.f32.mrb[0].mxu0
        %v5793 = vadd.f32 0.0, %v5792
        %v5794 = vpop.f32.mrb[0].mxu0
        %5795 = vmatprep.mubr.f32.mxu0 0.0
        %5796 = vmatmul.mubr.f32.gmra.mrb[0].mxu0 %v5697
        %v5797 = vpop.f32.mrb[0].mxu0
        %v5798 = vadd.f32 0.0, %v5797
        %v5799 = vpop.f32.mrb[0].mxu0
        %5800 = vmatprep.mubr.f32.mxu0 0.0
        %5801 = vmatmul.mubr.f32.gmra.mrb[0].mxu0 %v5700
        %v5802 = vpop.f32.mrb[0].mxu0
        %v5803 = vadd.f32 0.0, %v5802
        %v5804 = vpop.f32.mrb[0].mxu0
        %5805 = vmatprep.mubr.f32.mxu0 0.0
        %5806 = vmatmul.mubr.f32.gmra.mrb[0].mxu0 %v5703
        %v5807 = vpop.f32.mrb[0].mxu0
        %v5808 = vadd.f32 0.0, %v5807
        %v5809 = vpop.f32.mrb[0].mxu0
        %5810 = vmatprep.mubr.f32.mxu0 0.0
        %5811 = vmatmul.mubr.f32.gmra.mrb[0].mxu0 %v5706
        %v5812 = vpop.f32.mrb[0].mxu0
        %v5813 = vadd.f32 0.0, %v5812
        %v5814 = vpop.f32.mrb[0].mxu0
        %5815 = vmatprep.mubr.f32.mxu0 0.0
        %5816 = vmatmul.mubr.f32.gmra.mrb[0].mxu0 %v5709
        %v5817 = vpop.f32.mrb[0].mxu0
        %v5818 = vadd.f32 0.0, %v5817
        %v5819 = vpop.f32.mrb[0].mxu0
        %5820 = vdwg.mxu0
        %v5821 = vadd.f32 %v5658, %v5778
        %v5822 = vadd.f32 %v5659, %v5783
        %v5823 = vadd.f32 %v5660, %v5788
        %v5824 = vadd.f32 %v5661, %v5793
        %v5825 = vadd.f32 %v5662, %v5798
        %v5826 = vadd.f32 %v5663, %v5803
        %v5827 = vadd.f32 %v5664, %v5808
        %v5828 = vadd.f32 %v5665, %v5813
        %v5829 = vadd.f32 %v5666, %v5818
        %v5830 = vld [vmem:[%s4] sm:$0x1]
        %v5832 = vlaneseq
        %v5833 = vshrl.u32 %v5832, 7
        %v5834 = vsub.s32 0, %v5833
        %v5835 = vrot.slane %v5830, %v5834
        %v5837 = vadd.f32 %v5821, %v5835
        %v5838 = vadd.f32 %v5822, %v5835
        %v5839 = vadd.f32 %v5823, %v5835
        %v5840 = vadd.f32 %v5824, %v5835
        %v5841 = vadd.f32 %v5825, %v5835
        %v5842 = vadd.f32 %v5826, %v5835
        %v5843 = vadd.f32 %v5827, %v5835
        %v5844 = vadd.f32 %v5828, %v5835
        %v5845 = vadd.f32 %v5829, %v5835
        %v5846 = vmax.f32 %v5837, 0.0
        %v5847 = vmax.f32 %v5838, 0.0
        %v5848 = vmax.f32 %v5839, 0.0
        %v5849 = vmax.f32 %v5840, 0.0
        %v5850 = vmax.f32 %v5841, 0.0
        %v5851 = vmax.f32 %v5842, 0.0
        %v5852 = vmax.f32 %v5843, 0.0
        %v5853 = vmax.f32 %v5844, 0.0
        %v5854 = vmax.f32 %v5845, 0.0
        %5855 = vst.msk [vmem:[#allocation2 + $0x80] sm:$0xff] %vm731, %v5846
        %5856 = vst.msk [vmem:[#allocation2 + $0x88] sm:$0xff] %vm731, %v5847
        %5857 = vst.msk [vmem:[#allocation2 + $0x90] sm:$0xff] %vm731, %v5848
        %5858 = vst.msk [vmem:[#allocation2 + $0x98] sm:$0xff] %vm731, %v5849
        %5859 = vst.msk [vmem:[#allocation2 + $0xa0] sm:$0xff] %vm731, %v5850
        %5860 = vst.msk [vmem:[#allocation2 + $0xa8] sm:$0xff] %vm731, %v5851
        %5861 = vst.msk [vmem:[#allocation2 + $0xb0] sm:$0xff] %vm731, %v5852
        %5862 = vst.msk [vmem:[#allocation2 + $0xb8] sm:$0xff] %vm731, %v5853
        %5863 = vst.msk [vmem:[#allocation2 + $0xc0] sm:$0xff] %vm731, %v5854
        %v5864 = vld [vmem:[#allocation2] ss:$2 sm:$0x3f]
        %v5865 = vld [vmem:[%s1895] ss:$2 sm:$0x3f]
        %s5866 = scalar_lea.vmem [#allocation2], 15
        %v5867 = vld [vmem:[%s5866] ss:$2 sm:$0x3f]
        %v5868 = vld [vmem:[%s1893] ss:$2 sm:$0x3f]
        %v5869 = vmax.f32 %v5864, %v5865
        %v5870 = vmax.f32 %v5867, %v5868
        %v5871 = vmax.f32 %v5869, %v5870
        %vm5872 = vcmask 521216
        %5873 = vst.msk [vmem:[#allocation3] sm:$0x3f] %vm5872, %v5871
        %v5874 = vld [vmem:[%s1899] ss:$2 sm:$0x3f]
        %v5875 = vld [vmem:[%s1903] ss:$2 sm:$0x3f]
        %s5876 = scalar_lea.vmem [#allocation2], 45
        %v5877 = vld [vmem:[%s5876] ss:$2 sm:$0x3f]
        %v5878 = vld [vmem:[%s1901] ss:$2 sm:$0x3f]
        %v5879 = vmax.f32 %v5874, %v5875
        %v5880 = vmax.f32 %v5877, %v5878
        %v5881 = vmax.f32 %v5879, %v5880
        %5882 = vst.msk [vmem:[#allocation3 + $0x6] sm:$0x3f] %vm5872, %v5881
        %v5883 = vld [vmem:[%s1916] ss:$2 sm:$0x3f]
        %v5884 = vld [vmem:[%s1920] ss:$2 sm:$0x3f]
        %s5885 = scalar_lea.vmem [#allocation2], 75
        %v5886 = vld [vmem:[%s5885] ss:$2 sm:$0x3f]
        %v5887 = vld [vmem:[%s1918] ss:$2 sm:$0x3f]
        %v5888 = vmax.f32 %v5883, %v5884
        %v5889 = vmax.f32 %v5886, %v5887
        %v5890 = vmax.f32 %v5888, %v5889
        %5891 = vst.msk [vmem:[#allocation3 + $0xc] sm:$0x3f] %vm5872, %v5890
        %v5892 = vld [vmem:[%s1924] ss:$2 sm:$0x3f]
        %v5893 = vld [vmem:[%s1928] ss:$2 sm:$0x3f]
        %s5894 = scalar_lea.vmem [#allocation2], 105
        %v5895 = vld [vmem:[%s5894] ss:$2 sm:$0x3f]
        %v5896 = vld [vmem:[%s1926] ss:$2 sm:$0x3f]
        %v5897 = vmax.f32 %v5892, %v5893
        %v5898 = vmax.f32 %v5895, %v5896
        %v5899 = vmax.f32 %v5897, %v5898
        %5900 = vst.msk [vmem:[#allocation3 + $0x12] sm:$0x3f] %vm5872, %v5899
        %v5901 = vld [vmem:[%s1940] ss:$2 sm:$0x3f]
        %v5902 = vld [vmem:[%s1944] ss:$2 sm:$0x3f]
        %s5903 = scalar_lea.vmem [#allocation2], 135
        %v5904 = vld [vmem:[%s5903] ss:$2 sm:$0x3f]
        %v5905 = vld [vmem:[%s1942] ss:$2 sm:$0x3f]
        %v5906 = vmax.f32 %v5901, %v5902
        %v5907 = vmax.f32 %v5904, %v5905
        %v5908 = vmax.f32 %v5906, %v5907
        %5909 = vst.msk [vmem:[#allocation3 + $0x18] sm:$0x3f] %vm5872, %v5908
        %v5910 = vld [vmem:[%s1948] ss:$2 sm:$0x3f]
        %v5911 = vld [vmem:[%s1952] ss:$2 sm:$0x3f]
        %s5912 = scalar_lea.vmem [#allocation2], 165
        %v5913 = vld [vmem:[%s5912] ss:$2 sm:$0x3f]
        %v5914 = vld [vmem:[%s1950] ss:$2 sm:$0x3f]
        %v5915 = vmax.f32 %v5910, %v5911
        %v5916 = vmax.f32 %v5913, %v5914
        %v5917 = vmax.f32 %v5915, %v5916
        %5918 = vst.msk [vmem:[#allocation3 + $0x1e] sm:$0x3f] %vm5872, %v5917
        %vm5919 = vcmask 519168
        %5920 = vst.msk [vmem:[#allocation3 + $0x24] sm:$0xf] %vm5919, 0.0
        %v5921 = vld [vmem:[#allocation3] sm:$0xff]
        %v5922 = vld [vmem:[#allocation3 + $0x8] sm:$0xff]
        %v5923 = vld [vmem:[#allocation3 + $0x10] sm:$0xff]
        %v5924 = vld [vmem:[%s5] sm:$0xff]
        %v5925 = vld [vmem:[%s5 + $0x8] sm:$0xff]
        %v5926 = vld [vmem:[%s5 + $0x10] sm:$0xff]
        %v5927 = vld [vmem:[%s5 + $0x18] sm:$0xff]
        %v5928 = vld [vmem:[%s5 + $0x20] sm:$0xff]
        %v5929 = vld [vmem:[%s5 + $0x28] sm:$0xff]
        %v5930 = vld [vmem:[%s5 + $0x30] sm:$0xff]
        %v5931 = vld [vmem:[%s5 + $0x38] sm:$0xff]
        %v5932 = vld [vmem:[#allocation3 + $0x1] sm:$0xff]
        %v5933 = vld [vmem:[#allocation3 + $0x9] sm:$0xff]
        %v5934 = vld [vmem:[#allocation3 + $0x11] sm:$0xff]
        %s5935 = scalar_lea.vmem %s5, 64
        %v5936 = vld [vmem:[%s5935] sm:$0xff]
        %v5937 = vld [vmem:[%s5935 + $0x8] sm:$0xff]
        %v5938 = vld [vmem:[%s5935 + $0x10] sm:$0xff]
        %v5939 = vld [vmem:[%s5935 + $0x18] sm:$0xff]
        %v5940 = vld [vmem:[%s5935 + $0x20] sm:$0xff]
        %v5941 = vld [vmem:[%s5935 + $0x28] sm:$0xff]
        %v5942 = vld [vmem:[%s5935 + $0x30] sm:$0xff]
        %v5943 = vld [vmem:[%s5935 + $0x38] sm:$0xff]
        %v5945 = vsel %vm731, %v5932, 0
        %v5948 = vsel %vm731, %v5933, 0
        %v5951 = vsel %vm731, %v5934, 0
        %5953 = vmatprep.subr.mxu0 0.0
        %5954 = vmatpush1.msra.mxu0 %v5936
        %5955 = vmatprep.subr.mxu0 0.0
        %5956 = vmatpush1.msra.mxu0 %v5937
        %5957 = vmatprep.subr.mxu0 0.0
        %5958 = vmatpush1.msra.mxu0 %v5938
        %5959 = vmatprep.subr.mxu0 0.0
        %5960 = vmatpush1.msra.mxu0 %v5939
        %5961 = vmatprep.subr.mxu0 0.0
        %5962 = vmatpush1.msra.mxu0 %v5940
        %5963 = vmatprep.subr.mxu0 0.0
        %5964 = vmatpush1.msra.mxu0 %v5941
        %5965 = vmatprep.subr.mxu0 0.0
        %5966 = vmatpush1.msra.mxu0 %v5942
        %5967 = vmatprep.subr.mxu0 0.0
        %5968 = vmatpush1.msra.mxu0 %v5943
        %5969 = vmatprep.subr.mxu0 0.0
        %5970 = vmatpush1.msra.mxu0 0.0
        %5971 = vmatprep.subr.mxu0 0.0
        %5972 = vmatpush1.msra.mxu0 0.0
        %5973 = vmatprep.subr.mxu0 0.0
        %5974 = vmatpush1.msra.mxu0 0.0
        %5975 = vmatprep.subr.mxu0 0.0
        %5976 = vmatpush1.msra.mxu0 0.0
        %5977 = vmatprep.subr.mxu0 0.0
        %5978 = vmatpush1.msra.mxu0 0.0
        %5979 = vmatprep.subr.mxu0 0.0
        %5980 = vmatpush1.msra.mxu0 0.0
        %5981 = vmatprep.subr.mxu0 0.0
        %5982 = vmatpush1.msra.mxu0 0.0
        %5983 = vmatprep.subr.mxu0 0.0
        %5984 = vmatpush1.msra.mxu0 0.0
        %5985 = vmatprep.subr.mxu0 0.0
        %5986 = vmatpush1.msra.mxu0 0.0
        %5987 = vmatprep.subr.mxu0 0.0
        %5988 = vmatpush1.msra.mxu0 0.0
        %5989 = vmatprep.subr.mxu0 0.0
        %5990 = vmatpush1.msra.mxu0 0.0
        %5991 = vmatprep.subr.mxu0 0.0
        %5992 = vmatpush1.msra.mxu0 0.0
        %5993 = vmatprep.subr.mxu0 0.0
        %5994 = vmatpush1.msra.mxu0 0.0
        %5995 = vmatprep.subr.mxu0 0.0
        %5996 = vmatpush1.msra.mxu0 0.0
        %5997 = vmatprep.subr.mxu0 0.0
        %5998 = vmatpush1.msra.mxu0 0.0
        %5999 = vmatprep.subr.mxu0 0.0
        %6000 = vmatpush1.msra.mxu0 0.0
        %6001 = vmatprep.subr.mxu0 0.0
        %6002 = vmatpush1.msra.mxu0 0.0
        %6003 = vmatprep.subr.mxu0 0.0
        %6004 = vmatpush1.msra.mxu0 0.0
        %6005 = vmatprep.subr.mxu0 0.0
        %6006 = vmatpush1.msra.mxu0 0.0
        %6007 = vmatprep.subr.mxu0 0.0
        %6008 = vmatpush1.msra.mxu0 0.0
        %6009 = vmatprep.subr.mxu0 0.0
        %6010 = vmatpush1.msra.mxu0 0.0
        %6011 = vmatprep.subr.mxu0 0.0
        %6012 = vmatpush1.msra.mxu0 0.0
        %6013 = vmatprep.subr.mxu0 0.0
        %6014 = vmatpush1.msra.mxu0 0.0
        %6015 = vmatprep.subr.mxu0 0.0
        %6016 = vmatpush1.msra.mxu0 0.0
        %6017 = vmatprep.mubr.f32.mxu0 0.0
        %6018 = vmatmul.mubr.f32.gmra.mrb[0].mxu0 %v5945
        %v6019 = vpop.f32.mrb[0].mxu0
        %v6020 = vadd.f32 0.0, %v6019
        %v6021 = vpop.f32.mrb[0].mxu0
        %6022 = vmatprep.mubr.f32.mxu0 0.0
        %6023 = vmatmul.mubr.f32.gmra.mrb[0].mxu0 %v5948
        %v6024 = vpop.f32.mrb[0].mxu0
        %v6025 = vadd.f32 0.0, %v6024
        %v6026 = vpop.f32.mrb[0].mxu0
        %6027 = vmatprep.mubr.f32.mxu0 0.0
        %6028 = vmatmul.mubr.f32.gmra.mrb[0].mxu0 %v5951
        %v6029 = vpop.f32.mrb[0].mxu0
        %v6030 = vadd.f32 0.0, %v6029
        %v6031 = vpop.f32.mrb[0].mxu0
        %6032 = vdwg.mxu0
        %v6034 = vsel %vm731, %v5921, 0
        %v6037 = vsel %vm731, %v5922, 0
        %v6040 = vsel %vm731, %v5923, 0
        %6042 = vmatprep.subr.mxu0 0.0
        %6043 = vmatpush1.msra.mxu0 %v5924
        %6044 = vmatprep.subr.mxu0 0.0
        %6045 = vmatpush1.msra.mxu0 %v5925
        %6046 = vmatprep.subr.mxu0 0.0
        %6047 = vmatpush1.msra.mxu0 %v5926
        %6048 = vmatprep.subr.mxu0 0.0
        %6049 = vmatpush1.msra.mxu0 %v5927
        %6050 = vmatprep.subr.mxu0 0.0
        %6051 = vmatpush1.msra.mxu0 %v5928
        %6052 = vmatprep.subr.mxu0 0.0
        %6053 = vmatpush1.msra.mxu0 %v5929
        %6054 = vmatprep.subr.mxu0 0.0
        %6055 = vmatpush1.msra.mxu0 %v5930
        %6056 = vmatprep.subr.mxu0 0.0
        %6057 = vmatpush1.msra.mxu0 %v5931
        %6058 = vmatprep.subr.mxu0 0.0
        %6059 = vmatpush1.msra.mxu0 0.0
        %6060 = vmatprep.subr.mxu0 0.0
        %6061 = vmatpush1.msra.mxu0 0.0
        %6062 = vmatprep.subr.mxu0 0.0
        %6063 = vmatpush1.msra.mxu0 0.0
        %6064 = vmatprep.subr.mxu0 0.0
        %6065 = vmatpush1.msra.mxu0 0.0
        %6066 = vmatprep.subr.mxu0 0.0
        %6067 = vmatpush1.msra.mxu0 0.0
        %6068 = vmatprep.subr.mxu0 0.0
        %6069 = vmatpush1.msra.mxu0 0.0
        %6070 = vmatprep.subr.mxu0 0.0
        %6071 = vmatpush1.msra.mxu0 0.0
        %6072 = vmatprep.subr.mxu0 0.0
        %6073 = vmatpush1.msra.mxu0 0.0
        %6074 = vmatprep.subr.mxu0 0.0
        %6075 = vmatpush1.msra.mxu0 0.0
        %6076 = vmatprep.subr.mxu0 0.0
        %6077 = vmatpush1.msra.mxu0 0.0
        %6078 = vmatprep.subr.mxu0 0.0
        %6079 = vmatpush1.msra.mxu0 0.0
        %6080 = vmatprep.subr.mxu0 0.0
        %6081 = vmatpush1.msra.mxu0 0.0
        %6082 = vmatprep.subr.mxu0 0.0
        %6083 = vmatpush1.msra.mxu0 0.0
        %6084 = vmatprep.subr.mxu0 0.0
        %6085 = vmatpush1.msra.mxu0 0.0
        %6086 = vmatprep.subr.mxu0 0.0
        %6087 = vmatpush1.msra.mxu0 0.0
        %6088 = vmatprep.subr.mxu0 0.0
        %6089 = vmatpush1.msra.mxu0 0.0
        %6090 = vmatprep.subr.mxu0 0.0
        %6091 = vmatpush1.msra.mxu0 0.0
        %6092 = vmatprep.subr.mxu0 0.0
        %6093 = vmatpush1.msra.mxu0 0.0
        %6094 = vmatprep.subr.mxu0 0.0
        %6095 = vmatpush1.msra.mxu0 0.0
        %6096 = vmatprep.subr.mxu0 0.0
        %6097 = vmatpush1.msra.mxu0 0.0
        %6098 = vmatprep.subr.mxu0 0.0
        %6099 = vmatpush1.msra.mxu0 0.0
        %6100 = vmatprep.subr.mxu0 0.0
        %6101 = vmatpush1.msra.mxu0 0.0
        %6102 = vmatprep.subr.mxu0 0.0
        %6103 = vmatpush1.msra.mxu0 0.0
        %6104 = vmatprep.subr.mxu0 0.0
        %6105 = vmatpush1.msra.mxu0 0.0
        %6106 = vmatprep.mubr.f32.mxu0 0.0
        %6107 = vmatmul.mubr.f32.gmra.mrb[0].mxu0 %v6034
        %v6108 = vpop.f32.mrb[0].mxu0
        %v6109 = vadd.f32 %v6020, %v6108
        %v6110 = vpop.f32.mrb[0].mxu0
        %6111 = vmatprep.mubr.f32.mxu0 0.0
        %6112 = vmatmul.mubr.f32.gmra.mrb[0].mxu0 %v6037
        %v6113 = vpop.f32.mrb[0].mxu0
        %v6114 = vadd.f32 %v6025, %v6113
        %v6115 = vpop.f32.mrb[0].mxu0
        %6116 = vmatprep.mubr.f32.mxu0 0.0
        %6117 = vmatmul.mubr.f32.gmra.mrb[0].mxu0 %v6040
        %v6118 = vpop.f32.mrb[0].mxu0
        %v6119 = vadd.f32 %v6030, %v6118
        %v6120 = vpop.f32.mrb[0].mxu0
        %6121 = vdwg.mxu0
        %v6122 = vld [vmem:[#allocation3 + $0x2] sm:$0xff]
        %v6123 = vld [vmem:[#allocation3 + $0xa] sm:$0xff]
        %v6124 = vld [vmem:[#allocation3 + $0x12] sm:$0xff]
        %s6125 = scalar_lea.vmem %s5, 128
        %v6126 = vld [vmem:[%s6125] sm:$0xff]
        %v6127 = vld [vmem:[%s6125 + $0x8] sm:$0xff]
        %v6128 = vld [vmem:[%s6125 + $0x10] sm:$0xff]
        %v6129 = vld [vmem:[%s6125 + $0x18] sm:$0xff]
        %v6130 = vld [vmem:[%s6125 + $0x20] sm:$0xff]
        %v6131 = vld [vmem:[%s6125 + $0x28] sm:$0xff]
        %v6132 = vld [vmem:[%s6125 + $0x30] sm:$0xff]
        %v6133 = vld [vmem:[%s6125 + $0x38] sm:$0xff]
        %v6135 = vsel %vm731, %v6122, 0
        %v6138 = vsel %vm731, %v6123, 0
        %v6141 = vsel %vm731, %v6124, 0
        %6143 = vmatprep.subr.mxu0 0.0
        %6144 = vmatpush1.msra.mxu0 %v6126
        %6145 = vmatprep.subr.mxu0 0.0
        %6146 = vmatpush1.msra.mxu0 %v6127
        %6147 = vmatprep.subr.mxu0 0.0
        %6148 = vmatpush1.msra.mxu0 %v6128
        %6149 = vmatprep.subr.mxu0 0.0
        %6150 = vmatpush1.msra.mxu0 %v6129
        %6151 = vmatprep.subr.mxu0 0.0
        %6152 = vmatpush1.msra.mxu0 %v6130
        %6153 = vmatprep.subr.mxu0 0.0
        %6154 = vmatpush1.msra.mxu0 %v6131
        %6155 = vmatprep.subr.mxu0 0.0
        %6156 = vmatpush1.msra.mxu0 %v6132
        %6157 = vmatprep.subr.mxu0 0.0
        %6158 = vmatpush1.msra.mxu0 %v6133
        %6159 = vmatprep.subr.mxu0 0.0
        %6160 = vmatpush1.msra.mxu0 0.0
        %6161 = vmatprep.subr.mxu0 0.0
        %6162 = vmatpush1.msra.mxu0 0.0
        %6163 = vmatprep.subr.mxu0 0.0
        %6164 = vmatpush1.msra.mxu0 0.0
        %6165 = vmatprep.subr.mxu0 0.0
        %6166 = vmatpush1.msra.mxu0 0.0
        %6167 = vmatprep.subr.mxu0 0.0
        %6168 = vmatpush1.msra.mxu0 0.0
        %6169 = vmatprep.subr.mxu0 0.0
        %6170 = vmatpush1.msra.mxu0 0.0
        %6171 = vmatprep.subr.mxu0 0.0
        %6172 = vmatpush1.msra.mxu0 0.0
        %6173 = vmatprep.subr.mxu0 0.0
        %6174 = vmatpush1.msra.mxu0 0.0
        %6175 = vmatprep.subr.mxu0 0.0
        %6176 = vmatpush1.msra.mxu0 0.0
        %6177 = vmatprep.subr.mxu0 0.0
        %6178 = vmatpush1.msra.mxu0 0.0
        %6179 = vmatprep.subr.mxu0 0.0
        %6180 = vmatpush1.msra.mxu0 0.0
        %6181 = vmatprep.subr.mxu0 0.0
        %6182 = vmatpush1.msra.mxu0 0.0
        %6183 = vmatprep.subr.mxu0 0.0
        %6184 = vmatpush1.msra.mxu0 0.0
        %6185 = vmatprep.subr.mxu0 0.0
        %6186 = vmatpush1.msra.mxu0 0.0
        %6187 = vmatprep.subr.mxu0 0.0
        %6188 = vmatpush1.msra.mxu0 0.0
        %6189 = vmatprep.subr.mxu0 0.0
        %6190 = vmatpush1.msra.mxu0 0.0
        %6191 = vmatprep.subr.mxu0 0.0
        %6192 = vmatpush1.msra.mxu0 0.0
        %6193 = vmatprep.subr.mxu0 0.0
        %6194 = vmatpush1.msra.mxu0 0.0
        %6195 = vmatprep.subr.mxu0 0.0
        %6196 = vmatpush1.msra.mxu0 0.0
        %6197 = vmatprep.subr.mxu0 0.0
        %6198 = vmatpush1.msra.mxu0 0.0
        %6199 = vmatprep.subr.mxu0 0.0
        %6200 = vmatpush1.msra.mxu0 0.0
        %6201 = vmatprep.subr.mxu0 0.0
        %6202 = vmatpush1.msra.mxu0 0.0
        %6203 = vmatprep.subr.mxu0 0.0
        %6204 = vmatpush1.msra.mxu0 0.0
        %6205 = vmatprep.subr.mxu0 0.0
        %6206 = vmatpush1.msra.mxu0 0.0
        %6207 = vmatprep.mubr.f32.mxu0 0.0
        %6208 = vmatmul.mubr.f32.gmra.mrb[0].mxu0 %v6135
        %v6209 = vpop.f32.mrb[0].mxu0
        %v6210 = vadd.f32 0.0, %v6209
        %v6211 = vpop.f32.mrb[0].mxu0
        %6212 = vmatprep.mubr.f32.mxu0 0.0
        %6213 = vmatmul.mubr.f32.gmra.mrb[0].mxu0 %v6138
        %v6214 = vpop.f32.mrb[0].mxu0
        %v6215 = vadd.f32 0.0, %v6214
        %v6216 = vpop.f32.mrb[0].mxu0
        %6217 = vmatprep.mubr.f32.mxu0 0.0
        %6218 = vmatmul.mubr.f32.gmra.mrb[0].mxu0 %v6141
        %v6219 = vpop.f32.mrb[0].mxu0
        %v6220 = vadd.f32 0.0, %v6219
        %v6221 = vpop.f32.mrb[0].mxu0
        %6222 = vdwg.mxu0
        %v6223 = vadd.f32 %v6109, %v6210
        %v6224 = vadd.f32 %v6114, %v6215
        %v6225 = vadd.f32 %v6119, %v6220
        %v6226 = vld [vmem:[#allocation3 + $0x6] sm:$0xff]
        %v6227 = vld [vmem:[#allocation3 + $0xe] sm:$0xff]
        %v6228 = vld [vmem:[#allocation3 + $0x16] sm:$0xff]
        %s6229 = scalar_lea.vmem %s5, 192
        %v6230 = vld [vmem:[%s6229] sm:$0xff]
        %v6231 = vld [vmem:[%s6229 + $0x8] sm:$0xff]
        %v6232 = vld [vmem:[%s6229 + $0x10] sm:$0xff]
        %v6233 = vld [vmem:[%s6229 + $0x18] sm:$0xff]
        %v6234 = vld [vmem:[%s6229 + $0x20] sm:$0xff]
        %v6235 = vld [vmem:[%s6229 + $0x28] sm:$0xff]
        %v6236 = vld [vmem:[%s6229 + $0x30] sm:$0xff]
        %v6237 = vld [vmem:[%s6229 + $0x38] sm:$0xff]
        %v6239 = vsel %vm731, %v6226, 0
        %v6242 = vsel %vm731, %v6227, 0
        %v6245 = vsel %vm731, %v6228, 0
        %6247 = vmatprep.subr.mxu0 0.0
        %6248 = vmatpush1.msra.mxu0 %v6230
        %6249 = vmatprep.subr.mxu0 0.0
        %6250 = vmatpush1.msra.mxu0 %v6231
        %6251 = vmatprep.subr.mxu0 0.0
        %6252 = vmatpush1.msra.mxu0 %v6232
        %6253 = vmatprep.subr.mxu0 0.0
        %6254 = vmatpush1.msra.mxu0 %v6233
        %6255 = vmatprep.subr.mxu0 0.0
        %6256 = vmatpush1.msra.mxu0 %v6234
        %6257 = vmatprep.subr.mxu0 0.0
        %6258 = vmatpush1.msra.mxu0 %v6235
        %6259 = vmatprep.subr.mxu0 0.0
        %6260 = vmatpush1.msra.mxu0 %v6236
        %6261 = vmatprep.subr.mxu0 0.0
        %6262 = vmatpush1.msra.mxu0 %v6237
        %6263 = vmatprep.subr.mxu0 0.0
        %6264 = vmatpush1.msra.mxu0 0.0
        %6265 = vmatprep.subr.mxu0 0.0
        %6266 = vmatpush1.msra.mxu0 0.0
        %6267 = vmatprep.subr.mxu0 0.0
        %6268 = vmatpush1.msra.mxu0 0.0
        %6269 = vmatprep.subr.mxu0 0.0
        %6270 = vmatpush1.msra.mxu0 0.0
        %6271 = vmatprep.subr.mxu0 0.0
        %6272 = vmatpush1.msra.mxu0 0.0
        %6273 = vmatprep.subr.mxu0 0.0
        %6274 = vmatpush1.msra.mxu0 0.0
        %6275 = vmatprep.subr.mxu0 0.0
        %6276 = vmatpush1.msra.mxu0 0.0
        %6277 = vmatprep.subr.mxu0 0.0
        %6278 = vmatpush1.msra.mxu0 0.0
        %6279 = vmatprep.subr.mxu0 0.0
        %6280 = vmatpush1.msra.mxu0 0.0
        %6281 = vmatprep.subr.mxu0 0.0
        %6282 = vmatpush1.msra.mxu0 0.0
        %6283 = vmatprep.subr.mxu0 0.0
        %6284 = vmatpush1.msra.mxu0 0.0
        %6285 = vmatprep.subr.mxu0 0.0
        %6286 = vmatpush1.msra.mxu0 0.0
        %6287 = vmatprep.subr.mxu0 0.0
        %6288 = vmatpush1.msra.mxu0 0.0
        %6289 = vmatprep.subr.mxu0 0.0
        %6290 = vmatpush1.msra.mxu0 0.0
        %6291 = vmatprep.subr.mxu0 0.0
        %6292 = vmatpush1.msra.mxu0 0.0
        %6293 = vmatprep.subr.mxu0 0.0
        %6294 = vmatpush1.msra.mxu0 0.0
        %6295 = vmatprep.subr.mxu0 0.0
        %6296 = vmatpush1.msra.mxu0 0.0
        %6297 = vmatprep.subr.mxu0 0.0
        %6298 = vmatpush1.msra.mxu0 0.0
        %6299 = vmatprep.subr.mxu0 0.0
        %6300 = vmatpush1.msra.mxu0 0.0
        %6301 = vmatprep.subr.mxu0 0.0
        %6302 = vmatpush1.msra.mxu0 0.0
        %6303 = vmatprep.subr.mxu0 0.0
        %6304 = vmatpush1.msra.mxu0 0.0
        %6305 = vmatprep.subr.mxu0 0.0
        %6306 = vmatpush1.msra.mxu0 0.0
        %6307 = vmatprep.subr.mxu0 0.0
        %6308 = vmatpush1.msra.mxu0 0.0
        %6309 = vmatprep.subr.mxu0 0.0
        %6310 = vmatpush1.msra.mxu0 0.0
        %6311 = vmatprep.mubr.f32.mxu0 0.0
        %6312 = vmatmul.mubr.f32.gmra.mrb[0].mxu0 %v6239
        %v6313 = vpop.f32.mrb[0].mxu0
        %v6314 = vadd.f32 0.0, %v6313
        %v6315 = vpop.f32.mrb[0].mxu0
        %6316 = vmatprep.mubr.f32.mxu0 0.0
        %6317 = vmatmul.mubr.f32.gmra.mrb[0].mxu0 %v6242
        %v6318 = vpop.f32.mrb[0].mxu0
        %v6319 = vadd.f32 0.0, %v6318
        %v6320 = vpop.f32.mrb[0].mxu0
        %6321 = vmatprep.mubr.f32.mxu0 0.0
        %6322 = vmatmul.mubr.f32.gmra.mrb[0].mxu0 %v6245
        %v6323 = vpop.f32.mrb[0].mxu0
        %v6324 = vadd.f32 0.0, %v6323
        %v6325 = vpop.f32.mrb[0].mxu0
        %6326 = vdwg.mxu0
        %v6327 = vadd.f32 %v6223, %v6314
        %v6328 = vadd.f32 %v6224, %v6319
        %v6329 = vadd.f32 %v6225, %v6324
        %v6330 = vld [vmem:[#allocation3 + $0x7] sm:$0xff]
        %v6331 = vld [vmem:[#allocation3 + $0xf] sm:$0xff]
        %v6332 = vld [vmem:[#allocation3 + $0x17] sm:$0xff]
        %s6333 = scalar_lea.vmem %s5, 256
        %v6334 = vld [vmem:[%s6333] sm:$0xff]
        %v6335 = vld [vmem:[%s6333 + $0x8] sm:$0xff]
        %v6336 = vld [vmem:[%s6333 + $0x10] sm:$0xff]
        %v6337 = vld [vmem:[%s6333 + $0x18] sm:$0xff]
        %v6338 = vld [vmem:[%s6333 + $0x20] sm:$0xff]
        %v6339 = vld [vmem:[%s6333 + $0x28] sm:$0xff]
        %v6340 = vld [vmem:[%s6333 + $0x30] sm:$0xff]
        %v6341 = vld [vmem:[%s6333 + $0x38] sm:$0xff]
        %v6343 = vsel %vm731, %v6330, 0
        %v6346 = vsel %vm731, %v6331, 0
        %v6349 = vsel %vm731, %v6332, 0
        %6351 = vmatprep.subr.mxu0 0.0
        %6352 = vmatpush1.msra.mxu0 %v6334
        %6353 = vmatprep.subr.mxu0 0.0
        %6354 = vmatpush1.msra.mxu0 %v6335
        %6355 = vmatprep.subr.mxu0 0.0
        %6356 = vmatpush1.msra.mxu0 %v6336
        %6357 = vmatprep.subr.mxu0 0.0
        %6358 = vmatpush1.msra.mxu0 %v6337
        %6359 = vmatprep.subr.mxu0 0.0
        %6360 = vmatpush1.msra.mxu0 %v6338
        %6361 = vmatprep.subr.mxu0 0.0
        %6362 = vmatpush1.msra.mxu0 %v6339
        %6363 = vmatprep.subr.mxu0 0.0
        %6364 = vmatpush1.msra.mxu0 %v6340
        %6365 = vmatprep.subr.mxu0 0.0
        %6366 = vmatpush1.msra.mxu0 %v6341
        %6367 = vmatprep.subr.mxu0 0.0
        %6368 = vmatpush1.msra.mxu0 0.0
        %6369 = vmatprep.subr.mxu0 0.0
        %6370 = vmatpush1.msra.mxu0 0.0
        %6371 = vmatprep.subr.mxu0 0.0
        %6372 = vmatpush1.msra.mxu0 0.0
        %6373 = vmatprep.subr.mxu0 0.0
        %6374 = vmatpush1.msra.mxu0 0.0
        %6375 = vmatprep.subr.mxu0 0.0
        %6376 = vmatpush1.msra.mxu0 0.0
        %6377 = vmatprep.subr.mxu0 0.0
        %6378 = vmatpush1.msra.mxu0 0.0
        %6379 = vmatprep.subr.mxu0 0.0
        %6380 = vmatpush1.msra.mxu0 0.0
        %6381 = vmatprep.subr.mxu0 0.0
        %6382 = vmatpush1.msra.mxu0 0.0
        %6383 = vmatprep.subr.mxu0 0.0
        %6384 = vmatpush1.msra.mxu0 0.0
        %6385 = vmatprep.subr.mxu0 0.0
        %6386 = vmatpush1.msra.mxu0 0.0
        %6387 = vmatprep.subr.mxu0 0.0
        %6388 = vmatpush1.msra.mxu0 0.0
        %6389 = vmatprep.subr.mxu0 0.0
        %6390 = vmatpush1.msra.mxu0 0.0
        %6391 = vmatprep.subr.mxu0 0.0
        %6392 = vmatpush1.msra.mxu0 0.0
        %6393 = vmatprep.subr.mxu0 0.0
        %6394 = vmatpush1.msra.mxu0 0.0
        %6395 = vmatprep.subr.mxu0 0.0
        %6396 = vmatpush1.msra.mxu0 0.0
        %6397 = vmatprep.subr.mxu0 0.0
        %6398 = vmatpush1.msra.mxu0 0.0
        %6399 = vmatprep.subr.mxu0 0.0
        %6400 = vmatpush1.msra.mxu0 0.0
        %6401 = vmatprep.subr.mxu0 0.0
        %6402 = vmatpush1.msra.mxu0 0.0
        %6403 = vmatprep.subr.mxu0 0.0
        %6404 = vmatpush1.msra.mxu0 0.0
        %6405 = vmatprep.subr.mxu0 0.0
        %6406 = vmatpush1.msra.mxu0 0.0
        %6407 = vmatprep.subr.mxu0 0.0
        %6408 = vmatpush1.msra.mxu0 0.0
        %6409 = vmatprep.subr.mxu0 0.0
        %6410 = vmatpush1.msra.mxu0 0.0
        %6411 = vmatprep.subr.mxu0 0.0
        %6412 = vmatpush1.msra.mxu0 0.0
        %6413 = vmatprep.subr.mxu0 0.0
        %6414 = vmatpush1.msra.mxu0 0.0
        %6415 = vmatprep.mubr.f32.mxu0 0.0
        %6416 = vmatmul.mubr.f32.gmra.mrb[0].mxu0 %v6343
        %v6417 = vpop.f32.mrb[0].mxu0
        %v6418 = vadd.f32 0.0, %v6417
        %v6419 = vpop.f32.mrb[0].mxu0
        %6420 = vmatprep.mubr.f32.mxu0 0.0
        %6421 = vmatmul.mubr.f32.gmra.mrb[0].mxu0 %v6346
        %v6422 = vpop.f32.mrb[0].mxu0
        %v6423 = vadd.f32 0.0, %v6422
        %v6424 = vpop.f32.mrb[0].mxu0
        %6425 = vmatprep.mubr.f32.mxu0 0.0
        %6426 = vmatmul.mubr.f32.gmra.mrb[0].mxu0 %v6349
        %v6427 = vpop.f32.mrb[0].mxu0
        %v6428 = vadd.f32 0.0, %v6427
        %v6429 = vpop.f32.mrb[0].mxu0
        %6430 = vdwg.mxu0
        %v6431 = vadd.f32 %v6327, %v6418
        %v6432 = vadd.f32 %v6328, %v6423
        %v6433 = vadd.f32 %v6329, %v6428
        %v6434 = vld [vmem:[#allocation3 + $0x8] sm:$0xff]
        %v6435 = vld [vmem:[#allocation3 + $0x10] sm:$0xff]
        %v6436 = vld [vmem:[#allocation3 + $0x18] sm:$0xff]
        %s6437 = scalar_lea.vmem %s5, 320
        %v6438 = vld [vmem:[%s6437] sm:$0xff]
        %v6439 = vld [vmem:[%s6437 + $0x8] sm:$0xff]
        %v6440 = vld [vmem:[%s6437 + $0x10] sm:$0xff]
        %v6441 = vld [vmem:[%s6437 + $0x18] sm:$0xff]
        %v6442 = vld [vmem:[%s6437 + $0x20] sm:$0xff]
        %v6443 = vld [vmem:[%s6437 + $0x28] sm:$0xff]
        %v6444 = vld [vmem:[%s6437 + $0x30] sm:$0xff]
        %v6445 = vld [vmem:[%s6437 + $0x38] sm:$0xff]
        %v6447 = vsel %vm731, %v6434, 0
        %v6450 = vsel %vm731, %v6435, 0
        %v6453 = vsel %vm731, %v6436, 0
        %6455 = vmatprep.subr.mxu0 0.0
        %6456 = vmatpush1.msra.mxu0 %v6438
        %6457 = vmatprep.subr.mxu0 0.0
        %6458 = vmatpush1.msra.mxu0 %v6439
        %6459 = vmatprep.subr.mxu0 0.0
        %6460 = vmatpush1.msra.mxu0 %v6440
        %6461 = vmatprep.subr.mxu0 0.0
        %6462 = vmatpush1.msra.mxu0 %v6441
        %6463 = vmatprep.subr.mxu0 0.0
        %6464 = vmatpush1.msra.mxu0 %v6442
        %6465 = vmatprep.subr.mxu0 0.0
        %6466 = vmatpush1.msra.mxu0 %v6443
        %6467 = vmatprep.subr.mxu0 0.0
        %6468 = vmatpush1.msra.mxu0 %v6444
        %6469 = vmatprep.subr.mxu0 0.0
        %6470 = vmatpush1.msra.mxu0 %v6445
        %6471 = vmatprep.subr.mxu0 0.0
        %6472 = vmatpush1.msra.mxu0 0.0
        %6473 = vmatprep.subr.mxu0 0.0
        %6474 = vmatpush1.msra.mxu0 0.0
        %6475 = vmatprep.subr.mxu0 0.0
        %6476 = vmatpush1.msra.mxu0 0.0
        %6477 = vmatprep.subr.mxu0 0.0
        %6478 = vmatpush1.msra.mxu0 0.0
        %6479 = vmatprep.subr.mxu0 0.0
        %6480 = vmatpush1.msra.mxu0 0.0
        %6481 = vmatprep.subr.mxu0 0.0
        %6482 = vmatpush1.msra.mxu0 0.0
        %6483 = vmatprep.subr.mxu0 0.0
        %6484 = vmatpush1.msra.mxu0 0.0
        %6485 = vmatprep.subr.mxu0 0.0
        %6486 = vmatpush1.msra.mxu0 0.0
        %6487 = vmatprep.subr.mxu0 0.0
        %6488 = vmatpush1.msra.mxu0 0.0
        %6489 = vmatprep.subr.mxu0 0.0
        %6490 = vmatpush1.msra.mxu0 0.0
        %6491 = vmatprep.subr.mxu0 0.0
        %6492 = vmatpush1.msra.mxu0 0.0
        %6493 = vmatprep.subr.mxu0 0.0
        %6494 = vmatpush1.msra.mxu0 0.0
        %6495 = vmatprep.subr.mxu0 0.0
        %6496 = vmatpush1.msra.mxu0 0.0
        %6497 = vmatprep.subr.mxu0 0.0
        %6498 = vmatpush1.msra.mxu0 0.0
        %6499 = vmatprep.subr.mxu0 0.0
        %6500 = vmatpush1.msra.mxu0 0.0
        %6501 = vmatprep.subr.mxu0 0.0
        %6502 = vmatpush1.msra.mxu0 0.0
        %6503 = vmatprep.subr.mxu0 0.0
        %6504 = vmatpush1.msra.mxu0 0.0
        %6505 = vmatprep.subr.mxu0 0.0
        %6506 = vmatpush1.msra.mxu0 0.0
        %6507 = vmatprep.subr.mxu0 0.0
        %6508 = vmatpush1.msra.mxu0 0.0
        %6509 = vmatprep.subr.mxu0 0.0
        %6510 = vmatpush1.msra.mxu0 0.0
        %6511 = vmatprep.subr.mxu0 0.0
        %6512 = vmatpush1.msra.mxu0 0.0
        %6513 = vmatprep.subr.mxu0 0.0
        %6514 = vmatpush1.msra.mxu0 0.0
        %6515 = vmatprep.subr.mxu0 0.0
        %6516 = vmatpush1.msra.mxu0 0.0
        %6517 = vmatprep.subr.mxu0 0.0
        %6518 = vmatpush1.msra.mxu0 0.0
        %6519 = vmatprep.mubr.f32.mxu0 0.0
        %6520 = vmatmul.mubr.f32.gmra.mrb[0].mxu0 %v6447
        %v6521 = vpop.f32.mrb[0].mxu0
        %v6522 = vadd.f32 0.0, %v6521
        %v6523 = vpop.f32.mrb[0].mxu0
        %6524 = vmatprep.mubr.f32.mxu0 0.0
        %6525 = vmatmul.mubr.f32.gmra.mrb[0].mxu0 %v6450
        %v6526 = vpop.f32.mrb[0].mxu0
        %v6527 = vadd.f32 0.0, %v6526
        %v6528 = vpop.f32.mrb[0].mxu0
        %6529 = vmatprep.mubr.f32.mxu0 0.0
        %6530 = vmatmul.mubr.f32.gmra.mrb[0].mxu0 %v6453
        %v6531 = vpop.f32.mrb[0].mxu0
        %v6532 = vadd.f32 0.0, %v6531
        %v6533 = vpop.f32.mrb[0].mxu0
        %6534 = vdwg.mxu0
        %v6535 = vadd.f32 %v6431, %v6522
        %v6536 = vadd.f32 %v6432, %v6527
        %v6537 = vadd.f32 %v6433, %v6532
        %v6538 = vld [vmem:[#allocation3 + $0xc] sm:$0xff]
        %v6539 = vld [vmem:[#allocation3 + $0x14] sm:$0xff]
        %v6540 = vld [vmem:[#allocation3 + $0x1c] sm:$0xff]
        %s6541 = scalar_lea.vmem %s5, 384
        %v6542 = vld [vmem:[%s6541] sm:$0xff]
        %v6543 = vld [vmem:[%s6541 + $0x8] sm:$0xff]
        %v6544 = vld [vmem:[%s6541 + $0x10] sm:$0xff]
        %v6545 = vld [vmem:[%s6541 + $0x18] sm:$0xff]
        %v6546 = vld [vmem:[%s6541 + $0x20] sm:$0xff]
        %v6547 = vld [vmem:[%s6541 + $0x28] sm:$0xff]
        %v6548 = vld [vmem:[%s6541 + $0x30] sm:$0xff]
        %v6549 = vld [vmem:[%s6541 + $0x38] sm:$0xff]
        %v6551 = vsel %vm731, %v6538, 0
        %v6554 = vsel %vm731, %v6539, 0
        %v6557 = vsel %vm731, %v6540, 0
        %6559 = vmatprep.subr.mxu0 0.0
        %6560 = vmatpush1.msra.mxu0 %v6542
        %6561 = vmatprep.subr.mxu0 0.0
        %6562 = vmatpush1.msra.mxu0 %v6543
        %6563 = vmatprep.subr.mxu0 0.0
        %6564 = vmatpush1.msra.mxu0 %v6544
        %6565 = vmatprep.subr.mxu0 0.0
        %6566 = vmatpush1.msra.mxu0 %v6545
        %6567 = vmatprep.subr.mxu0 0.0
        %6568 = vmatpush1.msra.mxu0 %v6546
        %6569 = vmatprep.subr.mxu0 0.0
        %6570 = vmatpush1.msra.mxu0 %v6547
        %6571 = vmatprep.subr.mxu0 0.0
        %6572 = vmatpush1.msra.mxu0 %v6548
        %6573 = vmatprep.subr.mxu0 0.0
        %6574 = vmatpush1.msra.mxu0 %v6549
        %6575 = vmatprep.subr.mxu0 0.0
        %6576 = vmatpush1.msra.mxu0 0.0
        %6577 = vmatprep.subr.mxu0 0.0
        %6578 = vmatpush1.msra.mxu0 0.0
        %6579 = vmatprep.subr.mxu0 0.0
        %6580 = vmatpush1.msra.mxu0 0.0
        %6581 = vmatprep.subr.mxu0 0.0
        %6582 = vmatpush1.msra.mxu0 0.0
        %6583 = vmatprep.subr.mxu0 0.0
        %6584 = vmatpush1.msra.mxu0 0.0
        %6585 = vmatprep.subr.mxu0 0.0
        %6586 = vmatpush1.msra.mxu0 0.0
        %6587 = vmatprep.subr.mxu0 0.0
        %6588 = vmatpush1.msra.mxu0 0.0
        %6589 = vmatprep.subr.mxu0 0.0
        %6590 = vmatpush1.msra.mxu0 0.0
        %6591 = vmatprep.subr.mxu0 0.0
        %6592 = vmatpush1.msra.mxu0 0.0
        %6593 = vmatprep.subr.mxu0 0.0
        %6594 = vmatpush1.msra.mxu0 0.0
        %6595 = vmatprep.subr.mxu0 0.0
        %6596 = vmatpush1.msra.mxu0 0.0
        %6597 = vmatprep.subr.mxu0 0.0
        %6598 = vmatpush1.msra.mxu0 0.0
        %6599 = vmatprep.subr.mxu0 0.0
        %6600 = vmatpush1.msra.mxu0 0.0
        %6601 = vmatprep.subr.mxu0 0.0
        %6602 = vmatpush1.msra.mxu0 0.0
        %6603 = vmatprep.subr.mxu0 0.0
        %6604 = vmatpush1.msra.mxu0 0.0
        %6605 = vmatprep.subr.mxu0 0.0
        %6606 = vmatpush1.msra.mxu0 0.0
        %6607 = vmatprep.subr.mxu0 0.0
        %6608 = vmatpush1.msra.mxu0 0.0
        %6609 = vmatprep.subr.mxu0 0.0
        %6610 = vmatpush1.msra.mxu0 0.0
        %6611 = vmatprep.subr.mxu0 0.0
        %6612 = vmatpush1.msra.mxu0 0.0
        %6613 = vmatprep.subr.mxu0 0.0
        %6614 = vmatpush1.msra.mxu0 0.0
        %6615 = vmatprep.subr.mxu0 0.0
        %6616 = vmatpush1.msra.mxu0 0.0
        %6617 = vmatprep.subr.mxu0 0.0
        %6618 = vmatpush1.msra.mxu0 0.0
        %6619 = vmatprep.subr.mxu0 0.0
        %6620 = vmatpush1.msra.mxu0 0.0
        %6621 = vmatprep.subr.mxu0 0.0
        %6622 = vmatpush1.msra.mxu0 0.0
        %6623 = vmatprep.mubr.f32.mxu0 0.0
        %6624 = vmatmul.mubr.f32.gmra.mrb[0].mxu0 %v6551
        %v6625 = vpop.f32.mrb[0].mxu0
        %v6626 = vadd.f32 0.0, %v6625
        %v6627 = vpop.f32.mrb[0].mxu0
        %6628 = vmatprep.mubr.f32.mxu0 0.0
        %6629 = vmatmul.mubr.f32.gmra.mrb[0].mxu0 %v6554
        %v6630 = vpop.f32.mrb[0].mxu0
        %v6631 = vadd.f32 0.0, %v6630
        %v6632 = vpop.f32.mrb[0].mxu0
        %6633 = vmatprep.mubr.f32.mxu0 0.0
        %6634 = vmatmul.mubr.f32.gmra.mrb[0].mxu0 %v6557
        %v6635 = vpop.f32.mrb[0].mxu0
        %v6636 = vadd.f32 0.0, %v6635
        %v6637 = vpop.f32.mrb[0].mxu0
        %6638 = vdwg.mxu0
        %v6639 = vadd.f32 %v6535, %v6626
        %v6640 = vadd.f32 %v6536, %v6631
        %v6641 = vadd.f32 %v6537, %v6636
        %v6642 = vld [vmem:[#allocation3 + $0xd] sm:$0xff]
        %v6643 = vld [vmem:[#allocation3 + $0x15] sm:$0xff]
        %v6644 = vld [vmem:[#allocation3 + $0x1d] sm:$0xff]
        %s6645 = scalar_lea.vmem %s5, 448
        %v6646 = vld [vmem:[%s6645] sm:$0xff]
        %v6647 = vld [vmem:[%s6645 + $0x8] sm:$0xff]
        %v6648 = vld [vmem:[%s6645 + $0x10] sm:$0xff]
        %v6649 = vld [vmem:[%s6645 + $0x18] sm:$0xff]
        %v6650 = vld [vmem:[%s6645 + $0x20] sm:$0xff]
        %v6651 = vld [vmem:[%s6645 + $0x28] sm:$0xff]
        %v6652 = vld [vmem:[%s6645 + $0x30] sm:$0xff]
        %v6653 = vld [vmem:[%s6645 + $0x38] sm:$0xff]
        %v6655 = vsel %vm731, %v6642, 0
        %v6658 = vsel %vm731, %v6643, 0
        %v6661 = vsel %vm731, %v6644, 0
        %6663 = vmatprep.subr.mxu0 0.0
        %6664 = vmatpush1.msra.mxu0 %v6646
        %6665 = vmatprep.subr.mxu0 0.0
        %6666 = vmatpush1.msra.mxu0 %v6647
        %6667 = vmatprep.subr.mxu0 0.0
        %6668 = vmatpush1.msra.mxu0 %v6648
        %6669 = vmatprep.subr.mxu0 0.0
        %6670 = vmatpush1.msra.mxu0 %v6649
        %6671 = vmatprep.subr.mxu0 0.0
        %6672 = vmatpush1.msra.mxu0 %v6650
        %6673 = vmatprep.subr.mxu0 0.0
        %6674 = vmatpush1.msra.mxu0 %v6651
        %6675 = vmatprep.subr.mxu0 0.0
        %6676 = vmatpush1.msra.mxu0 %v6652
        %6677 = vmatprep.subr.mxu0 0.0
        %6678 = vmatpush1.msra.mxu0 %v6653
        %6679 = vmatprep.subr.mxu0 0.0
        %6680 = vmatpush1.msra.mxu0 0.0
        %6681 = vmatprep.subr.mxu0 0.0
        %6682 = vmatpush1.msra.mxu0 0.0
        %6683 = vmatprep.subr.mxu0 0.0
        %6684 = vmatpush1.msra.mxu0 0.0
        %6685 = vmatprep.subr.mxu0 0.0
        %6686 = vmatpush1.msra.mxu0 0.0
        %6687 = vmatprep.subr.mxu0 0.0
        %6688 = vmatpush1.msra.mxu0 0.0
        %6689 = vmatprep.subr.mxu0 0.0
        %6690 = vmatpush1.msra.mxu0 0.0
        %6691 = vmatprep.subr.mxu0 0.0
        %6692 = vmatpush1.msra.mxu0 0.0
        %6693 = vmatprep.subr.mxu0 0.0
        %6694 = vmatpush1.msra.mxu0 0.0
        %6695 = vmatprep.subr.mxu0 0.0
        %6696 = vmatpush1.msra.mxu0 0.0
        %6697 = vmatprep.subr.mxu0 0.0
        %6698 = vmatpush1.msra.mxu0 0.0
        %6699 = vmatprep.subr.mxu0 0.0
        %6700 = vmatpush1.msra.mxu0 0.0
        %6701 = vmatprep.subr.mxu0 0.0
        %6702 = vmatpush1.msra.mxu0 0.0
        %6703 = vmatprep.subr.mxu0 0.0
        %6704 = vmatpush1.msra.mxu0 0.0
        %6705 = vmatprep.subr.mxu0 0.0
        %6706 = vmatpush1.msra.mxu0 0.0
        %6707 = vmatprep.subr.mxu0 0.0
        %6708 = vmatpush1.msra.mxu0 0.0
        %6709 = vmatprep.subr.mxu0 0.0
        %6710 = vmatpush1.msra.mxu0 0.0
        %6711 = vmatprep.subr.mxu0 0.0
        %6712 = vmatpush1.msra.mxu0 0.0
        %6713 = vmatprep.subr.mxu0 0.0
        %6714 = vmatpush1.msra.mxu0 0.0
        %6715 = vmatprep.subr.mxu0 0.0
        %6716 = vmatpush1.msra.mxu0 0.0
        %6717 = vmatprep.subr.mxu0 0.0
        %6718 = vmatpush1.msra.mxu0 0.0
        %6719 = vmatprep.subr.mxu0 0.0
        %6720 = vmatpush1.msra.mxu0 0.0
        %6721 = vmatprep.subr.mxu0 0.0
        %6722 = vmatpush1.msra.mxu0 0.0
        %6723 = vmatprep.subr.mxu0 0.0
        %6724 = vmatpush1.msra.mxu0 0.0
        %6725 = vmatprep.subr.mxu0 0.0
        %6726 = vmatpush1.msra.mxu0 0.0
        %6727 = vmatprep.mubr.f32.mxu0 0.0
        %6728 = vmatmul.mubr.f32.gmra.mrb[0].mxu0 %v6655
        %v6729 = vpop.f32.mrb[0].mxu0
        %v6730 = vadd.f32 0.0, %v6729
        %v6731 = vpop.f32.mrb[0].mxu0
        %6732 = vmatprep.mubr.f32.mxu0 0.0
        %6733 = vmatmul.mubr.f32.gmra.mrb[0].mxu0 %v6658
        %v6734 = vpop.f32.mrb[0].mxu0
        %v6735 = vadd.f32 0.0, %v6734
        %v6736 = vpop.f32.mrb[0].mxu0
        %6737 = vmatprep.mubr.f32.mxu0 0.0
        %6738 = vmatmul.mubr.f32.gmra.mrb[0].mxu0 %v6661
        %v6739 = vpop.f32.mrb[0].mxu0
        %v6740 = vadd.f32 0.0, %v6739
        %v6741 = vpop.f32.mrb[0].mxu0
        %6742 = vdwg.mxu0
        %v6743 = vadd.f32 %v6639, %v6730
        %v6744 = vadd.f32 %v6640, %v6735
        %v6745 = vadd.f32 %v6641, %v6740
        %v6746 = vld [vmem:[#allocation3 + $0xe] sm:$0xff]
        %v6747 = vld [vmem:[#allocation3 + $0x16] sm:$0xff]
        %v6748 = vld [vmem:[#allocation3 + $0x1e] sm:$0xff]
        %s6749 = scalar_lea.vmem %s5, 512
        %v6750 = vld [vmem:[%s6749] sm:$0xff]
        %v6751 = vld [vmem:[%s6749 + $0x8] sm:$0xff]
        %v6752 = vld [vmem:[%s6749 + $0x10] sm:$0xff]
        %v6753 = vld [vmem:[%s6749 + $0x18] sm:$0xff]
        %v6754 = vld [vmem:[%s6749 + $0x20] sm:$0xff]
        %v6755 = vld [vmem:[%s6749 + $0x28] sm:$0xff]
        %v6756 = vld [vmem:[%s6749 + $0x30] sm:$0xff]
        %v6757 = vld [vmem:[%s6749 + $0x38] sm:$0xff]
        %v6759 = vsel %vm731, %v6746, 0
        %v6762 = vsel %vm731, %v6747, 0
        %v6765 = vsel %vm731, %v6748, 0
        %6767 = vmatprep.subr.mxu0 0.0
        %6768 = vmatpush1.msra.mxu0 %v6750
        %6769 = vmatprep.subr.mxu0 0.0
        %6770 = vmatpush1.msra.mxu0 %v6751
        %6771 = vmatprep.subr.mxu0 0.0
        %6772 = vmatpush1.msra.mxu0 %v6752
        %6773 = vmatprep.subr.mxu0 0.0
        %6774 = vmatpush1.msra.mxu0 %v6753
        %6775 = vmatprep.subr.mxu0 0.0
        %6776 = vmatpush1.msra.mxu0 %v6754
        %6777 = vmatprep.subr.mxu0 0.0
        %6778 = vmatpush1.msra.mxu0 %v6755
        %6779 = vmatprep.subr.mxu0 0.0
        %6780 = vmatpush1.msra.mxu0 %v6756
        %6781 = vmatprep.subr.mxu0 0.0
        %6782 = vmatpush1.msra.mxu0 %v6757
        %6783 = vmatprep.subr.mxu0 0.0
        %6784 = vmatpush1.msra.mxu0 0.0
        %6785 = vmatprep.subr.mxu0 0.0
        %6786 = vmatpush1.msra.mxu0 0.0
        %6787 = vmatprep.subr.mxu0 0.0
        %6788 = vmatpush1.msra.mxu0 0.0
        %6789 = vmatprep.subr.mxu0 0.0
        %6790 = vmatpush1.msra.mxu0 0.0
        %6791 = vmatprep.subr.mxu0 0.0
        %6792 = vmatpush1.msra.mxu0 0.0
        %6793 = vmatprep.subr.mxu0 0.0
        %6794 = vmatpush1.msra.mxu0 0.0
        %6795 = vmatprep.subr.mxu0 0.0
        %6796 = vmatpush1.msra.mxu0 0.0
        %6797 = vmatprep.subr.mxu0 0.0
        %6798 = vmatpush1.msra.mxu0 0.0
        %6799 = vmatprep.subr.mxu0 0.0
        %6800 = vmatpush1.msra.mxu0 0.0
        %6801 = vmatprep.subr.mxu0 0.0
        %6802 = vmatpush1.msra.mxu0 0.0
        %6803 = vmatprep.subr.mxu0 0.0
        %6804 = vmatpush1.msra.mxu0 0.0
        %6805 = vmatprep.subr.mxu0 0.0
        %6806 = vmatpush1.msra.mxu0 0.0
        %6807 = vmatprep.subr.mxu0 0.0
        %6808 = vmatpush1.msra.mxu0 0.0
        %6809 = vmatprep.subr.mxu0 0.0
        %6810 = vmatpush1.msra.mxu0 0.0
        %6811 = vmatprep.subr.mxu0 0.0
        %6812 = vmatpush1.msra.mxu0 0.0
        %6813 = vmatprep.subr.mxu0 0.0
        %6814 = vmatpush1.msra.mxu0 0.0
        %6815 = vmatprep.subr.mxu0 0.0
        %6816 = vmatpush1.msra.mxu0 0.0
        %6817 = vmatprep.subr.mxu0 0.0
        %6818 = vmatpush1.msra.mxu0 0.0
        %6819 = vmatprep.subr.mxu0 0.0
        %6820 = vmatpush1.msra.mxu0 0.0
        %6821 = vmatprep.subr.mxu0 0.0
        %6822 = vmatpush1.msra.mxu0 0.0
        %6823 = vmatprep.subr.mxu0 0.0
        %6824 = vmatpush1.msra.mxu0 0.0
        %6825 = vmatprep.subr.mxu0 0.0
        %6826 = vmatpush1.msra.mxu0 0.0
        %6827 = vmatprep.subr.mxu0 0.0
        %6828 = vmatpush1.msra.mxu0 0.0
        %6829 = vmatprep.subr.mxu0 0.0
        %6830 = vmatpush1.msra.mxu0 0.0
        %6831 = vmatprep.mubr.f32.mxu0 0.0
        %6832 = vmatmul.mubr.f32.gmra.mrb[0].mxu0 %v6759
        %v6833 = vpop.f32.mrb[0].mxu0
        %v6834 = vadd.f32 0.0, %v6833
        %v6835 = vpop.f32.mrb[0].mxu0
        %6836 = vmatprep.mubr.f32.mxu0 0.0
        %6837 = vmatmul.mubr.f32.gmra.mrb[0].mxu0 %v6762
        %v6838 = vpop.f32.mrb[0].mxu0
        %v6839 = vadd.f32 0.0, %v6838
        %v6840 = vpop.f32.mrb[0].mxu0
        %6841 = vmatprep.mubr.f32.mxu0 0.0
        %6842 = vmatmul.mubr.f32.gmra.mrb[0].mxu0 %v6765
        %v6843 = vpop.f32.mrb[0].mxu0
        %v6844 = vadd.f32 0.0, %v6843
        %v6845 = vpop.f32.mrb[0].mxu0
        %6846 = vdwg.mxu0
        %v6847 = vadd.f32 %v6743, %v6834
        %v6848 = vadd.f32 %v6744, %v6839
        %v6849 = vadd.f32 %v6745, %v6844
        %v6850 = vld [vmem:[%s6] sm:$0x1]
        %v6852 = vlaneseq
        %v6853 = vshrl.u32 %v6852, 7
        %v6854 = vsub.s32 0, %v6853
        %v6855 = vrot.slane %v6850, %v6854
        %v6857 = vadd.f32 %v6847, %v6855
        %v6858 = vadd.f32 %v6848, %v6855
        %v6859 = vadd.f32 %v6849, %v6855
        %v6860 = vmax.f32 %v6857, 0.0
        %v6861 = vmax.f32 %v6858, 0.0
        %v6862 = vmax.f32 %v6859, 0.0
        %vm6863 = vcmask 261120
        %6864 = vst.msk [vmem:[#allocation4] sm:$0xff] %vm6863, %v6860
        %6865 = vst.msk [vmem:[#allocation4 + $0x8] sm:$0xff] %vm6863, %v6861
        %6866 = vst.msk [vmem:[#allocation4 + $0x10] sm:$0xff] %vm6863, %v6862
        %v6867 = vld [vmem:[#allocation4] ss:$2 sm:$0x3]
        %s6868 = scalar_lea.vmem [#allocation4], 1
        %v6869 = vld [vmem:[%s6868] ss:$2 sm:$0x3]
        %s6870 = scalar_lea.vmem [#allocation4], 6
        %v6871 = vld [vmem:[%s6870] ss:$2 sm:$0x3]
        %s6872 = scalar_lea.vmem [#allocation4], 7
        %v6873 = vld [vmem:[%s6872] ss:$2 sm:$0x3]
        %v6874 = vmax.f32 %v6867, %v6869
        %v6875 = vmax.f32 %v6871, %v6873
        %v6876 = vmax.f32 %v6874, %v6875
        %vm6877 = vcmask 254976
        %v6878 = vsel %vm6877, %v6876, 0.0
        %v6879 = vrot.slane %v6878, 4
        %v6880 = vadd.f32 %v6878, %v6879
        %v6881 = vrot.slane %v6880, 2
        %v6882 = vadd.f32 %v6880, %v6881
        %v6883 = vrot.slane %v6882, 1
        %v6884 = vadd.f32 %v6882, %v6883
        %v6885 = vadd.f32 %v6884, 0.0
        %s6886 = scalar_lea.vmem [#allocation4], 12
        %v6887 = vld [vmem:[%s6886] ss:$2 sm:$0x3]
        %s6888 = scalar_lea.vmem [#allocation4], 13
        %v6889 = vld [vmem:[%s6888] ss:$2 sm:$0x3]
        %s6890 = scalar_lea.vmem [#allocation4], 18
        %v6891 = vld [vmem:[%s6890] ss:$2 sm:$0x3]
        %s6892 = scalar_lea.vmem [#allocation4], 19
        %v6893 = vld [vmem:[%s6892] ss:$2 sm:$0x3]
        %v6894 = vmax.f32 %v6887, %v6889
        %v6895 = vmax.f32 %v6891, %v6893
        %v6896 = vmax.f32 %v6894, %v6895
        %v6897 = vsel %vm6877, %v6896, 0.0
        %v6898 = vrot.slane %v6897, 4
        %v6899 = vadd.f32 %v6897, %v6898
        %v6900 = vrot.slane %v6899, 2
        %v6901 = vadd.f32 %v6899, %v6900
        %v6902 = vrot.slane %v6901, 1
        %v6903 = vadd.f32 %v6901, %v6902
        %v6904 = vadd.f32 %v6885, %v6903
        %v6905 = vmul.f32 %v6904, 0.25
        %v6906 = vld [vmem:[%s7] sm:$0xff]
        %v6907 = vld [vmem:[%s7 + $0x8] sm:$0xff]
        %v6908 = vld [vmem:[%s7 + $0x10] sm:$0xff]
        %v6909 = vld [vmem:[%s7 + $0x18] sm:$0xff]
        %v6910 = vld [vmem:[%s8] sm:$0x1]
        %v6912 = vsel %vm6863, %v6905, 0
        %6914 = vmatprep.subr.mxu0 0.0
        %6915 = vmatpush1.msra.mxu0 %v6906
        %6916 = vmatprep.subr.mxu0 0.0
        %6917 = vmatpush1.msra.mxu0 %v6907
        %6918 = vmatprep.subr.mxu0 0.0
        %6919 = vmatpush1.msra.mxu0 %v6908
        %6920 = vmatprep.subr.mxu0 0.0
        %6921 = vmatpush1.msra.mxu0 %v6909
        %6922 = vmatprep.subr.mxu0 0.0
        %6923 = vmatpush1.msra.mxu0 0.0
        %6924 = vmatprep.subr.mxu0 0.0
        %6925 = vmatpush1.msra.mxu0 0.0
        %6926 = vmatprep.subr.mxu0 0.0
        %6927 = vmatpush1.msra.mxu0 0.0
        %6928 = vmatprep.subr.mxu0 0.0
        %6929 = vmatpush1.msra.mxu0 0.0
        %6930 = vmatprep.subr.mxu0 0.0
        %6931 = vmatpush1.msra.mxu0 0.0
        %6932 = vmatprep.subr.mxu0 0.0
        %6933 = vmatpush1.msra.mxu0 0.0
        %6934 = vmatprep.subr.mxu0 0.0
        %6935 = vmatpush1.msra.mxu0 0.0
        %6936 = vmatprep.subr.mxu0 0.0
        %6937 = vmatpush1.msra.mxu0 0.0
        %6938 = vmatprep.subr.mxu0 0.0
        %6939 = vmatpush1.msra.mxu0 0.0
        %6940 = vmatprep.subr.mxu0 0.0
        %6941 = vmatpush1.msra.mxu0 0.0
        %6942 = vmatprep.subr.mxu0 0.0
        %6943 = vmatpush1.msra.mxu0 0.0
        %6944 = vmatprep.subr.mxu0 0.0
        %6945 = vmatpush1.msra.mxu0 0.0
        %6946 = vmatprep.subr.mxu0 0.0
        %6947 = vmatpush1.msra.mxu0 0.0
        %6948 = vmatprep.subr.mxu0 0.0
        %6949 = vmatpush1.msra.mxu0 0.0
        %6950 = vmatprep.subr.mxu0 0.0
        %6951 = vmatpush1.msra.mxu0 0.0
        %6952 = vmatprep.subr.mxu0 0.0
        %6953 = vmatpush1.msra.mxu0 0.0
        %6954 = vmatprep.subr.mxu0 0.0
        %6955 = vmatpush1.msra.mxu0 0.0
        %6956 = vmatprep.subr.mxu0 0.0
        %6957 = vmatpush1.msra.mxu0 0.0
        %6958 = vmatprep.subr.mxu0 0.0
        %6959 = vmatpush1.msra.mxu0 0.0
        %6960 = vmatprep.subr.mxu0 0.0
        %6961 = vmatpush1.msra.mxu0 0.0
        %6962 = vmatprep.subr.mxu0 0.0
        %6963 = vmatpush1.msra.mxu0 0.0
        %6964 = vmatprep.subr.mxu0 0.0
        %6965 = vmatpush1.msra.mxu0 0.0
        %6966 = vmatprep.subr.mxu0 0.0
        %6967 = vmatpush1.msra.mxu0 0.0
        %6968 = vmatprep.subr.mxu0 0.0
        %6969 = vmatpush1.msra.mxu0 0.0
        %6970 = vmatprep.subr.mxu0 0.0
        %6971 = vmatpush1.msra.mxu0 0.0
        %6972 = vmatprep.subr.mxu0 0.0
        %6973 = vmatpush1.msra.mxu0 0.0
        %6974 = vmatprep.subr.mxu0 0.0
        %6975 = vmatpush1.msra.mxu0 0.0
        %6976 = vmatprep.subr.mxu0 0.0
        %6977 = vmatpush1.msra.mxu0 0.0
        %6978 = vmatprep.mubr.f32.mxu0 0.0
        %6979 = vmatmul.mubr.f32.gmra.mrb[0].mxu0 %v6912
        %v6980 = vpop.f32.mrb[0].mxu0
        %v6981 = vadd.f32 %v6910, %v6980
        %v6982 = vpop.f32.mrb[0].mxu0
        %6983 = vdwg.mxu0
        %v6984 = vtanh.pop %v6981
        %vm6985 = vcmask 57344
        %6986 = vst.msk [vmem:[%s324] sm:$0x1] %vm6985, %v6984
        %s6987 = sand.u32 %s225, 1
        %s6988 = scalar_lea.sflag [#allocation6], %s6987
        %s6989 = sand.u32 %s225, 1
        %s6990 = scalar_lea.vmem [#allocation5], %s6989
        // Predicated region
        $region57: #{encoder_forward.1} parent=55 // pred_check
          %p6991 = pneg %p235
        $region58: #{encoder_forward.1} parent=55 // pred_check_branch
          %6993 = sbr.rel (%p6991) target = $region60
        $region59: #{encoder_forward.1} parent=55 // pred_region
          %s6995 = ssub.s32 16, 16
          %6996 = vsyncadd %s6988, %s6995
          %s6997 = smul.addr %s23, 16
          %s6998 = scalar_lea.hbm %s9, %s6997
          %s7000 = sshll.u32 %s6990, 4
          %s7001 = int_to_ptr.vmem [resolvable:$true] %s7000
          %7003 = dma.vmem_to_hbm [thread:$0]  %s7001, 16, %s6998, %s6988
        $region60: #{encoder_forward.1} parent=55 // pred_fallthru
          _
      $region56: #{encoder_forward.1} parent=5 // pred_fallthru
        _
      %p7004 = scmp.le.s32.totalorder 2, %s18
      // Predicated region
      $region61: #{encoder_forward.1} parent=5 // pred_check
        %p7005 = pneg %p7004
      $region62: #{encoder_forward.1} parent=5 // pred_check_branch
        %7007 = sbr.rel (%p7005) target = $region64
      $region63: #{encoder_forward.1} parent=5 // pred_region
        %s7008 = ssub.s32 %s18, 2
        // Predicated region
        $region65: #{encoder_forward.1} parent=63 // pred_check
          %p7009 = pneg %p241
        $region66: #{encoder_forward.1} parent=63 // pred_check_branch
          %7011 = sbr.rel (%p7009) target = $region68
        $region67: #{encoder_forward.1} parent=63 // pred_region
          %s7012 = sand.u32 %s226, 1
          %s7013 = scalar_lea.sflag [#allocation6], %s7012
          %s7014 = sand.u32 %s226, 1
          %s7015 = scalar_lea.vmem [#allocation5], %s7014
          %7016 = dma.done %s7013, 16
        $region68: #{encoder_forward.1} parent=63 // pred_fallthru
          _
      $region64: #{encoder_forward.1} parent=5 // pred_fallthru
        _
    $region6: #{encoder_forward.1} parent=1 // loop_footer
      %s22 = sadd.s32 1, %s18
    $region7: #{encoder_forward.1} parent=1 // loop_footer_branch
      %17 = sbr.rel target = $region3
    $region8: #{encoder_forward.1} parent=1 // loop_exit
      _
    %7017 = vsyncpa [#allocation6], 1
    %s7018 = scalar_lea.sflag [#allocation6], 1
    %7019 = vsyncpa %s7018, 1

</llo_original>
